<compile_context>
chip_gen: v6e
topology: v6e:2x2x1
jax: 0.10.0
libtpu: 0.0.40
codegen_flags: <defaults>
</compile_context>

<pallas_src>
import functools
import math

import jax
import jax.numpy as jnp
from jax.experimental import pallas as pl
from jax.experimental.pallas import tpu as pltpu


def _round_up(x: int, m: int) -> int:
    return (x + m - 1) // m * m


# ------------------------------ fused Pallas kernel ------------------------------

def _subsample_kernel(p_ref, w1_ref, b1_ref, w2_ref, b2_ref, wl_ref, bl_ref,
                      o_ref, y1_ref, z_ref, *,
                      nchunk, CH, F2, T2B, T2Bq, odim, odim_p):
    """One (batch, time-block) step: conv1+ReLU -> conv2+ReLU -> Linear(+scale)."""
    # ---- conv1 (3x3, stride 2) + ReLU --------------------------------------------
    # p_ref[0, 0, 3*ch + p][q, f1l*9 + 3*ki+kj] = x[2*t1 + ki, 2*(ch*CH + f1l) + kj]
    # with t1 = 3*T2B*tb + 3*q + p.  The block-diagonal w1 turns a whole chunk of CH
    # frequency columns into ONE GEMM whose (T2Bq, CH*odim_p) result is a contiguous,
    # 128-aligned lane slab of the y1 scratch (single store, no relayout).
    w1 = w1_ref[...]                                   # (CH*9, CH*odim_p) bf16
    b1 = b1_ref[...]                                   # (1, CH*odim_p)    f32
    for ch in range(nchunk):
        ls = ch * CH * odim_p
        for ph in range(3):
            a1 = p_ref[0, 0, 3 * ch + ph]              # (T2Bq, CH*9) bf16
            y = jnp.dot(a1, w1, preferred_element_type=jnp.float32) + b1
            y1_ref[ph, :, ls:ls + CH * odim_p] = jnp.maximum(y, 0.0).astype(y1_ref.dtype)

    # ---- conv2 (5x5, stride 3) + ReLU --------------------------------------------
    # y1 lanes are (f1, c) -> f1*odim_p + c, so the 5 frequency taps of one output
    # column f2 form ONE contiguous K = 5*odim_p slab: 5 matmuls per f2 (one per time
    # tap i) instead of 25.  Time taps i=3,4 read the q0=1 (row-shifted) view of
    # phases 0/1; on v7x the chained dots can also accumulate in the MRB.
    b2 = b2_ref[...]                                   # (1, odim_p) f32
    for f2 in range(F2):
        lo = 3 * f2 * odim_p
        acc = jnp.zeros((T2B, odim_p), jnp.float32)
        for i in range(5):                             # time tap
            ph, q0 = i % 3, i // 3
            a2 = y1_ref[ph, q0:q0 + T2B, lo:lo + 5 * odim_p]   # (T2B, 5*odim_p) bf16
            acc = acc + jnp.dot(a2, w2_ref[i], preferred_element_type=jnp.float32)
        z = jnp.maximum(acc + b2, 0.0).astype(z_ref.dtype)
        z_ref[0:T2B, f2 * odim_p:(f2 + 1) * odim_p] = z

    # ---- Linear (+bias, + RelPositionalEncoding sqrt(odim) scale) ------------------
    # One K = F2*odim_p GEMM; the (c, f2) interleave and the sqrt(odim) scale are
    # folded into wl / bl at weight-prep time, so y2 / the (b, t, c*f) reshape never
    # materialize.
    res = jnp.dot(z_ref[0:T2B, :], wl_ref[...],
                  preferred_element_type=jnp.float32) + bl_ref[...]
    o_ref[0] = res.astype(o_ref.dtype)
    # TODO(synk): convert the f2 / chunk Python loops to lax.fori_loop once Mosaic's
    # dynamic lane-slab addressing is verified; at the current unroll counts
    # (~15 conv1 + 5*F2 conv2 + 1 linear matmuls) register pressure is acceptable.


# --------------------------------- weight prep -----------------------------------

def _prepare_weights(params, odim, odim_p, F2, CH):
    """One-time weight re-layout (zero hot-path cost): bf16, padding + scale folded."""
    scale = math.sqrt(odim)
    f32, bf16 = jnp.float32, jnp.bfloat16

    # conv1: block-diagonal (CH*9, CH*odim_p) so a whole chunk of CH frequency
    # columns is one GEMM landing on a contiguous, 128-aligned lane slab of y1.
    w1 = params["w1"].reshape(odim, 9).T.astype(f32)                      # (9, odim)
    w1p = jnp.zeros((9, odim_p), f32).at[:, :odim].set(w1)
    eye = jnp.eye(CH, dtype=f32)
    w1blk = jnp.einsum("ab,kc->akbc", eye, w1p).reshape(CH * 9, CH * odim_p)
    w1blk = w1blk.astype(bf16)
    b1p = jnp.zeros((odim_p,), f32).at[:odim].set(params["b1"].astype(f32))
    b1blk = jnp.tile(b1p, (CH,)).reshape(1, CH * odim_p)

    # conv2: w2g[i, j*odim_p + c, o] = w2[o, c, i, j]; pad channels are zero rows /
    # zero columns so the odim_p lane padding of y1 / z never contributes.
    w2t = jnp.transpose(params["w2"], (2, 3, 1, 0)).astype(f32)           # (5,5,c,o)
    w2g = jnp.zeros((5, 5, odim_p, odim_p), f32).at[:, :, :odim, :odim].set(w2t)
    w2g = w2g.reshape(5, 5 * odim_p, odim_p).astype(bf16)
    b2 = jnp.zeros((1, odim_p), f32).at[:, :odim].set(params["b2"].reshape(1, odim))

    # Linear: torch input index is c*F2 + f2 -> wlg[f2*odim_p + c, n], with the
    # RelPositionalEncoding sqrt(odim) scale folded in.
    wl3 = jnp.transpose(params["wl"].reshape(odim, odim, F2), (2, 1, 0)) * scale
    wlg = jnp.zeros((F2, odim_p, odim), f32).at[:, :odim, :].set(wl3)
    wlg = wlg.reshape(F2 * odim_p, odim).astype(bf16)
    bl = (params["bl"] * scale).reshape(1, odim).astype(f32)
    return w1blk, b1blk, w2g, b2, wlg, bl


def _sinusoid_pe(length, d_model):
    pos = jnp.arange(length, dtype=jnp.float32)[:, None]
    div = jnp.exp(
        jnp.arange(0, d_model, 2, dtype=jnp.float32) * (-math.log(10000.0) / d_model)
    )
    pe = jnp.zeros((length, d_model), jnp.float32)
    pe = pe.at[:, 0::2].set(jnp.sin(pos * div))
    pe = pe.at[:, 1::2].set(jnp.cos(pos * div))
    return pe[None]                                                        # (1, L, d)


# --------------------------------- JAX wrapper -----------------------------------

@functools.partial(jax.jit, static_argnames=("odim", "max_t2_block"))
def rel_conv2d_subsampling6(params, x, x_mask, *, odim, max_t2_block=128):
    """Forward pass.  x: (B, T, idim) f32, x_mask: (B, 1, T) bool or None."""
    B, T, idim = x.shape
    T1 = (T - 3) // 2 + 1
    F1 = (idim - 3) // 2 + 1
    T2 = (T1 - 5) // 3 + 1
    F2 = (F1 - 5) // 3 + 1
    assert T2 >= 1 and F2 >= 1, "input too short / too narrow for 1/6 subsampling"

    odim_p = _round_up(odim, 128)      # 128-aligned channel slot per frequency column
    F1c = 3 * F2 + 2                   # conv1 freq columns conv2 actually reads (<=F1)
    CH = min(8, F1c)                   # freq columns per conv1 chunk (<=72 lanes)
    nchunk = -(-F1c // CH)
    F1cp = nchunk * CH

    # ---- time blocking of the output (always a multiple of 8 when tiled) ----------
    mtb = max(8, _round_up(max_t2_block, 8))
    if B == 1 and T2 >= 16:
        # keep >= 2 grid steps so both v7x TensorCores get work for single-batch input
        mtb = min(mtb, _round_up(-(-T2 // 2), 8))
    if T2 <= mtb:
        T2B, nTB = T2, 1
    else:
        T2B, nTB = mtb, -(-T2 // mtb)
    T2out = nTB * T2B
    T2Bq = _round_up(T2B + 2, 16)      # per-phase y1 rows (bf16 sublane packing)

    # ---- conv1 patches, lane-packed: CH freq columns x 9 taps -> <=72 lanes --------
    # P[b, tb, ch*3 + p, q, f1l*9 + 3*ki + kj] = x[b, 2*t1 + ki, 2*(ch*CH + f1l) + kj]
    # with t1 = 3*T2B*tb + 3*q + p   (zeros outside the valid range; the padded rows
    # give y1 = ReLU(b1) there but valid (t2, f2) outputs never read them).
    cols = []
    for ki in range(3):
        for kj in range(3):
            cols.append(x[:, ki:ki + 2 * (T1 - 1) + 1:2, kj:kj + 2 * (F1c - 1) + 1:2])
    pfull = jnp.stack(cols, axis=-1)                               # (B, T1, F1c, 9)
    T1need = 3 * T2B * (nTB - 1) + 3 * T2Bq
    pfull = jnp.pad(pfull, ((0, 0), (0, T1need - T1), (0, F1cp - F1c), (0, 0)))
    t_idx = (3 * T2B) * jnp.arange(nTB)[:, None] + jnp.arange(3 * T2Bq)[None, :]
    pblk = jnp.take(pfull, t_idx.reshape(-1), axis=1)              # (B, nTB*3*T2Bq, F1cp, 9)
    pblk = pblk.reshape(B, nTB, T2Bq, 3, nchunk, CH, 9)
    patches = pblk.transpose(0, 1, 4, 3, 2, 5, 6).reshape(
        B, nTB, nchunk * 3, T2Bq, CH * 9).astype(jnp.bfloat16)
    # TODO(synk): for very long utterances this im2col chain could be replaced by a
    # memory_space=pl.ANY x input + overlapped-window DMA / phase split inside the
    # kernel, removing the host-side copy entirely.

    w1blk, b1blk, w2g, b2, wlg, bl = _prepare_weights(params, odim, odim_p, F2, CH)

    kernel = functools.partial(_subsample_kernel, nchunk=nchunk, CH=CH, F2=F2,
                               T2B=T2B, T2Bq=T2Bq, odim=odim, odim_p=odim_p)

    flops = 2 * B * nTB * (nchunk * 3 * T2Bq * (CH * 9) * (CH * odim_p)
                           + F2 * 5 * T2B * (5 * odim_p) * odim_p
                           + T2B * (F2 * odim_p) * odim)
    bytes_accessed = (patches.size * 2
                      + (w1blk.size + w2g.size + wlg.size) * 2
                      + (b1blk.size + b2.size + bl.size) * 4
                      + B * T2out * odim * 2)

    # TODO(synk): the grid-invariant weight inputs (w1blk..bl) are still double
    # buffered; pipeline_mode=pl.Buffered(1) would reclaim ~5 MB of VMEM headroom.
    grid_spec = pltpu.PrefetchScalarGridSpec(
        num_scalar_prefetch=0,
        grid=(B, nTB),
        in_specs=[
            pl.BlockSpec((1, 1, nchunk * 3, T2Bq, CH * 9), lambda b, t: (b, t, 0, 0, 0)),
            pl.BlockSpec((CH * 9, CH * odim_p), lambda b, t: (0, 0)),
            pl.BlockSpec((1, CH * odim_p), lambda b, t: (0, 0)),
            pl.BlockSpec((5, 5 * odim_p, odim_p), lambda b, t: (0, 0, 0)),
            pl.BlockSpec((1, odim_p), lambda b, t: (0, 0)),
            pl.BlockSpec((F2 * odim_p, odim), lambda b, t: (0, 0)),
            pl.BlockSpec((1, odim), lambda b, t: (0, 0)),
        ],
        out_specs=pl.BlockSpec((1, T2B, odim), lambda b, t: (b, t, 0)),
        scratch_shapes=[
            pltpu.VMEM((3, T2Bq, F1cp * odim_p), jnp.bfloat16),   # y1, phase split
            pltpu.VMEM((T2Bq, F2 * odim_p), jnp.bfloat16),        # conv2 output (z)
        ],
    )

    out = pl.pallas_call(
        kernel,
        out_shape=jax.ShapeDtypeStruct((B, T2out, odim), jnp.bfloat16),
        grid_spec=grid_spec,
        compiler_params=pltpu.CompilerParams(
            dimension_semantics=("parallel", "parallel"),   # megacore on v7x
            vmem_limit_bytes=48 * 1024 * 1024,              # fits v5e/v6e/v7x budgets
        ),
        cost_estimate=pl.CostEstimate(flops=flops, transcendentals=0,
                                      bytes_accessed=bytes_accessed),
    )(patches, w1blk, b1blk, w2g, b2, wlg, bl)

    out = out[:, :T2, :]
    pos_emb = _sinusoid_pe(T2, odim)

    if x_mask is None:
        return (out, pos_emb), None
    return (out, pos_emb), x_mask[:, :, :-2:2][:, :, :-4:3]


# ------------------------------ init & pure-JAX reference ------------------------

def init_params(key, idim, odim):
    """Deterministic PyTorch-style (kaiming-uniform-ish) init for all layers."""
    f2 = ((idim - 1) // 2 - 2) // 3                 # freq dim after the two convs
    ks = jax.random.split(key, 6)

    def u(k, shape, fan_in):
        bound = 1.0 / math.sqrt(fan_in)
        return jax.random.uniform(k, shape, jnp.float32, -bound, bound)

    return {
        "w1": u(ks[0], (odim, 1, 3, 3), 1 * 3 * 3),
        "b1": u(ks[1], (odim,), 1 * 3 * 3),
        "w2": u(ks[2], (odim, odim, 5, 5), odim * 5 * 5),
        "b2": u(ks[3], (odim,), odim * 5 * 5),
        "wl": u(ks[4], (odim, odim * f2), odim * f2),   # torch Linear: (out, in)
        "bl": u(ks[5], (odim,), odim * f2),
    }


def _reference_forward(params, x, odim):
    """Pure-JAX (XLA conv) reference of the PyTorch forward, f32/HIGHEST."""
    hp = jax.lax.Precision.HIGHEST
    x4 = x[:, None, :, :]
    y = jax.lax.conv_general_dilated(x4, params["w1"], (2, 2), "VALID",
                                     dimension_numbers=("NCHW", "OIHW", "NCHW"),
                                     precision=hp)
    y = jnp.maximum(y + params["b1"][None, :, None, None], 0.0)
    y = jax.lax.conv_general_dilated(y, params["w2"], (3, 3), "VALID",
                                     dimension_numbers=("NCHW", "OIHW", "NCHW"),
                                     precision=hp)
    y = jnp.maximum(y + params["b2"][None, :, None, None], 0.0)
    b, c, t, f = y.shape
    y = jnp.transpose(y, (0, 2, 1, 3)).reshape(b, t, c * f)
    y = jnp.dot(y, params["wl"].T, precision=hp) + params["bl"]
    return y * math.sqrt(odim)


# ------------------------------------- main ---------------------------------------

if __name__ == "__main__":
    def run_case(B, T, idim, odim, max_t2_block):
        key = jax.random.PRNGKey(0)
        kx, kp = jax.random.split(key)
        x = jax.random.normal(kx, (B, T, idim), jnp.float32)
        x_mask = jnp.ones((B, 1, T), jnp.bool_)
        params = init_params(kp, idim, odim)

        (y, pos_emb), mask_out = rel_conv2d_subsampling6(
            params, x, x_mask, odim=odim, max_t2_block=max_t2_block)
        jax.block_until_ready((y, pos_emb, mask_out))

        T1 = (T - 3) // 2 + 1
        T2 = (T1 - 5) // 3 + 1
        assert y.shape == (B, T2, odim), y.shape
        assert pos_emb.shape == (1, T2, odim), pos_emb.shape
        assert mask_out.shape == (B, 1, T2), mask_out.shape

        ref = _reference_forward(params, x, odim)
        rel_err = float(jnp.max(jnp.abs(y.astype(jnp.float32) - ref))
                        / (jnp.max(jnp.abs(ref)) + 1e-6))
        assert rel_err < 0.1, f"numerical mismatch vs reference: rel_err={rel_err}"

    # Small shapes consistent with the module: x = (batch, time, idim).
    run_case(B=2, T=32, idim=32, odim=32, max_t2_block=32)    # single time-block path
    run_case(B=1, T=80, idim=22, odim=32, max_t2_block=8)     # exercises (B, nTB) tiling
    run_case(B=1, T=148, idim=35, odim=128, max_t2_block=128) # odim==odim_p, auto split

    print("KERNEL_OK")
</pallas_src>

<mosaic_0001>
module attributes {stable_mosaic.version = 11 : i64} {
  func.func @_subsample_kernel(%arg0: i32, %arg1: i32, %arg2: memref<1x1x6x16x72xbf16, #tpu.memory_space<vmem>>, %arg3: memref<72x1024xbf16, #tpu.memory_space<vmem>>, %arg4: memref<1x1024xf32, #tpu.memory_space<vmem>>, %arg5: memref<5x640x128xbf16, #tpu.memory_space<vmem>>, %arg6: memref<1x128xf32, #tpu.memory_space<vmem>>, %arg7: memref<512x32xbf16, #tpu.memory_space<vmem>>, %arg8: memref<1x32xf32, #tpu.memory_space<vmem>>, %arg9: memref<1x4x32xbf16, #tpu.memory_space<vmem>>, %arg10: memref<3x16x2048xbf16, #tpu.memory_space<vmem>>, %arg11: memref<16x512xbf16, #tpu.memory_space<vmem>>) attributes {dimension_semantics = [#tpu.dimension_semantics<parallel>, #tpu.dimension_semantics<parallel>], iteration_bounds = array<i64: 2, 1>, scalar_prefetch = 0 : i64, scratch_operands = 2 : i64, tpu.core_type = #tpu.core_type<tc>, window_params = [{transform_indices = @transform_0, window_bounds = array<i64: 1, 1, 6, 16, 72>}, {pipeline_mode = #tpu.pipeline_mode<synchronous>, transform_indices = @transform_1, window_bounds = array<i64: 72, 1024>}, {pipeline_mode = #tpu.pipeline_mode<synchronous>, transform_indices = @transform_2, window_bounds = array<i64: 1, 1024>}, {pipeline_mode = #tpu.pipeline_mode<synchronous>, transform_indices = @transform_3, window_bounds = array<i64: 5, 640, 128>}, {pipeline_mode = #tpu.pipeline_mode<synchronous>, transform_indices = @transform_4, window_bounds = array<i64: 1, 128>}, {pipeline_mode = #tpu.pipeline_mode<synchronous>, transform_indices = @transform_5, window_bounds = array<i64: 512, 32>}, {pipeline_mode = #tpu.pipeline_mode<synchronous>, transform_indices = @transform_6, window_bounds = array<i64: 1, 32>}, {transform_indices = @transform_7, window_bounds = array<i64: 1, 4, 32>}]} {
    %c0 = arith.constant 0 : index
    %c0_0 = arith.constant 0 : index
    %0 = vector.load %arg3[%c0, %c0_0] : memref<72x1024xbf16, #tpu.memory_space<vmem>>, vector<72x1024xbf16>
    %c0_1 = arith.constant 0 : index
    %c0_2 = arith.constant 0 : index
    %1 = vector.load %arg4[%c0_1, %c0_2] : memref<1x1024xf32, #tpu.memory_space<vmem>>, vector<1x1024xf32>
    %c0_3 = arith.constant 0 : index
    %c0_4 = arith.constant 0 : index
    %c0_5 = arith.constant 0 : index
    %c0_6 = arith.constant 0 : index
    %c0_7 = arith.constant 0 : index
    %2 = vector.load %arg2[%c0_3, %c0_4, %c0_5, %c0_6, %c0_7] : memref<1x1x6x16x72xbf16, #tpu.memory_space<vmem>>, vector<1x1x1x16x72xbf16>
    %3 = vector.shape_cast %2 : vector<1x1x1x16x72xbf16> to vector<16x72xbf16>
    %cst = arith.constant dense<0.000000e+00> : vector<16x1024xf32>
    %4 = tpu.matmul %3, %0, %cst {dimension_numbers = #tpu.dot_dimension_numbers<[1], [0], [0], [1], [0, 0, 1, 1], [], []>} : vector<16x72xbf16>, vector<72x1024xbf16>, vector<16x1024xf32> -> vector<16x1024xf32>
    %5 = vector.broadcast %1 : vector<1x1024xf32> to vector<16x1024xf32>
    %6 = arith.addf %4, %5 : vector<16x1024xf32>
    %cst_8 = arith.constant 0.000000e+00 : f32
    %7 = vector.broadcast %cst_8 : f32 to vector<16x1024xf32>
    %8 = arith.maximumf %6, %7 : vector<16x1024xf32>
    %9 = arith.truncf %8 : vector<16x1024xf32> to vector<16x1024xbf16>
    %c0_9 = arith.constant 0 : index
    %c0_10 = arith.constant 0 : index
    %c0_11 = arith.constant 0 : index
    %10 = vector.load %arg10[%c0_9, %c0_10, %c0_11] : memref<3x16x2048xbf16, #tpu.memory_space<vmem>>, vector<1x16x1024xbf16>
    %11 = vector.shape_cast %10 : vector<1x16x1024xbf16> to vector<16x1024xbf16>
    %12 = vector.shape_cast %9 : vector<16x1024xbf16> to vector<1x16x1024xbf16>
    tpu.vector_store %arg10[%c0_9, %c0_10, %c0_11], %12 {strides = array<i32>} : memref<3x16x2048xbf16, #tpu.memory_space<vmem>>, vector<1x16x1024xbf16>,
    %c0_12 = arith.constant 0 : index
    %c0_13 = arith.constant 0 : index
    %c1 = arith.constant 1 : index
    %c0_14 = arith.constant 0 : index
    %c0_15 = arith.constant 0 : index
    %13 = vector.load %arg2[%c0_12, %c0_13, %c1, %c0_14, %c0_15] : memref<1x1x6x16x72xbf16, #tpu.memory_space<vmem>>, vector<1x1x1x16x72xbf16>
    %14 = vector.shape_cast %13 : vector<1x1x1x16x72xbf16> to vector<16x72xbf16>
    %cst_16 = arith.constant dense<0.000000e+00> : vector<16x1024xf32>
    %15 = tpu.matmul %14, %0, %cst_16 {dimension_numbers = #tpu.dot_dimension_numbers<[1], [0], [0], [1], [0, 0, 1, 1], [], []>} : vector<16x72xbf16>, vector<72x1024xbf16>, vector<16x1024xf32> -> vector<16x1024xf32>
    %16 = vector.broadcast %1 : vector<1x1024xf32> to vector<16x1024xf32>
    %17 = arith.addf %15, %16 : vector<16x1024xf32>
    %cst_17 = arith.constant 0.000000e+00 : f32
    %18 = vector.broadcast %cst_17 : f32 to vector<16x1024xf32>
    %19 = arith.maximumf %17, %18 : vector<16x1024xf32>
    %20 = arith.truncf %19 : vector<16x1024xf32> to vector<16x1024xbf16>
    %c1_18 = arith.constant 1 : index
    %c0_19 = arith.constant 0 : index
    %c0_20 = arith.constant 0 : index
    %21 = vector.load %arg10[%c1_18, %c0_19, %c0_20] : memref<3x16x2048xbf16, #tpu.memory_space<vmem>>, vector<1x16x1024xbf16>
    %22 = vector.shape_cast %21 : vector<1x16x1024xbf16> to vector<16x1024xbf16>
    %23 = vector.shape_cast %20 : vector<16x1024xbf16> to vector<1x16x1024xbf16>
    tpu.vector_store %arg10[%c1_18, %c0_19, %c0_20], %23 {strides = array<i32>} : memref<3x16x2048xbf16, #tpu.memory_space<vmem>>, vector<1x16x1024xbf16>,
    %c0_21 = arith.constant 0 : index
    %c0_22 = arith.constant 0 : index
    %c2 = arith.constant 2 : index
    %c0_23 = arith.constant 0 : index
    %c0_24 = arith.constant 0 : index
    %24 = vector.load %arg2[%c0_21, %c0_22, %c2, %c0_23, %c0_24] : memref<1x1x6x16x72xbf16, #tpu.memory_space<vmem>>, vector<1x1x1x16x72xbf16>
    %25 = vector.shape_cast %24 : vector<1x1x1x16x72xbf16> to vector<16x72xbf16>
    %cst_25 = arith.constant dense<0.000000e+00> : vector<16x1024xf32>
    %26 = tpu.matmul %25, %0, %cst_25 {dimension_numbers = #tpu.dot_dimension_numbers<[1], [0], [0], [1], [0, 0, 1, 1], [], []>} : vector<16x72xbf16>, vector<72x1024xbf16>, vector<16x1024xf32> -> vector<16x1024xf32>
    %27 = vector.broadcast %1 : vector<1x1024xf32> to vector<16x1024xf32>
    %28 = arith.addf %26, %27 : vector<16x1024xf32>
    %cst_26 = arith.constant 0.000000e+00 : f32
    %29 = vector.broadcast %cst_26 : f32 to vector<16x1024xf32>
    %30 = arith.maximumf %28, %29 : vector<16x1024xf32>
    %31 = arith.truncf %30 : vector<16x1024xf32> to vector<16x1024xbf16>
    %c2_27 = arith.constant 2 : index
    %c0_28 = arith.constant 0 : index
    %c0_29 = arith.constant 0 : index
    %32 = vector.load %arg10[%c2_27, %c0_28, %c0_29] : memref<3x16x2048xbf16, #tpu.memory_space<vmem>>, vector<1x16x1024xbf16>
    %33 = vector.shape_cast %32 : vector<1x16x1024xbf16> to vector<16x1024xbf16>
    %34 = vector.shape_cast %31 : vector<16x1024xbf16> to vector<1x16x1024xbf16>
    tpu.vector_store %arg10[%c2_27, %c0_28, %c0_29], %34 {strides = array<i32>} : memref<3x16x2048xbf16, #tpu.memory_space<vmem>>, vector<1x16x1024xbf16>,
    %c0_30 = arith.constant 0 : index
    %c0_31 = arith.constant 0 : index
    %c3 = arith.constant 3 : index
    %c0_32 = arith.constant 0 : index
    %c0_33 = arith.constant 0 : index
    %35 = vector.load %arg2[%c0_30, %c0_31, %c3, %c0_32, %c0_33] : memref<1x1x6x16x72xbf16, #tpu.memory_space<vmem>>, vector<1x1x1x16x72xbf16>
    %36 = vector.shape_cast %35 : vector<1x1x1x16x72xbf16> to vector<16x72xbf16>
    %cst_34 = arith.constant dense<0.000000e+00> : vector<16x1024xf32>
    %37 = tpu.matmul %36, %0, %cst_34 {dimension_numbers = #tpu.dot_dimension_numbers<[1], [0], [0], [1], [0, 0, 1, 1], [], []>} : vector<16x72xbf16>, vector<72x1024xbf16>, vector<16x1024xf32> -> vector<16x1024xf32>
    %38 = vector.broadcast %1 : vector<1x1024xf32> to vector<16x1024xf32>
    %39 = arith.addf %37, %38 : vector<16x1024xf32>
    %cst_35 = arith.constant 0.000000e+00 : f32
    %40 = vector.broadcast %cst_35 : f32 to vector<16x1024xf32>
    %41 = arith.maximumf %39, %40 : vector<16x1024xf32>
    %42 = arith.truncf %41 : vector<16x1024xf32> to vector<16x1024xbf16>
    %c0_36 = arith.constant 0 : index
    %c0_37 = arith.constant 0 : index
    %c1024 = arith.constant 1024 : index
    %43 = vector.load %arg10[%c0_36, %c0_37, %c1024] : memref<3x16x2048xbf16, #tpu.memory_space<vmem>>, vector<1x16x1024xbf16>
    %44 = vector.shape_cast %43 : vector<1x16x1024xbf16> to vector<16x1024xbf16>
    %45 = vector.shape_cast %42 : vector<16x1024xbf16> to vector<1x16x1024xbf16>
    tpu.vector_store %arg10[%c0_36, %c0_37, %c1024], %45 {strides = array<i32>} : memref<3x16x2048xbf16, #tpu.memory_space<vmem>>, vector<1x16x1024xbf16>,
    %c0_38 = arith.constant 0 : index
    %c0_39 = arith.constant 0 : index
    %c4 = arith.constant 4 : index
    %c0_40 = arith.constant 0 : index
    %c0_41 = arith.constant 0 : index
    %46 = vector.load %arg2[%c0_38, %c0_39, %c4, %c0_40, %c0_41] : memref<1x1x6x16x72xbf16, #tpu.memory_space<vmem>>, vector<1x1x1x16x72xbf16>
    %47 = vector.shape_cast %46 : vector<1x1x1x16x72xbf16> to vector<16x72xbf16>
    %cst_42 = arith.constant dense<0.000000e+00> : vector<16x1024xf32>
    %48 = tpu.matmul %47, %0, %cst_42 {dimension_numbers = #tpu.dot_dimension_numbers<[1], [0], [0], [1], [0, 0, 1, 1], [], []>} : vector<16x72xbf16>, vector<72x1024xbf16>, vector<16x1024xf32> -> vector<16x1024xf32>
    %49 = vector.broadcast %1 : vector<1x1024xf32> to vector<16x1024xf32>
    %50 = arith.addf %48, %49 : vector<16x1024xf32>
    %cst_43 = arith.constant 0.000000e+00 : f32
    %51 = vector.broadcast %cst_43 : f32 to vector<16x1024xf32>
    %52 = arith.maximumf %50, %51 : vector<16x1024xf32>
    %53 = arith.truncf %52 : vector<16x1024xf32> to vector<16x1024xbf16>
    %c1_44 = arith.constant 1 : index
    %c0_45 = arith.constant 0 : index
    %c1024_46 = arith.constant 1024 : index
    %54 = vector.load %arg10[%c1_44, %c0_45, %c1024_46] : memref<3x16x2048xbf16, #tpu.memory_space<vmem>>, vector<1x16x1024xbf16>
    %55 = vector.shape_cast %54 : vector<1x16x1024xbf16> to vector<16x1024xbf16>
    %56 = vector.shape_cast %53 : vector<16x1024xbf16> to vector<1x16x1024xbf16>
    tpu.vector_store %arg10[%c1_44, %c0_45, %c1024_46], %56 {strides = array<i32>} : memref<3x16x2048xbf16, #tpu.memory_space<vmem>>, vector<1x16x1024xbf16>,
    %c0_47 = arith.constant 0 : index
    %c0_48 = arith.constant 0 : index
    %c5 = arith.constant 5 : index
    %c0_49 = arith.constant 0 : index
    %c0_50 = arith.constant 0 : index
    %57 = vector.load %arg2[%c0_47, %c0_48, %c5, %c0_49, %c0_50] : memref<1x1x6x16x72xbf16, #tpu.memory_space<vmem>>, vector<1x1x1x16x72xbf16>
    %58 = vector.shape_cast %57 : vector<1x1x1x16x72xbf16> to vector<16x72xbf16>
    %cst_51 = arith.constant dense<0.000000e+00> : vector<16x1024xf32>
    %59 = tpu.matmul %58, %0, %cst_51 {dimension_numbers = #tpu.dot_dimension_numbers<[1], [0], [0], [1], [0, 0, 1, 1], [], []>} : vector<16x72xbf16>, vector<72x1024xbf16>, vector<16x1024xf32> -> vector<16x1024xf32>
    %60 = vector.broadcast %1 : vector<1x1024xf32> to vector<16x1024xf32>
    %61 = arith.addf %59, %60 : vector<16x1024xf32>
    %cst_52 = arith.constant 0.000000e+00 : f32
    %62 = vector.broadcast %cst_52 : f32 to vector<16x1024xf32>
    %63 = arith.maximumf %61, %62 : vector<16x1024xf32>
    %64 = arith.truncf %63 : vector<16x1024xf32> to vector<16x1024xbf16>
    %c2_53 = arith.constant 2 : index
    %c0_54 = arith.constant 0 : index
    %c1024_55 = arith.constant 1024 : index
    %65 = vector.load %arg10[%c2_53, %c0_54, %c1024_55] : memref<3x16x2048xbf16, #tpu.memory_space<vmem>>, vector<1x16x1024xbf16>
    %66 = vector.shape_cast %65 : vector<1x16x1024xbf16> to vector<16x1024xbf16>
    %67 = vector.shape_cast %64 : vector<16x1024xbf16> to vector<1x16x1024xbf16>
    tpu.vector_store %arg10[%c2_53, %c0_54, %c1024_55], %67 {strides = array<i32>} : memref<3x16x2048xbf16, #tpu.memory_space<vmem>>, vector<1x16x1024xbf16>,
    %c0_56 = arith.constant 0 : index
    %c0_57 = arith.constant 0 : index
    %68 = vector.load %arg6[%c0_56, %c0_57] : memref<1x128xf32, #tpu.memory_space<vmem>>, vector<1x128xf32>
    %cst_58 = arith.constant 0.000000e+00 : f32
    %69 = vector.broadcast %cst_58 : f32 to vector<4x128xf32>
    %c0_59 = arith.constant 0 : index
    %c0_60 = arith.constant 0 : index
    %c0_61 = arith.constant 0 : index
    %70 = vector.load %arg10[%c0_59, %c0_60, %c0_61] : memref<3x16x2048xbf16, #tpu.memory_space<vmem>>, vector<1x4x640xbf16>
    %71 = vector.shape_cast %70 : vector<1x4x640xbf16> to vector<4x640xbf16>
    %c0_62 = arith.constant 0 : index
    %c0_63 = arith.constant 0 : index
    %c0_64 = arith.constant 0 : index
    %72 = vector.load %arg5[%c0_62, %c0_63, %c0_64] : memref<5x640x128xbf16, #tpu.memory_space<vmem>>, vector<1x640x128xbf16>
    %73 = vector.shape_cast %72 : vector<1x640x128xbf16> to vector<640x128xbf16>
    %cst_65 = arith.constant dense<0.000000e+00> : vector<4x128xf32>
    %74 = tpu.matmul %71, %73, %cst_65 {dimension_numbers = #tpu.dot_dimension_numbers<[1], [0], [0], [1], [0, 0, 1, 1], [], []>} : vector<4x640xbf16>, vector<640x128xbf16>, vector<4x128xf32> -> vector<4x128xf32>
    %75 = arith.addf %69, %74 : vector<4x128xf32>
    %c1_66 = arith.constant 1 : index
    %c0_67 = arith.constant 0 : index
    %c0_68 = arith.constant 0 : index
    %76 = vector.load %arg10[%c1_66, %c0_67, %c0_68] : memref<3x16x2048xbf16, #tpu.memory_space<vmem>>, vector<1x4x640xbf16>
    %77 = vector.shape_cast %76 : vector<1x4x640xbf16> to vector<4x640xbf16>
    %c1_69 = arith.constant 1 : index
    %c0_70 = arith.constant 0 : index
    %c0_71 = arith.constant 0 : index
    %78 = vector.load %arg5[%c1_69, %c0_70, %c0_71] : memref<5x640x128xbf16, #tpu.memory_space<vmem>>, vector<1x640x128xbf16>
    %79 = vector.shape_cast %78 : vector<1x640x128xbf16> to vector<640x128xbf16>
    %cst_72 = arith.constant dense<0.000000e+00> : vector<4x128xf32>
    %80 = tpu.matmul %77, %79, %cst_72 {dimension_numbers = #tpu.dot_dimension_numbers<[1], [0], [0], [1], [0, 0, 1, 1], [], []>} : vector<4x640xbf16>, vector<640x128xbf16>, vector<4x128xf32> -> vector<4x128xf32>
    %81 = arith.addf %75, %80 : vector<4x128xf32>
    %c2_73 = arith.constant 2 : index
    %c0_74 = arith.constant 0 : index
    %c0_75 = arith.constant 0 : index
    %82 = vector.load %arg10[%c2_73, %c0_74, %c0_75] : memref<3x16x2048xbf16, #tpu.memory_space<vmem>>, vector<1x4x640xbf16>
    %83 = vector.shape_cast %82 : vector<1x4x640xbf16> to vector<4x640xbf16>
    %c2_76 = arith.constant 2 : index
    %c0_77 = arith.constant 0 : index
    %c0_78 = arith.constant 0 : index
    %84 = vector.load %arg5[%c2_76, %c0_77, %c0_78] : memref<5x640x128xbf16, #tpu.memory_space<vmem>>, vector<1x640x128xbf16>
    %85 = vector.shape_cast %84 : vector<1x640x128xbf16> to vector<640x128xbf16>
    %cst_79 = arith.constant dense<0.000000e+00> : vector<4x128xf32>
    %86 = tpu.matmul %83, %85, %cst_79 {dimension_numbers = #tpu.dot_dimension_numbers<[1], [0], [0], [1], [0, 0, 1, 1], [], []>} : vector<4x640xbf16>, vector<640x128xbf16>, vector<4x128xf32> -> vector<4x128xf32>
    %87 = arith.addf %81, %86 : vector<4x128xf32>
    %c0_80 = arith.constant 0 : index
    %c1_81 = arith.constant 1 : index
    %c0_82 = arith.constant 0 : index
    %88 = vector.load %arg10[%c0_80, %c1_81, %c0_82] : memref<3x16x2048xbf16, #tpu.memory_space<vmem>>, vector<1x4x640xbf16>
    %89 = vector.shape_cast %88 : vector<1x4x640xbf16> to vector<4x640xbf16>
    %c3_83 = arith.constant 3 : index
    %c0_84 = arith.constant 0 : index
    %c0_85 = arith.constant 0 : index
    %90 = vector.load %arg5[%c3_83, %c0_84, %c0_85] : memref<5x640x128xbf16, #tpu.memory_space<vmem>>, vector<1x640x128xbf16>
    %91 = vector.shape_cast %90 : vector<1x640x128xbf16> to vector<640x128xbf16>
    %cst_86 = arith.constant dense<0.000000e+00> : vector<4x128xf32>
    %92 = tpu.matmul %89, %91, %cst_86 {dimension_numbers = #tpu.dot_dimension_numbers<[1], [0], [0], [1], [0, 0, 1, 1], [], []>} : vector<4x640xbf16>, vector<640x128xbf16>, vector<4x128xf32> -> vector<4x128xf32>
    %93 = arith.addf %87, %92 : vector<4x128xf32>
    %c1_87 = arith.constant 1 : index
    %c1_88 = arith.constant 1 : index
    %c0_89 = arith.constant 0 : index
    %94 = vector.load %arg10[%c1_87, %c1_88, %c0_89] : memref<3x16x2048xbf16, #tpu.memory_space<vmem>>, vector<1x4x640xbf16>
    %95 = vector.shape_cast %94 : vector<1x4x640xbf16> to vector<4x640xbf16>
    %c4_90 = arith.constant 4 : index
    %c0_91 = arith.constant 0 : index
    %c0_92 = arith.constant 0 : index
    %96 = vector.load %arg5[%c4_90, %c0_91, %c0_92] : memref<5x640x128xbf16, #tpu.memory_space<vmem>>, vector<1x640x128xbf16>
    %97 = vector.shape_cast %96 : vector<1x640x128xbf16> to vector<640x128xbf16>
    %cst_93 = arith.constant dense<0.000000e+00> : vector<4x128xf32>
    %98 = tpu.matmul %95, %97, %cst_93 {dimension_numbers = #tpu.dot_dimension_numbers<[1], [0], [0], [1], [0, 0, 1, 1], [], []>} : vector<4x640xbf16>, vector<640x128xbf16>, vector<4x128xf32> -> vector<4x128xf32>
    %99 = arith.addf %93, %98 : vector<4x128xf32>
    %100 = vector.broadcast %68 : vector<1x128xf32> to vector<4x128xf32>
    %101 = arith.addf %99, %100 : vector<4x128xf32>
    %cst_94 = arith.constant 0.000000e+00 : f32
    %102 = vector.broadcast %cst_94 : f32 to vector<4x128xf32>
    %103 = arith.maximumf %101, %102 : vector<4x128xf32>
    %104 = arith.truncf %103 : vector<4x128xf32> to vector<4x128xbf16>
    %c0_95 = arith.constant 0 : index
    %c0_96 = arith.constant 0 : index
    %105 = vector.load %arg11[%c0_95, %c0_96] : memref<16x512xbf16, #tpu.memory_space<vmem>>, vector<4x128xbf16>
    tpu.vector_store %arg11[%c0_95, %c0_96], %104 {strides = array<i32>} : memref<16x512xbf16, #tpu.memory_space<vmem>>, vector<4x128xbf16>,
    %cst_97 = arith.constant 0.000000e+00 : f32
    %106 = vector.broadcast %cst_97 : f32 to vector<4x128xf32>
    %c0_98 = arith.constant 0 : index
    %c0_99 = arith.constant 0 : index
    %c384 = arith.constant 384 : index
    %107 = vector.load %arg10[%c0_98, %c0_99, %c384] : memref<3x16x2048xbf16, #tpu.memory_space<vmem>>, vector<1x4x640xbf16>
    %108 = vector.shape_cast %107 : vector<1x4x640xbf16> to vector<4x640xbf16>
    %c0_100 = arith.constant 0 : index
    %c0_101 = arith.constant 0 : index
    %c0_102 = arith.constant 0 : index
    %109 = vector.load %arg5[%c0_100, %c0_101, %c0_102] : memref<5x640x128xbf16, #tpu.memory_space<vmem>>, vector<1x640x128xbf16>
    %110 = vector.shape_cast %109 : vector<1x640x128xbf16> to vector<640x128xbf16>
    %cst_103 = arith.constant dense<0.000000e+00> : vector<4x128xf32>
    %111 = tpu.matmul %108, %110, %cst_103 {dimension_numbers = #tpu.dot_dimension_numbers<[1], [0], [0], [1], [0, 0, 1, 1], [], []>} : vector<4x640xbf16>, vector<640x128xbf16>, vector<4x128xf32> -> vector<4x128xf32>
    %112 = arith.addf %106, %111 : vector<4x128xf32>
    %c1_104 = arith.constant 1 : index
    %c0_105 = arith.constant 0 : index
    %c384_106 = arith.constant 384 : index
    %113 = vector.load %arg10[%c1_104, %c0_105, %c384_106] : memref<3x16x2048xbf16, #tpu.memory_space<vmem>>, vector<1x4x640xbf16>
    %114 = vector.shape_cast %113 : vector<1x4x640xbf16> to vector<4x640xbf16>
    %c1_107 = arith.constant 1 : index
    %c0_108 = arith.constant 0 : index
    %c0_109 = arith.constant 0 : index
    %115 = vector.load %arg5[%c1_107, %c0_108, %c0_109] : memref<5x640x128xbf16, #tpu.memory_space<vmem>>, vector<1x640x128xbf16>
    %116 = vector.shape_cast %115 : vector<1x640x128xbf16> to vector<640x128xbf16>
    %cst_110 = arith.constant dense<0.000000e+00> : vector<4x128xf32>
    %117 = tpu.matmul %114, %116, %cst_110 {dimension_numbers = #tpu.dot_dimension_numbers<[1], [0], [0], [1], [0, 0, 1, 1], [], []>} : vector<4x640xbf16>, vector<640x128xbf16>, vector<4x128xf32> -> vector<4x128xf32>
    %118 = arith.addf %112, %117 : vector<4x128xf32>
    %c2_111 = arith.constant 2 : index
    %c0_112 = arith.constant 0 : index
    %c384_113 = arith.constant 384 : index
    %119 = vector.load %arg10[%c2_111, %c0_112, %c384_113] : memref<3x16x2048xbf16, #tpu.memory_space<vmem>>, vector<1x4x640xbf16>
    %120 = vector.shape_cast %119 : vector<1x4x640xbf16> to vector<4x640xbf16>
    %c2_114 = arith.constant 2 : index
    %c0_115 = arith.constant 0 : index
    %c0_116 = arith.constant 0 : index
    %121 = vector.load %arg5[%c2_114, %c0_115, %c0_116] : memref<5x640x128xbf16, #tpu.memory_space<vmem>>, vector<1x640x128xbf16>
    %122 = vector.shape_cast %121 : vector<1x640x128xbf16> to vector<640x128xbf16>
    %cst_117 = arith.constant dense<0.000000e+00> : vector<4x128xf32>
    %123 = tpu.matmul %120, %122, %cst_117 {dimension_numbers = #tpu.dot_dimension_numbers<[1], [0], [0], [1], [0, 0, 1, 1], [], []>} : vector<4x640xbf16>, vector<640x128xbf16>, vector<4x128xf32> -> vector<4x128xf32>
    %124 = arith.addf %118, %123 : vector<4x128xf32>
    %c0_118 = arith.constant 0 : index
    %c1_119 = arith.constant 1 : index
    %c384_120 = arith.constant 384 : index
    %125 = vector.load %arg10[%c0_118, %c1_119, %c384_120] : memref<3x16x2048xbf16, #tpu.memory_space<vmem>>, vector<1x4x640xbf16>
    %126 = vector.shape_cast %125 : vector<1x4x640xbf16> to vector<4x640xbf16>
    %c3_121 = arith.constant 3 : index
    %c0_122 = arith.constant 0 : index
    %c0_123 = arith.constant 0 : index
    %127 = vector.load %arg5[%c3_121, %c0_122, %c0_123] : memref<5x640x128xbf16, #tpu.memory_space<vmem>>, vector<1x640x128xbf16>
    %128 = vector.shape_cast %127 : vector<1x640x128xbf16> to vector<640x128xbf16>
    %cst_124 = arith.constant dense<0.000000e+00> : vector<4x128xf32>
    %129 = tpu.matmul %126, %128, %cst_124 {dimension_numbers = #tpu.dot_dimension_numbers<[1], [0], [0], [1], [0, 0, 1, 1], [], []>} : vector<4x640xbf16>, vector<640x128xbf16>, vector<4x128xf32> -> vector<4x128xf32>
    %130 = arith.addf %124, %129 : vector<4x128xf32>
    %c1_125 = arith.constant 1 : index
    %c1_126 = arith.constant 1 : index
    %c384_127 = arith.constant 384 : index
    %131 = vector.load %arg10[%c1_125, %c1_126, %c384_127] : memref<3x16x2048xbf16, #tpu.memory_space<vmem>>, vector<1x4x640xbf16>
    %132 = vector.shape_cast %131 : vector<1x4x640xbf16> to vector<4x640xbf16>
    %c4_128 = arith.constant 4 : index
    %c0_129 = arith.constant 0 : index
    %c0_130 = arith.constant 0 : index
    %133 = vector.load %arg5[%c4_128, %c0_129, %c0_130] : memref<5x640x128xbf16, #tpu.memory_space<vmem>>, vector<1x640x128xbf16>
    %134 = vector.shape_cast %133 : vector<1x640x128xbf16> to vector<640x128xbf16>
    %cst_131 = arith.constant dense<0.000000e+00> : vector<4x128xf32>
    %135 = tpu.matmul %132, %134, %cst_131 {dimension_numbers = #tpu.dot_dimension_numbers<[1], [0], [0], [1], [0, 0, 1, 1], [], []>} : vector<4x640xbf16>, vector<640x128xbf16>, vector<4x128xf32> -> vector<4x128xf32>
    %136 = arith.addf %130, %135 : vector<4x128xf32>
    %137 = vector.broadcast %68 : vector<1x128xf32> to vector<4x128xf32>
    %138 = arith.addf %136, %137 : vector<4x128xf32>
    %cst_132 = arith.constant 0.000000e+00 : f32
    %139 = vector.broadcast %cst_132 : f32 to vector<4x128xf32>
    %140 = arith.maximumf %138, %139 : vector<4x128xf32>
    %141 = arith.truncf %140 : vector<4x128xf32> to vector<4x128xbf16>
    %c0_133 = arith.constant 0 : index
    %c128 = arith.constant 128 : index
    %142 = vector.load %arg11[%c0_133, %c128] : memref<16x512xbf16, #tpu.memory_space<vmem>>, vector<4x128xbf16>
    tpu.vector_store %arg11[%c0_133, %c128], %141 {strides = array<i32>} : memref<16x512xbf16, #tpu.memory_space<vmem>>, vector<4x128xbf16>,
    %cst_134 = arith.constant 0.000000e+00 : f32
    %143 = vector.broadcast %cst_134 : f32 to vector<4x128xf32>
    %c0_135 = arith.constant 0 : index
    %c0_136 = arith.constant 0 : index
    %c768 = arith.constant 768 : index
    %144 = vector.load %arg10[%c0_135, %c0_136, %c768] : memref<3x16x2048xbf16, #tpu.memory_space<vmem>>, vector<1x4x640xbf16>
    %145 = vector.shape_cast %144 : vector<1x4x640xbf16> to vector<4x640xbf16>
    %c0_137 = arith.constant 0 : index
    %c0_138 = arith.constant 0 : index
    %c0_139 = arith.constant 0 : index
    %146 = vector.load %arg5[%c0_137, %c0_138, %c0_139] : memref<5x640x128xbf16, #tpu.memory_space<vmem>>, vector<1x640x128xbf16>
    %147 = vector.shape_cast %146 : vector<1x640x128xbf16> to vector<640x128xbf16>
    %cst_140 = arith.constant dense<0.000000e+00> : vector<4x128xf32>
    %148 = tpu.matmul %145, %147, %cst_140 {dimension_numbers = #tpu.dot_dimension_numbers<[1], [0], [0], [1], [0, 0, 1, 1], [], []>} : vector<4x640xbf16>, vector<640x128xbf16>, vector<4x128xf32> -> vector<4x128xf32>
    %149 = arith.addf %143, %148 : vector<4x128xf32>
    %c1_141 = arith.constant 1 : index
    %c0_142 = arith.constant 0 : index
    %c768_143 = arith.constant 768 : index
    %150 = vector.load %arg10[%c1_141, %c0_142, %c768_143] : memref<3x16x2048xbf16, #tpu.memory_space<vmem>>, vector<1x4x640xbf16>
    %151 = vector.shape_cast %150 : vector<1x4x640xbf16> to vector<4x640xbf16>
    %c1_144 = arith.constant 1 : index
    %c0_145 = arith.constant 0 : index
    %c0_146 = arith.constant 0 : index
    %152 = vector.load %arg5[%c1_144, %c0_145, %c0_146] : memref<5x640x128xbf16, #tpu.memory_space<vmem>>, vector<1x640x128xbf16>
    %153 = vector.shape_cast %152 : vector<1x640x128xbf16> to vector<640x128xbf16>
    %cst_147 = arith.constant dense<0.000000e+00> : vector<4x128xf32>
    %154 = tpu.matmul %151, %153, %cst_147 {dimension_numbers = #tpu.dot_dimension_numbers<[1], [0], [0], [1], [0, 0, 1, 1], [], []>} : vector<4x640xbf16>, vector<640x128xbf16>, vector<4x128xf32> -> vector<4x128xf32>
    %155 = arith.addf %149, %154 : vector<4x128xf32>
    %c2_148 = arith.constant 2 : index
    %c0_149 = arith.constant 0 : index
    %c768_150 = arith.constant 768 : index
    %156 = vector.load %arg10[%c2_148, %c0_149, %c768_150] : memref<3x16x2048xbf16, #tpu.memory_space<vmem>>, vector<1x4x640xbf16>
    %157 = vector.shape_cast %156 : vector<1x4x640xbf16> to vector<4x640xbf16>
    %c2_151 = arith.constant 2 : index
    %c0_152 = arith.constant 0 : index
    %c0_153 = arith.constant 0 : index
    %158 = vector.load %arg5[%c2_151, %c0_152, %c0_153] : memref<5x640x128xbf16, #tpu.memory_space<vmem>>, vector<1x640x128xbf16>
    %159 = vector.shape_cast %158 : vector<1x640x128xbf16> to vector<640x128xbf16>
    %cst_154 = arith.constant dense<0.000000e+00> : vector<4x128xf32>
    %160 = tpu.matmul %157, %159, %cst_154 {dimension_numbers = #tpu.dot_dimension_numbers<[1], [0], [0], [1], [0, 0, 1, 1], [], []>} : vector<4x640xbf16>, vector<640x128xbf16>, vector<4x128xf32> -> vector<4x128xf32>
    %161 = arith.addf %155, %160 : vector<4x128xf32>
    %c0_155 = arith.constant 0 : index
    %c1_156 = arith.constant 1 : index
    %c768_157 = arith.constant 768 : index
    %162 = vector.load %arg10[%c0_155, %c1_156, %c768_157] : memref<3x16x2048xbf16, #tpu.memory_space<vmem>>, vector<1x4x640xbf16>
    %163 = vector.shape_cast %162 : vector<1x4x640xbf16> to vector<4x640xbf16>
    %c3_158 = arith.constant 3 : index
    %c0_159 = arith.constant 0 : index
    %c0_160 = arith.constant 0 : index
    %164 = vector.load %arg5[%c3_158, %c0_159, %c0_160] : memref<5x640x128xbf16, #tpu.memory_space<vmem>>, vector<1x640x128xbf16>
    %165 = vector.shape_cast %164 : vector<1x640x128xbf16> to vector<640x128xbf16>
    %cst_161 = arith.constant dense<0.000000e+00> : vector<4x128xf32>
    %166 = tpu.matmul %163, %165, %cst_161 {dimension_numbers = #tpu.dot_dimension_numbers<[1], [0], [0], [1], [0, 0, 1, 1], [], []>} : vector<4x640xbf16>, vector<640x128xbf16>, vector<4x128xf32> -> vector<4x128xf32>
    %167 = arith.addf %161, %166 : vector<4x128xf32>
    %c1_162 = arith.constant 1 : index
    %c1_163 = arith.constant 1 : index
    %c768_164 = arith.constant 768 : index
    %168 = vector.load %arg10[%c1_162, %c1_163, %c768_164] : memref<3x16x2048xbf16, #tpu.memory_space<vmem>>, vector<1x4x640xbf16>
    %169 = vector.shape_cast %168 : vector<1x4x640xbf16> to vector<4x640xbf16>
    %c4_165 = arith.constant 4 : index
    %c0_166 = arith.constant 0 : index
    %c0_167 = arith.constant 0 : index
    %170 = vector.load %arg5[%c4_165, %c0_166, %c0_167] : memref<5x640x128xbf16, #tpu.memory_space<vmem>>, vector<1x640x128xbf16>
    %171 = vector.shape_cast %170 : vector<1x640x128xbf16> to vector<640x128xbf16>
    %cst_168 = arith.constant dense<0.000000e+00> : vector<4x128xf32>
    %172 = tpu.matmul %169, %171, %cst_168 {dimension_numbers = #tpu.dot_dimension_numbers<[1], [0], [0], [1], [0, 0, 1, 1], [], []>} : vector<4x640xbf16>, vector<640x128xbf16>, vector<4x128xf32> -> vector<4x128xf32>
    %173 = arith.addf %167, %172 : vector<4x128xf32>
    %174 = vector.broadcast %68 : vector<1x128xf32> to vector<4x128xf32>
    %175 = arith.addf %173, %174 : vector<4x128xf32>
    %cst_169 = arith.constant 0.000000e+00 : f32
    %176 = vector.broadcast %cst_169 : f32 to vector<4x128xf32>
    %177 = arith.maximumf %175, %176 : vector<4x128xf32>
    %178 = arith.truncf %177 : vector<4x128xf32> to vector<4x128xbf16>
    %c0_170 = arith.constant 0 : index
    %c256 = arith.constant 256 : index
    %179 = vector.load %arg11[%c0_170, %c256] : memref<16x512xbf16, #tpu.memory_space<vmem>>, vector<4x128xbf16>
    tpu.vector_store %arg11[%c0_170, %c256], %178 {strides = array<i32>} : memref<16x512xbf16, #tpu.memory_space<vmem>>, vector<4x128xbf16>,
    %cst_171 = arith.constant 0.000000e+00 : f32
    %180 = vector.broadcast %cst_171 : f32 to vector<4x128xf32>
    %c0_172 = arith.constant 0 : index
    %c0_173 = arith.constant 0 : index
    %c1152 = arith.constant 1152 : index
    %181 = vector.load %arg10[%c0_172, %c0_173, %c1152] : memref<3x16x2048xbf16, #tpu.memory_space<vmem>>, vector<1x4x640xbf16>
    %182 = vector.shape_cast %181 : vector<1x4x640xbf16> to vector<4x640xbf16>
    %c0_174 = arith.constant 0 : index
    %c0_175 = arith.constant 0 : index
    %c0_176 = arith.constant 0 : index
    %183 = vector.load %arg5[%c0_174, %c0_175, %c0_176] : memref<5x640x128xbf16, #tpu.memory_space<vmem>>, vector<1x640x128xbf16>
    %184 = vector.shape_cast %183 : vector<1x640x128xbf16> to vector<640x128xbf16>
    %cst_177 = arith.constant dense<0.000000e+00> : vector<4x128xf32>
    %185 = tpu.matmul %182, %184, %cst_177 {dimension_numbers = #tpu.dot_dimension_numbers<[1], [0], [0], [1], [0, 0, 1, 1], [], []>} : vector<4x640xbf16>, vector<640x128xbf16>, vector<4x128xf32> -> vector<4x128xf32>
    %186 = arith.addf %180, %185 : vector<4x128xf32>
    %c1_178 = arith.constant 1 : index
    %c0_179 = arith.constant 0 : index
    %c1152_180 = arith.constant 1152 : index
    %187 = vector.load %arg10[%c1_178, %c0_179, %c1152_180] : memref<3x16x2048xbf16, #tpu.memory_space<vmem>>, vector<1x4x640xbf16>
    %188 = vector.shape_cast %187 : vector<1x4x640xbf16> to vector<4x640xbf16>
    %c1_181 = arith.constant 1 : index
    %c0_182 = arith.constant 0 : index
    %c0_183 = arith.constant 0 : index
    %189 = vector.load %arg5[%c1_181, %c0_182, %c0_183] : memref<5x640x128xbf16, #tpu.memory_space<vmem>>, vector<1x640x128xbf16>
    %190 = vector.shape_cast %189 : vector<1x640x128xbf16> to vector<640x128xbf16>
    %cst_184 = arith.constant dense<0.000000e+00> : vector<4x128xf32>
    %191 = tpu.matmul %188, %190, %cst_184 {dimension_numbers = #tpu.dot_dimension_numbers<[1], [0], [0], [1], [0, 0, 1, 1], [], []>} : vector<4x640xbf16>, vector<640x128xbf16>, vector<4x128xf32> -> vector<4x128xf32>
    %192 = arith.addf %186, %191 : vector<4x128xf32>
    %c2_185 = arith.constant 2 : index
    %c0_186 = arith.constant 0 : index
    %c1152_187 = arith.constant 1152 : index
    %193 = vector.load %arg10[%c2_185, %c0_186, %c1152_187] : memref<3x16x2048xbf16, #tpu.memory_space<vmem>>, vector<1x4x640xbf16>
    %194 = vector.shape_cast %193 : vector<1x4x640xbf16> to vector<4x640xbf16>
    %c2_188 = arith.constant 2 : index
    %c0_189 = arith.constant 0 : index
    %c0_190 = arith.constant 0 : index
    %195 = vector.load %arg5[%c2_188, %c0_189, %c0_190] : memref<5x640x128xbf16, #tpu.memory_space<vmem>>, vector<1x640x128xbf16>
    %196 = vector.shape_cast %195 : vector<1x640x128xbf16> to vector<640x128xbf16>
    %cst_191 = arith.constant dense<0.000000e+00> : vector<4x128xf32>
    %197 = tpu.matmul %194, %196, %cst_191 {dimension_numbers = #tpu.dot_dimension_numbers<[1], [0], [0], [1], [0, 0, 1, 1], [], []>} : vector<4x640xbf16>, vector<640x128xbf16>, vector<4x128xf32> -> vector<4x128xf32>
    %198 = arith.addf %192, %197 : vector<4x128xf32>
    %c0_192 = arith.constant 0 : index
    %c1_193 = arith.constant 1 : index
    %c1152_194 = arith.constant 1152 : index
    %199 = vector.load %arg10[%c0_192, %c1_193, %c1152_194] : memref<3x16x2048xbf16, #tpu.memory_space<vmem>>, vector<1x4x640xbf16>
    %200 = vector.shape_cast %199 : vector<1x4x640xbf16> to vector<4x640xbf16>
    %c3_195 = arith.constant 3 : index
    %c0_196 = arith.constant 0 : index
    %c0_197 = arith.constant 0 : index
    %201 = vector.load %arg5[%c3_195, %c0_196, %c0_197] : memref<5x640x128xbf16, #tpu.memory_space<vmem>>, vector<1x640x128xbf16>
    %202 = vector.shape_cast %201 : vector<1x640x128xbf16> to vector<640x128xbf16>
    %cst_198 = arith.constant dense<0.000000e+00> : vector<4x128xf32>
    %203 = tpu.matmul %200, %202, %cst_198 {dimension_numbers = #tpu.dot_dimension_numbers<[1], [0], [0], [1], [0, 0, 1, 1], [], []>} : vector<4x640xbf16>, vector<640x128xbf16>, vector<4x128xf32> -> vector<4x128xf32>
    %204 = arith.addf %198, %203 : vector<4x128xf32>
    %c1_199 = arith.constant 1 : index
    %c1_200 = arith.constant 1 : index
    %c1152_201 = arith.constant 1152 : index
    %205 = vector.load %arg10[%c1_199, %c1_200, %c1152_201] : memref<3x16x2048xbf16, #tpu.memory_space<vmem>>, vector<1x4x640xbf16>
    %206 = vector.shape_cast %205 : vector<1x4x640xbf16> to vector<4x640xbf16>
    %c4_202 = arith.constant 4 : index
    %c0_203 = arith.constant 0 : index
    %c0_204 = arith.constant 0 : index
    %207 = vector.load %arg5[%c4_202, %c0_203, %c0_204] : memref<5x640x128xbf16, #tpu.memory_space<vmem>>, vector<1x640x128xbf16>
    %208 = vector.shape_cast %207 : vector<1x640x128xbf16> to vector<640x128xbf16>
    %cst_205 = arith.constant dense<0.000000e+00> : vector<4x128xf32>
    %209 = tpu.matmul %206, %208, %cst_205 {dimension_numbers = #tpu.dot_dimension_numbers<[1], [0], [0], [1], [0, 0, 1, 1], [], []>} : vector<4x640xbf16>, vector<640x128xbf16>, vector<4x128xf32> -> vector<4x128xf32>
    %210 = arith.addf %204, %209 : vector<4x128xf32>
    %211 = vector.broadcast %68 : vector<1x128xf32> to vector<4x128xf32>
    %212 = arith.addf %210, %211 : vector<4x128xf32>
    %cst_206 = arith.constant 0.000000e+00 : f32
    %213 = vector.broadcast %cst_206 : f32 to vector<4x128xf32>
    %214 = arith.maximumf %212, %213 : vector<4x128xf32>
    %215 = arith.truncf %214 : vector<4x128xf32> to vector<4x128xbf16>
    %c0_207 = arith.constant 0 : index
    %c384_208 = arith.constant 384 : index
    %216 = vector.load %arg11[%c0_207, %c384_208] : memref<16x512xbf16, #tpu.memory_space<vmem>>, vector<4x128xbf16>
    tpu.vector_store %arg11[%c0_207, %c384_208], %215 {strides = array<i32>} : memref<16x512xbf16, #tpu.memory_space<vmem>>, vector<4x128xbf16>,
    %c0_209 = arith.constant 0 : index
    %c0_210 = arith.constant 0 : index
    %217 = vector.load %arg11[%c0_209, %c0_210] : memref<16x512xbf16, #tpu.memory_space<vmem>>, vector<4x512xbf16>
    %c0_211 = arith.constant 0 : index
    %c0_212 = arith.constant 0 : index
    %218 = vector.load %arg7[%c0_211, %c0_212] : memref<512x32xbf16, #tpu.memory_space<vmem>>, vector<512x32xbf16>
    %cst_213 = arith.constant dense<0.000000e+00> : vector<4x32xf32>
    %219 = tpu.matmul %217, %218, %cst_213 {dimension_numbers = #tpu.dot_dimension_numbers<[1], [0], [0], [1], [0, 0, 1, 1], [], []>} : vector<4x512xbf16>, vector<512x32xbf16>, vector<4x32xf32> -> vector<4x32xf32>
    %c0_214 = arith.constant 0 : index
    %c0_215 = arith.constant 0 : index
    %220 = vector.load %arg8[%c0_214, %c0_215] : memref<1x32xf32, #tpu.memory_space<vmem>>, vector<1x32xf32>
    %221 = vector.broadcast %220 : vector<1x32xf32> to vector<4x32xf32>
    %222 = arith.addf %219, %221 : vector<4x32xf32>
    %223 = arith.truncf %222 : vector<4x32xf32> to vector<4x32xbf16>
    %c0_216 = arith.constant 0 : index
    %c0_217 = arith.constant 0 : index
    %c0_218 = arith.constant 0 : index
    %224 = vector.load %arg9[%c0_216, %c0_217, %c0_218] : memref<1x4x32xbf16, #tpu.memory_space<vmem>>, vector<1x4x32xbf16>
    %225 = vector.shape_cast %224 : vector<1x4x32xbf16> to vector<4x32xbf16>
    %226 = vector.shape_cast %223 : vector<4x32xbf16> to vector<1x4x32xbf16>
    tpu.vector_store %arg9[%c0_216, %c0_217, %c0_218], %226 {strides = array<i32>} : memref<1x4x32xbf16, #tpu.memory_space<vmem>>, vector<1x4x32xbf16>,
    return
  }
  func.func @transform_0(%arg0: i32, %arg1: i32) -> (i32, i32, i32, i32, i32) {
    %c0_i32 = arith.constant 0 : i32
    %c0_i32_0 = arith.constant 0 : i32
    %c0_i32_1 = arith.constant 0 : i32
    %c0_i32_2 = arith.constant 0 : i32
    return %arg0, %arg1, %c0_i32, %c0_i32_0, %c0_i32_1 : i32, i32, i32, i32, i32
  }
  func.func @transform_1(%arg0: i32, %arg1: i32) -> (i32, i32) {
    %c0_i32 = arith.constant 0 : i32
    %c0_i32_0 = arith.constant 0 : i32
    %c0_i32_1 = arith.constant 0 : i32
    return %c0_i32, %c0_i32_0 : i32, i32
  }
  func.func @transform_2(%arg0: i32, %arg1: i32) -> (i32, i32) {
    %c0_i32 = arith.constant 0 : i32
    %c0_i32_0 = arith.constant 0 : i32
    %c0_i32_1 = arith.constant 0 : i32
    return %c0_i32, %c0_i32_0 : i32, i32
  }
  func.func @transform_3(%arg0: i32, %arg1: i32) -> (i32, i32, i32) {
    %c0_i32 = arith.constant 0 : i32
    %c0_i32_0 = arith.constant 0 : i32
    %c0_i32_1 = arith.constant 0 : i32
    %c0_i32_2 = arith.constant 0 : i32
    return %c0_i32, %c0_i32_0, %c0_i32_1 : i32, i32, i32
  }
  func.func @transform_4(%arg0: i32, %arg1: i32) -> (i32, i32) {
    %c0_i32 = arith.constant 0 : i32
    %c0_i32_0 = arith.constant 0 : i32
    %c0_i32_1 = arith.constant 0 : i32
    return %c0_i32, %c0_i32_0 : i32, i32
  }
  func.func @transform_5(%arg0: i32, %arg1: i32) -> (i32, i32) {
    %c0_i32 = arith.constant 0 : i32
    %c0_i32_0 = arith.constant 0 : i32
    %c0_i32_1 = arith.constant 0 : i32
    return %c0_i32, %c0_i32_0 : i32, i32
  }
  func.func @transform_6(%arg0: i32, %arg1: i32) -> (i32, i32) {
    %c0_i32 = arith.constant 0 : i32
    %c0_i32_0 = arith.constant 0 : i32
    %c0_i32_1 = arith.constant 0 : i32
    return %c0_i32, %c0_i32_0 : i32, i32
  }
  func.func @transform_7(%arg0: i32, %arg1: i32) -> (i32, i32, i32) {
    %c0_i32 = arith.constant 0 : i32
    %c0_i32_0 = arith.constant 0 : i32
    return %arg0, %arg1, %c0_i32 : i32, i32, i32
  }
}

</mosaic_0001>

<llo_original>
// kernel: tile.8
$region0: #{tile.8}
  #allocation0 [shape = 's32[1]{0}', space=sflag, size = 0x4, scoped, tag = 'scoped memory for tile.8']
  %s0 = inlined_call_operand.vmem [shape: f32[128], index: 0, kind: input, shape index: {}]
  %s1 = inlined_call_operand.vmem [shape: f32[8,128], index: 1, kind: output, shape index: {}]
  // Predicated region
  $region2: #{tile.8} parent=0 // pred_check
    _
  $region3: #{tile.8} parent=0 // pred_check_branch
    %3 = sbr.rel (0) target = $region5
  $region4: #{tile.8} parent=0 // pred_region
    _
  $region5: #{tile.8} parent=0 // pred_fallthru
    _
  %v4 = vld [vmem:[%s0] ss:$0 sm:$0xff]
  %5 = vst [vmem:[%s1] sm:$0xff] %v4

// kernel: rel_conv2d_subsampling6.1
$region0: #{rel_conv2d_subsampling6.1}
  #allocation0 [shape = 'u32[]', space=smem, size = 0x4, offset = 0x4, fixed_abs, tag = 'smem constant byte address 0x4 - core index']
  #allocation1 [shape = 'u32[144,128]{1,0:T(1,128)}', space=vmem, size = 0x12000, scoped, tag = 'internal scratch']
  #allocation2 [shape = 'bf16[3,16,2048]{2,1,0:T(8,128)(2,1)}', space=vmem, size = 0x30000, scoped, tag = 'scratch operand']
  #allocation3 [shape = 'bf16[16,512]{1,0:T(8,128)(2,1)}', space=vmem, size = 0x4000, scoped, tag = 'scratch operand']
  %s0 = inlined_call_operand.vmem [shape: bf16[2,1,6,16,72], index: 0, kind: input, shape index: {}]
  %s1 = inlined_call_operand.vmem [shape: bf16[72,1024], index: 1, kind: input, shape index: {}]
  %s2 = inlined_call_operand.vmem [shape: f32[1,1024], index: 2, kind: input, shape index: {}]
  %s3 = inlined_call_operand.vmem [shape: bf16[5,640,128], index: 3, kind: input, shape index: {}]
  %s4 = inlined_call_operand.vmem [shape: f32[1,128], index: 4, kind: input, shape index: {}]
  %s5 = inlined_call_operand.vmem [shape: bf16[512,32], index: 5, kind: input, shape index: {}]
  %s6 = inlined_call_operand.vmem [shape: f32[1,32], index: 6, kind: input, shape index: {}]
  %s7 = inlined_call_operand.hbm [shape: bf16[2,4,32], index: 7, kind: output, shape index: {}]
  %s8 = sld [smem:[#allocation0]]
  $region61: #{rel_conv2d_subsampling6.1} parent=0
    _
  %s10 = ssub.s32 1, %s8
  %s11 = scalar_select 0, %s10, %s8
  $region1: #{rel_conv2d_subsampling6.1} parent=0
    #allocation4 [shape = 'u8[2048]{0}', space=vmem, size = 0x800, scoped, tag = 'output window, operand 0']
    #allocation5 [shape = 's32[2]{0}', space=sflag, size = 0x8, scoped, tag = 'scoped memory for rel_conv2d_subsampling6.1']
    %12 = vsyncpa [#allocation5], 0
    %s13 = scalar_lea.sflag [#allocation5], 1
    %14 = vsyncpa %s13, 0
    loop: start=0, step=1, limit=4
    $region2: #{rel_conv2d_subsampling6.1} parent=1 // loop_pre_header
      _
    $region3: #{rel_conv2d_subsampling6.1} parent=1 // loop_header
      %s16 = sphi 0, %s20
      %p17 = scmp.ge.s32.totalorder %s16, 4
      %s23 = sphi 0, %s35
      %s24 = sphi 0, %s31
      %s25 = sphi 0, %s23
      %s26 = sphi 0, %s24
      %s27 = sphi 0, %s25
      %s28 = sphi 0, %s26
      %s40 = sphi 0, %s42
      %s43 = sphi 0, %s40
      %s44 = sphi 0, %s43
      %s60 = sphi 0, %s44
      %s64 = sphi 0, %s64
      %s66 = sphi 0, %s64
      %s67 = sphi 0, %s66
      %s81 = sphi 0, %s67
      %s85 = sphi 0, %s85
      %s87 = sphi 0, %s85
      %s88 = sphi 0, %s87
      %s102 = sphi 0, %s88
      %s106 = sphi 0, %s106
      %s108 = sphi 0, %s106
      %s109 = sphi 0, %s108
      %s123 = sphi 0, %s109
      %s127 = sphi 0, %s127
      %s129 = sphi 0, %s127
      %s130 = sphi 0, %s129
      %s144 = sphi 0, %s130
      %s148 = sphi 0, %s148
      %s150 = sphi 0, %s148
      %s151 = sphi 0, %s150
      %s165 = sphi 0, %s151
      %s169 = sphi 0, %s169
      %s171 = sphi 0, %s169
      %s172 = sphi 0, %s171
      %s186 = sphi 0, %s172
      %s194 = sphi 0, %s196
      %s197 = sphi 0, %s194
      %s198 = sphi 0, %s197
      %s214 = sphi 0, %s198
    $region4: #{rel_conv2d_subsampling6.1} parent=1 // loop_header_branch
      %19 = sbr.rel (%p17) target = $region8
    $region5: #{rel_conv2d_subsampling6.1} parent=1 // loop_body
      %s21 = ssub.s32 %s16, 1
      %s22 = ssub.s32 %s16, 2
      %s29 = sadd.s32 1, %s24
      %p30 = scmp.ge.s32.totalorder %s29, 1
      %s31 = scalar_select %p30, 0, %s29
      %s32 = sadd.s32 1, %s23
      %s33 = scalar_select %p30, %s32, %s23
      %p34 = scmp.ge.s32.totalorder %s33, 2
      %s35 = scalar_select %p34, 0, %s33
      %s36 = ssub.s32 %s23, %s35
      %s37 = ssub.s32 %s24, %s31
      %s38 = sor.u32 %s36, %s37
      %p39 = scmp.eq.s32.totalorder %s38, 0
      %s41 = sadd.s32 %s40, 1
      %s42 = scalar_select %p39, %s40, %s41
      %p45 = pneg %p39
      %p46 = scmp.eq.s32.totalorder %s16, 1
      %p47 = por %p45, %p46
      %p48 = scmp.ne.s32.totalorder %s40, %s43
      %p49 = scmp.eq.s32.totalorder %s16, 0
      %p50 = por %p48, %p49
      %p51 = scmp.ne.s32.totalorder %s40, %s43
      %p52 = scmp.eq.s32.totalorder %s21, 1
      %p53 = por %p51, %p52
      %p54 = scmp.ne.s32.totalorder %s43, %s44
      %p55 = scmp.eq.s32.totalorder %s21, 0
      %p56 = por %p54, %p55
      %p57 = scmp.ne.s32.totalorder %s43, %s44
      %p58 = scmp.eq.s32.totalorder %s22, 1
      %p59 = por %p57, %p58
      %p61 = scmp.ne.s32.totalorder %s44, %s60
      %p62 = scmp.eq.s32.totalorder %s22, 0
      %p63 = por %p61, %p62
      %s65 = sadd.s32 %s64, 1
      %p68 = scmp.eq.s32.totalorder %s16, 1
      %p69 = scmp.ne.s32.totalorder %s64, %s66
      %p70 = scmp.eq.s32.totalorder %s16, 0
      %p71 = por %p69, %p70
      %p72 = scmp.ne.s32.totalorder %s64, %s66
      %p73 = scmp.eq.s32.totalorder %s21, 1
      %p74 = por %p72, %p73
      %p75 = scmp.ne.s32.totalorder %s66, %s67
      %p76 = scmp.eq.s32.totalorder %s21, 0
      %p77 = por %p75, %p76
      %p78 = scmp.ne.s32.totalorder %s66, %s67
      %p79 = scmp.eq.s32.totalorder %s22, 1
      %p80 = por %p78, %p79
      %p82 = scmp.ne.s32.totalorder %s67, %s81
      %p83 = scmp.eq.s32.totalorder %s22, 0
      %p84 = por %p82, %p83
      %s86 = sadd.s32 %s85, 1
      %p89 = scmp.eq.s32.totalorder %s16, 1
      %p90 = scmp.ne.s32.totalorder %s85, %s87
      %p91 = scmp.eq.s32.totalorder %s16, 0
      %p92 = por %p90, %p91
      %p93 = scmp.ne.s32.totalorder %s85, %s87
      %p94 = scmp.eq.s32.totalorder %s21, 1
      %p95 = por %p93, %p94
      %p96 = scmp.ne.s32.totalorder %s87, %s88
      %p97 = scmp.eq.s32.totalorder %s21, 0
      %p98 = por %p96, %p97
      %p99 = scmp.ne.s32.totalorder %s87, %s88
      %p100 = scmp.eq.s32.totalorder %s22, 1
      %p101 = por %p99, %p100
      %p103 = scmp.ne.s32.totalorder %s88, %s102
      %p104 = scmp.eq.s32.totalorder %s22, 0
      %p105 = por %p103, %p104
      %s107 = sadd.s32 %s106, 1
      %p110 = scmp.eq.s32.totalorder %s16, 1
      %p111 = scmp.ne.s32.totalorder %s106, %s108
      %p112 = scmp.eq.s32.totalorder %s16, 0
      %p113 = por %p111, %p112
      %p114 = scmp.ne.s32.totalorder %s106, %s108
      %p115 = scmp.eq.s32.totalorder %s21, 1
      %p116 = por %p114, %p115
      %p117 = scmp.ne.s32.totalorder %s108, %s109
      %p118 = scmp.eq.s32.totalorder %s21, 0
      %p119 = por %p117, %p118
      %p120 = scmp.ne.s32.totalorder %s108, %s109
      %p121 = scmp.eq.s32.totalorder %s22, 1
      %p122 = por %p120, %p121
      %p124 = scmp.ne.s32.totalorder %s109, %s123
      %p125 = scmp.eq.s32.totalorder %s22, 0
      %p126 = por %p124, %p125
      %s128 = sadd.s32 %s127, 1
      %p131 = scmp.eq.s32.totalorder %s16, 1
      %p132 = scmp.ne.s32.totalorder %s127, %s129
      %p133 = scmp.eq.s32.totalorder %s16, 0
      %p134 = por %p132, %p133
      %p135 = scmp.ne.s32.totalorder %s127, %s129
      %p136 = scmp.eq.s32.totalorder %s21, 1
      %p137 = por %p135, %p136
      %p138 = scmp.ne.s32.totalorder %s129, %s130
      %p139 = scmp.eq.s32.totalorder %s21, 0
      %p140 = por %p138, %p139
      %p141 = scmp.ne.s32.totalorder %s129, %s130
      %p142 = scmp.eq.s32.totalorder %s22, 1
      %p143 = por %p141, %p142
      %p145 = scmp.ne.s32.totalorder %s130, %s144
      %p146 = scmp.eq.s32.totalorder %s22, 0
      %p147 = por %p145, %p146
      %s149 = sadd.s32 %s148, 1
      %p152 = scmp.eq.s32.totalorder %s16, 1
      %p153 = scmp.ne.s32.totalorder %s148, %s150
      %p154 = scmp.eq.s32.totalorder %s16, 0
      %p155 = por %p153, %p154
      %p156 = scmp.ne.s32.totalorder %s148, %s150
      %p157 = scmp.eq.s32.totalorder %s21, 1
      %p158 = por %p156, %p157
      %p159 = scmp.ne.s32.totalorder %s150, %s151
      %p160 = scmp.eq.s32.totalorder %s21, 0
      %p161 = por %p159, %p160
      %p162 = scmp.ne.s32.totalorder %s150, %s151
      %p163 = scmp.eq.s32.totalorder %s22, 1
      %p164 = por %p162, %p163
      %p166 = scmp.ne.s32.totalorder %s151, %s165
      %p167 = scmp.eq.s32.totalorder %s22, 0
      %p168 = por %p166, %p167
      %s170 = sadd.s32 %s169, 1
      %p173 = scmp.eq.s32.totalorder %s16, 1
      %p174 = scmp.ne.s32.totalorder %s169, %s171
      %p175 = scmp.eq.s32.totalorder %s16, 0
      %p176 = por %p174, %p175
      %p177 = scmp.ne.s32.totalorder %s169, %s171
      %p178 = scmp.eq.s32.totalorder %s21, 1
      %p179 = por %p177, %p178
      %p180 = scmp.ne.s32.totalorder %s171, %s172
      %p181 = scmp.eq.s32.totalorder %s21, 0
      %p182 = por %p180, %p181
      %p183 = scmp.ne.s32.totalorder %s171, %s172
      %p184 = scmp.eq.s32.totalorder %s22, 1
      %p185 = por %p183, %p184
      %p187 = scmp.ne.s32.totalorder %s172, %s186
      %p188 = scmp.eq.s32.totalorder %s22, 0
      %p189 = por %p187, %p188
      %s190 = ssub.s32 %s23, %s35
      %s191 = ssub.s32 %s24, %s31
      %s192 = sor.u32 %s190, %s191
      %p193 = scmp.eq.s32.totalorder %s192, 0
      %s195 = sadd.s32 %s194, 1
      %s196 = scalar_select %p193, %s194, %s195
      %p199 = pneg %p193
      %p200 = scmp.eq.s32.totalorder %s16, 1
      %p201 = por %p199, %p200
      %p202 = scmp.ne.s32.totalorder %s194, %s197
      %p203 = scmp.eq.s32.totalorder %s16, 0
      %p204 = por %p202, %p203
      %p205 = scmp.ne.s32.totalorder %s194, %s197
      %p206 = scmp.eq.s32.totalorder %s21, 1
      %p207 = por %p205, %p206
      %p208 = scmp.ne.s32.totalorder %s197, %s198
      %p209 = scmp.eq.s32.totalorder %s21, 0
      %p210 = por %p208, %p209
      %p211 = scmp.ne.s32.totalorder %s197, %s198
      %p212 = scmp.eq.s32.totalorder %s22, 1
      %p213 = por %p211, %p212
      %p215 = scmp.ne.s32.totalorder %s198, %s214
      %p216 = scmp.eq.s32.totalorder %s22, 0
      %p217 = por %p215, %p216
      %p218 = scmp.le.s32.totalorder 1, %s16
      %p219 = scmp.lt.s32.totalorder %s16, 3
      %p220 = pnand %p218, %p219
      %p221 = pneg %p220
      // Predicated region
      $region9: #{rel_conv2d_subsampling6.1} parent=5 // pred_check
        _
      $region10: #{rel_conv2d_subsampling6.1} parent=5 // pred_check_branch
        %223 = sbr.rel (%p220) target = $region12
      $region11: #{rel_conv2d_subsampling6.1} parent=5 // pred_region
        %s224 = ssub.s32 %s16, 1
        // Predicated region
        $region13: #{rel_conv2d_subsampling6.1} parent=11 // pred_check
          %p225 = pneg %p77
        $region14: #{rel_conv2d_subsampling6.1} parent=11 // pred_check_branch
          %227 = sbr.rel (%p225) target = $region16
        $region15: #{rel_conv2d_subsampling6.1} parent=11 // pred_region
          _
        $region16: #{rel_conv2d_subsampling6.1} parent=11 // pred_fallthru
          _
        // Predicated region
        $region17: #{rel_conv2d_subsampling6.1} parent=11 // pred_check
          %p228 = pneg %p98
        $region18: #{rel_conv2d_subsampling6.1} parent=11 // pred_check_branch
          %230 = sbr.rel (%p228) target = $region20
        $region19: #{rel_conv2d_subsampling6.1} parent=11 // pred_region
          _
        $region20: #{rel_conv2d_subsampling6.1} parent=11 // pred_fallthru
          _
        // Predicated region
        $region21: #{rel_conv2d_subsampling6.1} parent=11 // pred_check
          %p231 = pneg %p119
        $region22: #{rel_conv2d_subsampling6.1} parent=11 // pred_check_branch
          %233 = sbr.rel (%p231) target = $region24
        $region23: #{rel_conv2d_subsampling6.1} parent=11 // pred_region
          _
        $region24: #{rel_conv2d_subsampling6.1} parent=11 // pred_fallthru
          _
        // Predicated region
        $region25: #{rel_conv2d_subsampling6.1} parent=11 // pred_check
          %p234 = pneg %p140
        $region26: #{rel_conv2d_subsampling6.1} parent=11 // pred_check_branch
          %236 = sbr.rel (%p234) target = $region28
        $region27: #{rel_conv2d_subsampling6.1} parent=11 // pred_region
          _
        $region28: #{rel_conv2d_subsampling6.1} parent=11 // pred_fallthru
          _
        // Predicated region
        $region29: #{rel_conv2d_subsampling6.1} parent=11 // pred_check
          %p237 = pneg %p161
        $region30: #{rel_conv2d_subsampling6.1} parent=11 // pred_check_branch
          %239 = sbr.rel (%p237) target = $region32
        $region31: #{rel_conv2d_subsampling6.1} parent=11 // pred_region
          _
        $region32: #{rel_conv2d_subsampling6.1} parent=11 // pred_fallthru
          _
        // Predicated region
        $region33: #{rel_conv2d_subsampling6.1} parent=11 // pred_check
          %p240 = pneg %p182
        $region34: #{rel_conv2d_subsampling6.1} parent=11 // pred_check_branch
          %242 = sbr.rel (%p240) target = $region36
        $region35: #{rel_conv2d_subsampling6.1} parent=11 // pred_region
          _
        $region36: #{rel_conv2d_subsampling6.1} parent=11 // pred_fallthru
          _
      $region12: #{rel_conv2d_subsampling6.1} parent=5 // pred_fallthru
        _
      %p243 = scmp.lt.s32.totalorder %s16, 2
      // Predicated region
      $region37: #{rel_conv2d_subsampling6.1} parent=5 // pred_check
        %p244 = pneg %p243
      $region38: #{rel_conv2d_subsampling6.1} parent=5 // pred_check_branch
        %246 = sbr.rel (%p244) target = $region40
      $region39: #{rel_conv2d_subsampling6.1} parent=5 // pred_region
        // Predicated region
        $region41: #{rel_conv2d_subsampling6.1} parent=39 // pred_check
          %p247 = pneg %p50
        $region42: #{rel_conv2d_subsampling6.1} parent=39 // pred_check_branch
          %249 = sbr.rel (%p247) target = $region44
        $region43: #{rel_conv2d_subsampling6.1} parent=39 // pred_region
          %p250 = scmp.lt.s32.totalorder %s23, 1
          %s251 = scalar_select %p250, %s23, 1
          %p252 = scmp.lt.s32.totalorder %s24, 0
          %s253 = scalar_select %p252, %s24, 0
          %s254 = smul.addr %s253, 12
          %s255 = smul.addr %s251, 12
          %s256 = sadd.s32 %s254, %s255
          %s257 = smul.addr %s256, 4
          %s258 = scalar_lea.vmem %s0, %s257
        $region44: #{rel_conv2d_subsampling6.1} parent=39 // pred_fallthru
          _
      $region40: #{rel_conv2d_subsampling6.1} parent=5 // pred_fallthru
        _
      %p259 = scmp.le.s32.totalorder 1, %s16
      %p260 = scmp.lt.s32.totalorder %s16, 3
      %p261 = pnand %p259, %p260
      %p262 = pneg %p261
      // Predicated region
      $region45: #{rel_conv2d_subsampling6.1} parent=5 // pred_check
        _
      $region46: #{rel_conv2d_subsampling6.1} parent=5 // pred_check_branch
        %264 = sbr.rel (%p261) target = $region48
      $region47: #{rel_conv2d_subsampling6.1} parent=5 // pred_region
        %s265 = ssub.s32 %s16, 1
        %p266 = scmp.lt.s32.totalorder %s25, 1
        %s267 = scalar_select %p266, %s25, 1
        %p268 = scmp.lt.s32.totalorder %s26, 0
        %s269 = scalar_select %p268, %s26, 0
        %s270 = smul.addr %s269, 12
        %s271 = smul.addr %s267, 12
        %s272 = sadd.s32 %s270, %s271
        %s273 = smul.addr %s272, 4
        %s274 = scalar_lea.vmem %s0, %s273
        %p275 = pneg %p56
        %p276 = pneg %p53
        %p277 = pneg %p77
        %p278 = pneg %p74
        %p279 = pneg %p98
        %p280 = pneg %p95
        %p281 = pneg %p119
        %p282 = pneg %p116
        %p283 = pneg %p140
        %p284 = pneg %p137
        %p285 = pneg %p161
        %p286 = pneg %p158
        %p287 = pneg %p182
        %p288 = pneg %p179
        %p289 = pneg %p210
        %p290 = pneg %p207
        %s291 = sand.u32 %s197, 1
        %s292 = scalar_lea.sflag [#allocation5], %s291
        %s293 = sand.u32 %s197, 1
        %s294 = smul.addr %s293, 2
        %s295 = scalar_lea.vmem [#allocation4], %s294
        %p296 = scmp.lt.s32.totalorder %s25, 1
        %s297 = scalar_select %p296, %s25, 1
        %p298 = scmp.lt.s32.totalorder %s26, 0
        %s299 = scalar_select %p298, %s26, 0
        %s300 = smul.addr %s299, 12
        %s301 = smul.addr %s297, 12
        %s302 = sadd.s32 %s300, %s301
        %s303 = smul.addr %s302, 4
        %s304 = scalar_lea.vmem %s0, %s303
        %v306 = vld [vmem:[%s1] sm:$0xff]
        %v307 = vld [vmem:[%s1 + $0x8] sm:$0xff]
        %v308 = vld [vmem:[%s1 + $0x10] sm:$0xff]
        %v309 = vld [vmem:[%s1 + $0x18] sm:$0xff]
        %v310 = vld [vmem:[%s1 + $0x20] sm:$0xff]
        %v311 = vld [vmem:[%s1 + $0x28] sm:$0xff]
        %v312 = vld [vmem:[%s1 + $0x30] sm:$0xff]
        %v313 = vld [vmem:[%s1 + $0x38] sm:$0xff]
        %v314 = vld [vmem:[%s1 + $0x40] sm:$0xff]
        %v315 = vld [vmem:[%s1 + $0x48] sm:$0xff]
        %v316 = vld [vmem:[%s1 + $0x50] sm:$0xff]
        %v317 = vld [vmem:[%s1 + $0x58] sm:$0xff]
        %v318 = vld [vmem:[%s1 + $0x60] sm:$0xff]
        %v319 = vld [vmem:[%s1 + $0x68] sm:$0xff]
        %v320 = vld [vmem:[%s1 + $0x70] sm:$0xff]
        %v321 = vld [vmem:[%s1 + $0x78] sm:$0xff]
        %v322 = vld [vmem:[%s1 + $0x80] sm:$0xff]
        %v323 = vld [vmem:[%s1 + $0x88] sm:$0xff]
        %v324 = vld [vmem:[%s1 + $0x90] sm:$0xff]
        %v325 = vld [vmem:[%s1 + $0x98] sm:$0xff]
        %v326 = vld [vmem:[%s1 + $0xa0] sm:$0xff]
        %v327 = vld [vmem:[%s1 + $0xa8] sm:$0xff]
        %v328 = vld [vmem:[%s1 + $0xb0] sm:$0xff]
        %v329 = vld [vmem:[%s1 + $0xb8] sm:$0xff]
        %v330 = vld [vmem:[%s1 + $0xc0] sm:$0xff]
        %v331 = vld [vmem:[%s1 + $0xc8] sm:$0xff]
        %v332 = vld [vmem:[%s1 + $0xd0] sm:$0xff]
        %v333 = vld [vmem:[%s1 + $0xd8] sm:$0xff]
        %v334 = vld [vmem:[%s1 + $0xe0] sm:$0xff]
        %v335 = vld [vmem:[%s1 + $0xe8] sm:$0xff]
        %v336 = vld [vmem:[%s1 + $0xf0] sm:$0xff]
        %v337 = vld [vmem:[%s1 + $0xf8] sm:$0xff]
        %v338 = vld [vmem:[%s1 + $0x100] sm:$0xff]
        %v339 = vld [vmem:[%s1 + $0x108] sm:$0xff]
        %v340 = vld [vmem:[%s1 + $0x110] sm:$0xff]
        %v341 = vld [vmem:[%s1 + $0x118] sm:$0xff]
        %v342 = vld [vmem:[%s2] sm:$0xff]
        %v343 = vld [vmem:[%s304] sm:$0xf]
        %v344 = vld [vmem:[%s304 + $0x4] sm:$0xf]
        %v346 = vlaneseq
        %v347 = vshrl.u32 %v346, 7
        %v348 = vsub.s32 0, %v347
        %v349 = vrot.slane %v342, %v348
        %v350 = vlaneseq
        %v351 = vshrl.u32 %v350, 7
        %v352 = vsub.s32 1, %v351
        %v353 = vrot.slane %v342, %v352
        %v354 = vlaneseq
        %v355 = vshrl.u32 %v354, 7
        %v356 = vsub.s32 2, %v355
        %v357 = vrot.slane %v342, %v356
        %v358 = vlaneseq
        %v359 = vshrl.u32 %v358, 7
        %v360 = vsub.s32 3, %v359
        %v361 = vrot.slane %v342, %v360
        %v362 = vlaneseq
        %v363 = vshrl.u32 %v362, 7
        %v364 = vsub.s32 4, %v363
        %v365 = vrot.slane %v342, %v364
        %v366 = vlaneseq
        %v367 = vshrl.u32 %v366, 7
        %v368 = vsub.s32 5, %v367
        %v369 = vrot.slane %v342, %v368
        %v370 = vlaneseq
        %v371 = vshrl.u32 %v370, 7
        %v372 = vsub.s32 6, %v371
        %v373 = vrot.slane %v342, %v372
        %v374 = vlaneseq
        %v375 = vshrl.u32 %v374, 7
        %v376 = vsub.s32 7, %v375
        %v377 = vrot.slane %v342, %v376
        %v388 = vunpack.c.l.b16 %v343
        %v389 = vunpack.c.l.b16 %v344
        %v390 = vpack.c.b16 %v389, %v388
        %v427 = vunpack.c.l.b16 %v306
        %v428 = vunpack.c.h.b16 %v306
        %v429 = vunpack.c.l.b16 %v307
        %v430 = vunpack.c.h.b16 %v307
        %v431 = vunpack.c.l.b16 %v308
        %v432 = vunpack.c.h.b16 %v308
        %v433 = vunpack.c.l.b16 %v309
        %v434 = vunpack.c.h.b16 %v309
        %v435 = vunpack.c.l.b16 %v310
        %v436 = vunpack.c.h.b16 %v310
        %v437 = vunpack.c.l.b16 %v311
        %v438 = vunpack.c.h.b16 %v311
        %v439 = vunpack.c.l.b16 %v312
        %v440 = vunpack.c.h.b16 %v312
        %v441 = vunpack.c.l.b16 %v313
        %v442 = vunpack.c.h.b16 %v313
        %v443 = vunpack.c.l.b16 %v314
        %v444 = vunpack.c.h.b16 %v314
        %v445 = vunpack.c.l.b16 %v315
        %v446 = vunpack.c.h.b16 %v315
        %v447 = vunpack.c.l.b16 %v316
        %v448 = vunpack.c.h.b16 %v316
        %v449 = vunpack.c.l.b16 %v317
        %v450 = vunpack.c.h.b16 %v317
        %v451 = vunpack.c.l.b16 %v318
        %v452 = vunpack.c.h.b16 %v318
        %v453 = vunpack.c.l.b16 %v319
        %v454 = vunpack.c.h.b16 %v319
        %v455 = vunpack.c.l.b16 %v320
        %v456 = vunpack.c.h.b16 %v320
        %v457 = vunpack.c.l.b16 %v321
        %v458 = vunpack.c.h.b16 %v321
        %v459 = vunpack.c.l.b16 %v322
        %v460 = vunpack.c.h.b16 %v322
        %v461 = vunpack.c.l.b16 %v323
        %v462 = vunpack.c.h.b16 %v323
        %v463 = vunpack.c.l.b16 %v324
        %v464 = vunpack.c.h.b16 %v324
        %v465 = vunpack.c.l.b16 %v325
        %v466 = vunpack.c.h.b16 %v325
        %v467 = vunpack.c.l.b16 %v326
        %v468 = vunpack.c.h.b16 %v326
        %v469 = vunpack.c.l.b16 %v327
        %v470 = vunpack.c.h.b16 %v327
        %v471 = vunpack.c.l.b16 %v328
        %v472 = vunpack.c.h.b16 %v328
        %v473 = vunpack.c.l.b16 %v329
        %v474 = vunpack.c.h.b16 %v329
        %v475 = vunpack.c.l.b16 %v330
        %v476 = vunpack.c.h.b16 %v330
        %v477 = vunpack.c.l.b16 %v331
        %v478 = vunpack.c.h.b16 %v331
        %v479 = vunpack.c.l.b16 %v332
        %v480 = vunpack.c.h.b16 %v332
        %v481 = vunpack.c.l.b16 %v333
        %v482 = vunpack.c.h.b16 %v333
        %v483 = vunpack.c.l.b16 %v334
        %v484 = vunpack.c.h.b16 %v334
        %v485 = vunpack.c.l.b16 %v335
        %v486 = vunpack.c.h.b16 %v335
        %v487 = vunpack.c.l.b16 %v336
        %v488 = vunpack.c.h.b16 %v336
        %v489 = vunpack.c.l.b16 %v337
        %v490 = vunpack.c.h.b16 %v337
        %v491 = vunpack.c.l.b16 %v338
        %v492 = vunpack.c.h.b16 %v338
        %v493 = vunpack.c.l.b16 %v339
        %v494 = vunpack.c.h.b16 %v339
        %v495 = vunpack.c.l.b16 %v340
        %v496 = vunpack.c.h.b16 %v340
        %v497 = vunpack.c.l.b16 %v341
        %v498 = vunpack.c.h.b16 %v341
        %v499 = vpack.c.b16 %v435, %v427
        %v500 = vpack.c.b16 %v436, %v428
        %v501 = vpack.c.b16 %v437, %v429
        %v502 = vpack.c.b16 %v438, %v430
        %v503 = vpack.c.b16 %v439, %v431
        %v504 = vpack.c.b16 %v440, %v432
        %v505 = vpack.c.b16 %v441, %v433
        %v506 = vpack.c.b16 %v442, %v434
        %v507 = vpack.c.b16 %v451, %v443
        %v508 = vpack.c.b16 %v452, %v444
        %v509 = vpack.c.b16 %v453, %v445
        %v510 = vpack.c.b16 %v454, %v446
        %v511 = vpack.c.b16 %v455, %v447
        %v512 = vpack.c.b16 %v456, %v448
        %v513 = vpack.c.b16 %v457, %v449
        %v514 = vpack.c.b16 %v458, %v450
        %v515 = vpack.c.b16 %v467, %v459
        %v516 = vpack.c.b16 %v468, %v460
        %v517 = vpack.c.b16 %v469, %v461
        %v518 = vpack.c.b16 %v470, %v462
        %v519 = vpack.c.b16 %v471, %v463
        %v520 = vpack.c.b16 %v472, %v464
        %v521 = vpack.c.b16 %v473, %v465
        %v522 = vpack.c.b16 %v474, %v466
        %v523 = vpack.c.b16 %v483, %v475
        %v524 = vpack.c.b16 %v484, %v476
        %v525 = vpack.c.b16 %v485, %v477
        %v526 = vpack.c.b16 %v486, %v478
        %v527 = vpack.c.b16 %v487, %v479
        %v528 = vpack.c.b16 %v488, %v480
        %v529 = vpack.c.b16 %v489, %v481
        %v530 = vpack.c.b16 %v490, %v482
        %v531 = vpack.c.b16 %v491, %v491
        %v532 = vpack.c.b16 %v492, %v492
        %v533 = vpack.c.b16 %v493, %v493
        %v534 = vpack.c.b16 %v494, %v494
        %v535 = vpack.c.b16 %v495, %v495
        %v536 = vpack.c.b16 %v496, %v496
        %v537 = vpack.c.b16 %v497, %v497
        %v538 = vpack.c.b16 %v498, %v498
        %vm571 = vcmask 588800
        %v573 = vsel %vm571, %v390, 0
        %vm575 = vcmask 1043456
        %v577 = vsel %vm575, %v531, 0
        %v580 = vsel %vm575, %v532, 0
        %v583 = vsel %vm575, %v533, 0
        %v586 = vsel %vm575, %v534, 0
        %v589 = vsel %vm575, %v535, 0
        %v592 = vsel %vm575, %v536, 0
        %v595 = vsel %vm575, %v537, 0
        %v598 = vsel %vm575, %v538, 0
        %600 = vmatprep.subr.bf16.mxu0 0
        %601 = vmatpush1.bf16.msra.mxu0 0
        %602 = vmatprep.subr.bf16.mxu0 0
        %603 = vmatpush1.bf16.msra.mxu0 0
        %604 = vmatprep.subr.bf16.mxu0 0
        %605 = vmatpush1.bf16.msra.mxu0 0
        %606 = vmatprep.subr.bf16.mxu0 %v580
        %607 = vmatpush1.bf16.msra.mxu0 %v577
        %608 = vmatprep.subr.bf16.mxu0 %v524
        %609 = vmatpush1.bf16.msra.mxu0 %v523
        %610 = vmatprep.subr.bf16.mxu0 %v516
        %611 = vmatpush1.bf16.msra.mxu0 %v515
        %612 = vmatprep.subr.bf16.mxu0 %v508
        %613 = vmatpush1.bf16.msra.mxu0 %v507
        %614 = vmatprep.subr.bf16.mxu0 %v500
        %615 = vmatpush1.bf16.msra.mxu0 %v499
        %616 = vmatprep.subr.bf16.mxu0 0
        %617 = vmatpush2.bf16.msra.mxu0 0
        %618 = vmatprep.subr.bf16.mxu0 0
        %619 = vmatpush2.bf16.msra.mxu0 0
        %620 = vmatprep.subr.bf16.mxu0 0
        %621 = vmatpush2.bf16.msra.mxu0 0
        %622 = vmatprep.subr.bf16.mxu0 0
        %623 = vmatpush2.bf16.msra.mxu0 0
        %624 = vmatprep.subr.bf16.mxu0 0
        %625 = vmatpush2.bf16.msra.mxu0 0
        %626 = vmatprep.subr.bf16.mxu0 0
        %627 = vmatpush2.bf16.msra.mxu0 0
        %628 = vmatprep.subr.bf16.mxu0 0
        %629 = vmatpush2.bf16.msra.mxu0 0
        %630 = vmatprep.subr.bf16.mxu0 0
        %631 = vmatpush2.bf16.msra.mxu0 0
        %632 = vmatprep.mubr.bf16.mxu0 0
        %633 = vmatmul.mubr.bf16.gmra.mxu0 %v573
        %v634 = vpop.f32.mrf.mxu0
        %v635 = vadd.f32 %v349, %v634
        %v636 = vpop.f32.mrf.mxu0
        %v637 = vadd.f32 %v353, %v636
        %v638 = vpop.f32.mrf.mxu0
        %v639 = vadd.f32 %v349, %v638
        %v640 = vpop.f32.mrf.mxu0
        %v641 = vadd.f32 %v353, %v640
        %642 = vdwg.mxu0
        %643 = vmatprep.subr.bf16.mxu0 0
        %644 = vmatpush1.bf16.msra.mxu0 0
        %645 = vmatprep.subr.bf16.mxu0 0
        %646 = vmatpush1.bf16.msra.mxu0 0
        %647 = vmatprep.subr.bf16.mxu0 0
        %648 = vmatpush1.bf16.msra.mxu0 0
        %649 = vmatprep.subr.bf16.mxu0 %v586
        %650 = vmatpush1.bf16.msra.mxu0 %v583
        %651 = vmatprep.subr.bf16.mxu0 %v526
        %652 = vmatpush1.bf16.msra.mxu0 %v525
        %653 = vmatprep.subr.bf16.mxu0 %v518
        %654 = vmatpush1.bf16.msra.mxu0 %v517
        %655 = vmatprep.subr.bf16.mxu0 %v510
        %656 = vmatpush1.bf16.msra.mxu0 %v509
        %657 = vmatprep.subr.bf16.mxu0 %v502
        %658 = vmatpush1.bf16.msra.mxu0 %v501
        %659 = vmatprep.subr.bf16.mxu0 0
        %660 = vmatpush2.bf16.msra.mxu0 0
        %661 = vmatprep.subr.bf16.mxu0 0
        %662 = vmatpush2.bf16.msra.mxu0 0
        %663 = vmatprep.subr.bf16.mxu0 0
        %664 = vmatpush2.bf16.msra.mxu0 0
        %665 = vmatprep.subr.bf16.mxu0 0
        %666 = vmatpush2.bf16.msra.mxu0 0
        %667 = vmatprep.subr.bf16.mxu0 0
        %668 = vmatpush2.bf16.msra.mxu0 0
        %669 = vmatprep.subr.bf16.mxu0 0
        %670 = vmatpush2.bf16.msra.mxu0 0
        %671 = vmatprep.subr.bf16.mxu0 0
        %672 = vmatpush2.bf16.msra.mxu0 0
        %673 = vmatprep.subr.bf16.mxu0 0
        %674 = vmatpush2.bf16.msra.mxu0 0
        %675 = vmatprep.mubr.bf16.mxu0 0
        %676 = vmatmul.mubr.bf16.gmra.mxu0 %v573
        %v677 = vpop.f32.mrf.mxu0
        %v678 = vadd.f32 %v357, %v677
        %v679 = vpop.f32.mrf.mxu0
        %v680 = vadd.f32 %v361, %v679
        %v681 = vpop.f32.mrf.mxu0
        %v682 = vadd.f32 %v357, %v681
        %v683 = vpop.f32.mrf.mxu0
        %v684 = vadd.f32 %v361, %v683
        %685 = vdwg.mxu0
        %686 = vmatprep.subr.bf16.mxu0 0
        %687 = vmatpush1.bf16.msra.mxu0 0
        %688 = vmatprep.subr.bf16.mxu0 0
        %689 = vmatpush1.bf16.msra.mxu0 0
        %690 = vmatprep.subr.bf16.mxu0 0
        %691 = vmatpush1.bf16.msra.mxu0 0
        %692 = vmatprep.subr.bf16.mxu0 %v592
        %693 = vmatpush1.bf16.msra.mxu0 %v589
        %694 = vmatprep.subr.bf16.mxu0 %v528
        %695 = vmatpush1.bf16.msra.mxu0 %v527
        %696 = vmatprep.subr.bf16.mxu0 %v520
        %697 = vmatpush1.bf16.msra.mxu0 %v519
        %698 = vmatprep.subr.bf16.mxu0 %v512
        %699 = vmatpush1.bf16.msra.mxu0 %v511
        %700 = vmatprep.subr.bf16.mxu0 %v504
        %701 = vmatpush1.bf16.msra.mxu0 %v503
        %702 = vmatprep.subr.bf16.mxu0 0
        %703 = vmatpush2.bf16.msra.mxu0 0
        %704 = vmatprep.subr.bf16.mxu0 0
        %705 = vmatpush2.bf16.msra.mxu0 0
        %706 = vmatprep.subr.bf16.mxu0 0
        %707 = vmatpush2.bf16.msra.mxu0 0
        %708 = vmatprep.subr.bf16.mxu0 0
        %709 = vmatpush2.bf16.msra.mxu0 0
        %710 = vmatprep.subr.bf16.mxu0 0
        %711 = vmatpush2.bf16.msra.mxu0 0
        %712 = vmatprep.subr.bf16.mxu0 0
        %713 = vmatpush2.bf16.msra.mxu0 0
        %714 = vmatprep.subr.bf16.mxu0 0
        %715 = vmatpush2.bf16.msra.mxu0 0
        %716 = vmatprep.subr.bf16.mxu0 0
        %717 = vmatpush2.bf16.msra.mxu0 0
        %718 = vmatprep.mubr.bf16.mxu0 0
        %719 = vmatmul.mubr.bf16.gmra.mxu0 %v573
        %v720 = vpop.f32.mrf.mxu0
        %v721 = vadd.f32 %v365, %v720
        %v722 = vpop.f32.mrf.mxu0
        %v723 = vadd.f32 %v369, %v722
        %v724 = vpop.f32.mrf.mxu0
        %v725 = vadd.f32 %v365, %v724
        %v726 = vpop.f32.mrf.mxu0
        %v727 = vadd.f32 %v369, %v726
        %728 = vdwg.mxu0
        %729 = vmatprep.subr.bf16.mxu0 0
        %730 = vmatpush1.bf16.msra.mxu0 0
        %731 = vmatprep.subr.bf16.mxu0 0
        %732 = vmatpush1.bf16.msra.mxu0 0
        %733 = vmatprep.subr.bf16.mxu0 0
        %734 = vmatpush1.bf16.msra.mxu0 0
        %735 = vmatprep.subr.bf16.mxu0 %v598
        %736 = vmatpush1.bf16.msra.mxu0 %v595
        %737 = vmatprep.subr.bf16.mxu0 %v530
        %738 = vmatpush1.bf16.msra.mxu0 %v529
        %739 = vmatprep.subr.bf16.mxu0 %v522
        %740 = vmatpush1.bf16.msra.mxu0 %v521
        %741 = vmatprep.subr.bf16.mxu0 %v514
        %742 = vmatpush1.bf16.msra.mxu0 %v513
        %743 = vmatprep.subr.bf16.mxu0 %v506
        %744 = vmatpush1.bf16.msra.mxu0 %v505
        %745 = vmatprep.subr.bf16.mxu0 0
        %746 = vmatpush2.bf16.msra.mxu0 0
        %747 = vmatprep.subr.bf16.mxu0 0
        %748 = vmatpush2.bf16.msra.mxu0 0
        %749 = vmatprep.subr.bf16.mxu0 0
        %750 = vmatpush2.bf16.msra.mxu0 0
        %751 = vmatprep.subr.bf16.mxu0 0
        %752 = vmatpush2.bf16.msra.mxu0 0
        %753 = vmatprep.subr.bf16.mxu0 0
        %754 = vmatpush2.bf16.msra.mxu0 0
        %755 = vmatprep.subr.bf16.mxu0 0
        %756 = vmatpush2.bf16.msra.mxu0 0
        %757 = vmatprep.subr.bf16.mxu0 0
        %758 = vmatpush2.bf16.msra.mxu0 0
        %759 = vmatprep.subr.bf16.mxu0 0
        %760 = vmatpush2.bf16.msra.mxu0 0
        %761 = vmatprep.mubr.bf16.mxu0 0
        %762 = vmatmul.mubr.bf16.gmra.mxu0 %v573
        %v763 = vpop.f32.mrf.mxu0
        %v764 = vadd.f32 %v373, %v763
        %v765 = vpop.f32.mrf.mxu0
        %v766 = vadd.f32 %v377, %v765
        %v767 = vpop.f32.mrf.mxu0
        %v768 = vadd.f32 %v373, %v767
        %v769 = vpop.f32.mrf.mxu0
        %v770 = vadd.f32 %v377, %v769
        %771 = vdwg.mxu0
        %v772 = vmax.f32 %v635, 0.0
        %v773 = vmax.f32 %v637, 0.0
        %v774 = vmax.f32 %v678, 0.0
        %v775 = vmax.f32 %v680, 0.0
        %v776 = vmax.f32 %v721, 0.0
        %v777 = vmax.f32 %v723, 0.0
        %v778 = vmax.f32 %v764, 0.0
        %v779 = vmax.f32 %v766, 0.0
        %v780 = vmax.f32 %v639, 0.0
        %v781 = vmax.f32 %v641, 0.0
        %v782 = vmax.f32 %v682, 0.0
        %v783 = vmax.f32 %v684, 0.0
        %v784 = vmax.f32 %v725, 0.0
        %v785 = vmax.f32 %v727, 0.0
        %v786 = vmax.f32 %v768, 0.0
        %v787 = vmax.f32 %v770, 0.0
        %v788 = vpack.c.bf16 %v780, %v772
        %v789 = vpack.c.bf16 %v781, %v773
        %v790 = vpack.c.bf16 %v782, %v774
        %v791 = vpack.c.bf16 %v783, %v775
        %v792 = vpack.c.bf16 %v784, %v776
        %v793 = vpack.c.bf16 %v785, %v777
        %v794 = vpack.c.bf16 %v786, %v778
        %v795 = vpack.c.bf16 %v787, %v779
        %v804 = vunpack.c.l.b16 %v788
        %v805 = vunpack.c.l.b16 %v789
        %v806 = vunpack.c.l.b16 %v790
        %v807 = vunpack.c.l.b16 %v791
        %v808 = vunpack.c.l.b16 %v792
        %v809 = vunpack.c.l.b16 %v793
        %v810 = vunpack.c.l.b16 %v794
        %v811 = vunpack.c.l.b16 %v795
        %v812 = vunpack.c.h.b16 %v788
        %v813 = vunpack.c.h.b16 %v789
        %v814 = vunpack.c.h.b16 %v790
        %v815 = vunpack.c.h.b16 %v791
        %v816 = vunpack.c.h.b16 %v792
        %v817 = vunpack.c.h.b16 %v793
        %v818 = vunpack.c.h.b16 %v794
        %v819 = vunpack.c.h.b16 %v795
        %v820 = vpack.c.b16 %v805, %v804
        %v821 = vpack.c.b16 %v807, %v806
        %v822 = vpack.c.b16 %v809, %v808
        %v823 = vpack.c.b16 %v811, %v810
        %v824 = vpack.c.b16 %v813, %v812
        %v825 = vpack.c.b16 %v815, %v814
        %v826 = vpack.c.b16 %v817, %v816
        %v827 = vpack.c.b16 %v819, %v818
        %836 = vst [vmem:[#allocation2] sm:$0xff] %v820
        %837 = vst [vmem:[#allocation2 + $0x8] sm:$0xff] %v821
        %838 = vst [vmem:[#allocation2 + $0x10] sm:$0xff] %v822
        %839 = vst [vmem:[#allocation2 + $0x18] sm:$0xff] %v823
        %840 = vst [vmem:[#allocation2 + $0x40] sm:$0xff] %v824
        %841 = vst [vmem:[#allocation2 + $0x48] sm:$0xff] %v825
        %842 = vst [vmem:[#allocation2 + $0x50] sm:$0xff] %v826
        %843 = vst [vmem:[#allocation2 + $0x58] sm:$0xff] %v827
        %s844 = scalar_lea.vmem %s304, 8
        %v845 = vld [vmem:[%s844] sm:$0xf]
        %v846 = vld [vmem:[%s844 + $0x4] sm:$0xf]
        %v849 = vunpack.c.l.b16 %v845
        %v850 = vunpack.c.l.b16 %v846
        %v851 = vpack.c.b16 %v850, %v849
        %v853 = vsel %vm571, %v851, 0
        %855 = vmatprep.subr.bf16.mxu0 0
        %856 = vmatpush1.bf16.msra.mxu0 0
        %857 = vmatprep.subr.bf16.mxu0 0
        %858 = vmatpush1.bf16.msra.mxu0 0
        %859 = vmatprep.subr.bf16.mxu0 0
        %860 = vmatpush1.bf16.msra.mxu0 0
        %861 = vmatprep.subr.bf16.mxu0 %v580
        %862 = vmatpush1.bf16.msra.mxu0 %v577
        %863 = vmatprep.subr.bf16.mxu0 %v524
        %864 = vmatpush1.bf16.msra.mxu0 %v523
        %865 = vmatprep.subr.bf16.mxu0 %v516
        %866 = vmatpush1.bf16.msra.mxu0 %v515
        %867 = vmatprep.subr.bf16.mxu0 %v508
        %868 = vmatpush1.bf16.msra.mxu0 %v507
        %869 = vmatprep.subr.bf16.mxu0 %v500
        %870 = vmatpush1.bf16.msra.mxu0 %v499
        %871 = vmatprep.subr.bf16.mxu0 0
        %872 = vmatpush2.bf16.msra.mxu0 0
        %873 = vmatprep.subr.bf16.mxu0 0
        %874 = vmatpush2.bf16.msra.mxu0 0
        %875 = vmatprep.subr.bf16.mxu0 0
        %876 = vmatpush2.bf16.msra.mxu0 0
        %877 = vmatprep.subr.bf16.mxu0 0
        %878 = vmatpush2.bf16.msra.mxu0 0
        %879 = vmatprep.subr.bf16.mxu0 0
        %880 = vmatpush2.bf16.msra.mxu0 0
        %881 = vmatprep.subr.bf16.mxu0 0
        %882 = vmatpush2.bf16.msra.mxu0 0
        %883 = vmatprep.subr.bf16.mxu0 0
        %884 = vmatpush2.bf16.msra.mxu0 0
        %885 = vmatprep.subr.bf16.mxu0 0
        %886 = vmatpush2.bf16.msra.mxu0 0
        %887 = vmatprep.mubr.bf16.mxu0 0
        %888 = vmatmul.mubr.bf16.gmra.mxu0 %v853
        %v889 = vpop.f32.mrf.mxu0
        %v890 = vadd.f32 %v349, %v889
        %v891 = vpop.f32.mrf.mxu0
        %v892 = vadd.f32 %v353, %v891
        %v893 = vpop.f32.mrf.mxu0
        %v894 = vadd.f32 %v349, %v893
        %v895 = vpop.f32.mrf.mxu0
        %v896 = vadd.f32 %v353, %v895
        %897 = vdwg.mxu0
        %898 = vmatprep.subr.bf16.mxu0 0
        %899 = vmatpush1.bf16.msra.mxu0 0
        %900 = vmatprep.subr.bf16.mxu0 0
        %901 = vmatpush1.bf16.msra.mxu0 0
        %902 = vmatprep.subr.bf16.mxu0 0
        %903 = vmatpush1.bf16.msra.mxu0 0
        %904 = vmatprep.subr.bf16.mxu0 %v586
        %905 = vmatpush1.bf16.msra.mxu0 %v583
        %906 = vmatprep.subr.bf16.mxu0 %v526
        %907 = vmatpush1.bf16.msra.mxu0 %v525
        %908 = vmatprep.subr.bf16.mxu0 %v518
        %909 = vmatpush1.bf16.msra.mxu0 %v517
        %910 = vmatprep.subr.bf16.mxu0 %v510
        %911 = vmatpush1.bf16.msra.mxu0 %v509
        %912 = vmatprep.subr.bf16.mxu0 %v502
        %913 = vmatpush1.bf16.msra.mxu0 %v501
        %914 = vmatprep.subr.bf16.mxu0 0
        %915 = vmatpush2.bf16.msra.mxu0 0
        %916 = vmatprep.subr.bf16.mxu0 0
        %917 = vmatpush2.bf16.msra.mxu0 0
        %918 = vmatprep.subr.bf16.mxu0 0
        %919 = vmatpush2.bf16.msra.mxu0 0
        %920 = vmatprep.subr.bf16.mxu0 0
        %921 = vmatpush2.bf16.msra.mxu0 0
        %922 = vmatprep.subr.bf16.mxu0 0
        %923 = vmatpush2.bf16.msra.mxu0 0
        %924 = vmatprep.subr.bf16.mxu0 0
        %925 = vmatpush2.bf16.msra.mxu0 0
        %926 = vmatprep.subr.bf16.mxu0 0
        %927 = vmatpush2.bf16.msra.mxu0 0
        %928 = vmatprep.subr.bf16.mxu0 0
        %929 = vmatpush2.bf16.msra.mxu0 0
        %930 = vmatprep.mubr.bf16.mxu0 0
        %931 = vmatmul.mubr.bf16.gmra.mxu0 %v853
        %v932 = vpop.f32.mrf.mxu0
        %v933 = vadd.f32 %v357, %v932
        %v934 = vpop.f32.mrf.mxu0
        %v935 = vadd.f32 %v361, %v934
        %v936 = vpop.f32.mrf.mxu0
        %v937 = vadd.f32 %v357, %v936
        %v938 = vpop.f32.mrf.mxu0
        %v939 = vadd.f32 %v361, %v938
        %940 = vdwg.mxu0
        %941 = vmatprep.subr.bf16.mxu0 0
        %942 = vmatpush1.bf16.msra.mxu0 0
        %943 = vmatprep.subr.bf16.mxu0 0
        %944 = vmatpush1.bf16.msra.mxu0 0
        %945 = vmatprep.subr.bf16.mxu0 0
        %946 = vmatpush1.bf16.msra.mxu0 0
        %947 = vmatprep.subr.bf16.mxu0 %v592
        %948 = vmatpush1.bf16.msra.mxu0 %v589
        %949 = vmatprep.subr.bf16.mxu0 %v528
        %950 = vmatpush1.bf16.msra.mxu0 %v527
        %951 = vmatprep.subr.bf16.mxu0 %v520
        %952 = vmatpush1.bf16.msra.mxu0 %v519
        %953 = vmatprep.subr.bf16.mxu0 %v512
        %954 = vmatpush1.bf16.msra.mxu0 %v511
        %955 = vmatprep.subr.bf16.mxu0 %v504
        %956 = vmatpush1.bf16.msra.mxu0 %v503
        %957 = vmatprep.subr.bf16.mxu0 0
        %958 = vmatpush2.bf16.msra.mxu0 0
        %959 = vmatprep.subr.bf16.mxu0 0
        %960 = vmatpush2.bf16.msra.mxu0 0
        %961 = vmatprep.subr.bf16.mxu0 0
        %962 = vmatpush2.bf16.msra.mxu0 0
        %963 = vmatprep.subr.bf16.mxu0 0
        %964 = vmatpush2.bf16.msra.mxu0 0
        %965 = vmatprep.subr.bf16.mxu0 0
        %966 = vmatpush2.bf16.msra.mxu0 0
        %967 = vmatprep.subr.bf16.mxu0 0
        %968 = vmatpush2.bf16.msra.mxu0 0
        %969 = vmatprep.subr.bf16.mxu0 0
        %970 = vmatpush2.bf16.msra.mxu0 0
        %971 = vmatprep.subr.bf16.mxu0 0
        %972 = vmatpush2.bf16.msra.mxu0 0
        %973 = vmatprep.mubr.bf16.mxu0 0
        %974 = vmatmul.mubr.bf16.gmra.mxu0 %v853
        %v975 = vpop.f32.mrf.mxu0
        %v976 = vadd.f32 %v365, %v975
        %v977 = vpop.f32.mrf.mxu0
        %v978 = vadd.f32 %v369, %v977
        %v979 = vpop.f32.mrf.mxu0
        %v980 = vadd.f32 %v365, %v979
        %v981 = vpop.f32.mrf.mxu0
        %v982 = vadd.f32 %v369, %v981
        %983 = vdwg.mxu0
        %984 = vmatprep.subr.bf16.mxu0 0
        %985 = vmatpush1.bf16.msra.mxu0 0
        %986 = vmatprep.subr.bf16.mxu0 0
        %987 = vmatpush1.bf16.msra.mxu0 0
        %988 = vmatprep.subr.bf16.mxu0 0
        %989 = vmatpush1.bf16.msra.mxu0 0
        %990 = vmatprep.subr.bf16.mxu0 %v598
        %991 = vmatpush1.bf16.msra.mxu0 %v595
        %992 = vmatprep.subr.bf16.mxu0 %v530
        %993 = vmatpush1.bf16.msra.mxu0 %v529
        %994 = vmatprep.subr.bf16.mxu0 %v522
        %995 = vmatpush1.bf16.msra.mxu0 %v521
        %996 = vmatprep.subr.bf16.mxu0 %v514
        %997 = vmatpush1.bf16.msra.mxu0 %v513
        %998 = vmatprep.subr.bf16.mxu0 %v506
        %999 = vmatpush1.bf16.msra.mxu0 %v505
        %1000 = vmatprep.subr.bf16.mxu0 0
        %1001 = vmatpush2.bf16.msra.mxu0 0
        %1002 = vmatprep.subr.bf16.mxu0 0
        %1003 = vmatpush2.bf16.msra.mxu0 0
        %1004 = vmatprep.subr.bf16.mxu0 0
        %1005 = vmatpush2.bf16.msra.mxu0 0
        %1006 = vmatprep.subr.bf16.mxu0 0
        %1007 = vmatpush2.bf16.msra.mxu0 0
        %1008 = vmatprep.subr.bf16.mxu0 0
        %1009 = vmatpush2.bf16.msra.mxu0 0
        %1010 = vmatprep.subr.bf16.mxu0 0
        %1011 = vmatpush2.bf16.msra.mxu0 0
        %1012 = vmatprep.subr.bf16.mxu0 0
        %1013 = vmatpush2.bf16.msra.mxu0 0
        %1014 = vmatprep.subr.bf16.mxu0 0
        %1015 = vmatpush2.bf16.msra.mxu0 0
        %1016 = vmatprep.mubr.bf16.mxu0 0
        %1017 = vmatmul.mubr.bf16.gmra.mxu0 %v853
        %v1018 = vpop.f32.mrf.mxu0
        %v1019 = vadd.f32 %v373, %v1018
        %v1020 = vpop.f32.mrf.mxu0
        %v1021 = vadd.f32 %v377, %v1020
        %v1022 = vpop.f32.mrf.mxu0
        %v1023 = vadd.f32 %v373, %v1022
        %v1024 = vpop.f32.mrf.mxu0
        %v1025 = vadd.f32 %v377, %v1024
        %1026 = vdwg.mxu0
        %v1027 = vmax.f32 %v890, 0.0
        %v1028 = vmax.f32 %v892, 0.0
        %v1029 = vmax.f32 %v933, 0.0
        %v1030 = vmax.f32 %v935, 0.0
        %v1031 = vmax.f32 %v976, 0.0
        %v1032 = vmax.f32 %v978, 0.0
        %v1033 = vmax.f32 %v1019, 0.0
        %v1034 = vmax.f32 %v1021, 0.0
        %v1035 = vmax.f32 %v894, 0.0
        %v1036 = vmax.f32 %v896, 0.0
        %v1037 = vmax.f32 %v937, 0.0
        %v1038 = vmax.f32 %v939, 0.0
        %v1039 = vmax.f32 %v980, 0.0
        %v1040 = vmax.f32 %v982, 0.0
        %v1041 = vmax.f32 %v1023, 0.0
        %v1042 = vmax.f32 %v1025, 0.0
        %v1043 = vpack.c.bf16 %v1035, %v1027
        %v1044 = vpack.c.bf16 %v1036, %v1028
        %v1045 = vpack.c.bf16 %v1037, %v1029
        %v1046 = vpack.c.bf16 %v1038, %v1030
        %v1047 = vpack.c.bf16 %v1039, %v1031
        %v1048 = vpack.c.bf16 %v1040, %v1032
        %v1049 = vpack.c.bf16 %v1041, %v1033
        %v1050 = vpack.c.bf16 %v1042, %v1034
        %v1059 = vunpack.c.l.b16 %v1043
        %v1060 = vunpack.c.l.b16 %v1044
        %v1061 = vunpack.c.l.b16 %v1045
        %v1062 = vunpack.c.l.b16 %v1046
        %v1063 = vunpack.c.l.b16 %v1047
        %v1064 = vunpack.c.l.b16 %v1048
        %v1065 = vunpack.c.l.b16 %v1049
        %v1066 = vunpack.c.l.b16 %v1050
        %v1067 = vunpack.c.h.b16 %v1043
        %v1068 = vunpack.c.h.b16 %v1044
        %v1069 = vunpack.c.h.b16 %v1045
        %v1070 = vunpack.c.h.b16 %v1046
        %v1071 = vunpack.c.h.b16 %v1047
        %v1072 = vunpack.c.h.b16 %v1048
        %v1073 = vunpack.c.h.b16 %v1049
        %v1074 = vunpack.c.h.b16 %v1050
        %v1075 = vpack.c.b16 %v1060, %v1059
        %v1076 = vpack.c.b16 %v1062, %v1061
        %v1077 = vpack.c.b16 %v1064, %v1063
        %v1078 = vpack.c.b16 %v1066, %v1065
        %v1079 = vpack.c.b16 %v1068, %v1067
        %v1080 = vpack.c.b16 %v1070, %v1069
        %v1081 = vpack.c.b16 %v1072, %v1071
        %v1082 = vpack.c.b16 %v1074, %v1073
        %s1091 = scalar_lea.vmem [#allocation2], 128
        %1092 = vst [vmem:[%s1091] sm:$0xff] %v1075
        %1093 = vst [vmem:[%s1091 + $0x8] sm:$0xff] %v1076
        %1094 = vst [vmem:[%s1091 + $0x10] sm:$0xff] %v1077
        %1095 = vst [vmem:[%s1091 + $0x18] sm:$0xff] %v1078
        %1096 = vst [vmem:[%s1091 + $0x40] sm:$0xff] %v1079
        %1097 = vst [vmem:[%s1091 + $0x48] sm:$0xff] %v1080
        %1098 = vst [vmem:[%s1091 + $0x50] sm:$0xff] %v1081
        %1099 = vst [vmem:[%s1091 + $0x58] sm:$0xff] %v1082
        %s1100 = scalar_lea.vmem %s304, 16
        %v1101 = vld [vmem:[%s1100] sm:$0xf]
        %v1102 = vld [vmem:[%s1100 + $0x4] sm:$0xf]
        %v1105 = vunpack.c.l.b16 %v1101
        %v1106 = vunpack.c.l.b16 %v1102
        %v1107 = vpack.c.b16 %v1106, %v1105
        %v1109 = vsel %vm571, %v1107, 0
        %1111 = vmatprep.subr.bf16.mxu0 0
        %1112 = vmatpush1.bf16.msra.mxu0 0
        %1113 = vmatprep.subr.bf16.mxu0 0
        %1114 = vmatpush1.bf16.msra.mxu0 0
        %1115 = vmatprep.subr.bf16.mxu0 0
        %1116 = vmatpush1.bf16.msra.mxu0 0
        %1117 = vmatprep.subr.bf16.mxu0 %v580
        %1118 = vmatpush1.bf16.msra.mxu0 %v577
        %1119 = vmatprep.subr.bf16.mxu0 %v524
        %1120 = vmatpush1.bf16.msra.mxu0 %v523
        %1121 = vmatprep.subr.bf16.mxu0 %v516
        %1122 = vmatpush1.bf16.msra.mxu0 %v515
        %1123 = vmatprep.subr.bf16.mxu0 %v508
        %1124 = vmatpush1.bf16.msra.mxu0 %v507
        %1125 = vmatprep.subr.bf16.mxu0 %v500
        %1126 = vmatpush1.bf16.msra.mxu0 %v499
        %1127 = vmatprep.subr.bf16.mxu0 0
        %1128 = vmatpush2.bf16.msra.mxu0 0
        %1129 = vmatprep.subr.bf16.mxu0 0
        %1130 = vmatpush2.bf16.msra.mxu0 0
        %1131 = vmatprep.subr.bf16.mxu0 0
        %1132 = vmatpush2.bf16.msra.mxu0 0
        %1133 = vmatprep.subr.bf16.mxu0 0
        %1134 = vmatpush2.bf16.msra.mxu0 0
        %1135 = vmatprep.subr.bf16.mxu0 0
        %1136 = vmatpush2.bf16.msra.mxu0 0
        %1137 = vmatprep.subr.bf16.mxu0 0
        %1138 = vmatpush2.bf16.msra.mxu0 0
        %1139 = vmatprep.subr.bf16.mxu0 0
        %1140 = vmatpush2.bf16.msra.mxu0 0
        %1141 = vmatprep.subr.bf16.mxu0 0
        %1142 = vmatpush2.bf16.msra.mxu0 0
        %1143 = vmatprep.mubr.bf16.mxu0 0
        %1144 = vmatmul.mubr.bf16.gmra.mxu0 %v1109
        %v1145 = vpop.f32.mrf.mxu0
        %v1146 = vadd.f32 %v349, %v1145
        %v1147 = vpop.f32.mrf.mxu0
        %v1148 = vadd.f32 %v353, %v1147
        %v1149 = vpop.f32.mrf.mxu0
        %v1150 = vadd.f32 %v349, %v1149
        %v1151 = vpop.f32.mrf.mxu0
        %v1152 = vadd.f32 %v353, %v1151
        %1153 = vdwg.mxu0
        %1154 = vmatprep.subr.bf16.mxu0 0
        %1155 = vmatpush1.bf16.msra.mxu0 0
        %1156 = vmatprep.subr.bf16.mxu0 0
        %1157 = vmatpush1.bf16.msra.mxu0 0
        %1158 = vmatprep.subr.bf16.mxu0 0
        %1159 = vmatpush1.bf16.msra.mxu0 0
        %1160 = vmatprep.subr.bf16.mxu0 %v586
        %1161 = vmatpush1.bf16.msra.mxu0 %v583
        %1162 = vmatprep.subr.bf16.mxu0 %v526
        %1163 = vmatpush1.bf16.msra.mxu0 %v525
        %1164 = vmatprep.subr.bf16.mxu0 %v518
        %1165 = vmatpush1.bf16.msra.mxu0 %v517
        %1166 = vmatprep.subr.bf16.mxu0 %v510
        %1167 = vmatpush1.bf16.msra.mxu0 %v509
        %1168 = vmatprep.subr.bf16.mxu0 %v502
        %1169 = vmatpush1.bf16.msra.mxu0 %v501
        %1170 = vmatprep.subr.bf16.mxu0 0
        %1171 = vmatpush2.bf16.msra.mxu0 0
        %1172 = vmatprep.subr.bf16.mxu0 0
        %1173 = vmatpush2.bf16.msra.mxu0 0
        %1174 = vmatprep.subr.bf16.mxu0 0
        %1175 = vmatpush2.bf16.msra.mxu0 0
        %1176 = vmatprep.subr.bf16.mxu0 0
        %1177 = vmatpush2.bf16.msra.mxu0 0
        %1178 = vmatprep.subr.bf16.mxu0 0
        %1179 = vmatpush2.bf16.msra.mxu0 0
        %1180 = vmatprep.subr.bf16.mxu0 0
        %1181 = vmatpush2.bf16.msra.mxu0 0
        %1182 = vmatprep.subr.bf16.mxu0 0
        %1183 = vmatpush2.bf16.msra.mxu0 0
        %1184 = vmatprep.subr.bf16.mxu0 0
        %1185 = vmatpush2.bf16.msra.mxu0 0
        %1186 = vmatprep.mubr.bf16.mxu0 0
        %1187 = vmatmul.mubr.bf16.gmra.mxu0 %v1109
        %v1188 = vpop.f32.mrf.mxu0
        %v1189 = vadd.f32 %v357, %v1188
        %v1190 = vpop.f32.mrf.mxu0
        %v1191 = vadd.f32 %v361, %v1190
        %v1192 = vpop.f32.mrf.mxu0
        %v1193 = vadd.f32 %v357, %v1192
        %v1194 = vpop.f32.mrf.mxu0
        %v1195 = vadd.f32 %v361, %v1194
        %1196 = vdwg.mxu0
        %1197 = vmatprep.subr.bf16.mxu0 0
        %1198 = vmatpush1.bf16.msra.mxu0 0
        %1199 = vmatprep.subr.bf16.mxu0 0
        %1200 = vmatpush1.bf16.msra.mxu0 0
        %1201 = vmatprep.subr.bf16.mxu0 0
        %1202 = vmatpush1.bf16.msra.mxu0 0
        %1203 = vmatprep.subr.bf16.mxu0 %v592
        %1204 = vmatpush1.bf16.msra.mxu0 %v589
        %1205 = vmatprep.subr.bf16.mxu0 %v528
        %1206 = vmatpush1.bf16.msra.mxu0 %v527
        %1207 = vmatprep.subr.bf16.mxu0 %v520
        %1208 = vmatpush1.bf16.msra.mxu0 %v519
        %1209 = vmatprep.subr.bf16.mxu0 %v512
        %1210 = vmatpush1.bf16.msra.mxu0 %v511
        %1211 = vmatprep.subr.bf16.mxu0 %v504
        %1212 = vmatpush1.bf16.msra.mxu0 %v503
        %1213 = vmatprep.subr.bf16.mxu0 0
        %1214 = vmatpush2.bf16.msra.mxu0 0
        %1215 = vmatprep.subr.bf16.mxu0 0
        %1216 = vmatpush2.bf16.msra.mxu0 0
        %1217 = vmatprep.subr.bf16.mxu0 0
        %1218 = vmatpush2.bf16.msra.mxu0 0
        %1219 = vmatprep.subr.bf16.mxu0 0
        %1220 = vmatpush2.bf16.msra.mxu0 0
        %1221 = vmatprep.subr.bf16.mxu0 0
        %1222 = vmatpush2.bf16.msra.mxu0 0
        %1223 = vmatprep.subr.bf16.mxu0 0
        %1224 = vmatpush2.bf16.msra.mxu0 0
        %1225 = vmatprep.subr.bf16.mxu0 0
        %1226 = vmatpush2.bf16.msra.mxu0 0
        %1227 = vmatprep.subr.bf16.mxu0 0
        %1228 = vmatpush2.bf16.msra.mxu0 0
        %1229 = vmatprep.mubr.bf16.mxu0 0
        %1230 = vmatmul.mubr.bf16.gmra.mxu0 %v1109
        %v1231 = vpop.f32.mrf.mxu0
        %v1232 = vadd.f32 %v365, %v1231
        %v1233 = vpop.f32.mrf.mxu0
        %v1234 = vadd.f32 %v369, %v1233
        %v1235 = vpop.f32.mrf.mxu0
        %v1236 = vadd.f32 %v365, %v1235
        %v1237 = vpop.f32.mrf.mxu0
        %v1238 = vadd.f32 %v369, %v1237
        %1239 = vdwg.mxu0
        %1240 = vmatprep.subr.bf16.mxu0 0
        %1241 = vmatpush1.bf16.msra.mxu0 0
        %1242 = vmatprep.subr.bf16.mxu0 0
        %1243 = vmatpush1.bf16.msra.mxu0 0
        %1244 = vmatprep.subr.bf16.mxu0 0
        %1245 = vmatpush1.bf16.msra.mxu0 0
        %1246 = vmatprep.subr.bf16.mxu0 %v598
        %1247 = vmatpush1.bf16.msra.mxu0 %v595
        %1248 = vmatprep.subr.bf16.mxu0 %v530
        %1249 = vmatpush1.bf16.msra.mxu0 %v529
        %1250 = vmatprep.subr.bf16.mxu0 %v522
        %1251 = vmatpush1.bf16.msra.mxu0 %v521
        %1252 = vmatprep.subr.bf16.mxu0 %v514
        %1253 = vmatpush1.bf16.msra.mxu0 %v513
        %1254 = vmatprep.subr.bf16.mxu0 %v506
        %1255 = vmatpush1.bf16.msra.mxu0 %v505
        %1256 = vmatprep.subr.bf16.mxu0 0
        %1257 = vmatpush2.bf16.msra.mxu0 0
        %1258 = vmatprep.subr.bf16.mxu0 0
        %1259 = vmatpush2.bf16.msra.mxu0 0
        %1260 = vmatprep.subr.bf16.mxu0 0
        %1261 = vmatpush2.bf16.msra.mxu0 0
        %1262 = vmatprep.subr.bf16.mxu0 0
        %1263 = vmatpush2.bf16.msra.mxu0 0
        %1264 = vmatprep.subr.bf16.mxu0 0
        %1265 = vmatpush2.bf16.msra.mxu0 0
        %1266 = vmatprep.subr.bf16.mxu0 0
        %1267 = vmatpush2.bf16.msra.mxu0 0
        %1268 = vmatprep.subr.bf16.mxu0 0
        %1269 = vmatpush2.bf16.msra.mxu0 0
        %1270 = vmatprep.subr.bf16.mxu0 0
        %1271 = vmatpush2.bf16.msra.mxu0 0
        %1272 = vmatprep.mubr.bf16.mxu0 0
        %1273 = vmatmul.mubr.bf16.gmra.mxu0 %v1109
        %v1274 = vpop.f32.mrf.mxu0
        %v1275 = vadd.f32 %v373, %v1274
        %v1276 = vpop.f32.mrf.mxu0
        %v1277 = vadd.f32 %v377, %v1276
        %v1278 = vpop.f32.mrf.mxu0
        %v1279 = vadd.f32 %v373, %v1278
        %v1280 = vpop.f32.mrf.mxu0
        %v1281 = vadd.f32 %v377, %v1280
        %1282 = vdwg.mxu0
        %v1283 = vmax.f32 %v1146, 0.0
        %v1284 = vmax.f32 %v1148, 0.0
        %v1285 = vmax.f32 %v1189, 0.0
        %v1286 = vmax.f32 %v1191, 0.0
        %v1287 = vmax.f32 %v1232, 0.0
        %v1288 = vmax.f32 %v1234, 0.0
        %v1289 = vmax.f32 %v1275, 0.0
        %v1290 = vmax.f32 %v1277, 0.0
        %v1291 = vmax.f32 %v1150, 0.0
        %v1292 = vmax.f32 %v1152, 0.0
        %v1293 = vmax.f32 %v1193, 0.0
        %v1294 = vmax.f32 %v1195, 0.0
        %v1295 = vmax.f32 %v1236, 0.0
        %v1296 = vmax.f32 %v1238, 0.0
        %v1297 = vmax.f32 %v1279, 0.0
        %v1298 = vmax.f32 %v1281, 0.0
        %v1299 = vpack.c.bf16 %v1291, %v1283
        %v1300 = vpack.c.bf16 %v1292, %v1284
        %v1301 = vpack.c.bf16 %v1293, %v1285
        %v1302 = vpack.c.bf16 %v1294, %v1286
        %v1303 = vpack.c.bf16 %v1295, %v1287
        %v1304 = vpack.c.bf16 %v1296, %v1288
        %v1305 = vpack.c.bf16 %v1297, %v1289
        %v1306 = vpack.c.bf16 %v1298, %v1290
        %v1315 = vunpack.c.l.b16 %v1299
        %v1316 = vunpack.c.l.b16 %v1300
        %v1317 = vunpack.c.l.b16 %v1301
        %v1318 = vunpack.c.l.b16 %v1302
        %v1319 = vunpack.c.l.b16 %v1303
        %v1320 = vunpack.c.l.b16 %v1304
        %v1321 = vunpack.c.l.b16 %v1305
        %v1322 = vunpack.c.l.b16 %v1306
        %v1323 = vunpack.c.h.b16 %v1299
        %v1324 = vunpack.c.h.b16 %v1300
        %v1325 = vunpack.c.h.b16 %v1301
        %v1326 = vunpack.c.h.b16 %v1302
        %v1327 = vunpack.c.h.b16 %v1303
        %v1328 = vunpack.c.h.b16 %v1304
        %v1329 = vunpack.c.h.b16 %v1305
        %v1330 = vunpack.c.h.b16 %v1306
        %v1331 = vpack.c.b16 %v1316, %v1315
        %v1332 = vpack.c.b16 %v1318, %v1317
        %v1333 = vpack.c.b16 %v1320, %v1319
        %v1334 = vpack.c.b16 %v1322, %v1321
        %v1335 = vpack.c.b16 %v1324, %v1323
        %v1336 = vpack.c.b16 %v1326, %v1325
        %v1337 = vpack.c.b16 %v1328, %v1327
        %v1338 = vpack.c.b16 %v1330, %v1329
        %s1347 = scalar_lea.vmem [#allocation2], 256
        %1348 = vst [vmem:[%s1347] sm:$0xff] %v1331
        %1349 = vst [vmem:[%s1347 + $0x8] sm:$0xff] %v1332
        %1350 = vst [vmem:[%s1347 + $0x10] sm:$0xff] %v1333
        %1351 = vst [vmem:[%s1347 + $0x18] sm:$0xff] %v1334
        %1352 = vst [vmem:[%s1347 + $0x40] sm:$0xff] %v1335
        %1353 = vst [vmem:[%s1347 + $0x48] sm:$0xff] %v1336
        %1354 = vst [vmem:[%s1347 + $0x50] sm:$0xff] %v1337
        %1355 = vst [vmem:[%s1347 + $0x58] sm:$0xff] %v1338
        %s1356 = scalar_lea.vmem %s304, 24
        %v1357 = vld [vmem:[%s1356] sm:$0xf]
        %v1358 = vld [vmem:[%s1356 + $0x4] sm:$0xf]
        %v1361 = vunpack.c.l.b16 %v1357
        %v1362 = vunpack.c.l.b16 %v1358
        %v1363 = vpack.c.b16 %v1362, %v1361
        %v1365 = vsel %vm571, %v1363, 0
        %1367 = vmatprep.subr.bf16.mxu0 0
        %1368 = vmatpush1.bf16.msra.mxu0 0
        %1369 = vmatprep.subr.bf16.mxu0 0
        %1370 = vmatpush1.bf16.msra.mxu0 0
        %1371 = vmatprep.subr.bf16.mxu0 0
        %1372 = vmatpush1.bf16.msra.mxu0 0
        %1373 = vmatprep.subr.bf16.mxu0 %v580
        %1374 = vmatpush1.bf16.msra.mxu0 %v577
        %1375 = vmatprep.subr.bf16.mxu0 %v524
        %1376 = vmatpush1.bf16.msra.mxu0 %v523
        %1377 = vmatprep.subr.bf16.mxu0 %v516
        %1378 = vmatpush1.bf16.msra.mxu0 %v515
        %1379 = vmatprep.subr.bf16.mxu0 %v508
        %1380 = vmatpush1.bf16.msra.mxu0 %v507
        %1381 = vmatprep.subr.bf16.mxu0 %v500
        %1382 = vmatpush1.bf16.msra.mxu0 %v499
        %1383 = vmatprep.subr.bf16.mxu0 0
        %1384 = vmatpush2.bf16.msra.mxu0 0
        %1385 = vmatprep.subr.bf16.mxu0 0
        %1386 = vmatpush2.bf16.msra.mxu0 0
        %1387 = vmatprep.subr.bf16.mxu0 0
        %1388 = vmatpush2.bf16.msra.mxu0 0
        %1389 = vmatprep.subr.bf16.mxu0 0
        %1390 = vmatpush2.bf16.msra.mxu0 0
        %1391 = vmatprep.subr.bf16.mxu0 0
        %1392 = vmatpush2.bf16.msra.mxu0 0
        %1393 = vmatprep.subr.bf16.mxu0 0
        %1394 = vmatpush2.bf16.msra.mxu0 0
        %1395 = vmatprep.subr.bf16.mxu0 0
        %1396 = vmatpush2.bf16.msra.mxu0 0
        %1397 = vmatprep.subr.bf16.mxu0 0
        %1398 = vmatpush2.bf16.msra.mxu0 0
        %1399 = vmatprep.mubr.bf16.mxu0 0
        %1400 = vmatmul.mubr.bf16.gmra.mxu0 %v1365
        %v1401 = vpop.f32.mrf.mxu0
        %v1402 = vadd.f32 %v349, %v1401
        %v1403 = vpop.f32.mrf.mxu0
        %v1404 = vadd.f32 %v353, %v1403
        %v1405 = vpop.f32.mrf.mxu0
        %v1406 = vadd.f32 %v349, %v1405
        %v1407 = vpop.f32.mrf.mxu0
        %v1408 = vadd.f32 %v353, %v1407
        %1409 = vdwg.mxu0
        %1410 = vmatprep.subr.bf16.mxu0 0
        %1411 = vmatpush1.bf16.msra.mxu0 0
        %1412 = vmatprep.subr.bf16.mxu0 0
        %1413 = vmatpush1.bf16.msra.mxu0 0
        %1414 = vmatprep.subr.bf16.mxu0 0
        %1415 = vmatpush1.bf16.msra.mxu0 0
        %1416 = vmatprep.subr.bf16.mxu0 %v586
        %1417 = vmatpush1.bf16.msra.mxu0 %v583
        %1418 = vmatprep.subr.bf16.mxu0 %v526
        %1419 = vmatpush1.bf16.msra.mxu0 %v525
        %1420 = vmatprep.subr.bf16.mxu0 %v518
        %1421 = vmatpush1.bf16.msra.mxu0 %v517
        %1422 = vmatprep.subr.bf16.mxu0 %v510
        %1423 = vmatpush1.bf16.msra.mxu0 %v509
        %1424 = vmatprep.subr.bf16.mxu0 %v502
        %1425 = vmatpush1.bf16.msra.mxu0 %v501
        %1426 = vmatprep.subr.bf16.mxu0 0
        %1427 = vmatpush2.bf16.msra.mxu0 0
        %1428 = vmatprep.subr.bf16.mxu0 0
        %1429 = vmatpush2.bf16.msra.mxu0 0
        %1430 = vmatprep.subr.bf16.mxu0 0
        %1431 = vmatpush2.bf16.msra.mxu0 0
        %1432 = vmatprep.subr.bf16.mxu0 0
        %1433 = vmatpush2.bf16.msra.mxu0 0
        %1434 = vmatprep.subr.bf16.mxu0 0
        %1435 = vmatpush2.bf16.msra.mxu0 0
        %1436 = vmatprep.subr.bf16.mxu0 0
        %1437 = vmatpush2.bf16.msra.mxu0 0
        %1438 = vmatprep.subr.bf16.mxu0 0
        %1439 = vmatpush2.bf16.msra.mxu0 0
        %1440 = vmatprep.subr.bf16.mxu0 0
        %1441 = vmatpush2.bf16.msra.mxu0 0
        %1442 = vmatprep.mubr.bf16.mxu0 0
        %1443 = vmatmul.mubr.bf16.gmra.mxu0 %v1365
        %v1444 = vpop.f32.mrf.mxu0
        %v1445 = vadd.f32 %v357, %v1444
        %v1446 = vpop.f32.mrf.mxu0
        %v1447 = vadd.f32 %v361, %v1446
        %v1448 = vpop.f32.mrf.mxu0
        %v1449 = vadd.f32 %v357, %v1448
        %v1450 = vpop.f32.mrf.mxu0
        %v1451 = vadd.f32 %v361, %v1450
        %1452 = vdwg.mxu0
        %1453 = vmatprep.subr.bf16.mxu0 0
        %1454 = vmatpush1.bf16.msra.mxu0 0
        %1455 = vmatprep.subr.bf16.mxu0 0
        %1456 = vmatpush1.bf16.msra.mxu0 0
        %1457 = vmatprep.subr.bf16.mxu0 0
        %1458 = vmatpush1.bf16.msra.mxu0 0
        %1459 = vmatprep.subr.bf16.mxu0 %v592
        %1460 = vmatpush1.bf16.msra.mxu0 %v589
        %1461 = vmatprep.subr.bf16.mxu0 %v528
        %1462 = vmatpush1.bf16.msra.mxu0 %v527
        %1463 = vmatprep.subr.bf16.mxu0 %v520
        %1464 = vmatpush1.bf16.msra.mxu0 %v519
        %1465 = vmatprep.subr.bf16.mxu0 %v512
        %1466 = vmatpush1.bf16.msra.mxu0 %v511
        %1467 = vmatprep.subr.bf16.mxu0 %v504
        %1468 = vmatpush1.bf16.msra.mxu0 %v503
        %1469 = vmatprep.subr.bf16.mxu0 0
        %1470 = vmatpush2.bf16.msra.mxu0 0
        %1471 = vmatprep.subr.bf16.mxu0 0
        %1472 = vmatpush2.bf16.msra.mxu0 0
        %1473 = vmatprep.subr.bf16.mxu0 0
        %1474 = vmatpush2.bf16.msra.mxu0 0
        %1475 = vmatprep.subr.bf16.mxu0 0
        %1476 = vmatpush2.bf16.msra.mxu0 0
        %1477 = vmatprep.subr.bf16.mxu0 0
        %1478 = vmatpush2.bf16.msra.mxu0 0
        %1479 = vmatprep.subr.bf16.mxu0 0
        %1480 = vmatpush2.bf16.msra.mxu0 0
        %1481 = vmatprep.subr.bf16.mxu0 0
        %1482 = vmatpush2.bf16.msra.mxu0 0
        %1483 = vmatprep.subr.bf16.mxu0 0
        %1484 = vmatpush2.bf16.msra.mxu0 0
        %1485 = vmatprep.mubr.bf16.mxu0 0
        %1486 = vmatmul.mubr.bf16.gmra.mxu0 %v1365
        %v1487 = vpop.f32.mrf.mxu0
        %v1488 = vadd.f32 %v365, %v1487
        %v1489 = vpop.f32.mrf.mxu0
        %v1490 = vadd.f32 %v369, %v1489
        %v1491 = vpop.f32.mrf.mxu0
        %v1492 = vadd.f32 %v365, %v1491
        %v1493 = vpop.f32.mrf.mxu0
        %v1494 = vadd.f32 %v369, %v1493
        %1495 = vdwg.mxu0
        %1496 = vmatprep.subr.bf16.mxu0 0
        %1497 = vmatpush1.bf16.msra.mxu0 0
        %1498 = vmatprep.subr.bf16.mxu0 0
        %1499 = vmatpush1.bf16.msra.mxu0 0
        %1500 = vmatprep.subr.bf16.mxu0 0
        %1501 = vmatpush1.bf16.msra.mxu0 0
        %1502 = vmatprep.subr.bf16.mxu0 %v598
        %1503 = vmatpush1.bf16.msra.mxu0 %v595
        %1504 = vmatprep.subr.bf16.mxu0 %v530
        %1505 = vmatpush1.bf16.msra.mxu0 %v529
        %1506 = vmatprep.subr.bf16.mxu0 %v522
        %1507 = vmatpush1.bf16.msra.mxu0 %v521
        %1508 = vmatprep.subr.bf16.mxu0 %v514
        %1509 = vmatpush1.bf16.msra.mxu0 %v513
        %1510 = vmatprep.subr.bf16.mxu0 %v506
        %1511 = vmatpush1.bf16.msra.mxu0 %v505
        %1512 = vmatprep.subr.bf16.mxu0 0
        %1513 = vmatpush2.bf16.msra.mxu0 0
        %1514 = vmatprep.subr.bf16.mxu0 0
        %1515 = vmatpush2.bf16.msra.mxu0 0
        %1516 = vmatprep.subr.bf16.mxu0 0
        %1517 = vmatpush2.bf16.msra.mxu0 0
        %1518 = vmatprep.subr.bf16.mxu0 0
        %1519 = vmatpush2.bf16.msra.mxu0 0
        %1520 = vmatprep.subr.bf16.mxu0 0
        %1521 = vmatpush2.bf16.msra.mxu0 0
        %1522 = vmatprep.subr.bf16.mxu0 0
        %1523 = vmatpush2.bf16.msra.mxu0 0
        %1524 = vmatprep.subr.bf16.mxu0 0
        %1525 = vmatpush2.bf16.msra.mxu0 0
        %1526 = vmatprep.subr.bf16.mxu0 0
        %1527 = vmatpush2.bf16.msra.mxu0 0
        %1528 = vmatprep.mubr.bf16.mxu0 0
        %1529 = vmatmul.mubr.bf16.gmra.mxu0 %v1365
        %v1530 = vpop.f32.mrf.mxu0
        %v1531 = vadd.f32 %v373, %v1530
        %v1532 = vpop.f32.mrf.mxu0
        %v1533 = vadd.f32 %v377, %v1532
        %v1534 = vpop.f32.mrf.mxu0
        %v1535 = vadd.f32 %v373, %v1534
        %v1536 = vpop.f32.mrf.mxu0
        %v1537 = vadd.f32 %v377, %v1536
        %1538 = vdwg.mxu0
        %v1539 = vmax.f32 %v1402, 0.0
        %v1540 = vmax.f32 %v1404, 0.0
        %v1541 = vmax.f32 %v1445, 0.0
        %v1542 = vmax.f32 %v1447, 0.0
        %v1543 = vmax.f32 %v1488, 0.0
        %v1544 = vmax.f32 %v1490, 0.0
        %v1545 = vmax.f32 %v1531, 0.0
        %v1546 = vmax.f32 %v1533, 0.0
        %v1547 = vmax.f32 %v1406, 0.0
        %v1548 = vmax.f32 %v1408, 0.0
        %v1549 = vmax.f32 %v1449, 0.0
        %v1550 = vmax.f32 %v1451, 0.0
        %v1551 = vmax.f32 %v1492, 0.0
        %v1552 = vmax.f32 %v1494, 0.0
        %v1553 = vmax.f32 %v1535, 0.0
        %v1554 = vmax.f32 %v1537, 0.0
        %v1555 = vpack.c.bf16 %v1547, %v1539
        %v1556 = vpack.c.bf16 %v1548, %v1540
        %v1557 = vpack.c.bf16 %v1549, %v1541
        %v1558 = vpack.c.bf16 %v1550, %v1542
        %v1559 = vpack.c.bf16 %v1551, %v1543
        %v1560 = vpack.c.bf16 %v1552, %v1544
        %v1561 = vpack.c.bf16 %v1553, %v1545
        %v1562 = vpack.c.bf16 %v1554, %v1546
        %v1571 = vunpack.c.l.b16 %v1555
        %v1572 = vunpack.c.l.b16 %v1556
        %v1573 = vunpack.c.l.b16 %v1557
        %v1574 = vunpack.c.l.b16 %v1558
        %v1575 = vunpack.c.l.b16 %v1559
        %v1576 = vunpack.c.l.b16 %v1560
        %v1577 = vunpack.c.l.b16 %v1561
        %v1578 = vunpack.c.l.b16 %v1562
        %v1579 = vunpack.c.h.b16 %v1555
        %v1580 = vunpack.c.h.b16 %v1556
        %v1581 = vunpack.c.h.b16 %v1557
        %v1582 = vunpack.c.h.b16 %v1558
        %v1583 = vunpack.c.h.b16 %v1559
        %v1584 = vunpack.c.h.b16 %v1560
        %v1585 = vunpack.c.h.b16 %v1561
        %v1586 = vunpack.c.h.b16 %v1562
        %v1587 = vpack.c.b16 %v1572, %v1571
        %v1588 = vpack.c.b16 %v1574, %v1573
        %v1589 = vpack.c.b16 %v1576, %v1575
        %v1590 = vpack.c.b16 %v1578, %v1577
        %v1591 = vpack.c.b16 %v1580, %v1579
        %v1592 = vpack.c.b16 %v1582, %v1581
        %v1593 = vpack.c.b16 %v1584, %v1583
        %v1594 = vpack.c.b16 %v1586, %v1585
        %1603 = vst [vmem:[#allocation2 + $0x20] sm:$0xff] %v1587
        %1604 = vst [vmem:[#allocation2 + $0x28] sm:$0xff] %v1588
        %1605 = vst [vmem:[#allocation2 + $0x30] sm:$0xff] %v1589
        %1606 = vst [vmem:[#allocation2 + $0x38] sm:$0xff] %v1590
        %1607 = vst [vmem:[#allocation2 + $0x60] sm:$0xff] %v1591
        %1608 = vst [vmem:[#allocation2 + $0x68] sm:$0xff] %v1592
        %1609 = vst [vmem:[#allocation2 + $0x70] sm:$0xff] %v1593
        %1610 = vst [vmem:[#allocation2 + $0x78] sm:$0xff] %v1594
        %s1611 = scalar_lea.vmem %s304, 32
        %v1612 = vld [vmem:[%s1611] sm:$0xf]
        %v1613 = vld [vmem:[%s1611 + $0x4] sm:$0xf]
        %v1616 = vunpack.c.l.b16 %v1612
        %v1617 = vunpack.c.l.b16 %v1613
        %v1618 = vpack.c.b16 %v1617, %v1616
        %v1620 = vsel %vm571, %v1618, 0
        %1622 = vmatprep.subr.bf16.mxu0 0
        %1623 = vmatpush1.bf16.msra.mxu0 0
        %1624 = vmatprep.subr.bf16.mxu0 0
        %1625 = vmatpush1.bf16.msra.mxu0 0
        %1626 = vmatprep.subr.bf16.mxu0 0
        %1627 = vmatpush1.bf16.msra.mxu0 0
        %1628 = vmatprep.subr.bf16.mxu0 %v580
        %1629 = vmatpush1.bf16.msra.mxu0 %v577
        %1630 = vmatprep.subr.bf16.mxu0 %v524
        %1631 = vmatpush1.bf16.msra.mxu0 %v523
        %1632 = vmatprep.subr.bf16.mxu0 %v516
        %1633 = vmatpush1.bf16.msra.mxu0 %v515
        %1634 = vmatprep.subr.bf16.mxu0 %v508
        %1635 = vmatpush1.bf16.msra.mxu0 %v507
        %1636 = vmatprep.subr.bf16.mxu0 %v500
        %1637 = vmatpush1.bf16.msra.mxu0 %v499
        %1638 = vmatprep.subr.bf16.mxu0 0
        %1639 = vmatpush2.bf16.msra.mxu0 0
        %1640 = vmatprep.subr.bf16.mxu0 0
        %1641 = vmatpush2.bf16.msra.mxu0 0
        %1642 = vmatprep.subr.bf16.mxu0 0
        %1643 = vmatpush2.bf16.msra.mxu0 0
        %1644 = vmatprep.subr.bf16.mxu0 0
        %1645 = vmatpush2.bf16.msra.mxu0 0
        %1646 = vmatprep.subr.bf16.mxu0 0
        %1647 = vmatpush2.bf16.msra.mxu0 0
        %1648 = vmatprep.subr.bf16.mxu0 0
        %1649 = vmatpush2.bf16.msra.mxu0 0
        %1650 = vmatprep.subr.bf16.mxu0 0
        %1651 = vmatpush2.bf16.msra.mxu0 0
        %1652 = vmatprep.subr.bf16.mxu0 0
        %1653 = vmatpush2.bf16.msra.mxu0 0
        %1654 = vmatprep.mubr.bf16.mxu0 0
        %1655 = vmatmul.mubr.bf16.gmra.mxu0 %v1620
        %v1656 = vpop.f32.mrf.mxu0
        %v1657 = vadd.f32 %v349, %v1656
        %v1658 = vpop.f32.mrf.mxu0
        %v1659 = vadd.f32 %v353, %v1658
        %v1660 = vpop.f32.mrf.mxu0
        %v1661 = vadd.f32 %v349, %v1660
        %v1662 = vpop.f32.mrf.mxu0
        %v1663 = vadd.f32 %v353, %v1662
        %1664 = vdwg.mxu0
        %1665 = vmatprep.subr.bf16.mxu0 0
        %1666 = vmatpush1.bf16.msra.mxu0 0
        %1667 = vmatprep.subr.bf16.mxu0 0
        %1668 = vmatpush1.bf16.msra.mxu0 0
        %1669 = vmatprep.subr.bf16.mxu0 0
        %1670 = vmatpush1.bf16.msra.mxu0 0
        %1671 = vmatprep.subr.bf16.mxu0 %v586
        %1672 = vmatpush1.bf16.msra.mxu0 %v583
        %1673 = vmatprep.subr.bf16.mxu0 %v526
        %1674 = vmatpush1.bf16.msra.mxu0 %v525
        %1675 = vmatprep.subr.bf16.mxu0 %v518
        %1676 = vmatpush1.bf16.msra.mxu0 %v517
        %1677 = vmatprep.subr.bf16.mxu0 %v510
        %1678 = vmatpush1.bf16.msra.mxu0 %v509
        %1679 = vmatprep.subr.bf16.mxu0 %v502
        %1680 = vmatpush1.bf16.msra.mxu0 %v501
        %1681 = vmatprep.subr.bf16.mxu0 0
        %1682 = vmatpush2.bf16.msra.mxu0 0
        %1683 = vmatprep.subr.bf16.mxu0 0
        %1684 = vmatpush2.bf16.msra.mxu0 0
        %1685 = vmatprep.subr.bf16.mxu0 0
        %1686 = vmatpush2.bf16.msra.mxu0 0
        %1687 = vmatprep.subr.bf16.mxu0 0
        %1688 = vmatpush2.bf16.msra.mxu0 0
        %1689 = vmatprep.subr.bf16.mxu0 0
        %1690 = vmatpush2.bf16.msra.mxu0 0
        %1691 = vmatprep.subr.bf16.mxu0 0
        %1692 = vmatpush2.bf16.msra.mxu0 0
        %1693 = vmatprep.subr.bf16.mxu0 0
        %1694 = vmatpush2.bf16.msra.mxu0 0
        %1695 = vmatprep.subr.bf16.mxu0 0
        %1696 = vmatpush2.bf16.msra.mxu0 0
        %1697 = vmatprep.mubr.bf16.mxu0 0
        %1698 = vmatmul.mubr.bf16.gmra.mxu0 %v1620
        %v1699 = vpop.f32.mrf.mxu0
        %v1700 = vadd.f32 %v357, %v1699
        %v1701 = vpop.f32.mrf.mxu0
        %v1702 = vadd.f32 %v361, %v1701
        %v1703 = vpop.f32.mrf.mxu0
        %v1704 = vadd.f32 %v357, %v1703
        %v1705 = vpop.f32.mrf.mxu0
        %v1706 = vadd.f32 %v361, %v1705
        %1707 = vdwg.mxu0
        %1708 = vmatprep.subr.bf16.mxu0 0
        %1709 = vmatpush1.bf16.msra.mxu0 0
        %1710 = vmatprep.subr.bf16.mxu0 0
        %1711 = vmatpush1.bf16.msra.mxu0 0
        %1712 = vmatprep.subr.bf16.mxu0 0
        %1713 = vmatpush1.bf16.msra.mxu0 0
        %1714 = vmatprep.subr.bf16.mxu0 %v592
        %1715 = vmatpush1.bf16.msra.mxu0 %v589
        %1716 = vmatprep.subr.bf16.mxu0 %v528
        %1717 = vmatpush1.bf16.msra.mxu0 %v527
        %1718 = vmatprep.subr.bf16.mxu0 %v520
        %1719 = vmatpush1.bf16.msra.mxu0 %v519
        %1720 = vmatprep.subr.bf16.mxu0 %v512
        %1721 = vmatpush1.bf16.msra.mxu0 %v511
        %1722 = vmatprep.subr.bf16.mxu0 %v504
        %1723 = vmatpush1.bf16.msra.mxu0 %v503
        %1724 = vmatprep.subr.bf16.mxu0 0
        %1725 = vmatpush2.bf16.msra.mxu0 0
        %1726 = vmatprep.subr.bf16.mxu0 0
        %1727 = vmatpush2.bf16.msra.mxu0 0
        %1728 = vmatprep.subr.bf16.mxu0 0
        %1729 = vmatpush2.bf16.msra.mxu0 0
        %1730 = vmatprep.subr.bf16.mxu0 0
        %1731 = vmatpush2.bf16.msra.mxu0 0
        %1732 = vmatprep.subr.bf16.mxu0 0
        %1733 = vmatpush2.bf16.msra.mxu0 0
        %1734 = vmatprep.subr.bf16.mxu0 0
        %1735 = vmatpush2.bf16.msra.mxu0 0
        %1736 = vmatprep.subr.bf16.mxu0 0
        %1737 = vmatpush2.bf16.msra.mxu0 0
        %1738 = vmatprep.subr.bf16.mxu0 0
        %1739 = vmatpush2.bf16.msra.mxu0 0
        %1740 = vmatprep.mubr.bf16.mxu0 0
        %1741 = vmatmul.mubr.bf16.gmra.mxu0 %v1620
        %v1742 = vpop.f32.mrf.mxu0
        %v1743 = vadd.f32 %v365, %v1742
        %v1744 = vpop.f32.mrf.mxu0
        %v1745 = vadd.f32 %v369, %v1744
        %v1746 = vpop.f32.mrf.mxu0
        %v1747 = vadd.f32 %v365, %v1746
        %v1748 = vpop.f32.mrf.mxu0
        %v1749 = vadd.f32 %v369, %v1748
        %1750 = vdwg.mxu0
        %1751 = vmatprep.subr.bf16.mxu0 0
        %1752 = vmatpush1.bf16.msra.mxu0 0
        %1753 = vmatprep.subr.bf16.mxu0 0
        %1754 = vmatpush1.bf16.msra.mxu0 0
        %1755 = vmatprep.subr.bf16.mxu0 0
        %1756 = vmatpush1.bf16.msra.mxu0 0
        %1757 = vmatprep.subr.bf16.mxu0 %v598
        %1758 = vmatpush1.bf16.msra.mxu0 %v595
        %1759 = vmatprep.subr.bf16.mxu0 %v530
        %1760 = vmatpush1.bf16.msra.mxu0 %v529
        %1761 = vmatprep.subr.bf16.mxu0 %v522
        %1762 = vmatpush1.bf16.msra.mxu0 %v521
        %1763 = vmatprep.subr.bf16.mxu0 %v514
        %1764 = vmatpush1.bf16.msra.mxu0 %v513
        %1765 = vmatprep.subr.bf16.mxu0 %v506
        %1766 = vmatpush1.bf16.msra.mxu0 %v505
        %1767 = vmatprep.subr.bf16.mxu0 0
        %1768 = vmatpush2.bf16.msra.mxu0 0
        %1769 = vmatprep.subr.bf16.mxu0 0
        %1770 = vmatpush2.bf16.msra.mxu0 0
        %1771 = vmatprep.subr.bf16.mxu0 0
        %1772 = vmatpush2.bf16.msra.mxu0 0
        %1773 = vmatprep.subr.bf16.mxu0 0
        %1774 = vmatpush2.bf16.msra.mxu0 0
        %1775 = vmatprep.subr.bf16.mxu0 0
        %1776 = vmatpush2.bf16.msra.mxu0 0
        %1777 = vmatprep.subr.bf16.mxu0 0
        %1778 = vmatpush2.bf16.msra.mxu0 0
        %1779 = vmatprep.subr.bf16.mxu0 0
        %1780 = vmatpush2.bf16.msra.mxu0 0
        %1781 = vmatprep.subr.bf16.mxu0 0
        %1782 = vmatpush2.bf16.msra.mxu0 0
        %1783 = vmatprep.mubr.bf16.mxu0 0
        %1784 = vmatmul.mubr.bf16.gmra.mxu0 %v1620
        %v1785 = vpop.f32.mrf.mxu0
        %v1786 = vadd.f32 %v373, %v1785
        %v1787 = vpop.f32.mrf.mxu0
        %v1788 = vadd.f32 %v377, %v1787
        %v1789 = vpop.f32.mrf.mxu0
        %v1790 = vadd.f32 %v373, %v1789
        %v1791 = vpop.f32.mrf.mxu0
        %v1792 = vadd.f32 %v377, %v1791
        %1793 = vdwg.mxu0
        %v1794 = vmax.f32 %v1657, 0.0
        %v1795 = vmax.f32 %v1659, 0.0
        %v1796 = vmax.f32 %v1700, 0.0
        %v1797 = vmax.f32 %v1702, 0.0
        %v1798 = vmax.f32 %v1743, 0.0
        %v1799 = vmax.f32 %v1745, 0.0
        %v1800 = vmax.f32 %v1786, 0.0
        %v1801 = vmax.f32 %v1788, 0.0
        %v1802 = vmax.f32 %v1661, 0.0
        %v1803 = vmax.f32 %v1663, 0.0
        %v1804 = vmax.f32 %v1704, 0.0
        %v1805 = vmax.f32 %v1706, 0.0
        %v1806 = vmax.f32 %v1747, 0.0
        %v1807 = vmax.f32 %v1749, 0.0
        %v1808 = vmax.f32 %v1790, 0.0
        %v1809 = vmax.f32 %v1792, 0.0
        %v1810 = vpack.c.bf16 %v1802, %v1794
        %v1811 = vpack.c.bf16 %v1803, %v1795
        %v1812 = vpack.c.bf16 %v1804, %v1796
        %v1813 = vpack.c.bf16 %v1805, %v1797
        %v1814 = vpack.c.bf16 %v1806, %v1798
        %v1815 = vpack.c.bf16 %v1807, %v1799
        %v1816 = vpack.c.bf16 %v1808, %v1800
        %v1817 = vpack.c.bf16 %v1809, %v1801
        %v1826 = vunpack.c.l.b16 %v1810
        %v1827 = vunpack.c.l.b16 %v1811
        %v1828 = vunpack.c.l.b16 %v1812
        %v1829 = vunpack.c.l.b16 %v1813
        %v1830 = vunpack.c.l.b16 %v1814
        %v1831 = vunpack.c.l.b16 %v1815
        %v1832 = vunpack.c.l.b16 %v1816
        %v1833 = vunpack.c.l.b16 %v1817
        %v1834 = vunpack.c.h.b16 %v1810
        %v1835 = vunpack.c.h.b16 %v1811
        %v1836 = vunpack.c.h.b16 %v1812
        %v1837 = vunpack.c.h.b16 %v1813
        %v1838 = vunpack.c.h.b16 %v1814
        %v1839 = vunpack.c.h.b16 %v1815
        %v1840 = vunpack.c.h.b16 %v1816
        %v1841 = vunpack.c.h.b16 %v1817
        %v1842 = vpack.c.b16 %v1827, %v1826
        %v1843 = vpack.c.b16 %v1829, %v1828
        %v1844 = vpack.c.b16 %v1831, %v1830
        %v1845 = vpack.c.b16 %v1833, %v1832
        %v1846 = vpack.c.b16 %v1835, %v1834
        %v1847 = vpack.c.b16 %v1837, %v1836
        %v1848 = vpack.c.b16 %v1839, %v1838
        %v1849 = vpack.c.b16 %v1841, %v1840
        %1858 = vst [vmem:[%s1091 + $0x20] sm:$0xff] %v1842
        %1859 = vst [vmem:[%s1091 + $0x28] sm:$0xff] %v1843
        %1860 = vst [vmem:[%s1091 + $0x30] sm:$0xff] %v1844
        %1861 = vst [vmem:[%s1091 + $0x38] sm:$0xff] %v1845
        %1862 = vst [vmem:[%s1091 + $0x60] sm:$0xff] %v1846
        %1863 = vst [vmem:[%s1091 + $0x68] sm:$0xff] %v1847
        %1864 = vst [vmem:[%s1091 + $0x70] sm:$0xff] %v1848
        %1865 = vst [vmem:[%s1091 + $0x78] sm:$0xff] %v1849
        %s1866 = scalar_lea.vmem %s304, 40
        %v1867 = vld [vmem:[%s1866] sm:$0xf]
        %v1868 = vld [vmem:[%s1866 + $0x4] sm:$0xf]
        %v1871 = vunpack.c.l.b16 %v1867
        %v1872 = vunpack.c.l.b16 %v1868
        %v1873 = vpack.c.b16 %v1872, %v1871
        %v1875 = vsel %vm571, %v1873, 0
        %1877 = vmatprep.subr.bf16.mxu0 0
        %1878 = vmatpush1.bf16.msra.mxu0 0
        %1879 = vmatprep.subr.bf16.mxu0 0
        %1880 = vmatpush1.bf16.msra.mxu0 0
        %1881 = vmatprep.subr.bf16.mxu0 0
        %1882 = vmatpush1.bf16.msra.mxu0 0
        %1883 = vmatprep.subr.bf16.mxu0 %v580
        %1884 = vmatpush1.bf16.msra.mxu0 %v577
        %1885 = vmatprep.subr.bf16.mxu0 %v524
        %1886 = vmatpush1.bf16.msra.mxu0 %v523
        %1887 = vmatprep.subr.bf16.mxu0 %v516
        %1888 = vmatpush1.bf16.msra.mxu0 %v515
        %1889 = vmatprep.subr.bf16.mxu0 %v508
        %1890 = vmatpush1.bf16.msra.mxu0 %v507
        %1891 = vmatprep.subr.bf16.mxu0 %v500
        %1892 = vmatpush1.bf16.msra.mxu0 %v499
        %1893 = vmatprep.subr.bf16.mxu0 0
        %1894 = vmatpush2.bf16.msra.mxu0 0
        %1895 = vmatprep.subr.bf16.mxu0 0
        %1896 = vmatpush2.bf16.msra.mxu0 0
        %1897 = vmatprep.subr.bf16.mxu0 0
        %1898 = vmatpush2.bf16.msra.mxu0 0
        %1899 = vmatprep.subr.bf16.mxu0 0
        %1900 = vmatpush2.bf16.msra.mxu0 0
        %1901 = vmatprep.subr.bf16.mxu0 0
        %1902 = vmatpush2.bf16.msra.mxu0 0
        %1903 = vmatprep.subr.bf16.mxu0 0
        %1904 = vmatpush2.bf16.msra.mxu0 0
        %1905 = vmatprep.subr.bf16.mxu0 0
        %1906 = vmatpush2.bf16.msra.mxu0 0
        %1907 = vmatprep.subr.bf16.mxu0 0
        %1908 = vmatpush2.bf16.msra.mxu0 0
        %1909 = vmatprep.mubr.bf16.mxu0 0
        %1910 = vmatmul.mubr.bf16.gmra.mxu0 %v1875
        %v1911 = vpop.f32.mrf.mxu0
        %v1912 = vadd.f32 %v349, %v1911
        %v1913 = vpop.f32.mrf.mxu0
        %v1914 = vadd.f32 %v353, %v1913
        %v1915 = vpop.f32.mrf.mxu0
        %v1916 = vadd.f32 %v349, %v1915
        %v1917 = vpop.f32.mrf.mxu0
        %v1918 = vadd.f32 %v353, %v1917
        %1919 = vdwg.mxu0
        %1920 = vmatprep.subr.bf16.mxu0 0
        %1921 = vmatpush1.bf16.msra.mxu0 0
        %1922 = vmatprep.subr.bf16.mxu0 0
        %1923 = vmatpush1.bf16.msra.mxu0 0
        %1924 = vmatprep.subr.bf16.mxu0 0
        %1925 = vmatpush1.bf16.msra.mxu0 0
        %1926 = vmatprep.subr.bf16.mxu0 %v586
        %1927 = vmatpush1.bf16.msra.mxu0 %v583
        %1928 = vmatprep.subr.bf16.mxu0 %v526
        %1929 = vmatpush1.bf16.msra.mxu0 %v525
        %1930 = vmatprep.subr.bf16.mxu0 %v518
        %1931 = vmatpush1.bf16.msra.mxu0 %v517
        %1932 = vmatprep.subr.bf16.mxu0 %v510
        %1933 = vmatpush1.bf16.msra.mxu0 %v509
        %1934 = vmatprep.subr.bf16.mxu0 %v502
        %1935 = vmatpush1.bf16.msra.mxu0 %v501
        %1936 = vmatprep.subr.bf16.mxu0 0
        %1937 = vmatpush2.bf16.msra.mxu0 0
        %1938 = vmatprep.subr.bf16.mxu0 0
        %1939 = vmatpush2.bf16.msra.mxu0 0
        %1940 = vmatprep.subr.bf16.mxu0 0
        %1941 = vmatpush2.bf16.msra.mxu0 0
        %1942 = vmatprep.subr.bf16.mxu0 0
        %1943 = vmatpush2.bf16.msra.mxu0 0
        %1944 = vmatprep.subr.bf16.mxu0 0
        %1945 = vmatpush2.bf16.msra.mxu0 0
        %1946 = vmatprep.subr.bf16.mxu0 0
        %1947 = vmatpush2.bf16.msra.mxu0 0
        %1948 = vmatprep.subr.bf16.mxu0 0
        %1949 = vmatpush2.bf16.msra.mxu0 0
        %1950 = vmatprep.subr.bf16.mxu0 0
        %1951 = vmatpush2.bf16.msra.mxu0 0
        %1952 = vmatprep.mubr.bf16.mxu0 0
        %1953 = vmatmul.mubr.bf16.gmra.mxu0 %v1875
        %v1954 = vpop.f32.mrf.mxu0
        %v1955 = vadd.f32 %v357, %v1954
        %v1956 = vpop.f32.mrf.mxu0
        %v1957 = vadd.f32 %v361, %v1956
        %v1958 = vpop.f32.mrf.mxu0
        %v1959 = vadd.f32 %v357, %v1958
        %v1960 = vpop.f32.mrf.mxu0
        %v1961 = vadd.f32 %v361, %v1960
        %1962 = vdwg.mxu0
        %1963 = vmatprep.subr.bf16.mxu0 0
        %1964 = vmatpush1.bf16.msra.mxu0 0
        %1965 = vmatprep.subr.bf16.mxu0 0
        %1966 = vmatpush1.bf16.msra.mxu0 0
        %1967 = vmatprep.subr.bf16.mxu0 0
        %1968 = vmatpush1.bf16.msra.mxu0 0
        %1969 = vmatprep.subr.bf16.mxu0 %v592
        %1970 = vmatpush1.bf16.msra.mxu0 %v589
        %1971 = vmatprep.subr.bf16.mxu0 %v528
        %1972 = vmatpush1.bf16.msra.mxu0 %v527
        %1973 = vmatprep.subr.bf16.mxu0 %v520
        %1974 = vmatpush1.bf16.msra.mxu0 %v519
        %1975 = vmatprep.subr.bf16.mxu0 %v512
        %1976 = vmatpush1.bf16.msra.mxu0 %v511
        %1977 = vmatprep.subr.bf16.mxu0 %v504
        %1978 = vmatpush1.bf16.msra.mxu0 %v503
        %1979 = vmatprep.subr.bf16.mxu0 0
        %1980 = vmatpush2.bf16.msra.mxu0 0
        %1981 = vmatprep.subr.bf16.mxu0 0
        %1982 = vmatpush2.bf16.msra.mxu0 0
        %1983 = vmatprep.subr.bf16.mxu0 0
        %1984 = vmatpush2.bf16.msra.mxu0 0
        %1985 = vmatprep.subr.bf16.mxu0 0
        %1986 = vmatpush2.bf16.msra.mxu0 0
        %1987 = vmatprep.subr.bf16.mxu0 0
        %1988 = vmatpush2.bf16.msra.mxu0 0
        %1989 = vmatprep.subr.bf16.mxu0 0
        %1990 = vmatpush2.bf16.msra.mxu0 0
        %1991 = vmatprep.subr.bf16.mxu0 0
        %1992 = vmatpush2.bf16.msra.mxu0 0
        %1993 = vmatprep.subr.bf16.mxu0 0
        %1994 = vmatpush2.bf16.msra.mxu0 0
        %1995 = vmatprep.mubr.bf16.mxu0 0
        %1996 = vmatmul.mubr.bf16.gmra.mxu0 %v1875
        %v1997 = vpop.f32.mrf.mxu0
        %v1998 = vadd.f32 %v365, %v1997
        %v1999 = vpop.f32.mrf.mxu0
        %v2000 = vadd.f32 %v369, %v1999
        %v2001 = vpop.f32.mrf.mxu0
        %v2002 = vadd.f32 %v365, %v2001
        %v2003 = vpop.f32.mrf.mxu0
        %v2004 = vadd.f32 %v369, %v2003
        %2005 = vdwg.mxu0
        %2006 = vmatprep.subr.bf16.mxu0 0
        %2007 = vmatpush1.bf16.msra.mxu0 0
        %2008 = vmatprep.subr.bf16.mxu0 0
        %2009 = vmatpush1.bf16.msra.mxu0 0
        %2010 = vmatprep.subr.bf16.mxu0 0
        %2011 = vmatpush1.bf16.msra.mxu0 0
        %2012 = vmatprep.subr.bf16.mxu0 %v598
        %2013 = vmatpush1.bf16.msra.mxu0 %v595
        %2014 = vmatprep.subr.bf16.mxu0 %v530
        %2015 = vmatpush1.bf16.msra.mxu0 %v529
        %2016 = vmatprep.subr.bf16.mxu0 %v522
        %2017 = vmatpush1.bf16.msra.mxu0 %v521
        %2018 = vmatprep.subr.bf16.mxu0 %v514
        %2019 = vmatpush1.bf16.msra.mxu0 %v513
        %2020 = vmatprep.subr.bf16.mxu0 %v506
        %2021 = vmatpush1.bf16.msra.mxu0 %v505
        %2022 = vmatprep.subr.bf16.mxu0 0
        %2023 = vmatpush2.bf16.msra.mxu0 0
        %2024 = vmatprep.subr.bf16.mxu0 0
        %2025 = vmatpush2.bf16.msra.mxu0 0
        %2026 = vmatprep.subr.bf16.mxu0 0
        %2027 = vmatpush2.bf16.msra.mxu0 0
        %2028 = vmatprep.subr.bf16.mxu0 0
        %2029 = vmatpush2.bf16.msra.mxu0 0
        %2030 = vmatprep.subr.bf16.mxu0 0
        %2031 = vmatpush2.bf16.msra.mxu0 0
        %2032 = vmatprep.subr.bf16.mxu0 0
        %2033 = vmatpush2.bf16.msra.mxu0 0
        %2034 = vmatprep.subr.bf16.mxu0 0
        %2035 = vmatpush2.bf16.msra.mxu0 0
        %2036 = vmatprep.subr.bf16.mxu0 0
        %2037 = vmatpush2.bf16.msra.mxu0 0
        %2038 = vmatprep.mubr.bf16.mxu0 0
        %2039 = vmatmul.mubr.bf16.gmra.mxu0 %v1875
        %v2040 = vpop.f32.mrf.mxu0
        %v2041 = vadd.f32 %v373, %v2040
        %v2042 = vpop.f32.mrf.mxu0
        %v2043 = vadd.f32 %v377, %v2042
        %v2044 = vpop.f32.mrf.mxu0
        %v2045 = vadd.f32 %v373, %v2044
        %v2046 = vpop.f32.mrf.mxu0
        %v2047 = vadd.f32 %v377, %v2046
        %2048 = vdwg.mxu0
        %v2049 = vmax.f32 %v1912, 0.0
        %v2050 = vmax.f32 %v1914, 0.0
        %v2051 = vmax.f32 %v1955, 0.0
        %v2052 = vmax.f32 %v1957, 0.0
        %v2053 = vmax.f32 %v1998, 0.0
        %v2054 = vmax.f32 %v2000, 0.0
        %v2055 = vmax.f32 %v2041, 0.0
        %v2056 = vmax.f32 %v2043, 0.0
        %v2057 = vmax.f32 %v1916, 0.0
        %v2058 = vmax.f32 %v1918, 0.0
        %v2059 = vmax.f32 %v1959, 0.0
        %v2060 = vmax.f32 %v1961, 0.0
        %v2061 = vmax.f32 %v2002, 0.0
        %v2062 = vmax.f32 %v2004, 0.0
        %v2063 = vmax.f32 %v2045, 0.0
        %v2064 = vmax.f32 %v2047, 0.0
        %v2065 = vpack.c.bf16 %v2057, %v2049
        %v2066 = vpack.c.bf16 %v2058, %v2050
        %v2067 = vpack.c.bf16 %v2059, %v2051
        %v2068 = vpack.c.bf16 %v2060, %v2052
        %v2069 = vpack.c.bf16 %v2061, %v2053
        %v2070 = vpack.c.bf16 %v2062, %v2054
        %v2071 = vpack.c.bf16 %v2063, %v2055
        %v2072 = vpack.c.bf16 %v2064, %v2056
        %v2081 = vunpack.c.l.b16 %v2065
        %v2082 = vunpack.c.l.b16 %v2066
        %v2083 = vunpack.c.l.b16 %v2067
        %v2084 = vunpack.c.l.b16 %v2068
        %v2085 = vunpack.c.l.b16 %v2069
        %v2086 = vunpack.c.l.b16 %v2070
        %v2087 = vunpack.c.l.b16 %v2071
        %v2088 = vunpack.c.l.b16 %v2072
        %v2089 = vunpack.c.h.b16 %v2065
        %v2090 = vunpack.c.h.b16 %v2066
        %v2091 = vunpack.c.h.b16 %v2067
        %v2092 = vunpack.c.h.b16 %v2068
        %v2093 = vunpack.c.h.b16 %v2069
        %v2094 = vunpack.c.h.b16 %v2070
        %v2095 = vunpack.c.h.b16 %v2071
        %v2096 = vunpack.c.h.b16 %v2072
        %v2097 = vpack.c.b16 %v2082, %v2081
        %v2098 = vpack.c.b16 %v2084, %v2083
        %v2099 = vpack.c.b16 %v2086, %v2085
        %v2100 = vpack.c.b16 %v2088, %v2087
        %v2101 = vpack.c.b16 %v2090, %v2089
        %v2102 = vpack.c.b16 %v2092, %v2091
        %v2103 = vpack.c.b16 %v2094, %v2093
        %v2104 = vpack.c.b16 %v2096, %v2095
        %2113 = vst [vmem:[%s1347 + $0x20] sm:$0xff] %v2097
        %2114 = vst [vmem:[%s1347 + $0x28] sm:$0xff] %v2098
        %2115 = vst [vmem:[%s1347 + $0x30] sm:$0xff] %v2099
        %2116 = vst [vmem:[%s1347 + $0x38] sm:$0xff] %v2100
        %2117 = vst [vmem:[%s1347 + $0x60] sm:$0xff] %v2101
        %2118 = vst [vmem:[%s1347 + $0x68] sm:$0xff] %v2102
        %2119 = vst [vmem:[%s1347 + $0x70] sm:$0xff] %v2103
        %2120 = vst [vmem:[%s1347 + $0x78] sm:$0xff] %v2104
        %v2121 = vld [vmem:[%s4] sm:$0x1]
        %v2122 = vld [vmem:[#allocation2] sm:$0x33]
        %v2123 = vld [vmem:[#allocation2 + $0x8] sm:$0x33]
        %v2124 = vld [vmem:[#allocation2 + $0x10] sm:$0x3]
        %v2125 = vld [vmem:[%s3] sm:$0xf]
        %v2126 = vld [vmem:[%s3 + $0x4] sm:$0xf]
        %v2127 = vld [vmem:[%s3 + $0x8] sm:$0xf]
        %v2128 = vld [vmem:[%s3 + $0xc] sm:$0xf]
        %v2129 = vld [vmem:[%s3 + $0x10] sm:$0xf]
        %v2130 = vld [vmem:[%s3 + $0x14] sm:$0xf]
        %v2131 = vld [vmem:[%s3 + $0x18] sm:$0xf]
        %v2132 = vld [vmem:[%s3 + $0x1c] sm:$0xf]
        %v2133 = vld [vmem:[%s3 + $0x20] sm:$0xf]
        %v2134 = vld [vmem:[%s3 + $0x24] sm:$0xf]
        %v2135 = vld [vmem:[%s3 + $0x28] sm:$0xf]
        %v2136 = vld [vmem:[%s3 + $0x2c] sm:$0xf]
        %v2137 = vld [vmem:[%s3 + $0x30] sm:$0xf]
        %v2138 = vld [vmem:[%s3 + $0x34] sm:$0xf]
        %v2139 = vld [vmem:[%s3 + $0x38] sm:$0xf]
        %v2140 = vld [vmem:[%s3 + $0x3c] sm:$0xf]
        %v2141 = vld [vmem:[%s3 + $0x40] sm:$0xf]
        %v2142 = vld [vmem:[%s3 + $0x44] sm:$0xf]
        %v2143 = vld [vmem:[%s3 + $0x48] sm:$0xf]
        %v2144 = vld [vmem:[%s3 + $0x4c] sm:$0xf]
        %v2145 = vld [vmem:[%s3 + $0x50] sm:$0xf]
        %v2146 = vld [vmem:[%s3 + $0x54] sm:$0xf]
        %v2147 = vld [vmem:[%s3 + $0x58] sm:$0xf]
        %v2148 = vld [vmem:[%s3 + $0x5c] sm:$0xf]
        %v2149 = vld [vmem:[%s3 + $0x60] sm:$0xf]
        %v2150 = vld [vmem:[%s3 + $0x64] sm:$0xf]
        %v2151 = vld [vmem:[%s3 + $0x68] sm:$0xf]
        %v2152 = vld [vmem:[%s3 + $0x6c] sm:$0xf]
        %v2153 = vld [vmem:[%s3 + $0x70] sm:$0xf]
        %v2154 = vld [vmem:[%s3 + $0x74] sm:$0xf]
        %v2155 = vld [vmem:[%s3 + $0x78] sm:$0xf]
        %v2156 = vld [vmem:[%s3 + $0x7c] sm:$0xf]
        %v2157 = vld [vmem:[%s3 + $0x80] sm:$0xf]
        %v2158 = vld [vmem:[%s3 + $0x84] sm:$0xf]
        %v2159 = vld [vmem:[%s3 + $0x88] sm:$0xf]
        %v2160 = vld [vmem:[%s3 + $0x8c] sm:$0xf]
        %v2161 = vld [vmem:[%s3 + $0x90] sm:$0xf]
        %v2162 = vld [vmem:[%s3 + $0x94] sm:$0xf]
        %v2163 = vld [vmem:[%s3 + $0x98] sm:$0xf]
        %v2164 = vld [vmem:[%s3 + $0x9c] sm:$0xf]
        %v2165 = vld [vmem:[%s3 + $0xa0] sm:$0xf]
        %v2166 = vld [vmem:[%s3 + $0xa4] sm:$0xf]
        %v2167 = vld [vmem:[%s3 + $0xa8] sm:$0xf]
        %v2168 = vld [vmem:[%s3 + $0xac] sm:$0xf]
        %v2169 = vld [vmem:[%s3 + $0xb0] sm:$0xf]
        %v2170 = vld [vmem:[%s3 + $0xb4] sm:$0xf]
        %v2171 = vld [vmem:[%s3 + $0xb8] sm:$0xf]
        %v2172 = vld [vmem:[%s3 + $0xbc] sm:$0xf]
        %v2173 = vld [vmem:[%s3 + $0xc0] sm:$0xf]
        %v2174 = vld [vmem:[%s3 + $0xc4] sm:$0xf]
        %v2175 = vld [vmem:[%s3 + $0xc8] sm:$0xf]
        %v2176 = vld [vmem:[%s3 + $0xcc] sm:$0xf]
        %v2177 = vld [vmem:[%s3 + $0xd0] sm:$0xf]
        %v2178 = vld [vmem:[%s3 + $0xd4] sm:$0xf]
        %v2179 = vld [vmem:[%s3 + $0xd8] sm:$0xf]
        %v2180 = vld [vmem:[%s3 + $0xdc] sm:$0xf]
        %v2181 = vld [vmem:[%s3 + $0xe0] sm:$0xf]
        %v2182 = vld [vmem:[%s3 + $0xe4] sm:$0xf]
        %v2183 = vld [vmem:[%s3 + $0xe8] sm:$0xf]
        %v2184 = vld [vmem:[%s3 + $0xec] sm:$0xf]
        %v2185 = vld [vmem:[%s3 + $0xf0] sm:$0xf]
        %v2186 = vld [vmem:[%s3 + $0xf4] sm:$0xf]
        %v2187 = vld [vmem:[%s3 + $0xf8] sm:$0xf]
        %v2188 = vld [vmem:[%s3 + $0xfc] sm:$0xf]
        %v2189 = vld [vmem:[%s3 + $0x100] sm:$0xf]
        %v2190 = vld [vmem:[%s3 + $0x104] sm:$0xf]
        %v2191 = vld [vmem:[%s3 + $0x108] sm:$0xf]
        %v2192 = vld [vmem:[%s3 + $0x10c] sm:$0xf]
        %v2193 = vld [vmem:[%s3 + $0x110] sm:$0xf]
        %v2194 = vld [vmem:[%s3 + $0x114] sm:$0xf]
        %v2195 = vld [vmem:[%s3 + $0x118] sm:$0xf]
        %v2196 = vld [vmem:[%s3 + $0x11c] sm:$0xf]
        %v2197 = vld [vmem:[%s3 + $0x120] sm:$0xf]
        %v2198 = vld [vmem:[%s3 + $0x124] sm:$0xf]
        %v2199 = vld [vmem:[%s3 + $0x128] sm:$0xf]
        %v2200 = vld [vmem:[%s3 + $0x12c] sm:$0xf]
        %v2201 = vld [vmem:[%s3 + $0x130] sm:$0xf]
        %v2202 = vld [vmem:[%s3 + $0x134] sm:$0xf]
        %v2203 = vld [vmem:[%s3 + $0x138] sm:$0xf]
        %v2204 = vld [vmem:[%s3 + $0x13c] sm:$0xf]
        %v2205 = vld [vmem:[%s1091] sm:$0x33]
        %v2206 = vld [vmem:[%s1091 + $0x8] sm:$0x33]
        %v2207 = vld [vmem:[%s1091 + $0x10] sm:$0x3]
        %s2208 = scalar_lea.vmem %s3, 320
        %v2209 = vld [vmem:[%s2208] sm:$0xf]
        %v2210 = vld [vmem:[%s2208 + $0x4] sm:$0xf]
        %v2211 = vld [vmem:[%s2208 + $0x8] sm:$0xf]
        %v2212 = vld [vmem:[%s2208 + $0xc] sm:$0xf]
        %v2213 = vld [vmem:[%s2208 + $0x10] sm:$0xf]
        %v2214 = vld [vmem:[%s2208 + $0x14] sm:$0xf]
        %v2215 = vld [vmem:[%s2208 + $0x18] sm:$0xf]
        %v2216 = vld [vmem:[%s2208 + $0x1c] sm:$0xf]
        %v2217 = vld [vmem:[%s2208 + $0x20] sm:$0xf]
        %v2218 = vld [vmem:[%s2208 + $0x24] sm:$0xf]
        %v2219 = vld [vmem:[%s2208 + $0x28] sm:$0xf]
        %v2220 = vld [vmem:[%s2208 + $0x2c] sm:$0xf]
        %v2221 = vld [vmem:[%s2208 + $0x30] sm:$0xf]
        %v2222 = vld [vmem:[%s2208 + $0x34] sm:$0xf]
        %v2223 = vld [vmem:[%s2208 + $0x38] sm:$0xf]
        %v2224 = vld [vmem:[%s2208 + $0x3c] sm:$0xf]
        %v2225 = vld [vmem:[%s2208 + $0x40] sm:$0xf]
        %v2226 = vld [vmem:[%s2208 + $0x44] sm:$0xf]
        %v2227 = vld [vmem:[%s2208 + $0x48] sm:$0xf]
        %v2228 = vld [vmem:[%s2208 + $0x4c] sm:$0xf]
        %v2229 = vld [vmem:[%s2208 + $0x50] sm:$0xf]
        %v2230 = vld [vmem:[%s2208 + $0x54] sm:$0xf]
        %v2231 = vld [vmem:[%s2208 + $0x58] sm:$0xf]
        %v2232 = vld [vmem:[%s2208 + $0x5c] sm:$0xf]
        %v2233 = vld [vmem:[%s2208 + $0x60] sm:$0xf]
        %v2234 = vld [vmem:[%s2208 + $0x64] sm:$0xf]
        %v2235 = vld [vmem:[%s2208 + $0x68] sm:$0xf]
        %v2236 = vld [vmem:[%s2208 + $0x6c] sm:$0xf]
        %v2237 = vld [vmem:[%s2208 + $0x70] sm:$0xf]
        %v2238 = vld [vmem:[%s2208 + $0x74] sm:$0xf]
        %v2239 = vld [vmem:[%s2208 + $0x78] sm:$0xf]
        %v2240 = vld [vmem:[%s2208 + $0x7c] sm:$0xf]
        %v2241 = vld [vmem:[%s2208 + $0x80] sm:$0xf]
        %v2242 = vld [vmem:[%s2208 + $0x84] sm:$0xf]
        %v2243 = vld [vmem:[%s2208 + $0x88] sm:$0xf]
        %v2244 = vld [vmem:[%s2208 + $0x8c] sm:$0xf]
        %v2245 = vld [vmem:[%s2208 + $0x90] sm:$0xf]
        %v2246 = vld [vmem:[%s2208 + $0x94] sm:$0xf]
        %v2247 = vld [vmem:[%s2208 + $0x98] sm:$0xf]
        %v2248 = vld [vmem:[%s2208 + $0x9c] sm:$0xf]
        %v2249 = vld [vmem:[%s2208 + $0xa0] sm:$0xf]
        %v2250 = vld [vmem:[%s2208 + $0xa4] sm:$0xf]
        %v2251 = vld [vmem:[%s2208 + $0xa8] sm:$0xf]
        %v2252 = vld [vmem:[%s2208 + $0xac] sm:$0xf]
        %v2253 = vld [vmem:[%s2208 + $0xb0] sm:$0xf]
        %v2254 = vld [vmem:[%s2208 + $0xb4] sm:$0xf]
        %v2255 = vld [vmem:[%s2208 + $0xb8] sm:$0xf]
        %v2256 = vld [vmem:[%s2208 + $0xbc] sm:$0xf]
        %v2257 = vld [vmem:[%s2208 + $0xc0] sm:$0xf]
        %v2258 = vld [vmem:[%s2208 + $0xc4] sm:$0xf]
        %v2259 = vld [vmem:[%s2208 + $0xc8] sm:$0xf]
        %v2260 = vld [vmem:[%s2208 + $0xcc] sm:$0xf]
        %v2261 = vld [vmem:[%s2208 + $0xd0] sm:$0xf]
        %v2262 = vld [vmem:[%s2208 + $0xd4] sm:$0xf]
        %v2263 = vld [vmem:[%s2208 + $0xd8] sm:$0xf]
        %v2264 = vld [vmem:[%s2208 + $0xdc] sm:$0xf]
        %v2265 = vld [vmem:[%s2208 + $0xe0] sm:$0xf]
        %v2266 = vld [vmem:[%s2208 + $0xe4] sm:$0xf]
        %v2267 = vld [vmem:[%s2208 + $0xe8] sm:$0xf]
        %v2268 = vld [vmem:[%s2208 + $0xec] sm:$0xf]
        %v2269 = vld [vmem:[%s2208 + $0xf0] sm:$0xf]
        %v2270 = vld [vmem:[%s2208 + $0xf4] sm:$0xf]
        %v2271 = vld [vmem:[%s2208 + $0xf8] sm:$0xf]
        %v2272 = vld [vmem:[%s2208 + $0xfc] sm:$0xf]
        %v2273 = vld [vmem:[%s2208 + $0x100] sm:$0xf]
        %v2274 = vld [vmem:[%s2208 + $0x104] sm:$0xf]
        %v2275 = vld [vmem:[%s2208 + $0x108] sm:$0xf]
        %v2276 = vld [vmem:[%s2208 + $0x10c] sm:$0xf]
        %v2277 = vld [vmem:[%s2208 + $0x110] sm:$0xf]
        %v2278 = vld [vmem:[%s2208 + $0x114] sm:$0xf]
        %v2279 = vld [vmem:[%s2208 + $0x118] sm:$0xf]
        %v2280 = vld [vmem:[%s2208 + $0x11c] sm:$0xf]
        %v2281 = vld [vmem:[%s2208 + $0x120] sm:$0xf]
        %v2282 = vld [vmem:[%s2208 + $0x124] sm:$0xf]
        %v2283 = vld [vmem:[%s2208 + $0x128] sm:$0xf]
        %v2284 = vld [vmem:[%s2208 + $0x12c] sm:$0xf]
        %v2285 = vld [vmem:[%s2208 + $0x130] sm:$0xf]
        %v2286 = vld [vmem:[%s2208 + $0x134] sm:$0xf]
        %v2287 = vld [vmem:[%s2208 + $0x138] sm:$0xf]
        %v2288 = vld [vmem:[%s2208 + $0x13c] sm:$0xf]
        %v2292 = vunpack.c.l.b16 %v2205
        %v2293 = vunpack.c.h.b16 %v2205
        %v2294 = vunpack.c.l.b16 %v2206
        %v2295 = vunpack.c.h.b16 %v2206
        %v2296 = vunpack.c.l.b16 %v2207
        %v2297 = vpack.c.b16 %v2292, %v2292
        %v2298 = vpack.c.b16 %v2293, %v2293
        %v2299 = vpack.c.b16 %v2294, %v2294
        %v2300 = vpack.c.b16 %v2295, %v2295
        %v2301 = vpack.c.b16 %v2296, %v2296
        %v2387 = vunpack.c.l.b16 %v2209
        %v2388 = vunpack.c.l.b16 %v2210
        %v2389 = vunpack.c.l.b16 %v2211
        %v2390 = vunpack.c.l.b16 %v2212
        %v2391 = vunpack.c.l.b16 %v2213
        %v2392 = vunpack.c.l.b16 %v2214
        %v2393 = vunpack.c.l.b16 %v2215
        %v2394 = vunpack.c.l.b16 %v2216
        %v2395 = vunpack.c.l.b16 %v2217
        %v2396 = vunpack.c.l.b16 %v2218
        %v2397 = vunpack.c.l.b16 %v2219
        %v2398 = vunpack.c.l.b16 %v2220
        %v2399 = vunpack.c.l.b16 %v2221
        %v2400 = vunpack.c.l.b16 %v2222
        %v2401 = vunpack.c.l.b16 %v2223
        %v2402 = vunpack.c.l.b16 %v2224
        %v2403 = vunpack.c.l.b16 %v2225
        %v2404 = vunpack.c.l.b16 %v2226
        %v2405 = vunpack.c.l.b16 %v2227
        %v2406 = vunpack.c.l.b16 %v2228
        %v2407 = vunpack.c.l.b16 %v2229
        %v2408 = vunpack.c.l.b16 %v2230
        %v2409 = vunpack.c.l.b16 %v2231
        %v2410 = vunpack.c.l.b16 %v2232
        %v2411 = vunpack.c.l.b16 %v2233
        %v2412 = vunpack.c.l.b16 %v2234
        %v2413 = vunpack.c.l.b16 %v2235
        %v2414 = vunpack.c.l.b16 %v2236
        %v2415 = vunpack.c.l.b16 %v2237
        %v2416 = vunpack.c.l.b16 %v2238
        %v2417 = vunpack.c.l.b16 %v2239
        %v2418 = vunpack.c.l.b16 %v2240
        %v2419 = vunpack.c.l.b16 %v2241
        %v2420 = vunpack.c.l.b16 %v2242
        %v2421 = vunpack.c.l.b16 %v2243
        %v2422 = vunpack.c.l.b16 %v2244
        %v2423 = vunpack.c.l.b16 %v2245
        %v2424 = vunpack.c.l.b16 %v2246
        %v2425 = vunpack.c.l.b16 %v2247
        %v2426 = vunpack.c.l.b16 %v2248
        %v2427 = vunpack.c.l.b16 %v2249
        %v2428 = vunpack.c.l.b16 %v2250
        %v2429 = vunpack.c.l.b16 %v2251
        %v2430 = vunpack.c.l.b16 %v2252
        %v2431 = vunpack.c.l.b16 %v2253
        %v2432 = vunpack.c.l.b16 %v2254
        %v2433 = vunpack.c.l.b16 %v2255
        %v2434 = vunpack.c.l.b16 %v2256
        %v2435 = vunpack.c.l.b16 %v2257
        %v2436 = vunpack.c.l.b16 %v2258
        %v2437 = vunpack.c.l.b16 %v2259
        %v2438 = vunpack.c.l.b16 %v2260
        %v2439 = vunpack.c.l.b16 %v2261
        %v2440 = vunpack.c.l.b16 %v2262
        %v2441 = vunpack.c.l.b16 %v2263
        %v2442 = vunpack.c.l.b16 %v2264
        %v2443 = vunpack.c.l.b16 %v2265
        %v2444 = vunpack.c.l.b16 %v2266
        %v2445 = vunpack.c.l.b16 %v2267
        %v2446 = vunpack.c.l.b16 %v2268
        %v2447 = vunpack.c.l.b16 %v2269
        %v2448 = vunpack.c.l.b16 %v2270
        %v2449 = vunpack.c.l.b16 %v2271
        %v2450 = vunpack.c.l.b16 %v2272
        %v2451 = vunpack.c.l.b16 %v2273
        %v2452 = vunpack.c.l.b16 %v2274
        %v2453 = vunpack.c.l.b16 %v2275
        %v2454 = vunpack.c.l.b16 %v2276
        %v2455 = vunpack.c.l.b16 %v2277
        %v2456 = vunpack.c.l.b16 %v2278
        %v2457 = vunpack.c.l.b16 %v2279
        %v2458 = vunpack.c.l.b16 %v2280
        %v2459 = vunpack.c.l.b16 %v2281
        %v2460 = vunpack.c.l.b16 %v2282
        %v2461 = vunpack.c.l.b16 %v2283
        %v2462 = vunpack.c.l.b16 %v2284
        %v2463 = vunpack.c.l.b16 %v2285
        %v2464 = vunpack.c.l.b16 %v2286
        %v2465 = vunpack.c.l.b16 %v2287
        %v2466 = vunpack.c.l.b16 %v2288
        %v2467 = vpack.c.b16 %v2388, %v2387
        %v2468 = vpack.c.b16 %v2390, %v2389
        %v2469 = vpack.c.b16 %v2392, %v2391
        %v2470 = vpack.c.b16 %v2394, %v2393
        %v2471 = vpack.c.b16 %v2396, %v2395
        %v2472 = vpack.c.b16 %v2398, %v2397
        %v2473 = vpack.c.b16 %v2400, %v2399
        %v2474 = vpack.c.b16 %v2402, %v2401
        %v2475 = vpack.c.b16 %v2404, %v2403
        %v2476 = vpack.c.b16 %v2406, %v2405
        %v2477 = vpack.c.b16 %v2408, %v2407
        %v2478 = vpack.c.b16 %v2410, %v2409
        %v2479 = vpack.c.b16 %v2412, %v2411
        %v2480 = vpack.c.b16 %v2414, %v2413
        %v2481 = vpack.c.b16 %v2416, %v2415
        %v2482 = vpack.c.b16 %v2418, %v2417
        %v2483 = vpack.c.b16 %v2420, %v2419
        %v2484 = vpack.c.b16 %v2422, %v2421
        %v2485 = vpack.c.b16 %v2424, %v2423
        %v2486 = vpack.c.b16 %v2426, %v2425
        %v2487 = vpack.c.b16 %v2428, %v2427
        %v2488 = vpack.c.b16 %v2430, %v2429
        %v2489 = vpack.c.b16 %v2432, %v2431
        %v2490 = vpack.c.b16 %v2434, %v2433
        %v2491 = vpack.c.b16 %v2436, %v2435
        %v2492 = vpack.c.b16 %v2438, %v2437
        %v2493 = vpack.c.b16 %v2440, %v2439
        %v2494 = vpack.c.b16 %v2442, %v2441
        %v2495 = vpack.c.b16 %v2444, %v2443
        %v2496 = vpack.c.b16 %v2446, %v2445
        %v2497 = vpack.c.b16 %v2448, %v2447
        %v2498 = vpack.c.b16 %v2450, %v2449
        %v2499 = vpack.c.b16 %v2452, %v2451
        %v2500 = vpack.c.b16 %v2454, %v2453
        %v2501 = vpack.c.b16 %v2456, %v2455
        %v2502 = vpack.c.b16 %v2458, %v2457
        %v2503 = vpack.c.b16 %v2460, %v2459
        %v2504 = vpack.c.b16 %v2462, %v2461
        %v2505 = vpack.c.b16 %v2464, %v2463
        %v2506 = vpack.c.b16 %v2466, %v2465
        %2547 = vmatprep.subr.bf16.mxu0 0
        %2548 = vmatpush1.bf16.msra.mxu0 %v2474
        %2549 = vmatprep.subr.bf16.mxu0 0
        %2550 = vmatpush1.bf16.msra.mxu0 %v2473
        %2551 = vmatprep.subr.bf16.mxu0 0
        %2552 = vmatpush1.bf16.msra.mxu0 %v2472
        %2553 = vmatprep.subr.bf16.mxu0 0
        %2554 = vmatpush1.bf16.msra.mxu0 %v2471
        %2555 = vmatprep.subr.bf16.mxu0 0
        %2556 = vmatpush1.bf16.msra.mxu0 %v2470
        %2557 = vmatprep.subr.bf16.mxu0 0
        %2558 = vmatpush1.bf16.msra.mxu0 %v2469
        %2559 = vmatprep.subr.bf16.mxu0 0
        %2560 = vmatpush1.bf16.msra.mxu0 %v2468
        %2561 = vmatprep.subr.bf16.mxu0 0
        %2562 = vmatpush1.bf16.msra.mxu0 %v2467
        %2563 = vmatprep.subr.bf16.mxu0 0
        %2564 = vmatpush2.bf16.msra.mxu0 %v2482
        %2565 = vmatprep.subr.bf16.mxu0 0
        %2566 = vmatpush2.bf16.msra.mxu0 %v2481
        %2567 = vmatprep.subr.bf16.mxu0 0
        %2568 = vmatpush2.bf16.msra.mxu0 %v2480
        %2569 = vmatprep.subr.bf16.mxu0 0
        %2570 = vmatpush2.bf16.msra.mxu0 %v2479
        %2571 = vmatprep.subr.bf16.mxu0 0
        %2572 = vmatpush2.bf16.msra.mxu0 %v2478
        %2573 = vmatprep.subr.bf16.mxu0 0
        %2574 = vmatpush2.bf16.msra.mxu0 %v2477
        %2575 = vmatprep.subr.bf16.mxu0 0
        %2576 = vmatpush2.bf16.msra.mxu0 %v2476
        %2577 = vmatprep.subr.bf16.mxu0 0
        %2578 = vmatpush2.bf16.msra.mxu0 %v2475
        %2579 = vmatprep.mubr.bf16.mxu0 %v2298
        %2580 = vmatmul.mubr.bf16.gmra.mxu0 %v2297
        %v2581 = vpop.f32.mrf.mxu0
        %v2582 = vadd.f32 0.0, %v2581
        %v2583 = vpop.f32.mrf.mxu0
        %v2584 = vpop.f32.mrf.mxu0
        %v2585 = vpop.f32.mrf.mxu0
        %2586 = vdwg.mxu0
        %2587 = vmatprep.subr.bf16.mxu0 0
        %2588 = vmatpush1.bf16.msra.mxu0 %v2490
        %2589 = vmatprep.subr.bf16.mxu0 0
        %2590 = vmatpush1.bf16.msra.mxu0 %v2489
        %2591 = vmatprep.subr.bf16.mxu0 0
        %2592 = vmatpush1.bf16.msra.mxu0 %v2488
        %2593 = vmatprep.subr.bf16.mxu0 0
        %2594 = vmatpush1.bf16.msra.mxu0 %v2487
        %2595 = vmatprep.subr.bf16.mxu0 0
        %2596 = vmatpush1.bf16.msra.mxu0 %v2486
        %2597 = vmatprep.subr.bf16.mxu0 0
        %2598 = vmatpush1.bf16.msra.mxu0 %v2485
        %2599 = vmatprep.subr.bf16.mxu0 0
        %2600 = vmatpush1.bf16.msra.mxu0 %v2484
        %2601 = vmatprep.subr.bf16.mxu0 0
        %2602 = vmatpush1.bf16.msra.mxu0 %v2483
        %2603 = vmatprep.subr.bf16.mxu0 0
        %2604 = vmatpush2.bf16.msra.mxu0 %v2498
        %2605 = vmatprep.subr.bf16.mxu0 0
        %2606 = vmatpush2.bf16.msra.mxu0 %v2497
        %2607 = vmatprep.subr.bf16.mxu0 0
        %2608 = vmatpush2.bf16.msra.mxu0 %v2496
        %2609 = vmatprep.subr.bf16.mxu0 0
        %2610 = vmatpush2.bf16.msra.mxu0 %v2495
        %2611 = vmatprep.subr.bf16.mxu0 0
        %2612 = vmatpush2.bf16.msra.mxu0 %v2494
        %2613 = vmatprep.subr.bf16.mxu0 0
        %2614 = vmatpush2.bf16.msra.mxu0 %v2493
        %2615 = vmatprep.subr.bf16.mxu0 0
        %2616 = vmatpush2.bf16.msra.mxu0 %v2492
        %2617 = vmatprep.subr.bf16.mxu0 0
        %2618 = vmatpush2.bf16.msra.mxu0 %v2491
        %2619 = vmatprep.mubr.bf16.mxu0 %v2300
        %2620 = vmatmul.mubr.bf16.gmra.mxu0 %v2299
        %v2621 = vpop.f32.mrf.mxu0
        %v2622 = vadd.f32 %v2582, %v2621
        %v2623 = vpop.f32.mrf.mxu0
        %v2624 = vpop.f32.mrf.mxu0
        %v2625 = vpop.f32.mrf.mxu0
        %2626 = vdwg.mxu0
        %2627 = vmatprep.subr.bf16.mxu0 0
        %2628 = vmatpush1.bf16.msra.mxu0 %v2506
        %2629 = vmatprep.subr.bf16.mxu0 0
        %2630 = vmatpush1.bf16.msra.mxu0 %v2505
        %2631 = vmatprep.subr.bf16.mxu0 0
        %2632 = vmatpush1.bf16.msra.mxu0 %v2504
        %2633 = vmatprep.subr.bf16.mxu0 0
        %2634 = vmatpush1.bf16.msra.mxu0 %v2503
        %2635 = vmatprep.subr.bf16.mxu0 0
        %2636 = vmatpush1.bf16.msra.mxu0 %v2502
        %2637 = vmatprep.subr.bf16.mxu0 0
        %2638 = vmatpush1.bf16.msra.mxu0 %v2501
        %2639 = vmatprep.subr.bf16.mxu0 0
        %2640 = vmatpush1.bf16.msra.mxu0 %v2500
        %2641 = vmatprep.subr.bf16.mxu0 0
        %2642 = vmatpush1.bf16.msra.mxu0 %v2499
        %2643 = vmatprep.subr.bf16.mxu0 0
        %2644 = vmatpush2.bf16.msra.mxu0 0
        %2645 = vmatprep.subr.bf16.mxu0 0
        %2646 = vmatpush2.bf16.msra.mxu0 0
        %2647 = vmatprep.subr.bf16.mxu0 0
        %2648 = vmatpush2.bf16.msra.mxu0 0
        %2649 = vmatprep.subr.bf16.mxu0 0
        %2650 = vmatpush2.bf16.msra.mxu0 0
        %2651 = vmatprep.subr.bf16.mxu0 0
        %2652 = vmatpush2.bf16.msra.mxu0 0
        %2653 = vmatprep.subr.bf16.mxu0 0
        %2654 = vmatpush2.bf16.msra.mxu0 0
        %2655 = vmatprep.subr.bf16.mxu0 0
        %2656 = vmatpush2.bf16.msra.mxu0 0
        %2657 = vmatprep.subr.bf16.mxu0 0
        %2658 = vmatpush2.bf16.msra.mxu0 0
        %2659 = vmatprep.mubr.bf16.mxu0 0
        %2660 = vmatmul.mubr.bf16.gmra.mxu0 %v2301
        %v2661 = vpop.f32.mrf.mxu0
        %v2662 = vadd.f32 %v2622, %v2661
        %v2663 = vpop.f32.mrf.mxu0
        %v2664 = vpop.f32.mrf.mxu0
        %v2665 = vpop.f32.mrf.mxu0
        %2666 = vdwg.mxu0
        %v2670 = vunpack.c.l.b16 %v2122
        %v2671 = vunpack.c.h.b16 %v2122
        %v2672 = vunpack.c.l.b16 %v2123
        %v2673 = vunpack.c.h.b16 %v2123
        %v2674 = vunpack.c.l.b16 %v2124
        %v2675 = vpack.c.b16 %v2670, %v2670
        %v2676 = vpack.c.b16 %v2671, %v2671
        %v2677 = vpack.c.b16 %v2672, %v2672
        %v2678 = vpack.c.b16 %v2673, %v2673
        %v2679 = vpack.c.b16 %v2674, %v2674
        %v2765 = vunpack.c.l.b16 %v2125
        %v2766 = vunpack.c.l.b16 %v2126
        %v2767 = vunpack.c.l.b16 %v2127
        %v2768 = vunpack.c.l.b16 %v2128
        %v2769 = vunpack.c.l.b16 %v2129
        %v2770 = vunpack.c.l.b16 %v2130
        %v2771 = vunpack.c.l.b16 %v2131
        %v2772 = vunpack.c.l.b16 %v2132
        %v2773 = vunpack.c.l.b16 %v2133
        %v2774 = vunpack.c.l.b16 %v2134
        %v2775 = vunpack.c.l.b16 %v2135
        %v2776 = vunpack.c.l.b16 %v2136
        %v2777 = vunpack.c.l.b16 %v2137
        %v2778 = vunpack.c.l.b16 %v2138
        %v2779 = vunpack.c.l.b16 %v2139
        %v2780 = vunpack.c.l.b16 %v2140
        %v2781 = vunpack.c.l.b16 %v2141
        %v2782 = vunpack.c.l.b16 %v2142
        %v2783 = vunpack.c.l.b16 %v2143
        %v2784 = vunpack.c.l.b16 %v2144
        %v2785 = vunpack.c.l.b16 %v2145
        %v2786 = vunpack.c.l.b16 %v2146
        %v2787 = vunpack.c.l.b16 %v2147
        %v2788 = vunpack.c.l.b16 %v2148
        %v2789 = vunpack.c.l.b16 %v2149
        %v2790 = vunpack.c.l.b16 %v2150
        %v2791 = vunpack.c.l.b16 %v2151
        %v2792 = vunpack.c.l.b16 %v2152
        %v2793 = vunpack.c.l.b16 %v2153
        %v2794 = vunpack.c.l.b16 %v2154
        %v2795 = vunpack.c.l.b16 %v2155
        %v2796 = vunpack.c.l.b16 %v2156
        %v2797 = vunpack.c.l.b16 %v2157
        %v2798 = vunpack.c.l.b16 %v2158
        %v2799 = vunpack.c.l.b16 %v2159
        %v2800 = vunpack.c.l.b16 %v2160
        %v2801 = vunpack.c.l.b16 %v2161
        %v2802 = vunpack.c.l.b16 %v2162
        %v2803 = vunpack.c.l.b16 %v2163
        %v2804 = vunpack.c.l.b16 %v2164
        %v2805 = vunpack.c.l.b16 %v2165
        %v2806 = vunpack.c.l.b16 %v2166
        %v2807 = vunpack.c.l.b16 %v2167
        %v2808 = vunpack.c.l.b16 %v2168
        %v2809 = vunpack.c.l.b16 %v2169
        %v2810 = vunpack.c.l.b16 %v2170
        %v2811 = vunpack.c.l.b16 %v2171
        %v2812 = vunpack.c.l.b16 %v2172
        %v2813 = vunpack.c.l.b16 %v2173
        %v2814 = vunpack.c.l.b16 %v2174
        %v2815 = vunpack.c.l.b16 %v2175
        %v2816 = vunpack.c.l.b16 %v2176
        %v2817 = vunpack.c.l.b16 %v2177
        %v2818 = vunpack.c.l.b16 %v2178
        %v2819 = vunpack.c.l.b16 %v2179
        %v2820 = vunpack.c.l.b16 %v2180
        %v2821 = vunpack.c.l.b16 %v2181
        %v2822 = vunpack.c.l.b16 %v2182
        %v2823 = vunpack.c.l.b16 %v2183
        %v2824 = vunpack.c.l.b16 %v2184
        %v2825 = vunpack.c.l.b16 %v2185
        %v2826 = vunpack.c.l.b16 %v2186
        %v2827 = vunpack.c.l.b16 %v2187
        %v2828 = vunpack.c.l.b16 %v2188
        %v2829 = vunpack.c.l.b16 %v2189
        %v2830 = vunpack.c.l.b16 %v2190
        %v2831 = vunpack.c.l.b16 %v2191
        %v2832 = vunpack.c.l.b16 %v2192
        %v2833 = vunpack.c.l.b16 %v2193
        %v2834 = vunpack.c.l.b16 %v2194
        %v2835 = vunpack.c.l.b16 %v2195
        %v2836 = vunpack.c.l.b16 %v2196
        %v2837 = vunpack.c.l.b16 %v2197
        %v2838 = vunpack.c.l.b16 %v2198
        %v2839 = vunpack.c.l.b16 %v2199
        %v2840 = vunpack.c.l.b16 %v2200
        %v2841 = vunpack.c.l.b16 %v2201
        %v2842 = vunpack.c.l.b16 %v2202
        %v2843 = vunpack.c.l.b16 %v2203
        %v2844 = vunpack.c.l.b16 %v2204
        %v2845 = vpack.c.b16 %v2766, %v2765
        %v2846 = vpack.c.b16 %v2768, %v2767
        %v2847 = vpack.c.b16 %v2770, %v2769
        %v2848 = vpack.c.b16 %v2772, %v2771
        %v2849 = vpack.c.b16 %v2774, %v2773
        %v2850 = vpack.c.b16 %v2776, %v2775
        %v2851 = vpack.c.b16 %v2778, %v2777
        %v2852 = vpack.c.b16 %v2780, %v2779
        %v2853 = vpack.c.b16 %v2782, %v2781
        %v2854 = vpack.c.b16 %v2784, %v2783
        %v2855 = vpack.c.b16 %v2786, %v2785
        %v2856 = vpack.c.b16 %v2788, %v2787
        %v2857 = vpack.c.b16 %v2790, %v2789
        %v2858 = vpack.c.b16 %v2792, %v2791
        %v2859 = vpack.c.b16 %v2794, %v2793
        %v2860 = vpack.c.b16 %v2796, %v2795
        %v2861 = vpack.c.b16 %v2798, %v2797
        %v2862 = vpack.c.b16 %v2800, %v2799
        %v2863 = vpack.c.b16 %v2802, %v2801
        %v2864 = vpack.c.b16 %v2804, %v2803
        %v2865 = vpack.c.b16 %v2806, %v2805
        %v2866 = vpack.c.b16 %v2808, %v2807
        %v2867 = vpack.c.b16 %v2810, %v2809
        %v2868 = vpack.c.b16 %v2812, %v2811
        %v2869 = vpack.c.b16 %v2814, %v2813
        %v2870 = vpack.c.b16 %v2816, %v2815
        %v2871 = vpack.c.b16 %v2818, %v2817
        %v2872 = vpack.c.b16 %v2820, %v2819
        %v2873 = vpack.c.b16 %v2822, %v2821
        %v2874 = vpack.c.b16 %v2824, %v2823
        %v2875 = vpack.c.b16 %v2826, %v2825
        %v2876 = vpack.c.b16 %v2828, %v2827
        %v2877 = vpack.c.b16 %v2830, %v2829
        %v2878 = vpack.c.b16 %v2832, %v2831
        %v2879 = vpack.c.b16 %v2834, %v2833
        %v2880 = vpack.c.b16 %v2836, %v2835
        %v2881 = vpack.c.b16 %v2838, %v2837
        %v2882 = vpack.c.b16 %v2840, %v2839
        %v2883 = vpack.c.b16 %v2842, %v2841
        %v2884 = vpack.c.b16 %v2844, %v2843
        %2925 = vmatprep.subr.bf16.mxu0 0
        %2926 = vmatpush1.bf16.msra.mxu0 %v2852
        %2927 = vmatprep.subr.bf16.mxu0 0
        %2928 = vmatpush1.bf16.msra.mxu0 %v2851
        %2929 = vmatprep.subr.bf16.mxu0 0
        %2930 = vmatpush1.bf16.msra.mxu0 %v2850
        %2931 = vmatprep.subr.bf16.mxu0 0
        %2932 = vmatpush1.bf16.msra.mxu0 %v2849
        %2933 = vmatprep.subr.bf16.mxu0 0
        %2934 = vmatpush1.bf16.msra.mxu0 %v2848
        %2935 = vmatprep.subr.bf16.mxu0 0
        %2936 = vmatpush1.bf16.msra.mxu0 %v2847
        %2937 = vmatprep.subr.bf16.mxu0 0
        %2938 = vmatpush1.bf16.msra.mxu0 %v2846
        %2939 = vmatprep.subr.bf16.mxu0 0
        %2940 = vmatpush1.bf16.msra.mxu0 %v2845
        %2941 = vmatprep.subr.bf16.mxu0 0
        %2942 = vmatpush2.bf16.msra.mxu0 %v2860
        %2943 = vmatprep.subr.bf16.mxu0 0
        %2944 = vmatpush2.bf16.msra.mxu0 %v2859
        %2945 = vmatprep.subr.bf16.mxu0 0
        %2946 = vmatpush2.bf16.msra.mxu0 %v2858
        %2947 = vmatprep.subr.bf16.mxu0 0
        %2948 = vmatpush2.bf16.msra.mxu0 %v2857
        %2949 = vmatprep.subr.bf16.mxu0 0
        %2950 = vmatpush2.bf16.msra.mxu0 %v2856
        %2951 = vmatprep.subr.bf16.mxu0 0
        %2952 = vmatpush2.bf16.msra.mxu0 %v2855
        %2953 = vmatprep.subr.bf16.mxu0 0
        %2954 = vmatpush2.bf16.msra.mxu0 %v2854
        %2955 = vmatprep.subr.bf16.mxu0 0
        %2956 = vmatpush2.bf16.msra.mxu0 %v2853
        %2957 = vmatprep.mubr.bf16.mxu0 %v2676
        %2958 = vmatmul.mubr.bf16.gmra.mxu0 %v2675
        %v2959 = vpop.f32.mrf.mxu0
        %v2960 = vadd.f32 %v2662, %v2959
        %v2961 = vpop.f32.mrf.mxu0
        %v2962 = vpop.f32.mrf.mxu0
        %v2963 = vpop.f32.mrf.mxu0
        %2964 = vdwg.mxu0
        %2965 = vmatprep.subr.bf16.mxu0 0
        %2966 = vmatpush1.bf16.msra.mxu0 %v2868
        %2967 = vmatprep.subr.bf16.mxu0 0
        %2968 = vmatpush1.bf16.msra.mxu0 %v2867
        %2969 = vmatprep.subr.bf16.mxu0 0
        %2970 = vmatpush1.bf16.msra.mxu0 %v2866
        %2971 = vmatprep.subr.bf16.mxu0 0
        %2972 = vmatpush1.bf16.msra.mxu0 %v2865
        %2973 = vmatprep.subr.bf16.mxu0 0
        %2974 = vmatpush1.bf16.msra.mxu0 %v2864
        %2975 = vmatprep.subr.bf16.mxu0 0
        %2976 = vmatpush1.bf16.msra.mxu0 %v2863
        %2977 = vmatprep.subr.bf16.mxu0 0
        %2978 = vmatpush1.bf16.msra.mxu0 %v2862
        %2979 = vmatprep.subr.bf16.mxu0 0
        %2980 = vmatpush1.bf16.msra.mxu0 %v2861
        %2981 = vmatprep.subr.bf16.mxu0 0
        %2982 = vmatpush2.bf16.msra.mxu0 %v2876
        %2983 = vmatprep.subr.bf16.mxu0 0
        %2984 = vmatpush2.bf16.msra.mxu0 %v2875
        %2985 = vmatprep.subr.bf16.mxu0 0
        %2986 = vmatpush2.bf16.msra.mxu0 %v2874
        %2987 = vmatprep.subr.bf16.mxu0 0
        %2988 = vmatpush2.bf16.msra.mxu0 %v2873
        %2989 = vmatprep.subr.bf16.mxu0 0
        %2990 = vmatpush2.bf16.msra.mxu0 %v2872
        %2991 = vmatprep.subr.bf16.mxu0 0
        %2992 = vmatpush2.bf16.msra.mxu0 %v2871
        %2993 = vmatprep.subr.bf16.mxu0 0
        %2994 = vmatpush2.bf16.msra.mxu0 %v2870
        %2995 = vmatprep.subr.bf16.mxu0 0
        %2996 = vmatpush2.bf16.msra.mxu0 %v2869
        %2997 = vmatprep.mubr.bf16.mxu0 %v2678
        %2998 = vmatmul.mubr.bf16.gmra.mxu0 %v2677
        %v2999 = vpop.f32.mrf.mxu0
        %v3000 = vadd.f32 %v2960, %v2999
        %v3001 = vpop.f32.mrf.mxu0
        %v3002 = vpop.f32.mrf.mxu0
        %v3003 = vpop.f32.mrf.mxu0
        %3004 = vdwg.mxu0
        %3005 = vmatprep.subr.bf16.mxu0 0
        %3006 = vmatpush1.bf16.msra.mxu0 %v2884
        %3007 = vmatprep.subr.bf16.mxu0 0
        %3008 = vmatpush1.bf16.msra.mxu0 %v2883
        %3009 = vmatprep.subr.bf16.mxu0 0
        %3010 = vmatpush1.bf16.msra.mxu0 %v2882
        %3011 = vmatprep.subr.bf16.mxu0 0
        %3012 = vmatpush1.bf16.msra.mxu0 %v2881
        %3013 = vmatprep.subr.bf16.mxu0 0
        %3014 = vmatpush1.bf16.msra.mxu0 %v2880
        %3015 = vmatprep.subr.bf16.mxu0 0
        %3016 = vmatpush1.bf16.msra.mxu0 %v2879
        %3017 = vmatprep.subr.bf16.mxu0 0
        %3018 = vmatpush1.bf16.msra.mxu0 %v2878
        %3019 = vmatprep.subr.bf16.mxu0 0
        %3020 = vmatpush1.bf16.msra.mxu0 %v2877
        %3021 = vmatprep.subr.bf16.mxu0 0
        %3022 = vmatpush2.bf16.msra.mxu0 0
        %3023 = vmatprep.subr.bf16.mxu0 0
        %3024 = vmatpush2.bf16.msra.mxu0 0
        %3025 = vmatprep.subr.bf16.mxu0 0
        %3026 = vmatpush2.bf16.msra.mxu0 0
        %3027 = vmatprep.subr.bf16.mxu0 0
        %3028 = vmatpush2.bf16.msra.mxu0 0
        %3029 = vmatprep.subr.bf16.mxu0 0
        %3030 = vmatpush2.bf16.msra.mxu0 0
        %3031 = vmatprep.subr.bf16.mxu0 0
        %3032 = vmatpush2.bf16.msra.mxu0 0
        %3033 = vmatprep.subr.bf16.mxu0 0
        %3034 = vmatpush2.bf16.msra.mxu0 0
        %3035 = vmatprep.subr.bf16.mxu0 0
        %3036 = vmatpush2.bf16.msra.mxu0 0
        %3037 = vmatprep.mubr.bf16.mxu0 0
        %3038 = vmatmul.mubr.bf16.gmra.mxu0 %v2679
        %v3039 = vpop.f32.mrf.mxu0
        %v3040 = vadd.f32 %v3000, %v3039
        %v3041 = vpop.f32.mrf.mxu0
        %v3042 = vpop.f32.mrf.mxu0
        %v3043 = vpop.f32.mrf.mxu0
        %3044 = vdwg.mxu0
        %v3045 = vld [vmem:[%s1347] sm:$0x33]
        %v3046 = vld [vmem:[%s1347 + $0x8] sm:$0x33]
        %v3047 = vld [vmem:[%s1347 + $0x10] sm:$0x3]
        %s3048 = scalar_lea.vmem %s3, 640
        %v3049 = vld [vmem:[%s3048] sm:$0xf]
        %v3050 = vld [vmem:[%s3048 + $0x4] sm:$0xf]
        %v3051 = vld [vmem:[%s3048 + $0x8] sm:$0xf]
        %v3052 = vld [vmem:[%s3048 + $0xc] sm:$0xf]
        %v3053 = vld [vmem:[%s3048 + $0x10] sm:$0xf]
        %v3054 = vld [vmem:[%s3048 + $0x14] sm:$0xf]
        %v3055 = vld [vmem:[%s3048 + $0x18] sm:$0xf]
        %v3056 = vld [vmem:[%s3048 + $0x1c] sm:$0xf]
        %v3057 = vld [vmem:[%s3048 + $0x20] sm:$0xf]
        %v3058 = vld [vmem:[%s3048 + $0x24] sm:$0xf]
        %v3059 = vld [vmem:[%s3048 + $0x28] sm:$0xf]
        %v3060 = vld [vmem:[%s3048 + $0x2c] sm:$0xf]
        %v3061 = vld [vmem:[%s3048 + $0x30] sm:$0xf]
        %v3062 = vld [vmem:[%s3048 + $0x34] sm:$0xf]
        %v3063 = vld [vmem:[%s3048 + $0x38] sm:$0xf]
        %v3064 = vld [vmem:[%s3048 + $0x3c] sm:$0xf]
        %v3065 = vld [vmem:[%s3048 + $0x40] sm:$0xf]
        %v3066 = vld [vmem:[%s3048 + $0x44] sm:$0xf]
        %v3067 = vld [vmem:[%s3048 + $0x48] sm:$0xf]
        %v3068 = vld [vmem:[%s3048 + $0x4c] sm:$0xf]
        %v3069 = vld [vmem:[%s3048 + $0x50] sm:$0xf]
        %v3070 = vld [vmem:[%s3048 + $0x54] sm:$0xf]
        %v3071 = vld [vmem:[%s3048 + $0x58] sm:$0xf]
        %v3072 = vld [vmem:[%s3048 + $0x5c] sm:$0xf]
        %v3073 = vld [vmem:[%s3048 + $0x60] sm:$0xf]
        %v3074 = vld [vmem:[%s3048 + $0x64] sm:$0xf]
        %v3075 = vld [vmem:[%s3048 + $0x68] sm:$0xf]
        %v3076 = vld [vmem:[%s3048 + $0x6c] sm:$0xf]
        %v3077 = vld [vmem:[%s3048 + $0x70] sm:$0xf]
        %v3078 = vld [vmem:[%s3048 + $0x74] sm:$0xf]
        %v3079 = vld [vmem:[%s3048 + $0x78] sm:$0xf]
        %v3080 = vld [vmem:[%s3048 + $0x7c] sm:$0xf]
        %v3081 = vld [vmem:[%s3048 + $0x80] sm:$0xf]
        %v3082 = vld [vmem:[%s3048 + $0x84] sm:$0xf]
        %v3083 = vld [vmem:[%s3048 + $0x88] sm:$0xf]
        %v3084 = vld [vmem:[%s3048 + $0x8c] sm:$0xf]
        %v3085 = vld [vmem:[%s3048 + $0x90] sm:$0xf]
        %v3086 = vld [vmem:[%s3048 + $0x94] sm:$0xf]
        %v3087 = vld [vmem:[%s3048 + $0x98] sm:$0xf]
        %v3088 = vld [vmem:[%s3048 + $0x9c] sm:$0xf]
        %v3089 = vld [vmem:[%s3048 + $0xa0] sm:$0xf]
        %v3090 = vld [vmem:[%s3048 + $0xa4] sm:$0xf]
        %v3091 = vld [vmem:[%s3048 + $0xa8] sm:$0xf]
        %v3092 = vld [vmem:[%s3048 + $0xac] sm:$0xf]
        %v3093 = vld [vmem:[%s3048 + $0xb0] sm:$0xf]
        %v3094 = vld [vmem:[%s3048 + $0xb4] sm:$0xf]
        %v3095 = vld [vmem:[%s3048 + $0xb8] sm:$0xf]
        %v3096 = vld [vmem:[%s3048 + $0xbc] sm:$0xf]
        %v3097 = vld [vmem:[%s3048 + $0xc0] sm:$0xf]
        %v3098 = vld [vmem:[%s3048 + $0xc4] sm:$0xf]
        %v3099 = vld [vmem:[%s3048 + $0xc8] sm:$0xf]
        %v3100 = vld [vmem:[%s3048 + $0xcc] sm:$0xf]
        %v3101 = vld [vmem:[%s3048 + $0xd0] sm:$0xf]
        %v3102 = vld [vmem:[%s3048 + $0xd4] sm:$0xf]
        %v3103 = vld [vmem:[%s3048 + $0xd8] sm:$0xf]
        %v3104 = vld [vmem:[%s3048 + $0xdc] sm:$0xf]
        %v3105 = vld [vmem:[%s3048 + $0xe0] sm:$0xf]
        %v3106 = vld [vmem:[%s3048 + $0xe4] sm:$0xf]
        %v3107 = vld [vmem:[%s3048 + $0xe8] sm:$0xf]
        %v3108 = vld [vmem:[%s3048 + $0xec] sm:$0xf]
        %v3109 = vld [vmem:[%s3048 + $0xf0] sm:$0xf]
        %v3110 = vld [vmem:[%s3048 + $0xf4] sm:$0xf]
        %v3111 = vld [vmem:[%s3048 + $0xf8] sm:$0xf]
        %v3112 = vld [vmem:[%s3048 + $0xfc] sm:$0xf]
        %v3113 = vld [vmem:[%s3048 + $0x100] sm:$0xf]
        %v3114 = vld [vmem:[%s3048 + $0x104] sm:$0xf]
        %v3115 = vld [vmem:[%s3048 + $0x108] sm:$0xf]
        %v3116 = vld [vmem:[%s3048 + $0x10c] sm:$0xf]
        %v3117 = vld [vmem:[%s3048 + $0x110] sm:$0xf]
        %v3118 = vld [vmem:[%s3048 + $0x114] sm:$0xf]
        %v3119 = vld [vmem:[%s3048 + $0x118] sm:$0xf]
        %v3120 = vld [vmem:[%s3048 + $0x11c] sm:$0xf]
        %v3121 = vld [vmem:[%s3048 + $0x120] sm:$0xf]
        %v3122 = vld [vmem:[%s3048 + $0x124] sm:$0xf]
        %v3123 = vld [vmem:[%s3048 + $0x128] sm:$0xf]
        %v3124 = vld [vmem:[%s3048 + $0x12c] sm:$0xf]
        %v3125 = vld [vmem:[%s3048 + $0x130] sm:$0xf]
        %v3126 = vld [vmem:[%s3048 + $0x134] sm:$0xf]
        %v3127 = vld [vmem:[%s3048 + $0x138] sm:$0xf]
        %v3128 = vld [vmem:[%s3048 + $0x13c] sm:$0xf]
        %v3132 = vunpack.c.l.b16 %v3045
        %v3133 = vunpack.c.h.b16 %v3045
        %v3134 = vunpack.c.l.b16 %v3046
        %v3135 = vunpack.c.h.b16 %v3046
        %v3136 = vunpack.c.l.b16 %v3047
        %v3137 = vpack.c.b16 %v3132, %v3132
        %v3138 = vpack.c.b16 %v3133, %v3133
        %v3139 = vpack.c.b16 %v3134, %v3134
        %v3140 = vpack.c.b16 %v3135, %v3135
        %v3141 = vpack.c.b16 %v3136, %v3136
        %v3227 = vunpack.c.l.b16 %v3049
        %v3228 = vunpack.c.l.b16 %v3050
        %v3229 = vunpack.c.l.b16 %v3051
        %v3230 = vunpack.c.l.b16 %v3052
        %v3231 = vunpack.c.l.b16 %v3053
        %v3232 = vunpack.c.l.b16 %v3054
        %v3233 = vunpack.c.l.b16 %v3055
        %v3234 = vunpack.c.l.b16 %v3056
        %v3235 = vunpack.c.l.b16 %v3057
        %v3236 = vunpack.c.l.b16 %v3058
        %v3237 = vunpack.c.l.b16 %v3059
        %v3238 = vunpack.c.l.b16 %v3060
        %v3239 = vunpack.c.l.b16 %v3061
        %v3240 = vunpack.c.l.b16 %v3062
        %v3241 = vunpack.c.l.b16 %v3063
        %v3242 = vunpack.c.l.b16 %v3064
        %v3243 = vunpack.c.l.b16 %v3065
        %v3244 = vunpack.c.l.b16 %v3066
        %v3245 = vunpack.c.l.b16 %v3067
        %v3246 = vunpack.c.l.b16 %v3068
        %v3247 = vunpack.c.l.b16 %v3069
        %v3248 = vunpack.c.l.b16 %v3070
        %v3249 = vunpack.c.l.b16 %v3071
        %v3250 = vunpack.c.l.b16 %v3072
        %v3251 = vunpack.c.l.b16 %v3073
        %v3252 = vunpack.c.l.b16 %v3074
        %v3253 = vunpack.c.l.b16 %v3075
        %v3254 = vunpack.c.l.b16 %v3076
        %v3255 = vunpack.c.l.b16 %v3077
        %v3256 = vunpack.c.l.b16 %v3078
        %v3257 = vunpack.c.l.b16 %v3079
        %v3258 = vunpack.c.l.b16 %v3080
        %v3259 = vunpack.c.l.b16 %v3081
        %v3260 = vunpack.c.l.b16 %v3082
        %v3261 = vunpack.c.l.b16 %v3083
        %v3262 = vunpack.c.l.b16 %v3084
        %v3263 = vunpack.c.l.b16 %v3085
        %v3264 = vunpack.c.l.b16 %v3086
        %v3265 = vunpack.c.l.b16 %v3087
        %v3266 = vunpack.c.l.b16 %v3088
        %v3267 = vunpack.c.l.b16 %v3089
        %v3268 = vunpack.c.l.b16 %v3090
        %v3269 = vunpack.c.l.b16 %v3091
        %v3270 = vunpack.c.l.b16 %v3092
        %v3271 = vunpack.c.l.b16 %v3093
        %v3272 = vunpack.c.l.b16 %v3094
        %v3273 = vunpack.c.l.b16 %v3095
        %v3274 = vunpack.c.l.b16 %v3096
        %v3275 = vunpack.c.l.b16 %v3097
        %v3276 = vunpack.c.l.b16 %v3098
        %v3277 = vunpack.c.l.b16 %v3099
        %v3278 = vunpack.c.l.b16 %v3100
        %v3279 = vunpack.c.l.b16 %v3101
        %v3280 = vunpack.c.l.b16 %v3102
        %v3281 = vunpack.c.l.b16 %v3103
        %v3282 = vunpack.c.l.b16 %v3104
        %v3283 = vunpack.c.l.b16 %v3105
        %v3284 = vunpack.c.l.b16 %v3106
        %v3285 = vunpack.c.l.b16 %v3107
        %v3286 = vunpack.c.l.b16 %v3108
        %v3287 = vunpack.c.l.b16 %v3109
        %v3288 = vunpack.c.l.b16 %v3110
        %v3289 = vunpack.c.l.b16 %v3111
        %v3290 = vunpack.c.l.b16 %v3112
        %v3291 = vunpack.c.l.b16 %v3113
        %v3292 = vunpack.c.l.b16 %v3114
        %v3293 = vunpack.c.l.b16 %v3115
        %v3294 = vunpack.c.l.b16 %v3116
        %v3295 = vunpack.c.l.b16 %v3117
        %v3296 = vunpack.c.l.b16 %v3118
        %v3297 = vunpack.c.l.b16 %v3119
        %v3298 = vunpack.c.l.b16 %v3120
        %v3299 = vunpack.c.l.b16 %v3121
        %v3300 = vunpack.c.l.b16 %v3122
        %v3301 = vunpack.c.l.b16 %v3123
        %v3302 = vunpack.c.l.b16 %v3124
        %v3303 = vunpack.c.l.b16 %v3125
        %v3304 = vunpack.c.l.b16 %v3126
        %v3305 = vunpack.c.l.b16 %v3127
        %v3306 = vunpack.c.l.b16 %v3128
        %v3307 = vpack.c.b16 %v3228, %v3227
        %v3308 = vpack.c.b16 %v3230, %v3229
        %v3309 = vpack.c.b16 %v3232, %v3231
        %v3310 = vpack.c.b16 %v3234, %v3233
        %v3311 = vpack.c.b16 %v3236, %v3235
        %v3312 = vpack.c.b16 %v3238, %v3237
        %v3313 = vpack.c.b16 %v3240, %v3239
        %v3314 = vpack.c.b16 %v3242, %v3241
        %v3315 = vpack.c.b16 %v3244, %v3243
        %v3316 = vpack.c.b16 %v3246, %v3245
        %v3317 = vpack.c.b16 %v3248, %v3247
        %v3318 = vpack.c.b16 %v3250, %v3249
        %v3319 = vpack.c.b16 %v3252, %v3251
        %v3320 = vpack.c.b16 %v3254, %v3253
        %v3321 = vpack.c.b16 %v3256, %v3255
        %v3322 = vpack.c.b16 %v3258, %v3257
        %v3323 = vpack.c.b16 %v3260, %v3259
        %v3324 = vpack.c.b16 %v3262, %v3261
        %v3325 = vpack.c.b16 %v3264, %v3263
        %v3326 = vpack.c.b16 %v3266, %v3265
        %v3327 = vpack.c.b16 %v3268, %v3267
        %v3328 = vpack.c.b16 %v3270, %v3269
        %v3329 = vpack.c.b16 %v3272, %v3271
        %v3330 = vpack.c.b16 %v3274, %v3273
        %v3331 = vpack.c.b16 %v3276, %v3275
        %v3332 = vpack.c.b16 %v3278, %v3277
        %v3333 = vpack.c.b16 %v3280, %v3279
        %v3334 = vpack.c.b16 %v3282, %v3281
        %v3335 = vpack.c.b16 %v3284, %v3283
        %v3336 = vpack.c.b16 %v3286, %v3285
        %v3337 = vpack.c.b16 %v3288, %v3287
        %v3338 = vpack.c.b16 %v3290, %v3289
        %v3339 = vpack.c.b16 %v3292, %v3291
        %v3340 = vpack.c.b16 %v3294, %v3293
        %v3341 = vpack.c.b16 %v3296, %v3295
        %v3342 = vpack.c.b16 %v3298, %v3297
        %v3343 = vpack.c.b16 %v3300, %v3299
        %v3344 = vpack.c.b16 %v3302, %v3301
        %v3345 = vpack.c.b16 %v3304, %v3303
        %v3346 = vpack.c.b16 %v3306, %v3305
        %3387 = vmatprep.subr.bf16.mxu0 0
        %3388 = vmatpush1.bf16.msra.mxu0 %v3314
        %3389 = vmatprep.subr.bf16.mxu0 0
        %3390 = vmatpush1.bf16.msra.mxu0 %v3313
        %3391 = vmatprep.subr.bf16.mxu0 0
        %3392 = vmatpush1.bf16.msra.mxu0 %v3312
        %3393 = vmatprep.subr.bf16.mxu0 0
        %3394 = vmatpush1.bf16.msra.mxu0 %v3311
        %3395 = vmatprep.subr.bf16.mxu0 0
        %3396 = vmatpush1.bf16.msra.mxu0 %v3310
        %3397 = vmatprep.subr.bf16.mxu0 0
        %3398 = vmatpush1.bf16.msra.mxu0 %v3309
        %3399 = vmatprep.subr.bf16.mxu0 0
        %3400 = vmatpush1.bf16.msra.mxu0 %v3308
        %3401 = vmatprep.subr.bf16.mxu0 0
        %3402 = vmatpush1.bf16.msra.mxu0 %v3307
        %3403 = vmatprep.subr.bf16.mxu0 0
        %3404 = vmatpush2.bf16.msra.mxu0 %v3322
        %3405 = vmatprep.subr.bf16.mxu0 0
        %3406 = vmatpush2.bf16.msra.mxu0 %v3321
        %3407 = vmatprep.subr.bf16.mxu0 0
        %3408 = vmatpush2.bf16.msra.mxu0 %v3320
        %3409 = vmatprep.subr.bf16.mxu0 0
        %3410 = vmatpush2.bf16.msra.mxu0 %v3319
        %3411 = vmatprep.subr.bf16.mxu0 0
        %3412 = vmatpush2.bf16.msra.mxu0 %v3318
        %3413 = vmatprep.subr.bf16.mxu0 0
        %3414 = vmatpush2.bf16.msra.mxu0 %v3317
        %3415 = vmatprep.subr.bf16.mxu0 0
        %3416 = vmatpush2.bf16.msra.mxu0 %v3316
        %3417 = vmatprep.subr.bf16.mxu0 0
        %3418 = vmatpush2.bf16.msra.mxu0 %v3315
        %3419 = vmatprep.mubr.bf16.mxu0 %v3138
        %3420 = vmatmul.mubr.bf16.gmra.mxu0 %v3137
        %v3421 = vpop.f32.mrf.mxu0
        %v3422 = vadd.f32 0.0, %v3421
        %v3423 = vpop.f32.mrf.mxu0
        %v3424 = vpop.f32.mrf.mxu0
        %v3425 = vpop.f32.mrf.mxu0
        %3426 = vdwg.mxu0
        %3427 = vmatprep.subr.bf16.mxu0 0
        %3428 = vmatpush1.bf16.msra.mxu0 %v3330
        %3429 = vmatprep.subr.bf16.mxu0 0
        %3430 = vmatpush1.bf16.msra.mxu0 %v3329
        %3431 = vmatprep.subr.bf16.mxu0 0
        %3432 = vmatpush1.bf16.msra.mxu0 %v3328
        %3433 = vmatprep.subr.bf16.mxu0 0
        %3434 = vmatpush1.bf16.msra.mxu0 %v3327
        %3435 = vmatprep.subr.bf16.mxu0 0
        %3436 = vmatpush1.bf16.msra.mxu0 %v3326
        %3437 = vmatprep.subr.bf16.mxu0 0
        %3438 = vmatpush1.bf16.msra.mxu0 %v3325
        %3439 = vmatprep.subr.bf16.mxu0 0
        %3440 = vmatpush1.bf16.msra.mxu0 %v3324
        %3441 = vmatprep.subr.bf16.mxu0 0
        %3442 = vmatpush1.bf16.msra.mxu0 %v3323
        %3443 = vmatprep.subr.bf16.mxu0 0
        %3444 = vmatpush2.bf16.msra.mxu0 %v3338
        %3445 = vmatprep.subr.bf16.mxu0 0
        %3446 = vmatpush2.bf16.msra.mxu0 %v3337
        %3447 = vmatprep.subr.bf16.mxu0 0
        %3448 = vmatpush2.bf16.msra.mxu0 %v3336
        %3449 = vmatprep.subr.bf16.mxu0 0
        %3450 = vmatpush2.bf16.msra.mxu0 %v3335
        %3451 = vmatprep.subr.bf16.mxu0 0
        %3452 = vmatpush2.bf16.msra.mxu0 %v3334
        %3453 = vmatprep.subr.bf16.mxu0 0
        %3454 = vmatpush2.bf16.msra.mxu0 %v3333
        %3455 = vmatprep.subr.bf16.mxu0 0
        %3456 = vmatpush2.bf16.msra.mxu0 %v3332
        %3457 = vmatprep.subr.bf16.mxu0 0
        %3458 = vmatpush2.bf16.msra.mxu0 %v3331
        %3459 = vmatprep.mubr.bf16.mxu0 %v3140
        %3460 = vmatmul.mubr.bf16.gmra.mxu0 %v3139
        %v3461 = vpop.f32.mrf.mxu0
        %v3462 = vadd.f32 %v3422, %v3461
        %v3463 = vpop.f32.mrf.mxu0
        %v3464 = vpop.f32.mrf.mxu0
        %v3465 = vpop.f32.mrf.mxu0
        %3466 = vdwg.mxu0
        %3467 = vmatprep.subr.bf16.mxu0 0
        %3468 = vmatpush1.bf16.msra.mxu0 %v3346
        %3469 = vmatprep.subr.bf16.mxu0 0
        %3470 = vmatpush1.bf16.msra.mxu0 %v3345
        %3471 = vmatprep.subr.bf16.mxu0 0
        %3472 = vmatpush1.bf16.msra.mxu0 %v3344
        %3473 = vmatprep.subr.bf16.mxu0 0
        %3474 = vmatpush1.bf16.msra.mxu0 %v3343
        %3475 = vmatprep.subr.bf16.mxu0 0
        %3476 = vmatpush1.bf16.msra.mxu0 %v3342
        %3477 = vmatprep.subr.bf16.mxu0 0
        %3478 = vmatpush1.bf16.msra.mxu0 %v3341
        %3479 = vmatprep.subr.bf16.mxu0 0
        %3480 = vmatpush1.bf16.msra.mxu0 %v3340
        %3481 = vmatprep.subr.bf16.mxu0 0
        %3482 = vmatpush1.bf16.msra.mxu0 %v3339
        %3483 = vmatprep.subr.bf16.mxu0 0
        %3484 = vmatpush2.bf16.msra.mxu0 0
        %3485 = vmatprep.subr.bf16.mxu0 0
        %3486 = vmatpush2.bf16.msra.mxu0 0
        %3487 = vmatprep.subr.bf16.mxu0 0
        %3488 = vmatpush2.bf16.msra.mxu0 0
        %3489 = vmatprep.subr.bf16.mxu0 0
        %3490 = vmatpush2.bf16.msra.mxu0 0
        %3491 = vmatprep.subr.bf16.mxu0 0
        %3492 = vmatpush2.bf16.msra.mxu0 0
        %3493 = vmatprep.subr.bf16.mxu0 0
        %3494 = vmatpush2.bf16.msra.mxu0 0
        %3495 = vmatprep.subr.bf16.mxu0 0
        %3496 = vmatpush2.bf16.msra.mxu0 0
        %3497 = vmatprep.subr.bf16.mxu0 0
        %3498 = vmatpush2.bf16.msra.mxu0 0
        %3499 = vmatprep.mubr.bf16.mxu0 0
        %3500 = vmatmul.mubr.bf16.gmra.mxu0 %v3141
        %v3501 = vpop.f32.mrf.mxu0
        %v3502 = vadd.f32 %v3462, %v3501
        %v3503 = vpop.f32.mrf.mxu0
        %v3504 = vpop.f32.mrf.mxu0
        %v3505 = vpop.f32.mrf.mxu0
        %3506 = vdwg.mxu0
        %v3507 = vadd.f32 %v3040, %v3502
        %v3508 = vld [vmem:[#allocation2] sm:$0x77]
        %v3509 = vld [vmem:[#allocation2 + $0x8] sm:$0x77]
        %v3510 = vld [vmem:[#allocation2 + $0x10] sm:$0x7]
        %s3511 = scalar_lea.vmem %s3, 960
        %v3512 = vld [vmem:[%s3511] sm:$0xf]
        %v3513 = vld [vmem:[%s3511 + $0x4] sm:$0xf]
        %v3514 = vld [vmem:[%s3511 + $0x8] sm:$0xf]
        %v3515 = vld [vmem:[%s3511 + $0xc] sm:$0xf]
        %v3516 = vld [vmem:[%s3511 + $0x10] sm:$0xf]
        %v3517 = vld [vmem:[%s3511 + $0x14] sm:$0xf]
        %v3518 = vld [vmem:[%s3511 + $0x18] sm:$0xf]
        %v3519 = vld [vmem:[%s3511 + $0x1c] sm:$0xf]
        %v3520 = vld [vmem:[%s3511 + $0x20] sm:$0xf]
        %v3521 = vld [vmem:[%s3511 + $0x24] sm:$0xf]
        %v3522 = vld [vmem:[%s3511 + $0x28] sm:$0xf]
        %v3523 = vld [vmem:[%s3511 + $0x2c] sm:$0xf]
        %v3524 = vld [vmem:[%s3511 + $0x30] sm:$0xf]
        %v3525 = vld [vmem:[%s3511 + $0x34] sm:$0xf]
        %v3526 = vld [vmem:[%s3511 + $0x38] sm:$0xf]
        %v3527 = vld [vmem:[%s3511 + $0x3c] sm:$0xf]
        %v3528 = vld [vmem:[%s3511 + $0x40] sm:$0xf]
        %v3529 = vld [vmem:[%s3511 + $0x44] sm:$0xf]
        %v3530 = vld [vmem:[%s3511 + $0x48] sm:$0xf]
        %v3531 = vld [vmem:[%s3511 + $0x4c] sm:$0xf]
        %v3532 = vld [vmem:[%s3511 + $0x50] sm:$0xf]
        %v3533 = vld [vmem:[%s3511 + $0x54] sm:$0xf]
        %v3534 = vld [vmem:[%s3511 + $0x58] sm:$0xf]
        %v3535 = vld [vmem:[%s3511 + $0x5c] sm:$0xf]
        %v3536 = vld [vmem:[%s3511 + $0x60] sm:$0xf]
        %v3537 = vld [vmem:[%s3511 + $0x64] sm:$0xf]
        %v3538 = vld [vmem:[%s3511 + $0x68] sm:$0xf]
        %v3539 = vld [vmem:[%s3511 + $0x6c] sm:$0xf]
        %v3540 = vld [vmem:[%s3511 + $0x70] sm:$0xf]
        %v3541 = vld [vmem:[%s3511 + $0x74] sm:$0xf]
        %v3542 = vld [vmem:[%s3511 + $0x78] sm:$0xf]
        %v3543 = vld [vmem:[%s3511 + $0x7c] sm:$0xf]
        %v3544 = vld [vmem:[%s3511 + $0x80] sm:$0xf]
        %v3545 = vld [vmem:[%s3511 + $0x84] sm:$0xf]
        %v3546 = vld [vmem:[%s3511 + $0x88] sm:$0xf]
        %v3547 = vld [vmem:[%s3511 + $0x8c] sm:$0xf]
        %v3548 = vld [vmem:[%s3511 + $0x90] sm:$0xf]
        %v3549 = vld [vmem:[%s3511 + $0x94] sm:$0xf]
        %v3550 = vld [vmem:[%s3511 + $0x98] sm:$0xf]
        %v3551 = vld [vmem:[%s3511 + $0x9c] sm:$0xf]
        %v3552 = vld [vmem:[%s3511 + $0xa0] sm:$0xf]
        %v3553 = vld [vmem:[%s3511 + $0xa4] sm:$0xf]
        %v3554 = vld [vmem:[%s3511 + $0xa8] sm:$0xf]
        %v3555 = vld [vmem:[%s3511 + $0xac] sm:$0xf]
        %v3556 = vld [vmem:[%s3511 + $0xb0] sm:$0xf]
        %v3557 = vld [vmem:[%s3511 + $0xb4] sm:$0xf]
        %v3558 = vld [vmem:[%s3511 + $0xb8] sm:$0xf]
        %v3559 = vld [vmem:[%s3511 + $0xbc] sm:$0xf]
        %v3560 = vld [vmem:[%s3511 + $0xc0] sm:$0xf]
        %v3561 = vld [vmem:[%s3511 + $0xc4] sm:$0xf]
        %v3562 = vld [vmem:[%s3511 + $0xc8] sm:$0xf]
        %v3563 = vld [vmem:[%s3511 + $0xcc] sm:$0xf]
        %v3564 = vld [vmem:[%s3511 + $0xd0] sm:$0xf]
        %v3565 = vld [vmem:[%s3511 + $0xd4] sm:$0xf]
        %v3566 = vld [vmem:[%s3511 + $0xd8] sm:$0xf]
        %v3567 = vld [vmem:[%s3511 + $0xdc] sm:$0xf]
        %v3568 = vld [vmem:[%s3511 + $0xe0] sm:$0xf]
        %v3569 = vld [vmem:[%s3511 + $0xe4] sm:$0xf]
        %v3570 = vld [vmem:[%s3511 + $0xe8] sm:$0xf]
        %v3571 = vld [vmem:[%s3511 + $0xec] sm:$0xf]
        %v3572 = vld [vmem:[%s3511 + $0xf0] sm:$0xf]
        %v3573 = vld [vmem:[%s3511 + $0xf4] sm:$0xf]
        %v3574 = vld [vmem:[%s3511 + $0xf8] sm:$0xf]
        %v3575 = vld [vmem:[%s3511 + $0xfc] sm:$0xf]
        %v3576 = vld [vmem:[%s3511 + $0x100] sm:$0xf]
        %v3577 = vld [vmem:[%s3511 + $0x104] sm:$0xf]
        %v3578 = vld [vmem:[%s3511 + $0x108] sm:$0xf]
        %v3579 = vld [vmem:[%s3511 + $0x10c] sm:$0xf]
        %v3580 = vld [vmem:[%s3511 + $0x110] sm:$0xf]
        %v3581 = vld [vmem:[%s3511 + $0x114] sm:$0xf]
        %v3582 = vld [vmem:[%s3511 + $0x118] sm:$0xf]
        %v3583 = vld [vmem:[%s3511 + $0x11c] sm:$0xf]
        %v3584 = vld [vmem:[%s3511 + $0x120] sm:$0xf]
        %v3585 = vld [vmem:[%s3511 + $0x124] sm:$0xf]
        %v3586 = vld [vmem:[%s3511 + $0x128] sm:$0xf]
        %v3587 = vld [vmem:[%s3511 + $0x12c] sm:$0xf]
        %v3588 = vld [vmem:[%s3511 + $0x130] sm:$0xf]
        %v3589 = vld [vmem:[%s3511 + $0x134] sm:$0xf]
        %v3590 = vld [vmem:[%s3511 + $0x138] sm:$0xf]
        %v3591 = vld [vmem:[%s3511 + $0x13c] sm:$0xf]
        %v3595 = vunpack.c.l.b16 %v3508
        %v3596 = vunpack.c.h.b16 %v3508
        %v3597 = vunpack.c.l.b16 %v3509
        %v3598 = vunpack.c.h.b16 %v3509
        %v3599 = vunpack.c.l.b16 %v3510
        %v3600 = vpack.c.b16 %v3595, %v3595
        %v3601 = vpack.c.b16 %v3596, %v3596
        %v3602 = vpack.c.b16 %v3597, %v3597
        %v3603 = vpack.c.b16 %v3598, %v3598
        %v3604 = vpack.c.b16 %v3599, %v3599
        %v3606 = vshrl.u32 %v3600, 16
        %v3608 = vshll.u32 %v3600, 16
        %v3610 = vrot.slane %v3608, 1
        %v3611 = vor.u32 %v3606, %v3610
        %v3613 = vshrl.u32 %v3601, 16
        %v3615 = vshll.u32 %v3601, 16
        %v3617 = vrot.slane %v3615, 1
        %v3618 = vor.u32 %v3613, %v3617
        %v3620 = vshrl.u32 %v3602, 16
        %v3622 = vshll.u32 %v3602, 16
        %v3624 = vrot.slane %v3622, 1
        %v3625 = vor.u32 %v3620, %v3624
        %v3627 = vshrl.u32 %v3603, 16
        %v3629 = vshll.u32 %v3603, 16
        %v3631 = vrot.slane %v3629, 1
        %v3632 = vor.u32 %v3627, %v3631
        %v3634 = vshrl.u32 %v3604, 16
        %v3636 = vshll.u32 %v3604, 16
        %v3638 = vrot.slane %v3636, 1
        %v3639 = vor.u32 %v3634, %v3638
        %v3725 = vunpack.c.l.b16 %v3512
        %v3726 = vunpack.c.l.b16 %v3513
        %v3727 = vunpack.c.l.b16 %v3514
        %v3728 = vunpack.c.l.b16 %v3515
        %v3729 = vunpack.c.l.b16 %v3516
        %v3730 = vunpack.c.l.b16 %v3517
        %v3731 = vunpack.c.l.b16 %v3518
        %v3732 = vunpack.c.l.b16 %v3519
        %v3733 = vunpack.c.l.b16 %v3520
        %v3734 = vunpack.c.l.b16 %v3521
        %v3735 = vunpack.c.l.b16 %v3522
        %v3736 = vunpack.c.l.b16 %v3523
        %v3737 = vunpack.c.l.b16 %v3524
        %v3738 = vunpack.c.l.b16 %v3525
        %v3739 = vunpack.c.l.b16 %v3526
        %v3740 = vunpack.c.l.b16 %v3527
        %v3741 = vunpack.c.l.b16 %v3528
        %v3742 = vunpack.c.l.b16 %v3529
        %v3743 = vunpack.c.l.b16 %v3530
        %v3744 = vunpack.c.l.b16 %v3531
        %v3745 = vunpack.c.l.b16 %v3532
        %v3746 = vunpack.c.l.b16 %v3533
        %v3747 = vunpack.c.l.b16 %v3534
        %v3748 = vunpack.c.l.b16 %v3535
        %v3749 = vunpack.c.l.b16 %v3536
        %v3750 = vunpack.c.l.b16 %v3537
        %v3751 = vunpack.c.l.b16 %v3538
        %v3752 = vunpack.c.l.b16 %v3539
        %v3753 = vunpack.c.l.b16 %v3540
        %v3754 = vunpack.c.l.b16 %v3541
        %v3755 = vunpack.c.l.b16 %v3542
        %v3756 = vunpack.c.l.b16 %v3543
        %v3757 = vunpack.c.l.b16 %v3544
        %v3758 = vunpack.c.l.b16 %v3545
        %v3759 = vunpack.c.l.b16 %v3546
        %v3760 = vunpack.c.l.b16 %v3547
        %v3761 = vunpack.c.l.b16 %v3548
        %v3762 = vunpack.c.l.b16 %v3549
        %v3763 = vunpack.c.l.b16 %v3550
        %v3764 = vunpack.c.l.b16 %v3551
        %v3765 = vunpack.c.l.b16 %v3552
        %v3766 = vunpack.c.l.b16 %v3553
        %v3767 = vunpack.c.l.b16 %v3554
        %v3768 = vunpack.c.l.b16 %v3555
        %v3769 = vunpack.c.l.b16 %v3556
        %v3770 = vunpack.c.l.b16 %v3557
        %v3771 = vunpack.c.l.b16 %v3558
        %v3772 = vunpack.c.l.b16 %v3559
        %v3773 = vunpack.c.l.b16 %v3560
        %v3774 = vunpack.c.l.b16 %v3561
        %v3775 = vunpack.c.l.b16 %v3562
        %v3776 = vunpack.c.l.b16 %v3563
        %v3777 = vunpack.c.l.b16 %v3564
        %v3778 = vunpack.c.l.b16 %v3565
        %v3779 = vunpack.c.l.b16 %v3566
        %v3780 = vunpack.c.l.b16 %v3567
        %v3781 = vunpack.c.l.b16 %v3568
        %v3782 = vunpack.c.l.b16 %v3569
        %v3783 = vunpack.c.l.b16 %v3570
        %v3784 = vunpack.c.l.b16 %v3571
        %v3785 = vunpack.c.l.b16 %v3572
        %v3786 = vunpack.c.l.b16 %v3573
        %v3787 = vunpack.c.l.b16 %v3574
        %v3788 = vunpack.c.l.b16 %v3575
        %v3789 = vunpack.c.l.b16 %v3576
        %v3790 = vunpack.c.l.b16 %v3577
        %v3791 = vunpack.c.l.b16 %v3578
        %v3792 = vunpack.c.l.b16 %v3579
        %v3793 = vunpack.c.l.b16 %v3580
        %v3794 = vunpack.c.l.b16 %v3581
        %v3795 = vunpack.c.l.b16 %v3582
        %v3796 = vunpack.c.l.b16 %v3583
        %v3797 = vunpack.c.l.b16 %v3584
        %v3798 = vunpack.c.l.b16 %v3585
        %v3799 = vunpack.c.l.b16 %v3586
        %v3800 = vunpack.c.l.b16 %v3587
        %v3801 = vunpack.c.l.b16 %v3588
        %v3802 = vunpack.c.l.b16 %v3589
        %v3803 = vunpack.c.l.b16 %v3590
        %v3804 = vunpack.c.l.b16 %v3591
        %v3805 = vpack.c.b16 %v3726, %v3725
        %v3806 = vpack.c.b16 %v3728, %v3727
        %v3807 = vpack.c.b16 %v3730, %v3729
        %v3808 = vpack.c.b16 %v3732, %v3731
        %v3809 = vpack.c.b16 %v3734, %v3733
        %v3810 = vpack.c.b16 %v3736, %v3735
        %v3811 = vpack.c.b16 %v3738, %v3737
        %v3812 = vpack.c.b16 %v3740, %v3739
        %v3813 = vpack.c.b16 %v3742, %v3741
        %v3814 = vpack.c.b16 %v3744, %v3743
        %v3815 = vpack.c.b16 %v3746, %v3745
        %v3816 = vpack.c.b16 %v3748, %v3747
        %v3817 = vpack.c.b16 %v3750, %v3749
        %v3818 = vpack.c.b16 %v3752, %v3751
        %v3819 = vpack.c.b16 %v3754, %v3753
        %v3820 = vpack.c.b16 %v3756, %v3755
        %v3821 = vpack.c.b16 %v3758, %v3757
        %v3822 = vpack.c.b16 %v3760, %v3759
        %v3823 = vpack.c.b16 %v3762, %v3761
        %v3824 = vpack.c.b16 %v3764, %v3763
        %v3825 = vpack.c.b16 %v3766, %v3765
        %v3826 = vpack.c.b16 %v3768, %v3767
        %v3827 = vpack.c.b16 %v3770, %v3769
        %v3828 = vpack.c.b16 %v3772, %v3771
        %v3829 = vpack.c.b16 %v3774, %v3773
        %v3830 = vpack.c.b16 %v3776, %v3775
        %v3831 = vpack.c.b16 %v3778, %v3777
        %v3832 = vpack.c.b16 %v3780, %v3779
        %v3833 = vpack.c.b16 %v3782, %v3781
        %v3834 = vpack.c.b16 %v3784, %v3783
        %v3835 = vpack.c.b16 %v3786, %v3785
        %v3836 = vpack.c.b16 %v3788, %v3787
        %v3837 = vpack.c.b16 %v3790, %v3789
        %v3838 = vpack.c.b16 %v3792, %v3791
        %v3839 = vpack.c.b16 %v3794, %v3793
        %v3840 = vpack.c.b16 %v3796, %v3795
        %v3841 = vpack.c.b16 %v3798, %v3797
        %v3842 = vpack.c.b16 %v3800, %v3799
        %v3843 = vpack.c.b16 %v3802, %v3801
        %v3844 = vpack.c.b16 %v3804, %v3803
        %3885 = vmatprep.subr.bf16.mxu0 0
        %3886 = vmatpush1.bf16.msra.mxu0 %v3812
        %3887 = vmatprep.subr.bf16.mxu0 0
        %3888 = vmatpush1.bf16.msra.mxu0 %v3811
        %3889 = vmatprep.subr.bf16.mxu0 0
        %3890 = vmatpush1.bf16.msra.mxu0 %v3810
        %3891 = vmatprep.subr.bf16.mxu0 0
        %3892 = vmatpush1.bf16.msra.mxu0 %v3809
        %3893 = vmatprep.subr.bf16.mxu0 0
        %3894 = vmatpush1.bf16.msra.mxu0 %v3808
        %3895 = vmatprep.subr.bf16.mxu0 0
        %3896 = vmatpush1.bf16.msra.mxu0 %v3807
        %3897 = vmatprep.subr.bf16.mxu0 0
        %3898 = vmatpush1.bf16.msra.mxu0 %v3806
        %3899 = vmatprep.subr.bf16.mxu0 0
        %3900 = vmatpush1.bf16.msra.mxu0 %v3805
        %3901 = vmatprep.subr.bf16.mxu0 0
        %3902 = vmatpush2.bf16.msra.mxu0 %v3820
        %3903 = vmatprep.subr.bf16.mxu0 0
        %3904 = vmatpush2.bf16.msra.mxu0 %v3819
        %3905 = vmatprep.subr.bf16.mxu0 0
        %3906 = vmatpush2.bf16.msra.mxu0 %v3818
        %3907 = vmatprep.subr.bf16.mxu0 0
        %3908 = vmatpush2.bf16.msra.mxu0 %v3817
        %3909 = vmatprep.subr.bf16.mxu0 0
        %3910 = vmatpush2.bf16.msra.mxu0 %v3816
        %3911 = vmatprep.subr.bf16.mxu0 0
        %3912 = vmatpush2.bf16.msra.mxu0 %v3815
        %3913 = vmatprep.subr.bf16.mxu0 0
        %3914 = vmatpush2.bf16.msra.mxu0 %v3814
        %3915 = vmatprep.subr.bf16.mxu0 0
        %3916 = vmatpush2.bf16.msra.mxu0 %v3813
        %3917 = vmatprep.mubr.bf16.mxu0 %v3618
        %3918 = vmatmul.mubr.bf16.gmra.mxu0 %v3611
        %v3919 = vpop.f32.mrf.mxu0
        %v3920 = vadd.f32 0.0, %v3919
        %v3921 = vpop.f32.mrf.mxu0
        %v3922 = vpop.f32.mrf.mxu0
        %v3923 = vpop.f32.mrf.mxu0
        %3924 = vdwg.mxu0
        %3925 = vmatprep.subr.bf16.mxu0 0
        %3926 = vmatpush1.bf16.msra.mxu0 %v3828
        %3927 = vmatprep.subr.bf16.mxu0 0
        %3928 = vmatpush1.bf16.msra.mxu0 %v3827
        %3929 = vmatprep.subr.bf16.mxu0 0
        %3930 = vmatpush1.bf16.msra.mxu0 %v3826
        %3931 = vmatprep.subr.bf16.mxu0 0
        %3932 = vmatpush1.bf16.msra.mxu0 %v3825
        %3933 = vmatprep.subr.bf16.mxu0 0
        %3934 = vmatpush1.bf16.msra.mxu0 %v3824
        %3935 = vmatprep.subr.bf16.mxu0 0
        %3936 = vmatpush1.bf16.msra.mxu0 %v3823
        %3937 = vmatprep.subr.bf16.mxu0 0
        %3938 = vmatpush1.bf16.msra.mxu0 %v3822
        %3939 = vmatprep.subr.bf16.mxu0 0
        %3940 = vmatpush1.bf16.msra.mxu0 %v3821
        %3941 = vmatprep.subr.bf16.mxu0 0
        %3942 = vmatpush2.bf16.msra.mxu0 %v3836
        %3943 = vmatprep.subr.bf16.mxu0 0
        %3944 = vmatpush2.bf16.msra.mxu0 %v3835
        %3945 = vmatprep.subr.bf16.mxu0 0
        %3946 = vmatpush2.bf16.msra.mxu0 %v3834
        %3947 = vmatprep.subr.bf16.mxu0 0
        %3948 = vmatpush2.bf16.msra.mxu0 %v3833
        %3949 = vmatprep.subr.bf16.mxu0 0
        %3950 = vmatpush2.bf16.msra.mxu0 %v3832
        %3951 = vmatprep.subr.bf16.mxu0 0
        %3952 = vmatpush2.bf16.msra.mxu0 %v3831
        %3953 = vmatprep.subr.bf16.mxu0 0
        %3954 = vmatpush2.bf16.msra.mxu0 %v3830
        %3955 = vmatprep.subr.bf16.mxu0 0
        %3956 = vmatpush2.bf16.msra.mxu0 %v3829
        %3957 = vmatprep.mubr.bf16.mxu0 %v3632
        %3958 = vmatmul.mubr.bf16.gmra.mxu0 %v3625
        %v3959 = vpop.f32.mrf.mxu0
        %v3960 = vadd.f32 %v3920, %v3959
        %v3961 = vpop.f32.mrf.mxu0
        %v3962 = vpop.f32.mrf.mxu0
        %v3963 = vpop.f32.mrf.mxu0
        %3964 = vdwg.mxu0
        %3965 = vmatprep.subr.bf16.mxu0 0
        %3966 = vmatpush1.bf16.msra.mxu0 %v3844
        %3967 = vmatprep.subr.bf16.mxu0 0
        %3968 = vmatpush1.bf16.msra.mxu0 %v3843
        %3969 = vmatprep.subr.bf16.mxu0 0
        %3970 = vmatpush1.bf16.msra.mxu0 %v3842
        %3971 = vmatprep.subr.bf16.mxu0 0
        %3972 = vmatpush1.bf16.msra.mxu0 %v3841
        %3973 = vmatprep.subr.bf16.mxu0 0
        %3974 = vmatpush1.bf16.msra.mxu0 %v3840
        %3975 = vmatprep.subr.bf16.mxu0 0
        %3976 = vmatpush1.bf16.msra.mxu0 %v3839
        %3977 = vmatprep.subr.bf16.mxu0 0
        %3978 = vmatpush1.bf16.msra.mxu0 %v3838
        %3979 = vmatprep.subr.bf16.mxu0 0
        %3980 = vmatpush1.bf16.msra.mxu0 %v3837
        %3981 = vmatprep.subr.bf16.mxu0 0
        %3982 = vmatpush2.bf16.msra.mxu0 0
        %3983 = vmatprep.subr.bf16.mxu0 0
        %3984 = vmatpush2.bf16.msra.mxu0 0
        %3985 = vmatprep.subr.bf16.mxu0 0
        %3986 = vmatpush2.bf16.msra.mxu0 0
        %3987 = vmatprep.subr.bf16.mxu0 0
        %3988 = vmatpush2.bf16.msra.mxu0 0
        %3989 = vmatprep.subr.bf16.mxu0 0
        %3990 = vmatpush2.bf16.msra.mxu0 0
        %3991 = vmatprep.subr.bf16.mxu0 0
        %3992 = vmatpush2.bf16.msra.mxu0 0
        %3993 = vmatprep.subr.bf16.mxu0 0
        %3994 = vmatpush2.bf16.msra.mxu0 0
        %3995 = vmatprep.subr.bf16.mxu0 0
        %3996 = vmatpush2.bf16.msra.mxu0 0
        %3997 = vmatprep.mubr.bf16.mxu0 0
        %3998 = vmatmul.mubr.bf16.gmra.mxu0 %v3639
        %v3999 = vpop.f32.mrf.mxu0
        %v4000 = vadd.f32 %v3960, %v3999
        %v4001 = vpop.f32.mrf.mxu0
        %v4002 = vpop.f32.mrf.mxu0
        %v4003 = vpop.f32.mrf.mxu0
        %4004 = vdwg.mxu0
        %v4005 = vadd.f32 %v3507, %v4000
        %v4006 = vld [vmem:[%s1091] sm:$0x77]
        %v4007 = vld [vmem:[%s1091 + $0x8] sm:$0x77]
        %v4008 = vld [vmem:[%s1091 + $0x10] sm:$0x7]
        %s4009 = scalar_lea.vmem %s3, 1280
        %v4010 = vld [vmem:[%s4009] sm:$0xf]
        %v4011 = vld [vmem:[%s4009 + $0x4] sm:$0xf]
        %v4012 = vld [vmem:[%s4009 + $0x8] sm:$0xf]
        %v4013 = vld [vmem:[%s4009 + $0xc] sm:$0xf]
        %v4014 = vld [vmem:[%s4009 + $0x10] sm:$0xf]
        %v4015 = vld [vmem:[%s4009 + $0x14] sm:$0xf]
        %v4016 = vld [vmem:[%s4009 + $0x18] sm:$0xf]
        %v4017 = vld [vmem:[%s4009 + $0x1c] sm:$0xf]
        %v4018 = vld [vmem:[%s4009 + $0x20] sm:$0xf]
        %v4019 = vld [vmem:[%s4009 + $0x24] sm:$0xf]
        %v4020 = vld [vmem:[%s4009 + $0x28] sm:$0xf]
        %v4021 = vld [vmem:[%s4009 + $0x2c] sm:$0xf]
        %v4022 = vld [vmem:[%s4009 + $0x30] sm:$0xf]
        %v4023 = vld [vmem:[%s4009 + $0x34] sm:$0xf]
        %v4024 = vld [vmem:[%s4009 + $0x38] sm:$0xf]
        %v4025 = vld [vmem:[%s4009 + $0x3c] sm:$0xf]
        %v4026 = vld [vmem:[%s4009 + $0x40] sm:$0xf]
        %v4027 = vld [vmem:[%s4009 + $0x44] sm:$0xf]
        %v4028 = vld [vmem:[%s4009 + $0x48] sm:$0xf]
        %v4029 = vld [vmem:[%s4009 + $0x4c] sm:$0xf]
        %v4030 = vld [vmem:[%s4009 + $0x50] sm:$0xf]
        %v4031 = vld [vmem:[%s4009 + $0x54] sm:$0xf]
        %v4032 = vld [vmem:[%s4009 + $0x58] sm:$0xf]
        %v4033 = vld [vmem:[%s4009 + $0x5c] sm:$0xf]
        %v4034 = vld [vmem:[%s4009 + $0x60] sm:$0xf]
        %v4035 = vld [vmem:[%s4009 + $0x64] sm:$0xf]
        %v4036 = vld [vmem:[%s4009 + $0x68] sm:$0xf]
        %v4037 = vld [vmem:[%s4009 + $0x6c] sm:$0xf]
        %v4038 = vld [vmem:[%s4009 + $0x70] sm:$0xf]
        %v4039 = vld [vmem:[%s4009 + $0x74] sm:$0xf]
        %v4040 = vld [vmem:[%s4009 + $0x78] sm:$0xf]
        %v4041 = vld [vmem:[%s4009 + $0x7c] sm:$0xf]
        %v4042 = vld [vmem:[%s4009 + $0x80] sm:$0xf]
        %v4043 = vld [vmem:[%s4009 + $0x84] sm:$0xf]
        %v4044 = vld [vmem:[%s4009 + $0x88] sm:$0xf]
        %v4045 = vld [vmem:[%s4009 + $0x8c] sm:$0xf]
        %v4046 = vld [vmem:[%s4009 + $0x90] sm:$0xf]
        %v4047 = vld [vmem:[%s4009 + $0x94] sm:$0xf]
        %v4048 = vld [vmem:[%s4009 + $0x98] sm:$0xf]
        %v4049 = vld [vmem:[%s4009 + $0x9c] sm:$0xf]
        %v4050 = vld [vmem:[%s4009 + $0xa0] sm:$0xf]
        %v4051 = vld [vmem:[%s4009 + $0xa4] sm:$0xf]
        %v4052 = vld [vmem:[%s4009 + $0xa8] sm:$0xf]
        %v4053 = vld [vmem:[%s4009 + $0xac] sm:$0xf]
        %v4054 = vld [vmem:[%s4009 + $0xb0] sm:$0xf]
        %v4055 = vld [vmem:[%s4009 + $0xb4] sm:$0xf]
        %v4056 = vld [vmem:[%s4009 + $0xb8] sm:$0xf]
        %v4057 = vld [vmem:[%s4009 + $0xbc] sm:$0xf]
        %v4058 = vld [vmem:[%s4009 + $0xc0] sm:$0xf]
        %v4059 = vld [vmem:[%s4009 + $0xc4] sm:$0xf]
        %v4060 = vld [vmem:[%s4009 + $0xc8] sm:$0xf]
        %v4061 = vld [vmem:[%s4009 + $0xcc] sm:$0xf]
        %v4062 = vld [vmem:[%s4009 + $0xd0] sm:$0xf]
        %v4063 = vld [vmem:[%s4009 + $0xd4] sm:$0xf]
        %v4064 = vld [vmem:[%s4009 + $0xd8] sm:$0xf]
        %v4065 = vld [vmem:[%s4009 + $0xdc] sm:$0xf]
        %v4066 = vld [vmem:[%s4009 + $0xe0] sm:$0xf]
        %v4067 = vld [vmem:[%s4009 + $0xe4] sm:$0xf]
        %v4068 = vld [vmem:[%s4009 + $0xe8] sm:$0xf]
        %v4069 = vld [vmem:[%s4009 + $0xec] sm:$0xf]
        %v4070 = vld [vmem:[%s4009 + $0xf0] sm:$0xf]
        %v4071 = vld [vmem:[%s4009 + $0xf4] sm:$0xf]
        %v4072 = vld [vmem:[%s4009 + $0xf8] sm:$0xf]
        %v4073 = vld [vmem:[%s4009 + $0xfc] sm:$0xf]
        %v4074 = vld [vmem:[%s4009 + $0x100] sm:$0xf]
        %v4075 = vld [vmem:[%s4009 + $0x104] sm:$0xf]
        %v4076 = vld [vmem:[%s4009 + $0x108] sm:$0xf]
        %v4077 = vld [vmem:[%s4009 + $0x10c] sm:$0xf]
        %v4078 = vld [vmem:[%s4009 + $0x110] sm:$0xf]
        %v4079 = vld [vmem:[%s4009 + $0x114] sm:$0xf]
        %v4080 = vld [vmem:[%s4009 + $0x118] sm:$0xf]
        %v4081 = vld [vmem:[%s4009 + $0x11c] sm:$0xf]
        %v4082 = vld [vmem:[%s4009 + $0x120] sm:$0xf]
        %v4083 = vld [vmem:[%s4009 + $0x124] sm:$0xf]
        %v4084 = vld [vmem:[%s4009 + $0x128] sm:$0xf]
        %v4085 = vld [vmem:[%s4009 + $0x12c] sm:$0xf]
        %v4086 = vld [vmem:[%s4009 + $0x130] sm:$0xf]
        %v4087 = vld [vmem:[%s4009 + $0x134] sm:$0xf]
        %v4088 = vld [vmem:[%s4009 + $0x138] sm:$0xf]
        %v4089 = vld [vmem:[%s4009 + $0x13c] sm:$0xf]
        %v4093 = vunpack.c.l.b16 %v4006
        %v4094 = vunpack.c.h.b16 %v4006
        %v4095 = vunpack.c.l.b16 %v4007
        %v4096 = vunpack.c.h.b16 %v4007
        %v4097 = vunpack.c.l.b16 %v4008
        %v4098 = vpack.c.b16 %v4093, %v4093
        %v4099 = vpack.c.b16 %v4094, %v4094
        %v4100 = vpack.c.b16 %v4095, %v4095
        %v4101 = vpack.c.b16 %v4096, %v4096
        %v4102 = vpack.c.b16 %v4097, %v4097
        %v4104 = vshrl.u32 %v4098, 16
        %v4106 = vshll.u32 %v4098, 16
        %v4108 = vrot.slane %v4106, 1
        %v4109 = vor.u32 %v4104, %v4108
        %v4111 = vshrl.u32 %v4099, 16
        %v4113 = vshll.u32 %v4099, 16
        %v4115 = vrot.slane %v4113, 1
        %v4116 = vor.u32 %v4111, %v4115
        %v4118 = vshrl.u32 %v4100, 16
        %v4120 = vshll.u32 %v4100, 16
        %v4122 = vrot.slane %v4120, 1
        %v4123 = vor.u32 %v4118, %v4122
        %v4125 = vshrl.u32 %v4101, 16
        %v4127 = vshll.u32 %v4101, 16
        %v4129 = vrot.slane %v4127, 1
        %v4130 = vor.u32 %v4125, %v4129
        %v4132 = vshrl.u32 %v4102, 16
        %v4134 = vshll.u32 %v4102, 16
        %v4136 = vrot.slane %v4134, 1
        %v4137 = vor.u32 %v4132, %v4136
        %v4223 = vunpack.c.l.b16 %v4010
        %v4224 = vunpack.c.l.b16 %v4011
        %v4225 = vunpack.c.l.b16 %v4012
        %v4226 = vunpack.c.l.b16 %v4013
        %v4227 = vunpack.c.l.b16 %v4014
        %v4228 = vunpack.c.l.b16 %v4015
        %v4229 = vunpack.c.l.b16 %v4016
        %v4230 = vunpack.c.l.b16 %v4017
        %v4231 = vunpack.c.l.b16 %v4018
        %v4232 = vunpack.c.l.b16 %v4019
        %v4233 = vunpack.c.l.b16 %v4020
        %v4234 = vunpack.c.l.b16 %v4021
        %v4235 = vunpack.c.l.b16 %v4022
        %v4236 = vunpack.c.l.b16 %v4023
        %v4237 = vunpack.c.l.b16 %v4024
        %v4238 = vunpack.c.l.b16 %v4025
        %v4239 = vunpack.c.l.b16 %v4026
        %v4240 = vunpack.c.l.b16 %v4027
        %v4241 = vunpack.c.l.b16 %v4028
        %v4242 = vunpack.c.l.b16 %v4029
        %v4243 = vunpack.c.l.b16 %v4030
        %v4244 = vunpack.c.l.b16 %v4031
        %v4245 = vunpack.c.l.b16 %v4032
        %v4246 = vunpack.c.l.b16 %v4033
        %v4247 = vunpack.c.l.b16 %v4034
        %v4248 = vunpack.c.l.b16 %v4035
        %v4249 = vunpack.c.l.b16 %v4036
        %v4250 = vunpack.c.l.b16 %v4037
        %v4251 = vunpack.c.l.b16 %v4038
        %v4252 = vunpack.c.l.b16 %v4039
        %v4253 = vunpack.c.l.b16 %v4040
        %v4254 = vunpack.c.l.b16 %v4041
        %v4255 = vunpack.c.l.b16 %v4042
        %v4256 = vunpack.c.l.b16 %v4043
        %v4257 = vunpack.c.l.b16 %v4044
        %v4258 = vunpack.c.l.b16 %v4045
        %v4259 = vunpack.c.l.b16 %v4046
        %v4260 = vunpack.c.l.b16 %v4047
        %v4261 = vunpack.c.l.b16 %v4048
        %v4262 = vunpack.c.l.b16 %v4049
        %v4263 = vunpack.c.l.b16 %v4050
        %v4264 = vunpack.c.l.b16 %v4051
        %v4265 = vunpack.c.l.b16 %v4052
        %v4266 = vunpack.c.l.b16 %v4053
        %v4267 = vunpack.c.l.b16 %v4054
        %v4268 = vunpack.c.l.b16 %v4055
        %v4269 = vunpack.c.l.b16 %v4056
        %v4270 = vunpack.c.l.b16 %v4057
        %v4271 = vunpack.c.l.b16 %v4058
        %v4272 = vunpack.c.l.b16 %v4059
        %v4273 = vunpack.c.l.b16 %v4060
        %v4274 = vunpack.c.l.b16 %v4061
        %v4275 = vunpack.c.l.b16 %v4062
        %v4276 = vunpack.c.l.b16 %v4063
        %v4277 = vunpack.c.l.b16 %v4064
        %v4278 = vunpack.c.l.b16 %v4065
        %v4279 = vunpack.c.l.b16 %v4066
        %v4280 = vunpack.c.l.b16 %v4067
        %v4281 = vunpack.c.l.b16 %v4068
        %v4282 = vunpack.c.l.b16 %v4069
        %v4283 = vunpack.c.l.b16 %v4070
        %v4284 = vunpack.c.l.b16 %v4071
        %v4285 = vunpack.c.l.b16 %v4072
        %v4286 = vunpack.c.l.b16 %v4073
        %v4287 = vunpack.c.l.b16 %v4074
        %v4288 = vunpack.c.l.b16 %v4075
        %v4289 = vunpack.c.l.b16 %v4076
        %v4290 = vunpack.c.l.b16 %v4077
        %v4291 = vunpack.c.l.b16 %v4078
        %v4292 = vunpack.c.l.b16 %v4079
        %v4293 = vunpack.c.l.b16 %v4080
        %v4294 = vunpack.c.l.b16 %v4081
        %v4295 = vunpack.c.l.b16 %v4082
        %v4296 = vunpack.c.l.b16 %v4083
        %v4297 = vunpack.c.l.b16 %v4084
        %v4298 = vunpack.c.l.b16 %v4085
        %v4299 = vunpack.c.l.b16 %v4086
        %v4300 = vunpack.c.l.b16 %v4087
        %v4301 = vunpack.c.l.b16 %v4088
        %v4302 = vunpack.c.l.b16 %v4089
        %v4303 = vpack.c.b16 %v4224, %v4223
        %v4304 = vpack.c.b16 %v4226, %v4225
        %v4305 = vpack.c.b16 %v4228, %v4227
        %v4306 = vpack.c.b16 %v4230, %v4229
        %v4307 = vpack.c.b16 %v4232, %v4231
        %v4308 = vpack.c.b16 %v4234, %v4233
        %v4309 = vpack.c.b16 %v4236, %v4235
        %v4310 = vpack.c.b16 %v4238, %v4237
        %v4311 = vpack.c.b16 %v4240, %v4239
        %v4312 = vpack.c.b16 %v4242, %v4241
        %v4313 = vpack.c.b16 %v4244, %v4243
        %v4314 = vpack.c.b16 %v4246, %v4245
        %v4315 = vpack.c.b16 %v4248, %v4247
        %v4316 = vpack.c.b16 %v4250, %v4249
        %v4317 = vpack.c.b16 %v4252, %v4251
        %v4318 = vpack.c.b16 %v4254, %v4253
        %v4319 = vpack.c.b16 %v4256, %v4255
        %v4320 = vpack.c.b16 %v4258, %v4257
        %v4321 = vpack.c.b16 %v4260, %v4259
        %v4322 = vpack.c.b16 %v4262, %v4261
        %v4323 = vpack.c.b16 %v4264, %v4263
        %v4324 = vpack.c.b16 %v4266, %v4265
        %v4325 = vpack.c.b16 %v4268, %v4267
        %v4326 = vpack.c.b16 %v4270, %v4269
        %v4327 = vpack.c.b16 %v4272, %v4271
        %v4328 = vpack.c.b16 %v4274, %v4273
        %v4329 = vpack.c.b16 %v4276, %v4275
        %v4330 = vpack.c.b16 %v4278, %v4277
        %v4331 = vpack.c.b16 %v4280, %v4279
        %v4332 = vpack.c.b16 %v4282, %v4281
        %v4333 = vpack.c.b16 %v4284, %v4283
        %v4334 = vpack.c.b16 %v4286, %v4285
        %v4335 = vpack.c.b16 %v4288, %v4287
        %v4336 = vpack.c.b16 %v4290, %v4289
        %v4337 = vpack.c.b16 %v4292, %v4291
        %v4338 = vpack.c.b16 %v4294, %v4293
        %v4339 = vpack.c.b16 %v4296, %v4295
        %v4340 = vpack.c.b16 %v4298, %v4297
        %v4341 = vpack.c.b16 %v4300, %v4299
        %v4342 = vpack.c.b16 %v4302, %v4301
        %4383 = vmatprep.subr.bf16.mxu0 0
        %4384 = vmatpush1.bf16.msra.mxu0 %v4310
        %4385 = vmatprep.subr.bf16.mxu0 0
        %4386 = vmatpush1.bf16.msra.mxu0 %v4309
        %4387 = vmatprep.subr.bf16.mxu0 0
        %4388 = vmatpush1.bf16.msra.mxu0 %v4308
        %4389 = vmatprep.subr.bf16.mxu0 0
        %4390 = vmatpush1.bf16.msra.mxu0 %v4307
        %4391 = vmatprep.subr.bf16.mxu0 0
        %4392 = vmatpush1.bf16.msra.mxu0 %v4306
        %4393 = vmatprep.subr.bf16.mxu0 0
        %4394 = vmatpush1.bf16.msra.mxu0 %v4305
        %4395 = vmatprep.subr.bf16.mxu0 0
        %4396 = vmatpush1.bf16.msra.mxu0 %v4304
        %4397 = vmatprep.subr.bf16.mxu0 0
        %4398 = vmatpush1.bf16.msra.mxu0 %v4303
        %4399 = vmatprep.subr.bf16.mxu0 0
        %4400 = vmatpush2.bf16.msra.mxu0 %v4318
        %4401 = vmatprep.subr.bf16.mxu0 0
        %4402 = vmatpush2.bf16.msra.mxu0 %v4317
        %4403 = vmatprep.subr.bf16.mxu0 0
        %4404 = vmatpush2.bf16.msra.mxu0 %v4316
        %4405 = vmatprep.subr.bf16.mxu0 0
        %4406 = vmatpush2.bf16.msra.mxu0 %v4315
        %4407 = vmatprep.subr.bf16.mxu0 0
        %4408 = vmatpush2.bf16.msra.mxu0 %v4314
        %4409 = vmatprep.subr.bf16.mxu0 0
        %4410 = vmatpush2.bf16.msra.mxu0 %v4313
        %4411 = vmatprep.subr.bf16.mxu0 0
        %4412 = vmatpush2.bf16.msra.mxu0 %v4312
        %4413 = vmatprep.subr.bf16.mxu0 0
        %4414 = vmatpush2.bf16.msra.mxu0 %v4311
        %4415 = vmatprep.mubr.bf16.mxu0 %v4116
        %4416 = vmatmul.mubr.bf16.gmra.mxu0 %v4109
        %v4417 = vpop.f32.mrf.mxu0
        %v4418 = vadd.f32 0.0, %v4417
        %v4419 = vpop.f32.mrf.mxu0
        %v4420 = vpop.f32.mrf.mxu0
        %v4421 = vpop.f32.mrf.mxu0
        %4422 = vdwg.mxu0
        %4423 = vmatprep.subr.bf16.mxu0 0
        %4424 = vmatpush1.bf16.msra.mxu0 %v4326
        %4425 = vmatprep.subr.bf16.mxu0 0
        %4426 = vmatpush1.bf16.msra.mxu0 %v4325
        %4427 = vmatprep.subr.bf16.mxu0 0
        %4428 = vmatpush1.bf16.msra.mxu0 %v4324
        %4429 = vmatprep.subr.bf16.mxu0 0
        %4430 = vmatpush1.bf16.msra.mxu0 %v4323
        %4431 = vmatprep.subr.bf16.mxu0 0
        %4432 = vmatpush1.bf16.msra.mxu0 %v4322
        %4433 = vmatprep.subr.bf16.mxu0 0
        %4434 = vmatpush1.bf16.msra.mxu0 %v4321
        %4435 = vmatprep.subr.bf16.mxu0 0
        %4436 = vmatpush1.bf16.msra.mxu0 %v4320
        %4437 = vmatprep.subr.bf16.mxu0 0
        %4438 = vmatpush1.bf16.msra.mxu0 %v4319
        %4439 = vmatprep.subr.bf16.mxu0 0
        %4440 = vmatpush2.bf16.msra.mxu0 %v4334
        %4441 = vmatprep.subr.bf16.mxu0 0
        %4442 = vmatpush2.bf16.msra.mxu0 %v4333
        %4443 = vmatprep.subr.bf16.mxu0 0
        %4444 = vmatpush2.bf16.msra.mxu0 %v4332
        %4445 = vmatprep.subr.bf16.mxu0 0
        %4446 = vmatpush2.bf16.msra.mxu0 %v4331
        %4447 = vmatprep.subr.bf16.mxu0 0
        %4448 = vmatpush2.bf16.msra.mxu0 %v4330
        %4449 = vmatprep.subr.bf16.mxu0 0
        %4450 = vmatpush2.bf16.msra.mxu0 %v4329
        %4451 = vmatprep.subr.bf16.mxu0 0
        %4452 = vmatpush2.bf16.msra.mxu0 %v4328
        %4453 = vmatprep.subr.bf16.mxu0 0
        %4454 = vmatpush2.bf16.msra.mxu0 %v4327
        %4455 = vmatprep.mubr.bf16.mxu0 %v4130
        %4456 = vmatmul.mubr.bf16.gmra.mxu0 %v4123
        %v4457 = vpop.f32.mrf.mxu0
        %v4458 = vadd.f32 %v4418, %v4457
        %v4459 = vpop.f32.mrf.mxu0
        %v4460 = vpop.f32.mrf.mxu0
        %v4461 = vpop.f32.mrf.mxu0
        %4462 = vdwg.mxu0
        %4463 = vmatprep.subr.bf16.mxu0 0
        %4464 = vmatpush1.bf16.msra.mxu0 %v4342
        %4465 = vmatprep.subr.bf16.mxu0 0
        %4466 = vmatpush1.bf16.msra.mxu0 %v4341
        %4467 = vmatprep.subr.bf16.mxu0 0
        %4468 = vmatpush1.bf16.msra.mxu0 %v4340
        %4469 = vmatprep.subr.bf16.mxu0 0
        %4470 = vmatpush1.bf16.msra.mxu0 %v4339
        %4471 = vmatprep.subr.bf16.mxu0 0
        %4472 = vmatpush1.bf16.msra.mxu0 %v4338
        %4473 = vmatprep.subr.bf16.mxu0 0
        %4474 = vmatpush1.bf16.msra.mxu0 %v4337
        %4475 = vmatprep.subr.bf16.mxu0 0
        %4476 = vmatpush1.bf16.msra.mxu0 %v4336
        %4477 = vmatprep.subr.bf16.mxu0 0
        %4478 = vmatpush1.bf16.msra.mxu0 %v4335
        %4479 = vmatprep.subr.bf16.mxu0 0
        %4480 = vmatpush2.bf16.msra.mxu0 0
        %4481 = vmatprep.subr.bf16.mxu0 0
        %4482 = vmatpush2.bf16.msra.mxu0 0
        %4483 = vmatprep.subr.bf16.mxu0 0
        %4484 = vmatpush2.bf16.msra.mxu0 0
        %4485 = vmatprep.subr.bf16.mxu0 0
        %4486 = vmatpush2.bf16.msra.mxu0 0
        %4487 = vmatprep.subr.bf16.mxu0 0
        %4488 = vmatpush2.bf16.msra.mxu0 0
        %4489 = vmatprep.subr.bf16.mxu0 0
        %4490 = vmatpush2.bf16.msra.mxu0 0
        %4491 = vmatprep.subr.bf16.mxu0 0
        %4492 = vmatpush2.bf16.msra.mxu0 0
        %4493 = vmatprep.subr.bf16.mxu0 0
        %4494 = vmatpush2.bf16.msra.mxu0 0
        %4495 = vmatprep.mubr.bf16.mxu0 0
        %4496 = vmatmul.mubr.bf16.gmra.mxu0 %v4137
        %v4497 = vpop.f32.mrf.mxu0
        %v4498 = vadd.f32 %v4458, %v4497
        %v4499 = vpop.f32.mrf.mxu0
        %v4500 = vpop.f32.mrf.mxu0
        %v4501 = vpop.f32.mrf.mxu0
        %4502 = vdwg.mxu0
        %v4503 = vadd.f32 %v4005, %v4498
        %v4505 = vlaneseq
        %v4506 = vshrl.u32 %v4505, 7
        %v4507 = vsub.s32 0, %v4506
        %v4508 = vrot.slane %v2121, %v4507
        %v4510 = vadd.f32 %v4503, %v4508
        %v4511 = vmax.f32 %v4510, 0.0
        %v4512 = vpack.c.bf16 %v4511, %v4511
        %4513 = vst [vmem:[#allocation3] sm:$0x3] %v4512
        %v4514 = vld [vmem:[#allocation2 + $0xc] sm:$0x33]
        %v4515 = vld [vmem:[#allocation2 + $0x14] sm:$0x33]
        %v4516 = vld [vmem:[#allocation2 + $0x1c] sm:$0x3]
        %v4517 = vld [vmem:[%s3] sm:$0xf]
        %v4518 = vld [vmem:[%s3 + $0x4] sm:$0xf]
        %v4519 = vld [vmem:[%s3 + $0x8] sm:$0xf]
        %v4520 = vld [vmem:[%s3 + $0xc] sm:$0xf]
        %v4521 = vld [vmem:[%s3 + $0x10] sm:$0xf]
        %v4522 = vld [vmem:[%s3 + $0x14] sm:$0xf]
        %v4523 = vld [vmem:[%s3 + $0x18] sm:$0xf]
        %v4524 = vld [vmem:[%s3 + $0x1c] sm:$0xf]
        %v4525 = vld [vmem:[%s3 + $0x20] sm:$0xf]
        %v4526 = vld [vmem:[%s3 + $0x24] sm:$0xf]
        %v4527 = vld [vmem:[%s3 + $0x28] sm:$0xf]
        %v4528 = vld [vmem:[%s3 + $0x2c] sm:$0xf]
        %v4529 = vld [vmem:[%s3 + $0x30] sm:$0xf]
        %v4530 = vld [vmem:[%s3 + $0x34] sm:$0xf]
        %v4531 = vld [vmem:[%s3 + $0x38] sm:$0xf]
        %v4532 = vld [vmem:[%s3 + $0x3c] sm:$0xf]
        %v4533 = vld [vmem:[%s3 + $0x40] sm:$0xf]
        %v4534 = vld [vmem:[%s3 + $0x44] sm:$0xf]
        %v4535 = vld [vmem:[%s3 + $0x48] sm:$0xf]
        %v4536 = vld [vmem:[%s3 + $0x4c] sm:$0xf]
        %v4537 = vld [vmem:[%s3 + $0x50] sm:$0xf]
        %v4538 = vld [vmem:[%s3 + $0x54] sm:$0xf]
        %v4539 = vld [vmem:[%s3 + $0x58] sm:$0xf]
        %v4540 = vld [vmem:[%s3 + $0x5c] sm:$0xf]
        %v4541 = vld [vmem:[%s3 + $0x60] sm:$0xf]
        %v4542 = vld [vmem:[%s3 + $0x64] sm:$0xf]
        %v4543 = vld [vmem:[%s3 + $0x68] sm:$0xf]
        %v4544 = vld [vmem:[%s3 + $0x6c] sm:$0xf]
        %v4545 = vld [vmem:[%s3 + $0x70] sm:$0xf]
        %v4546 = vld [vmem:[%s3 + $0x74] sm:$0xf]
        %v4547 = vld [vmem:[%s3 + $0x78] sm:$0xf]
        %v4548 = vld [vmem:[%s3 + $0x7c] sm:$0xf]
        %v4549 = vld [vmem:[%s3 + $0x80] sm:$0xf]
        %v4550 = vld [vmem:[%s3 + $0x84] sm:$0xf]
        %v4551 = vld [vmem:[%s3 + $0x88] sm:$0xf]
        %v4552 = vld [vmem:[%s3 + $0x8c] sm:$0xf]
        %v4553 = vld [vmem:[%s3 + $0x90] sm:$0xf]
        %v4554 = vld [vmem:[%s3 + $0x94] sm:$0xf]
        %v4555 = vld [vmem:[%s3 + $0x98] sm:$0xf]
        %v4556 = vld [vmem:[%s3 + $0x9c] sm:$0xf]
        %v4557 = vld [vmem:[%s3 + $0xa0] sm:$0xf]
        %v4558 = vld [vmem:[%s3 + $0xa4] sm:$0xf]
        %v4559 = vld [vmem:[%s3 + $0xa8] sm:$0xf]
        %v4560 = vld [vmem:[%s3 + $0xac] sm:$0xf]
        %v4561 = vld [vmem:[%s3 + $0xb0] sm:$0xf]
        %v4562 = vld [vmem:[%s3 + $0xb4] sm:$0xf]
        %v4563 = vld [vmem:[%s3 + $0xb8] sm:$0xf]
        %v4564 = vld [vmem:[%s3 + $0xbc] sm:$0xf]
        %v4565 = vld [vmem:[%s3 + $0xc0] sm:$0xf]
        %v4566 = vld [vmem:[%s3 + $0xc4] sm:$0xf]
        %v4567 = vld [vmem:[%s3 + $0xc8] sm:$0xf]
        %v4568 = vld [vmem:[%s3 + $0xcc] sm:$0xf]
        %v4569 = vld [vmem:[%s3 + $0xd0] sm:$0xf]
        %v4570 = vld [vmem:[%s3 + $0xd4] sm:$0xf]
        %v4571 = vld [vmem:[%s3 + $0xd8] sm:$0xf]
        %v4572 = vld [vmem:[%s3 + $0xdc] sm:$0xf]
        %v4573 = vld [vmem:[%s3 + $0xe0] sm:$0xf]
        %v4574 = vld [vmem:[%s3 + $0xe4] sm:$0xf]
        %v4575 = vld [vmem:[%s3 + $0xe8] sm:$0xf]
        %v4576 = vld [vmem:[%s3 + $0xec] sm:$0xf]
        %v4577 = vld [vmem:[%s3 + $0xf0] sm:$0xf]
        %v4578 = vld [vmem:[%s3 + $0xf4] sm:$0xf]
        %v4579 = vld [vmem:[%s3 + $0xf8] sm:$0xf]
        %v4580 = vld [vmem:[%s3 + $0xfc] sm:$0xf]
        %v4581 = vld [vmem:[%s3 + $0x100] sm:$0xf]
        %v4582 = vld [vmem:[%s3 + $0x104] sm:$0xf]
        %v4583 = vld [vmem:[%s3 + $0x108] sm:$0xf]
        %v4584 = vld [vmem:[%s3 + $0x10c] sm:$0xf]
        %v4585 = vld [vmem:[%s3 + $0x110] sm:$0xf]
        %v4586 = vld [vmem:[%s3 + $0x114] sm:$0xf]
        %v4587 = vld [vmem:[%s3 + $0x118] sm:$0xf]
        %v4588 = vld [vmem:[%s3 + $0x11c] sm:$0xf]
        %v4589 = vld [vmem:[%s3 + $0x120] sm:$0xf]
        %v4590 = vld [vmem:[%s3 + $0x124] sm:$0xf]
        %v4591 = vld [vmem:[%s3 + $0x128] sm:$0xf]
        %v4592 = vld [vmem:[%s3 + $0x12c] sm:$0xf]
        %v4593 = vld [vmem:[%s3 + $0x130] sm:$0xf]
        %v4594 = vld [vmem:[%s3 + $0x134] sm:$0xf]
        %v4595 = vld [vmem:[%s3 + $0x138] sm:$0xf]
        %v4596 = vld [vmem:[%s3 + $0x13c] sm:$0xf]
        %v4597 = vld [vmem:[%s1091 + $0xc] sm:$0x33]
        %v4598 = vld [vmem:[%s1091 + $0x14] sm:$0x33]
        %v4599 = vld [vmem:[%s1091 + $0x1c] sm:$0x3]
        %v4600 = vld [vmem:[%s2208] sm:$0xf]
        %v4601 = vld [vmem:[%s2208 + $0x4] sm:$0xf]
        %v4602 = vld [vmem:[%s2208 + $0x8] sm:$0xf]
        %v4603 = vld [vmem:[%s2208 + $0xc] sm:$0xf]
        %v4604 = vld [vmem:[%s2208 + $0x10] sm:$0xf]
        %v4605 = vld [vmem:[%s2208 + $0x14] sm:$0xf]
        %v4606 = vld [vmem:[%s2208 + $0x18] sm:$0xf]
        %v4607 = vld [vmem:[%s2208 + $0x1c] sm:$0xf]
        %v4608 = vld [vmem:[%s2208 + $0x20] sm:$0xf]
        %v4609 = vld [vmem:[%s2208 + $0x24] sm:$0xf]
        %v4610 = vld [vmem:[%s2208 + $0x28] sm:$0xf]
        %v4611 = vld [vmem:[%s2208 + $0x2c] sm:$0xf]
        %v4612 = vld [vmem:[%s2208 + $0x30] sm:$0xf]
        %v4613 = vld [vmem:[%s2208 + $0x34] sm:$0xf]
        %v4614 = vld [vmem:[%s2208 + $0x38] sm:$0xf]
        %v4615 = vld [vmem:[%s2208 + $0x3c] sm:$0xf]
        %v4616 = vld [vmem:[%s2208 + $0x40] sm:$0xf]
        %v4617 = vld [vmem:[%s2208 + $0x44] sm:$0xf]
        %v4618 = vld [vmem:[%s2208 + $0x48] sm:$0xf]
        %v4619 = vld [vmem:[%s2208 + $0x4c] sm:$0xf]
        %v4620 = vld [vmem:[%s2208 + $0x50] sm:$0xf]
        %v4621 = vld [vmem:[%s2208 + $0x54] sm:$0xf]
        %v4622 = vld [vmem:[%s2208 + $0x58] sm:$0xf]
        %v4623 = vld [vmem:[%s2208 + $0x5c] sm:$0xf]
        %v4624 = vld [vmem:[%s2208 + $0x60] sm:$0xf]
        %v4625 = vld [vmem:[%s2208 + $0x64] sm:$0xf]
        %v4626 = vld [vmem:[%s2208 + $0x68] sm:$0xf]
        %v4627 = vld [vmem:[%s2208 + $0x6c] sm:$0xf]
        %v4628 = vld [vmem:[%s2208 + $0x70] sm:$0xf]
        %v4629 = vld [vmem:[%s2208 + $0x74] sm:$0xf]
        %v4630 = vld [vmem:[%s2208 + $0x78] sm:$0xf]
        %v4631 = vld [vmem:[%s2208 + $0x7c] sm:$0xf]
        %v4632 = vld [vmem:[%s2208 + $0x80] sm:$0xf]
        %v4633 = vld [vmem:[%s2208 + $0x84] sm:$0xf]
        %v4634 = vld [vmem:[%s2208 + $0x88] sm:$0xf]
        %v4635 = vld [vmem:[%s2208 + $0x8c] sm:$0xf]
        %v4636 = vld [vmem:[%s2208 + $0x90] sm:$0xf]
        %v4637 = vld [vmem:[%s2208 + $0x94] sm:$0xf]
        %v4638 = vld [vmem:[%s2208 + $0x98] sm:$0xf]
        %v4639 = vld [vmem:[%s2208 + $0x9c] sm:$0xf]
        %v4640 = vld [vmem:[%s2208 + $0xa0] sm:$0xf]
        %v4641 = vld [vmem:[%s2208 + $0xa4] sm:$0xf]
        %v4642 = vld [vmem:[%s2208 + $0xa8] sm:$0xf]
        %v4643 = vld [vmem:[%s2208 + $0xac] sm:$0xf]
        %v4644 = vld [vmem:[%s2208 + $0xb0] sm:$0xf]
        %v4645 = vld [vmem:[%s2208 + $0xb4] sm:$0xf]
        %v4646 = vld [vmem:[%s2208 + $0xb8] sm:$0xf]
        %v4647 = vld [vmem:[%s2208 + $0xbc] sm:$0xf]
        %v4648 = vld [vmem:[%s2208 + $0xc0] sm:$0xf]
        %v4649 = vld [vmem:[%s2208 + $0xc4] sm:$0xf]
        %v4650 = vld [vmem:[%s2208 + $0xc8] sm:$0xf]
        %v4651 = vld [vmem:[%s2208 + $0xcc] sm:$0xf]
        %v4652 = vld [vmem:[%s2208 + $0xd0] sm:$0xf]
        %v4653 = vld [vmem:[%s2208 + $0xd4] sm:$0xf]
        %v4654 = vld [vmem:[%s2208 + $0xd8] sm:$0xf]
        %v4655 = vld [vmem:[%s2208 + $0xdc] sm:$0xf]
        %v4656 = vld [vmem:[%s2208 + $0xe0] sm:$0xf]
        %v4657 = vld [vmem:[%s2208 + $0xe4] sm:$0xf]
        %v4658 = vld [vmem:[%s2208 + $0xe8] sm:$0xf]
        %v4659 = vld [vmem:[%s2208 + $0xec] sm:$0xf]
        %v4660 = vld [vmem:[%s2208 + $0xf0] sm:$0xf]
        %v4661 = vld [vmem:[%s2208 + $0xf4] sm:$0xf]
        %v4662 = vld [vmem:[%s2208 + $0xf8] sm:$0xf]
        %v4663 = vld [vmem:[%s2208 + $0xfc] sm:$0xf]
        %v4664 = vld [vmem:[%s2208 + $0x100] sm:$0xf]
        %v4665 = vld [vmem:[%s2208 + $0x104] sm:$0xf]
        %v4666 = vld [vmem:[%s2208 + $0x108] sm:$0xf]
        %v4667 = vld [vmem:[%s2208 + $0x10c] sm:$0xf]
        %v4668 = vld [vmem:[%s2208 + $0x110] sm:$0xf]
        %v4669 = vld [vmem:[%s2208 + $0x114] sm:$0xf]
        %v4670 = vld [vmem:[%s2208 + $0x118] sm:$0xf]
        %v4671 = vld [vmem:[%s2208 + $0x11c] sm:$0xf]
        %v4672 = vld [vmem:[%s2208 + $0x120] sm:$0xf]
        %v4673 = vld [vmem:[%s2208 + $0x124] sm:$0xf]
        %v4674 = vld [vmem:[%s2208 + $0x128] sm:$0xf]
        %v4675 = vld [vmem:[%s2208 + $0x12c] sm:$0xf]
        %v4676 = vld [vmem:[%s2208 + $0x130] sm:$0xf]
        %v4677 = vld [vmem:[%s2208 + $0x134] sm:$0xf]
        %v4678 = vld [vmem:[%s2208 + $0x138] sm:$0xf]
        %v4679 = vld [vmem:[%s2208 + $0x13c] sm:$0xf]
        %v4683 = vunpack.c.l.b16 %v4597
        %v4684 = vunpack.c.h.b16 %v4597
        %v4685 = vunpack.c.l.b16 %v4598
        %v4686 = vunpack.c.h.b16 %v4598
        %v4687 = vunpack.c.l.b16 %v4599
        %v4688 = vpack.c.b16 %v4683, %v4683
        %v4689 = vpack.c.b16 %v4684, %v4684
        %v4690 = vpack.c.b16 %v4685, %v4685
        %v4691 = vpack.c.b16 %v4686, %v4686
        %v4692 = vpack.c.b16 %v4687, %v4687
        %v4778 = vunpack.c.l.b16 %v4600
        %v4779 = vunpack.c.l.b16 %v4601
        %v4780 = vunpack.c.l.b16 %v4602
        %v4781 = vunpack.c.l.b16 %v4603
        %v4782 = vunpack.c.l.b16 %v4604
        %v4783 = vunpack.c.l.b16 %v4605
        %v4784 = vunpack.c.l.b16 %v4606
        %v4785 = vunpack.c.l.b16 %v4607
        %v4786 = vunpack.c.l.b16 %v4608
        %v4787 = vunpack.c.l.b16 %v4609
        %v4788 = vunpack.c.l.b16 %v4610
        %v4789 = vunpack.c.l.b16 %v4611
        %v4790 = vunpack.c.l.b16 %v4612
        %v4791 = vunpack.c.l.b16 %v4613
        %v4792 = vunpack.c.l.b16 %v4614
        %v4793 = vunpack.c.l.b16 %v4615
        %v4794 = vunpack.c.l.b16 %v4616
        %v4795 = vunpack.c.l.b16 %v4617
        %v4796 = vunpack.c.l.b16 %v4618
        %v4797 = vunpack.c.l.b16 %v4619
        %v4798 = vunpack.c.l.b16 %v4620
        %v4799 = vunpack.c.l.b16 %v4621
        %v4800 = vunpack.c.l.b16 %v4622
        %v4801 = vunpack.c.l.b16 %v4623
        %v4802 = vunpack.c.l.b16 %v4624
        %v4803 = vunpack.c.l.b16 %v4625
        %v4804 = vunpack.c.l.b16 %v4626
        %v4805 = vunpack.c.l.b16 %v4627
        %v4806 = vunpack.c.l.b16 %v4628
        %v4807 = vunpack.c.l.b16 %v4629
        %v4808 = vunpack.c.l.b16 %v4630
        %v4809 = vunpack.c.l.b16 %v4631
        %v4810 = vunpack.c.l.b16 %v4632
        %v4811 = vunpack.c.l.b16 %v4633
        %v4812 = vunpack.c.l.b16 %v4634
        %v4813 = vunpack.c.l.b16 %v4635
        %v4814 = vunpack.c.l.b16 %v4636
        %v4815 = vunpack.c.l.b16 %v4637
        %v4816 = vunpack.c.l.b16 %v4638
        %v4817 = vunpack.c.l.b16 %v4639
        %v4818 = vunpack.c.l.b16 %v4640
        %v4819 = vunpack.c.l.b16 %v4641
        %v4820 = vunpack.c.l.b16 %v4642
        %v4821 = vunpack.c.l.b16 %v4643
        %v4822 = vunpack.c.l.b16 %v4644
        %v4823 = vunpack.c.l.b16 %v4645
        %v4824 = vunpack.c.l.b16 %v4646
        %v4825 = vunpack.c.l.b16 %v4647
        %v4826 = vunpack.c.l.b16 %v4648
        %v4827 = vunpack.c.l.b16 %v4649
        %v4828 = vunpack.c.l.b16 %v4650
        %v4829 = vunpack.c.l.b16 %v4651
        %v4830 = vunpack.c.l.b16 %v4652
        %v4831 = vunpack.c.l.b16 %v4653
        %v4832 = vunpack.c.l.b16 %v4654
        %v4833 = vunpack.c.l.b16 %v4655
        %v4834 = vunpack.c.l.b16 %v4656
        %v4835 = vunpack.c.l.b16 %v4657
        %v4836 = vunpack.c.l.b16 %v4658
        %v4837 = vunpack.c.l.b16 %v4659
        %v4838 = vunpack.c.l.b16 %v4660
        %v4839 = vunpack.c.l.b16 %v4661
        %v4840 = vunpack.c.l.b16 %v4662
        %v4841 = vunpack.c.l.b16 %v4663
        %v4842 = vunpack.c.l.b16 %v4664
        %v4843 = vunpack.c.l.b16 %v4665
        %v4844 = vunpack.c.l.b16 %v4666
        %v4845 = vunpack.c.l.b16 %v4667
        %v4846 = vunpack.c.l.b16 %v4668
        %v4847 = vunpack.c.l.b16 %v4669
        %v4848 = vunpack.c.l.b16 %v4670
        %v4849 = vunpack.c.l.b16 %v4671
        %v4850 = vunpack.c.l.b16 %v4672
        %v4851 = vunpack.c.l.b16 %v4673
        %v4852 = vunpack.c.l.b16 %v4674
        %v4853 = vunpack.c.l.b16 %v4675
        %v4854 = vunpack.c.l.b16 %v4676
        %v4855 = vunpack.c.l.b16 %v4677
        %v4856 = vunpack.c.l.b16 %v4678
        %v4857 = vunpack.c.l.b16 %v4679
        %v4858 = vpack.c.b16 %v4779, %v4778
        %v4859 = vpack.c.b16 %v4781, %v4780
        %v4860 = vpack.c.b16 %v4783, %v4782
        %v4861 = vpack.c.b16 %v4785, %v4784
        %v4862 = vpack.c.b16 %v4787, %v4786
        %v4863 = vpack.c.b16 %v4789, %v4788
        %v4864 = vpack.c.b16 %v4791, %v4790
        %v4865 = vpack.c.b16 %v4793, %v4792
        %v4866 = vpack.c.b16 %v4795, %v4794
        %v4867 = vpack.c.b16 %v4797, %v4796
        %v4868 = vpack.c.b16 %v4799, %v4798
        %v4869 = vpack.c.b16 %v4801, %v4800
        %v4870 = vpack.c.b16 %v4803, %v4802
        %v4871 = vpack.c.b16 %v4805, %v4804
        %v4872 = vpack.c.b16 %v4807, %v4806
        %v4873 = vpack.c.b16 %v4809, %v4808
        %v4874 = vpack.c.b16 %v4811, %v4810
        %v4875 = vpack.c.b16 %v4813, %v4812
        %v4876 = vpack.c.b16 %v4815, %v4814
        %v4877 = vpack.c.b16 %v4817, %v4816
        %v4878 = vpack.c.b16 %v4819, %v4818
        %v4879 = vpack.c.b16 %v4821, %v4820
        %v4880 = vpack.c.b16 %v4823, %v4822
        %v4881 = vpack.c.b16 %v4825, %v4824
        %v4882 = vpack.c.b16 %v4827, %v4826
        %v4883 = vpack.c.b16 %v4829, %v4828
        %v4884 = vpack.c.b16 %v4831, %v4830
        %v4885 = vpack.c.b16 %v4833, %v4832
        %v4886 = vpack.c.b16 %v4835, %v4834
        %v4887 = vpack.c.b16 %v4837, %v4836
        %v4888 = vpack.c.b16 %v4839, %v4838
        %v4889 = vpack.c.b16 %v4841, %v4840
        %v4890 = vpack.c.b16 %v4843, %v4842
        %v4891 = vpack.c.b16 %v4845, %v4844
        %v4892 = vpack.c.b16 %v4847, %v4846
        %v4893 = vpack.c.b16 %v4849, %v4848
        %v4894 = vpack.c.b16 %v4851, %v4850
        %v4895 = vpack.c.b16 %v4853, %v4852
        %v4896 = vpack.c.b16 %v4855, %v4854
        %v4897 = vpack.c.b16 %v4857, %v4856
        %4938 = vmatprep.subr.bf16.mxu0 0
        %4939 = vmatpush1.bf16.msra.mxu0 %v4865
        %4940 = vmatprep.subr.bf16.mxu0 0
        %4941 = vmatpush1.bf16.msra.mxu0 %v4864
        %4942 = vmatprep.subr.bf16.mxu0 0
        %4943 = vmatpush1.bf16.msra.mxu0 %v4863
        %4944 = vmatprep.subr.bf16.mxu0 0
        %4945 = vmatpush1.bf16.msra.mxu0 %v4862
        %4946 = vmatprep.subr.bf16.mxu0 0
        %4947 = vmatpush1.bf16.msra.mxu0 %v4861
        %4948 = vmatprep.subr.bf16.mxu0 0
        %4949 = vmatpush1.bf16.msra.mxu0 %v4860
        %4950 = vmatprep.subr.bf16.mxu0 0
        %4951 = vmatpush1.bf16.msra.mxu0 %v4859
        %4952 = vmatprep.subr.bf16.mxu0 0
        %4953 = vmatpush1.bf16.msra.mxu0 %v4858
        %4954 = vmatprep.subr.bf16.mxu0 0
        %4955 = vmatpush2.bf16.msra.mxu0 %v4873
        %4956 = vmatprep.subr.bf16.mxu0 0
        %4957 = vmatpush2.bf16.msra.mxu0 %v4872
        %4958 = vmatprep.subr.bf16.mxu0 0
        %4959 = vmatpush2.bf16.msra.mxu0 %v4871
        %4960 = vmatprep.subr.bf16.mxu0 0
        %4961 = vmatpush2.bf16.msra.mxu0 %v4870
        %4962 = vmatprep.subr.bf16.mxu0 0
        %4963 = vmatpush2.bf16.msra.mxu0 %v4869
        %4964 = vmatprep.subr.bf16.mxu0 0
        %4965 = vmatpush2.bf16.msra.mxu0 %v4868
        %4966 = vmatprep.subr.bf16.mxu0 0
        %4967 = vmatpush2.bf16.msra.mxu0 %v4867
        %4968 = vmatprep.subr.bf16.mxu0 0
        %4969 = vmatpush2.bf16.msra.mxu0 %v4866
        %4970 = vmatprep.mubr.bf16.mxu0 %v4689
        %4971 = vmatmul.mubr.bf16.gmra.mxu0 %v4688
        %v4972 = vpop.f32.mrf.mxu0
        %v4973 = vadd.f32 0.0, %v4972
        %v4974 = vpop.f32.mrf.mxu0
        %v4975 = vpop.f32.mrf.mxu0
        %v4976 = vpop.f32.mrf.mxu0
        %4977 = vdwg.mxu0
        %4978 = vmatprep.subr.bf16.mxu0 0
        %4979 = vmatpush1.bf16.msra.mxu0 %v4881
        %4980 = vmatprep.subr.bf16.mxu0 0
        %4981 = vmatpush1.bf16.msra.mxu0 %v4880
        %4982 = vmatprep.subr.bf16.mxu0 0
        %4983 = vmatpush1.bf16.msra.mxu0 %v4879
        %4984 = vmatprep.subr.bf16.mxu0 0
        %4985 = vmatpush1.bf16.msra.mxu0 %v4878
        %4986 = vmatprep.subr.bf16.mxu0 0
        %4987 = vmatpush1.bf16.msra.mxu0 %v4877
        %4988 = vmatprep.subr.bf16.mxu0 0
        %4989 = vmatpush1.bf16.msra.mxu0 %v4876
        %4990 = vmatprep.subr.bf16.mxu0 0
        %4991 = vmatpush1.bf16.msra.mxu0 %v4875
        %4992 = vmatprep.subr.bf16.mxu0 0
        %4993 = vmatpush1.bf16.msra.mxu0 %v4874
        %4994 = vmatprep.subr.bf16.mxu0 0
        %4995 = vmatpush2.bf16.msra.mxu0 %v4889
        %4996 = vmatprep.subr.bf16.mxu0 0
        %4997 = vmatpush2.bf16.msra.mxu0 %v4888
        %4998 = vmatprep.subr.bf16.mxu0 0
        %4999 = vmatpush2.bf16.msra.mxu0 %v4887
        %5000 = vmatprep.subr.bf16.mxu0 0
        %5001 = vmatpush2.bf16.msra.mxu0 %v4886
        %5002 = vmatprep.subr.bf16.mxu0 0
        %5003 = vmatpush2.bf16.msra.mxu0 %v4885
        %5004 = vmatprep.subr.bf16.mxu0 0
        %5005 = vmatpush2.bf16.msra.mxu0 %v4884
        %5006 = vmatprep.subr.bf16.mxu0 0
        %5007 = vmatpush2.bf16.msra.mxu0 %v4883
        %5008 = vmatprep.subr.bf16.mxu0 0
        %5009 = vmatpush2.bf16.msra.mxu0 %v4882
        %5010 = vmatprep.mubr.bf16.mxu0 %v4691
        %5011 = vmatmul.mubr.bf16.gmra.mxu0 %v4690
        %v5012 = vpop.f32.mrf.mxu0
        %v5013 = vadd.f32 %v4973, %v5012
        %v5014 = vpop.f32.mrf.mxu0
        %v5015 = vpop.f32.mrf.mxu0
        %v5016 = vpop.f32.mrf.mxu0
        %5017 = vdwg.mxu0
        %5018 = vmatprep.subr.bf16.mxu0 0
        %5019 = vmatpush1.bf16.msra.mxu0 %v4897
        %5020 = vmatprep.subr.bf16.mxu0 0
        %5021 = vmatpush1.bf16.msra.mxu0 %v4896
        %5022 = vmatprep.subr.bf16.mxu0 0
        %5023 = vmatpush1.bf16.msra.mxu0 %v4895
        %5024 = vmatprep.subr.bf16.mxu0 0
        %5025 = vmatpush1.bf16.msra.mxu0 %v4894
        %5026 = vmatprep.subr.bf16.mxu0 0
        %5027 = vmatpush1.bf16.msra.mxu0 %v4893
        %5028 = vmatprep.subr.bf16.mxu0 0
        %5029 = vmatpush1.bf16.msra.mxu0 %v4892
        %5030 = vmatprep.subr.bf16.mxu0 0
        %5031 = vmatpush1.bf16.msra.mxu0 %v4891
        %5032 = vmatprep.subr.bf16.mxu0 0
        %5033 = vmatpush1.bf16.msra.mxu0 %v4890
        %5034 = vmatprep.subr.bf16.mxu0 0
        %5035 = vmatpush2.bf16.msra.mxu0 0
        %5036 = vmatprep.subr.bf16.mxu0 0
        %5037 = vmatpush2.bf16.msra.mxu0 0
        %5038 = vmatprep.subr.bf16.mxu0 0
        %5039 = vmatpush2.bf16.msra.mxu0 0
        %5040 = vmatprep.subr.bf16.mxu0 0
        %5041 = vmatpush2.bf16.msra.mxu0 0
        %5042 = vmatprep.subr.bf16.mxu0 0
        %5043 = vmatpush2.bf16.msra.mxu0 0
        %5044 = vmatprep.subr.bf16.mxu0 0
        %5045 = vmatpush2.bf16.msra.mxu0 0
        %5046 = vmatprep.subr.bf16.mxu0 0
        %5047 = vmatpush2.bf16.msra.mxu0 0
        %5048 = vmatprep.subr.bf16.mxu0 0
        %5049 = vmatpush2.bf16.msra.mxu0 0
        %5050 = vmatprep.mubr.bf16.mxu0 0
        %5051 = vmatmul.mubr.bf16.gmra.mxu0 %v4692
        %v5052 = vpop.f32.mrf.mxu0
        %v5053 = vadd.f32 %v5013, %v5052
        %v5054 = vpop.f32.mrf.mxu0
        %v5055 = vpop.f32.mrf.mxu0
        %v5056 = vpop.f32.mrf.mxu0
        %5057 = vdwg.mxu0
        %v5061 = vunpack.c.l.b16 %v4514
        %v5062 = vunpack.c.h.b16 %v4514
        %v5063 = vunpack.c.l.b16 %v4515
        %v5064 = vunpack.c.h.b16 %v4515
        %v5065 = vunpack.c.l.b16 %v4516
        %v5066 = vpack.c.b16 %v5061, %v5061
        %v5067 = vpack.c.b16 %v5062, %v5062
        %v5068 = vpack.c.b16 %v5063, %v5063
        %v5069 = vpack.c.b16 %v5064, %v5064
        %v5070 = vpack.c.b16 %v5065, %v5065
        %v5156 = vunpack.c.l.b16 %v4517
        %v5157 = vunpack.c.l.b16 %v4518
        %v5158 = vunpack.c.l.b16 %v4519
        %v5159 = vunpack.c.l.b16 %v4520
        %v5160 = vunpack.c.l.b16 %v4521
        %v5161 = vunpack.c.l.b16 %v4522
        %v5162 = vunpack.c.l.b16 %v4523
        %v5163 = vunpack.c.l.b16 %v4524
        %v5164 = vunpack.c.l.b16 %v4525
        %v5165 = vunpack.c.l.b16 %v4526
        %v5166 = vunpack.c.l.b16 %v4527
        %v5167 = vunpack.c.l.b16 %v4528
        %v5168 = vunpack.c.l.b16 %v4529
        %v5169 = vunpack.c.l.b16 %v4530
        %v5170 = vunpack.c.l.b16 %v4531
        %v5171 = vunpack.c.l.b16 %v4532
        %v5172 = vunpack.c.l.b16 %v4533
        %v5173 = vunpack.c.l.b16 %v4534
        %v5174 = vunpack.c.l.b16 %v4535
        %v5175 = vunpack.c.l.b16 %v4536
        %v5176 = vunpack.c.l.b16 %v4537
        %v5177 = vunpack.c.l.b16 %v4538
        %v5178 = vunpack.c.l.b16 %v4539
        %v5179 = vunpack.c.l.b16 %v4540
        %v5180 = vunpack.c.l.b16 %v4541
        %v5181 = vunpack.c.l.b16 %v4542
        %v5182 = vunpack.c.l.b16 %v4543
        %v5183 = vunpack.c.l.b16 %v4544
        %v5184 = vunpack.c.l.b16 %v4545
        %v5185 = vunpack.c.l.b16 %v4546
        %v5186 = vunpack.c.l.b16 %v4547
        %v5187 = vunpack.c.l.b16 %v4548
        %v5188 = vunpack.c.l.b16 %v4549
        %v5189 = vunpack.c.l.b16 %v4550
        %v5190 = vunpack.c.l.b16 %v4551
        %v5191 = vunpack.c.l.b16 %v4552
        %v5192 = vunpack.c.l.b16 %v4553
        %v5193 = vunpack.c.l.b16 %v4554
        %v5194 = vunpack.c.l.b16 %v4555
        %v5195 = vunpack.c.l.b16 %v4556
        %v5196 = vunpack.c.l.b16 %v4557
        %v5197 = vunpack.c.l.b16 %v4558
        %v5198 = vunpack.c.l.b16 %v4559
        %v5199 = vunpack.c.l.b16 %v4560
        %v5200 = vunpack.c.l.b16 %v4561
        %v5201 = vunpack.c.l.b16 %v4562
        %v5202 = vunpack.c.l.b16 %v4563
        %v5203 = vunpack.c.l.b16 %v4564
        %v5204 = vunpack.c.l.b16 %v4565
        %v5205 = vunpack.c.l.b16 %v4566
        %v5206 = vunpack.c.l.b16 %v4567
        %v5207 = vunpack.c.l.b16 %v4568
        %v5208 = vunpack.c.l.b16 %v4569
        %v5209 = vunpack.c.l.b16 %v4570
        %v5210 = vunpack.c.l.b16 %v4571
        %v5211 = vunpack.c.l.b16 %v4572
        %v5212 = vunpack.c.l.b16 %v4573
        %v5213 = vunpack.c.l.b16 %v4574
        %v5214 = vunpack.c.l.b16 %v4575
        %v5215 = vunpack.c.l.b16 %v4576
        %v5216 = vunpack.c.l.b16 %v4577
        %v5217 = vunpack.c.l.b16 %v4578
        %v5218 = vunpack.c.l.b16 %v4579
        %v5219 = vunpack.c.l.b16 %v4580
        %v5220 = vunpack.c.l.b16 %v4581
        %v5221 = vunpack.c.l.b16 %v4582
        %v5222 = vunpack.c.l.b16 %v4583
        %v5223 = vunpack.c.l.b16 %v4584
        %v5224 = vunpack.c.l.b16 %v4585
        %v5225 = vunpack.c.l.b16 %v4586
        %v5226 = vunpack.c.l.b16 %v4587
        %v5227 = vunpack.c.l.b16 %v4588
        %v5228 = vunpack.c.l.b16 %v4589
        %v5229 = vunpack.c.l.b16 %v4590
        %v5230 = vunpack.c.l.b16 %v4591
        %v5231 = vunpack.c.l.b16 %v4592
        %v5232 = vunpack.c.l.b16 %v4593
        %v5233 = vunpack.c.l.b16 %v4594
        %v5234 = vunpack.c.l.b16 %v4595
        %v5235 = vunpack.c.l.b16 %v4596
        %v5236 = vpack.c.b16 %v5157, %v5156
        %v5237 = vpack.c.b16 %v5159, %v5158
        %v5238 = vpack.c.b16 %v5161, %v5160
        %v5239 = vpack.c.b16 %v5163, %v5162
        %v5240 = vpack.c.b16 %v5165, %v5164
        %v5241 = vpack.c.b16 %v5167, %v5166
        %v5242 = vpack.c.b16 %v5169, %v5168
        %v5243 = vpack.c.b16 %v5171, %v5170
        %v5244 = vpack.c.b16 %v5173, %v5172
        %v5245 = vpack.c.b16 %v5175, %v5174
        %v5246 = vpack.c.b16 %v5177, %v5176
        %v5247 = vpack.c.b16 %v5179, %v5178
        %v5248 = vpack.c.b16 %v5181, %v5180
        %v5249 = vpack.c.b16 %v5183, %v5182
        %v5250 = vpack.c.b16 %v5185, %v5184
        %v5251 = vpack.c.b16 %v5187, %v5186
        %v5252 = vpack.c.b16 %v5189, %v5188
        %v5253 = vpack.c.b16 %v5191, %v5190
        %v5254 = vpack.c.b16 %v5193, %v5192
        %v5255 = vpack.c.b16 %v5195, %v5194
        %v5256 = vpack.c.b16 %v5197, %v5196
        %v5257 = vpack.c.b16 %v5199, %v5198
        %v5258 = vpack.c.b16 %v5201, %v5200
        %v5259 = vpack.c.b16 %v5203, %v5202
        %v5260 = vpack.c.b16 %v5205, %v5204
        %v5261 = vpack.c.b16 %v5207, %v5206
        %v5262 = vpack.c.b16 %v5209, %v5208
        %v5263 = vpack.c.b16 %v5211, %v5210
        %v5264 = vpack.c.b16 %v5213, %v5212
        %v5265 = vpack.c.b16 %v5215, %v5214
        %v5266 = vpack.c.b16 %v5217, %v5216
        %v5267 = vpack.c.b16 %v5219, %v5218
        %v5268 = vpack.c.b16 %v5221, %v5220
        %v5269 = vpack.c.b16 %v5223, %v5222
        %v5270 = vpack.c.b16 %v5225, %v5224
        %v5271 = vpack.c.b16 %v5227, %v5226
        %v5272 = vpack.c.b16 %v5229, %v5228
        %v5273 = vpack.c.b16 %v5231, %v5230
        %v5274 = vpack.c.b16 %v5233, %v5232
        %v5275 = vpack.c.b16 %v5235, %v5234
        %5316 = vmatprep.subr.bf16.mxu0 0
        %5317 = vmatpush1.bf16.msra.mxu0 %v5243
        %5318 = vmatprep.subr.bf16.mxu0 0
        %5319 = vmatpush1.bf16.msra.mxu0 %v5242
        %5320 = vmatprep.subr.bf16.mxu0 0
        %5321 = vmatpush1.bf16.msra.mxu0 %v5241
        %5322 = vmatprep.subr.bf16.mxu0 0
        %5323 = vmatpush1.bf16.msra.mxu0 %v5240
        %5324 = vmatprep.subr.bf16.mxu0 0
        %5325 = vmatpush1.bf16.msra.mxu0 %v5239
        %5326 = vmatprep.subr.bf16.mxu0 0
        %5327 = vmatpush1.bf16.msra.mxu0 %v5238
        %5328 = vmatprep.subr.bf16.mxu0 0
        %5329 = vmatpush1.bf16.msra.mxu0 %v5237
        %5330 = vmatprep.subr.bf16.mxu0 0
        %5331 = vmatpush1.bf16.msra.mxu0 %v5236
        %5332 = vmatprep.subr.bf16.mxu0 0
        %5333 = vmatpush2.bf16.msra.mxu0 %v5251
        %5334 = vmatprep.subr.bf16.mxu0 0
        %5335 = vmatpush2.bf16.msra.mxu0 %v5250
        %5336 = vmatprep.subr.bf16.mxu0 0
        %5337 = vmatpush2.bf16.msra.mxu0 %v5249
        %5338 = vmatprep.subr.bf16.mxu0 0
        %5339 = vmatpush2.bf16.msra.mxu0 %v5248
        %5340 = vmatprep.subr.bf16.mxu0 0
        %5341 = vmatpush2.bf16.msra.mxu0 %v5247
        %5342 = vmatprep.subr.bf16.mxu0 0
        %5343 = vmatpush2.bf16.msra.mxu0 %v5246
        %5344 = vmatprep.subr.bf16.mxu0 0
        %5345 = vmatpush2.bf16.msra.mxu0 %v5245
        %5346 = vmatprep.subr.bf16.mxu0 0
        %5347 = vmatpush2.bf16.msra.mxu0 %v5244
        %5348 = vmatprep.mubr.bf16.mxu0 %v5067
        %5349 = vmatmul.mubr.bf16.gmra.mxu0 %v5066
        %v5350 = vpop.f32.mrf.mxu0
        %v5351 = vadd.f32 %v5053, %v5350
        %v5352 = vpop.f32.mrf.mxu0
        %v5353 = vpop.f32.mrf.mxu0
        %v5354 = vpop.f32.mrf.mxu0
        %5355 = vdwg.mxu0
        %5356 = vmatprep.subr.bf16.mxu0 0
        %5357 = vmatpush1.bf16.msra.mxu0 %v5259
        %5358 = vmatprep.subr.bf16.mxu0 0
        %5359 = vmatpush1.bf16.msra.mxu0 %v5258
        %5360 = vmatprep.subr.bf16.mxu0 0
        %5361 = vmatpush1.bf16.msra.mxu0 %v5257
        %5362 = vmatprep.subr.bf16.mxu0 0
        %5363 = vmatpush1.bf16.msra.mxu0 %v5256
        %5364 = vmatprep.subr.bf16.mxu0 0
        %5365 = vmatpush1.bf16.msra.mxu0 %v5255
        %5366 = vmatprep.subr.bf16.mxu0 0
        %5367 = vmatpush1.bf16.msra.mxu0 %v5254
        %5368 = vmatprep.subr.bf16.mxu0 0
        %5369 = vmatpush1.bf16.msra.mxu0 %v5253
        %5370 = vmatprep.subr.bf16.mxu0 0
        %5371 = vmatpush1.bf16.msra.mxu0 %v5252
        %5372 = vmatprep.subr.bf16.mxu0 0
        %5373 = vmatpush2.bf16.msra.mxu0 %v5267
        %5374 = vmatprep.subr.bf16.mxu0 0
        %5375 = vmatpush2.bf16.msra.mxu0 %v5266
        %5376 = vmatprep.subr.bf16.mxu0 0
        %5377 = vmatpush2.bf16.msra.mxu0 %v5265
        %5378 = vmatprep.subr.bf16.mxu0 0
        %5379 = vmatpush2.bf16.msra.mxu0 %v5264
        %5380 = vmatprep.subr.bf16.mxu0 0
        %5381 = vmatpush2.bf16.msra.mxu0 %v5263
        %5382 = vmatprep.subr.bf16.mxu0 0
        %5383 = vmatpush2.bf16.msra.mxu0 %v5262
        %5384 = vmatprep.subr.bf16.mxu0 0
        %5385 = vmatpush2.bf16.msra.mxu0 %v5261
        %5386 = vmatprep.subr.bf16.mxu0 0
        %5387 = vmatpush2.bf16.msra.mxu0 %v5260
        %5388 = vmatprep.mubr.bf16.mxu0 %v5069
        %5389 = vmatmul.mubr.bf16.gmra.mxu0 %v5068
        %v5390 = vpop.f32.mrf.mxu0
        %v5391 = vadd.f32 %v5351, %v5390
        %v5392 = vpop.f32.mrf.mxu0
        %v5393 = vpop.f32.mrf.mxu0
        %v5394 = vpop.f32.mrf.mxu0
        %5395 = vdwg.mxu0
        %5396 = vmatprep.subr.bf16.mxu0 0
        %5397 = vmatpush1.bf16.msra.mxu0 %v5275
        %5398 = vmatprep.subr.bf16.mxu0 0
        %5399 = vmatpush1.bf16.msra.mxu0 %v5274
        %5400 = vmatprep.subr.bf16.mxu0 0
        %5401 = vmatpush1.bf16.msra.mxu0 %v5273
        %5402 = vmatprep.subr.bf16.mxu0 0
        %5403 = vmatpush1.bf16.msra.mxu0 %v5272
        %5404 = vmatprep.subr.bf16.mxu0 0
        %5405 = vmatpush1.bf16.msra.mxu0 %v5271
        %5406 = vmatprep.subr.bf16.mxu0 0
        %5407 = vmatpush1.bf16.msra.mxu0 %v5270
        %5408 = vmatprep.subr.bf16.mxu0 0
        %5409 = vmatpush1.bf16.msra.mxu0 %v5269
        %5410 = vmatprep.subr.bf16.mxu0 0
        %5411 = vmatpush1.bf16.msra.mxu0 %v5268
        %5412 = vmatprep.subr.bf16.mxu0 0
        %5413 = vmatpush2.bf16.msra.mxu0 0
        %5414 = vmatprep.subr.bf16.mxu0 0
        %5415 = vmatpush2.bf16.msra.mxu0 0
        %5416 = vmatprep.subr.bf16.mxu0 0
        %5417 = vmatpush2.bf16.msra.mxu0 0
        %5418 = vmatprep.subr.bf16.mxu0 0
        %5419 = vmatpush2.bf16.msra.mxu0 0
        %5420 = vmatprep.subr.bf16.mxu0 0
        %5421 = vmatpush2.bf16.msra.mxu0 0
        %5422 = vmatprep.subr.bf16.mxu0 0
        %5423 = vmatpush2.bf16.msra.mxu0 0
        %5424 = vmatprep.subr.bf16.mxu0 0
        %5425 = vmatpush2.bf16.msra.mxu0 0
        %5426 = vmatprep.subr.bf16.mxu0 0
        %5427 = vmatpush2.bf16.msra.mxu0 0
        %5428 = vmatprep.mubr.bf16.mxu0 0
        %5429 = vmatmul.mubr.bf16.gmra.mxu0 %v5070
        %v5430 = vpop.f32.mrf.mxu0
        %v5431 = vadd.f32 %v5391, %v5430
        %v5432 = vpop.f32.mrf.mxu0
        %v5433 = vpop.f32.mrf.mxu0
        %v5434 = vpop.f32.mrf.mxu0
        %5435 = vdwg.mxu0
        %v5436 = vld [vmem:[%s1347 + $0xc] sm:$0x33]
        %v5437 = vld [vmem:[%s1347 + $0x14] sm:$0x33]
        %v5438 = vld [vmem:[%s1347 + $0x1c] sm:$0x3]
        %v5439 = vld [vmem:[%s3048] sm:$0xf]
        %v5440 = vld [vmem:[%s3048 + $0x4] sm:$0xf]
        %v5441 = vld [vmem:[%s3048 + $0x8] sm:$0xf]
        %v5442 = vld [vmem:[%s3048 + $0xc] sm:$0xf]
        %v5443 = vld [vmem:[%s3048 + $0x10] sm:$0xf]
        %v5444 = vld [vmem:[%s3048 + $0x14] sm:$0xf]
        %v5445 = vld [vmem:[%s3048 + $0x18] sm:$0xf]
        %v5446 = vld [vmem:[%s3048 + $0x1c] sm:$0xf]
        %v5447 = vld [vmem:[%s3048 + $0x20] sm:$0xf]
        %v5448 = vld [vmem:[%s3048 + $0x24] sm:$0xf]
        %v5449 = vld [vmem:[%s3048 + $0x28] sm:$0xf]
        %v5450 = vld [vmem:[%s3048 + $0x2c] sm:$0xf]
        %v5451 = vld [vmem:[%s3048 + $0x30] sm:$0xf]
        %v5452 = vld [vmem:[%s3048 + $0x34] sm:$0xf]
        %v5453 = vld [vmem:[%s3048 + $0x38] sm:$0xf]
        %v5454 = vld [vmem:[%s3048 + $0x3c] sm:$0xf]
        %v5455 = vld [vmem:[%s3048 + $0x40] sm:$0xf]
        %v5456 = vld [vmem:[%s3048 + $0x44] sm:$0xf]
        %v5457 = vld [vmem:[%s3048 + $0x48] sm:$0xf]
        %v5458 = vld [vmem:[%s3048 + $0x4c] sm:$0xf]
        %v5459 = vld [vmem:[%s3048 + $0x50] sm:$0xf]
        %v5460 = vld [vmem:[%s3048 + $0x54] sm:$0xf]
        %v5461 = vld [vmem:[%s3048 + $0x58] sm:$0xf]
        %v5462 = vld [vmem:[%s3048 + $0x5c] sm:$0xf]
        %v5463 = vld [vmem:[%s3048 + $0x60] sm:$0xf]
        %v5464 = vld [vmem:[%s3048 + $0x64] sm:$0xf]
        %v5465 = vld [vmem:[%s3048 + $0x68] sm:$0xf]
        %v5466 = vld [vmem:[%s3048 + $0x6c] sm:$0xf]
        %v5467 = vld [vmem:[%s3048 + $0x70] sm:$0xf]
        %v5468 = vld [vmem:[%s3048 + $0x74] sm:$0xf]
        %v5469 = vld [vmem:[%s3048 + $0x78] sm:$0xf]
        %v5470 = vld [vmem:[%s3048 + $0x7c] sm:$0xf]
        %v5471 = vld [vmem:[%s3048 + $0x80] sm:$0xf]
        %v5472 = vld [vmem:[%s3048 + $0x84] sm:$0xf]
        %v5473 = vld [vmem:[%s3048 + $0x88] sm:$0xf]
        %v5474 = vld [vmem:[%s3048 + $0x8c] sm:$0xf]
        %v5475 = vld [vmem:[%s3048 + $0x90] sm:$0xf]
        %v5476 = vld [vmem:[%s3048 + $0x94] sm:$0xf]
        %v5477 = vld [vmem:[%s3048 + $0x98] sm:$0xf]
        %v5478 = vld [vmem:[%s3048 + $0x9c] sm:$0xf]
        %v5479 = vld [vmem:[%s3048 + $0xa0] sm:$0xf]
        %v5480 = vld [vmem:[%s3048 + $0xa4] sm:$0xf]
        %v5481 = vld [vmem:[%s3048 + $0xa8] sm:$0xf]
        %v5482 = vld [vmem:[%s3048 + $0xac] sm:$0xf]
        %v5483 = vld [vmem:[%s3048 + $0xb0] sm:$0xf]
        %v5484 = vld [vmem:[%s3048 + $0xb4] sm:$0xf]
        %v5485 = vld [vmem:[%s3048 + $0xb8] sm:$0xf]
        %v5486 = vld [vmem:[%s3048 + $0xbc] sm:$0xf]
        %v5487 = vld [vmem:[%s3048 + $0xc0] sm:$0xf]
        %v5488 = vld [vmem:[%s3048 + $0xc4] sm:$0xf]
        %v5489 = vld [vmem:[%s3048 + $0xc8] sm:$0xf]
        %v5490 = vld [vmem:[%s3048 + $0xcc] sm:$0xf]
        %v5491 = vld [vmem:[%s3048 + $0xd0] sm:$0xf]
        %v5492 = vld [vmem:[%s3048 + $0xd4] sm:$0xf]
        %v5493 = vld [vmem:[%s3048 + $0xd8] sm:$0xf]
        %v5494 = vld [vmem:[%s3048 + $0xdc] sm:$0xf]
        %v5495 = vld [vmem:[%s3048 + $0xe0] sm:$0xf]
        %v5496 = vld [vmem:[%s3048 + $0xe4] sm:$0xf]
        %v5497 = vld [vmem:[%s3048 + $0xe8] sm:$0xf]
        %v5498 = vld [vmem:[%s3048 + $0xec] sm:$0xf]
        %v5499 = vld [vmem:[%s3048 + $0xf0] sm:$0xf]
        %v5500 = vld [vmem:[%s3048 + $0xf4] sm:$0xf]
        %v5501 = vld [vmem:[%s3048 + $0xf8] sm:$0xf]
        %v5502 = vld [vmem:[%s3048 + $0xfc] sm:$0xf]
        %v5503 = vld [vmem:[%s3048 + $0x100] sm:$0xf]
        %v5504 = vld [vmem:[%s3048 + $0x104] sm:$0xf]
        %v5505 = vld [vmem:[%s3048 + $0x108] sm:$0xf]
        %v5506 = vld [vmem:[%s3048 + $0x10c] sm:$0xf]
        %v5507 = vld [vmem:[%s3048 + $0x110] sm:$0xf]
        %v5508 = vld [vmem:[%s3048 + $0x114] sm:$0xf]
        %v5509 = vld [vmem:[%s3048 + $0x118] sm:$0xf]
        %v5510 = vld [vmem:[%s3048 + $0x11c] sm:$0xf]
        %v5511 = vld [vmem:[%s3048 + $0x120] sm:$0xf]
        %v5512 = vld [vmem:[%s3048 + $0x124] sm:$0xf]
        %v5513 = vld [vmem:[%s3048 + $0x128] sm:$0xf]
        %v5514 = vld [vmem:[%s3048 + $0x12c] sm:$0xf]
        %v5515 = vld [vmem:[%s3048 + $0x130] sm:$0xf]
        %v5516 = vld [vmem:[%s3048 + $0x134] sm:$0xf]
        %v5517 = vld [vmem:[%s3048 + $0x138] sm:$0xf]
        %v5518 = vld [vmem:[%s3048 + $0x13c] sm:$0xf]
        %v5522 = vunpack.c.l.b16 %v5436
        %v5523 = vunpack.c.h.b16 %v5436
        %v5524 = vunpack.c.l.b16 %v5437
        %v5525 = vunpack.c.h.b16 %v5437
        %v5526 = vunpack.c.l.b16 %v5438
        %v5527 = vpack.c.b16 %v5522, %v5522
        %v5528 = vpack.c.b16 %v5523, %v5523
        %v5529 = vpack.c.b16 %v5524, %v5524
        %v5530 = vpack.c.b16 %v5525, %v5525
        %v5531 = vpack.c.b16 %v5526, %v5526
        %v5617 = vunpack.c.l.b16 %v5439
        %v5618 = vunpack.c.l.b16 %v5440
        %v5619 = vunpack.c.l.b16 %v5441
        %v5620 = vunpack.c.l.b16 %v5442
        %v5621 = vunpack.c.l.b16 %v5443
        %v5622 = vunpack.c.l.b16 %v5444
        %v5623 = vunpack.c.l.b16 %v5445
        %v5624 = vunpack.c.l.b16 %v5446
        %v5625 = vunpack.c.l.b16 %v5447
        %v5626 = vunpack.c.l.b16 %v5448
        %v5627 = vunpack.c.l.b16 %v5449
        %v5628 = vunpack.c.l.b16 %v5450
        %v5629 = vunpack.c.l.b16 %v5451
        %v5630 = vunpack.c.l.b16 %v5452
        %v5631 = vunpack.c.l.b16 %v5453
        %v5632 = vunpack.c.l.b16 %v5454
        %v5633 = vunpack.c.l.b16 %v5455
        %v5634 = vunpack.c.l.b16 %v5456
        %v5635 = vunpack.c.l.b16 %v5457
        %v5636 = vunpack.c.l.b16 %v5458
        %v5637 = vunpack.c.l.b16 %v5459
        %v5638 = vunpack.c.l.b16 %v5460
        %v5639 = vunpack.c.l.b16 %v5461
        %v5640 = vunpack.c.l.b16 %v5462
        %v5641 = vunpack.c.l.b16 %v5463
        %v5642 = vunpack.c.l.b16 %v5464
        %v5643 = vunpack.c.l.b16 %v5465
        %v5644 = vunpack.c.l.b16 %v5466
        %v5645 = vunpack.c.l.b16 %v5467
        %v5646 = vunpack.c.l.b16 %v5468
        %v5647 = vunpack.c.l.b16 %v5469
        %v5648 = vunpack.c.l.b16 %v5470
        %v5649 = vunpack.c.l.b16 %v5471
        %v5650 = vunpack.c.l.b16 %v5472
        %v5651 = vunpack.c.l.b16 %v5473
        %v5652 = vunpack.c.l.b16 %v5474
        %v5653 = vunpack.c.l.b16 %v5475
        %v5654 = vunpack.c.l.b16 %v5476
        %v5655 = vunpack.c.l.b16 %v5477
        %v5656 = vunpack.c.l.b16 %v5478
        %v5657 = vunpack.c.l.b16 %v5479
        %v5658 = vunpack.c.l.b16 %v5480
        %v5659 = vunpack.c.l.b16 %v5481
        %v5660 = vunpack.c.l.b16 %v5482
        %v5661 = vunpack.c.l.b16 %v5483
        %v5662 = vunpack.c.l.b16 %v5484
        %v5663 = vunpack.c.l.b16 %v5485
        %v5664 = vunpack.c.l.b16 %v5486
        %v5665 = vunpack.c.l.b16 %v5487
        %v5666 = vunpack.c.l.b16 %v5488
        %v5667 = vunpack.c.l.b16 %v5489
        %v5668 = vunpack.c.l.b16 %v5490
        %v5669 = vunpack.c.l.b16 %v5491
        %v5670 = vunpack.c.l.b16 %v5492
        %v5671 = vunpack.c.l.b16 %v5493
        %v5672 = vunpack.c.l.b16 %v5494
        %v5673 = vunpack.c.l.b16 %v5495
        %v5674 = vunpack.c.l.b16 %v5496
        %v5675 = vunpack.c.l.b16 %v5497
        %v5676 = vunpack.c.l.b16 %v5498
        %v5677 = vunpack.c.l.b16 %v5499
        %v5678 = vunpack.c.l.b16 %v5500
        %v5679 = vunpack.c.l.b16 %v5501
        %v5680 = vunpack.c.l.b16 %v5502
        %v5681 = vunpack.c.l.b16 %v5503
        %v5682 = vunpack.c.l.b16 %v5504
        %v5683 = vunpack.c.l.b16 %v5505
        %v5684 = vunpack.c.l.b16 %v5506
        %v5685 = vunpack.c.l.b16 %v5507
        %v5686 = vunpack.c.l.b16 %v5508
        %v5687 = vunpack.c.l.b16 %v5509
        %v5688 = vunpack.c.l.b16 %v5510
        %v5689 = vunpack.c.l.b16 %v5511
        %v5690 = vunpack.c.l.b16 %v5512
        %v5691 = vunpack.c.l.b16 %v5513
        %v5692 = vunpack.c.l.b16 %v5514
        %v5693 = vunpack.c.l.b16 %v5515
        %v5694 = vunpack.c.l.b16 %v5516
        %v5695 = vunpack.c.l.b16 %v5517
        %v5696 = vunpack.c.l.b16 %v5518
        %v5697 = vpack.c.b16 %v5618, %v5617
        %v5698 = vpack.c.b16 %v5620, %v5619
        %v5699 = vpack.c.b16 %v5622, %v5621
        %v5700 = vpack.c.b16 %v5624, %v5623
        %v5701 = vpack.c.b16 %v5626, %v5625
        %v5702 = vpack.c.b16 %v5628, %v5627
        %v5703 = vpack.c.b16 %v5630, %v5629
        %v5704 = vpack.c.b16 %v5632, %v5631
        %v5705 = vpack.c.b16 %v5634, %v5633
        %v5706 = vpack.c.b16 %v5636, %v5635
        %v5707 = vpack.c.b16 %v5638, %v5637
        %v5708 = vpack.c.b16 %v5640, %v5639
        %v5709 = vpack.c.b16 %v5642, %v5641
        %v5710 = vpack.c.b16 %v5644, %v5643
        %v5711 = vpack.c.b16 %v5646, %v5645
        %v5712 = vpack.c.b16 %v5648, %v5647
        %v5713 = vpack.c.b16 %v5650, %v5649
        %v5714 = vpack.c.b16 %v5652, %v5651
        %v5715 = vpack.c.b16 %v5654, %v5653
        %v5716 = vpack.c.b16 %v5656, %v5655
        %v5717 = vpack.c.b16 %v5658, %v5657
        %v5718 = vpack.c.b16 %v5660, %v5659
        %v5719 = vpack.c.b16 %v5662, %v5661
        %v5720 = vpack.c.b16 %v5664, %v5663
        %v5721 = vpack.c.b16 %v5666, %v5665
        %v5722 = vpack.c.b16 %v5668, %v5667
        %v5723 = vpack.c.b16 %v5670, %v5669
        %v5724 = vpack.c.b16 %v5672, %v5671
        %v5725 = vpack.c.b16 %v5674, %v5673
        %v5726 = vpack.c.b16 %v5676, %v5675
        %v5727 = vpack.c.b16 %v5678, %v5677
        %v5728 = vpack.c.b16 %v5680, %v5679
        %v5729 = vpack.c.b16 %v5682, %v5681
        %v5730 = vpack.c.b16 %v5684, %v5683
        %v5731 = vpack.c.b16 %v5686, %v5685
        %v5732 = vpack.c.b16 %v5688, %v5687
        %v5733 = vpack.c.b16 %v5690, %v5689
        %v5734 = vpack.c.b16 %v5692, %v5691
        %v5735 = vpack.c.b16 %v5694, %v5693
        %v5736 = vpack.c.b16 %v5696, %v5695
        %5777 = vmatprep.subr.bf16.mxu0 0
        %5778 = vmatpush1.bf16.msra.mxu0 %v5704
        %5779 = vmatprep.subr.bf16.mxu0 0
        %5780 = vmatpush1.bf16.msra.mxu0 %v5703
        %5781 = vmatprep.subr.bf16.mxu0 0
        %5782 = vmatpush1.bf16.msra.mxu0 %v5702
        %5783 = vmatprep.subr.bf16.mxu0 0
        %5784 = vmatpush1.bf16.msra.mxu0 %v5701
        %5785 = vmatprep.subr.bf16.mxu0 0
        %5786 = vmatpush1.bf16.msra.mxu0 %v5700
        %5787 = vmatprep.subr.bf16.mxu0 0
        %5788 = vmatpush1.bf16.msra.mxu0 %v5699
        %5789 = vmatprep.subr.bf16.mxu0 0
        %5790 = vmatpush1.bf16.msra.mxu0 %v5698
        %5791 = vmatprep.subr.bf16.mxu0 0
        %5792 = vmatpush1.bf16.msra.mxu0 %v5697
        %5793 = vmatprep.subr.bf16.mxu0 0
        %5794 = vmatpush2.bf16.msra.mxu0 %v5712
        %5795 = vmatprep.subr.bf16.mxu0 0
        %5796 = vmatpush2.bf16.msra.mxu0 %v5711
        %5797 = vmatprep.subr.bf16.mxu0 0
        %5798 = vmatpush2.bf16.msra.mxu0 %v5710
        %5799 = vmatprep.subr.bf16.mxu0 0
        %5800 = vmatpush2.bf16.msra.mxu0 %v5709
        %5801 = vmatprep.subr.bf16.mxu0 0
        %5802 = vmatpush2.bf16.msra.mxu0 %v5708
        %5803 = vmatprep.subr.bf16.mxu0 0
        %5804 = vmatpush2.bf16.msra.mxu0 %v5707
        %5805 = vmatprep.subr.bf16.mxu0 0
        %5806 = vmatpush2.bf16.msra.mxu0 %v5706
        %5807 = vmatprep.subr.bf16.mxu0 0
        %5808 = vmatpush2.bf16.msra.mxu0 %v5705
        %5809 = vmatprep.mubr.bf16.mxu0 %v5528
        %5810 = vmatmul.mubr.bf16.gmra.mxu0 %v5527
        %v5811 = vpop.f32.mrf.mxu0
        %v5812 = vadd.f32 0.0, %v5811
        %v5813 = vpop.f32.mrf.mxu0
        %v5814 = vpop.f32.mrf.mxu0
        %v5815 = vpop.f32.mrf.mxu0
        %5816 = vdwg.mxu0
        %5817 = vmatprep.subr.bf16.mxu0 0
        %5818 = vmatpush1.bf16.msra.mxu0 %v5720
        %5819 = vmatprep.subr.bf16.mxu0 0
        %5820 = vmatpush1.bf16.msra.mxu0 %v5719
        %5821 = vmatprep.subr.bf16.mxu0 0
        %5822 = vmatpush1.bf16.msra.mxu0 %v5718
        %5823 = vmatprep.subr.bf16.mxu0 0
        %5824 = vmatpush1.bf16.msra.mxu0 %v5717
        %5825 = vmatprep.subr.bf16.mxu0 0
        %5826 = vmatpush1.bf16.msra.mxu0 %v5716
        %5827 = vmatprep.subr.bf16.mxu0 0
        %5828 = vmatpush1.bf16.msra.mxu0 %v5715
        %5829 = vmatprep.subr.bf16.mxu0 0
        %5830 = vmatpush1.bf16.msra.mxu0 %v5714
        %5831 = vmatprep.subr.bf16.mxu0 0
        %5832 = vmatpush1.bf16.msra.mxu0 %v5713
        %5833 = vmatprep.subr.bf16.mxu0 0
        %5834 = vmatpush2.bf16.msra.mxu0 %v5728
        %5835 = vmatprep.subr.bf16.mxu0 0
        %5836 = vmatpush2.bf16.msra.mxu0 %v5727
        %5837 = vmatprep.subr.bf16.mxu0 0
        %5838 = vmatpush2.bf16.msra.mxu0 %v5726
        %5839 = vmatprep.subr.bf16.mxu0 0
        %5840 = vmatpush2.bf16.msra.mxu0 %v5725
        %5841 = vmatprep.subr.bf16.mxu0 0
        %5842 = vmatpush2.bf16.msra.mxu0 %v5724
        %5843 = vmatprep.subr.bf16.mxu0 0
        %5844 = vmatpush2.bf16.msra.mxu0 %v5723
        %5845 = vmatprep.subr.bf16.mxu0 0
        %5846 = vmatpush2.bf16.msra.mxu0 %v5722
        %5847 = vmatprep.subr.bf16.mxu0 0
        %5848 = vmatpush2.bf16.msra.mxu0 %v5721
        %5849 = vmatprep.mubr.bf16.mxu0 %v5530
        %5850 = vmatmul.mubr.bf16.gmra.mxu0 %v5529
        %v5851 = vpop.f32.mrf.mxu0
        %v5852 = vadd.f32 %v5812, %v5851
        %v5853 = vpop.f32.mrf.mxu0
        %v5854 = vpop.f32.mrf.mxu0
        %v5855 = vpop.f32.mrf.mxu0
        %5856 = vdwg.mxu0
        %5857 = vmatprep.subr.bf16.mxu0 0
        %5858 = vmatpush1.bf16.msra.mxu0 %v5736
        %5859 = vmatprep.subr.bf16.mxu0 0
        %5860 = vmatpush1.bf16.msra.mxu0 %v5735
        %5861 = vmatprep.subr.bf16.mxu0 0
        %5862 = vmatpush1.bf16.msra.mxu0 %v5734
        %5863 = vmatprep.subr.bf16.mxu0 0
        %5864 = vmatpush1.bf16.msra.mxu0 %v5733
        %5865 = vmatprep.subr.bf16.mxu0 0
        %5866 = vmatpush1.bf16.msra.mxu0 %v5732
        %5867 = vmatprep.subr.bf16.mxu0 0
        %5868 = vmatpush1.bf16.msra.mxu0 %v5731
        %5869 = vmatprep.subr.bf16.mxu0 0
        %5870 = vmatpush1.bf16.msra.mxu0 %v5730
        %5871 = vmatprep.subr.bf16.mxu0 0
        %5872 = vmatpush1.bf16.msra.mxu0 %v5729
        %5873 = vmatprep.subr.bf16.mxu0 0
        %5874 = vmatpush2.bf16.msra.mxu0 0
        %5875 = vmatprep.subr.bf16.mxu0 0
        %5876 = vmatpush2.bf16.msra.mxu0 0
        %5877 = vmatprep.subr.bf16.mxu0 0
        %5878 = vmatpush2.bf16.msra.mxu0 0
        %5879 = vmatprep.subr.bf16.mxu0 0
        %5880 = vmatpush2.bf16.msra.mxu0 0
        %5881 = vmatprep.subr.bf16.mxu0 0
        %5882 = vmatpush2.bf16.msra.mxu0 0
        %5883 = vmatprep.subr.bf16.mxu0 0
        %5884 = vmatpush2.bf16.msra.mxu0 0
        %5885 = vmatprep.subr.bf16.mxu0 0
        %5886 = vmatpush2.bf16.msra.mxu0 0
        %5887 = vmatprep.subr.bf16.mxu0 0
        %5888 = vmatpush2.bf16.msra.mxu0 0
        %5889 = vmatprep.mubr.bf16.mxu0 0
        %5890 = vmatmul.mubr.bf16.gmra.mxu0 %v5531
        %v5891 = vpop.f32.mrf.mxu0
        %v5892 = vadd.f32 %v5852, %v5891
        %v5893 = vpop.f32.mrf.mxu0
        %v5894 = vpop.f32.mrf.mxu0
        %v5895 = vpop.f32.mrf.mxu0
        %5896 = vdwg.mxu0
        %v5897 = vadd.f32 %v5431, %v5892
        %v5898 = vld [vmem:[#allocation2 + $0xc] sm:$0x77]
        %v5899 = vld [vmem:[#allocation2 + $0x14] sm:$0x77]
        %v5900 = vld [vmem:[#allocation2 + $0x1c] sm:$0x7]
        %v5901 = vld [vmem:[%s3511] sm:$0xf]
        %v5902 = vld [vmem:[%s3511 + $0x4] sm:$0xf]
        %v5903 = vld [vmem:[%s3511 + $0x8] sm:$0xf]
        %v5904 = vld [vmem:[%s3511 + $0xc] sm:$0xf]
        %v5905 = vld [vmem:[%s3511 + $0x10] sm:$0xf]
        %v5906 = vld [vmem:[%s3511 + $0x14] sm:$0xf]
        %v5907 = vld [vmem:[%s3511 + $0x18] sm:$0xf]
        %v5908 = vld [vmem:[%s3511 + $0x1c] sm:$0xf]
        %v5909 = vld [vmem:[%s3511 + $0x20] sm:$0xf]
        %v5910 = vld [vmem:[%s3511 + $0x24] sm:$0xf]
        %v5911 = vld [vmem:[%s3511 + $0x28] sm:$0xf]
        %v5912 = vld [vmem:[%s3511 + $0x2c] sm:$0xf]
        %v5913 = vld [vmem:[%s3511 + $0x30] sm:$0xf]
        %v5914 = vld [vmem:[%s3511 + $0x34] sm:$0xf]
        %v5915 = vld [vmem:[%s3511 + $0x38] sm:$0xf]
        %v5916 = vld [vmem:[%s3511 + $0x3c] sm:$0xf]
        %v5917 = vld [vmem:[%s3511 + $0x40] sm:$0xf]
        %v5918 = vld [vmem:[%s3511 + $0x44] sm:$0xf]
        %v5919 = vld [vmem:[%s3511 + $0x48] sm:$0xf]
        %v5920 = vld [vmem:[%s3511 + $0x4c] sm:$0xf]
        %v5921 = vld [vmem:[%s3511 + $0x50] sm:$0xf]
        %v5922 = vld [vmem:[%s3511 + $0x54] sm:$0xf]
        %v5923 = vld [vmem:[%s3511 + $0x58] sm:$0xf]
        %v5924 = vld [vmem:[%s3511 + $0x5c] sm:$0xf]
        %v5925 = vld [vmem:[%s3511 + $0x60] sm:$0xf]
        %v5926 = vld [vmem:[%s3511 + $0x64] sm:$0xf]
        %v5927 = vld [vmem:[%s3511 + $0x68] sm:$0xf]
        %v5928 = vld [vmem:[%s3511 + $0x6c] sm:$0xf]
        %v5929 = vld [vmem:[%s3511 + $0x70] sm:$0xf]
        %v5930 = vld [vmem:[%s3511 + $0x74] sm:$0xf]
        %v5931 = vld [vmem:[%s3511 + $0x78] sm:$0xf]
        %v5932 = vld [vmem:[%s3511 + $0x7c] sm:$0xf]
        %v5933 = vld [vmem:[%s3511 + $0x80] sm:$0xf]
        %v5934 = vld [vmem:[%s3511 + $0x84] sm:$0xf]
        %v5935 = vld [vmem:[%s3511 + $0x88] sm:$0xf]
        %v5936 = vld [vmem:[%s3511 + $0x8c] sm:$0xf]
        %v5937 = vld [vmem:[%s3511 + $0x90] sm:$0xf]
        %v5938 = vld [vmem:[%s3511 + $0x94] sm:$0xf]
        %v5939 = vld [vmem:[%s3511 + $0x98] sm:$0xf]
        %v5940 = vld [vmem:[%s3511 + $0x9c] sm:$0xf]
        %v5941 = vld [vmem:[%s3511 + $0xa0] sm:$0xf]
        %v5942 = vld [vmem:[%s3511 + $0xa4] sm:$0xf]
        %v5943 = vld [vmem:[%s3511 + $0xa8] sm:$0xf]
        %v5944 = vld [vmem:[%s3511 + $0xac] sm:$0xf]
        %v5945 = vld [vmem:[%s3511 + $0xb0] sm:$0xf]
        %v5946 = vld [vmem:[%s3511 + $0xb4] sm:$0xf]
        %v5947 = vld [vmem:[%s3511 + $0xb8] sm:$0xf]
        %v5948 = vld [vmem:[%s3511 + $0xbc] sm:$0xf]
        %v5949 = vld [vmem:[%s3511 + $0xc0] sm:$0xf]
        %v5950 = vld [vmem:[%s3511 + $0xc4] sm:$0xf]
        %v5951 = vld [vmem:[%s3511 + $0xc8] sm:$0xf]
        %v5952 = vld [vmem:[%s3511 + $0xcc] sm:$0xf]
        %v5953 = vld [vmem:[%s3511 + $0xd0] sm:$0xf]
        %v5954 = vld [vmem:[%s3511 + $0xd4] sm:$0xf]
        %v5955 = vld [vmem:[%s3511 + $0xd8] sm:$0xf]
        %v5956 = vld [vmem:[%s3511 + $0xdc] sm:$0xf]
        %v5957 = vld [vmem:[%s3511 + $0xe0] sm:$0xf]
        %v5958 = vld [vmem:[%s3511 + $0xe4] sm:$0xf]
        %v5959 = vld [vmem:[%s3511 + $0xe8] sm:$0xf]
        %v5960 = vld [vmem:[%s3511 + $0xec] sm:$0xf]
        %v5961 = vld [vmem:[%s3511 + $0xf0] sm:$0xf]
        %v5962 = vld [vmem:[%s3511 + $0xf4] sm:$0xf]
        %v5963 = vld [vmem:[%s3511 + $0xf8] sm:$0xf]
        %v5964 = vld [vmem:[%s3511 + $0xfc] sm:$0xf]
        %v5965 = vld [vmem:[%s3511 + $0x100] sm:$0xf]
        %v5966 = vld [vmem:[%s3511 + $0x104] sm:$0xf]
        %v5967 = vld [vmem:[%s3511 + $0x108] sm:$0xf]
        %v5968 = vld [vmem:[%s3511 + $0x10c] sm:$0xf]
        %v5969 = vld [vmem:[%s3511 + $0x110] sm:$0xf]
        %v5970 = vld [vmem:[%s3511 + $0x114] sm:$0xf]
        %v5971 = vld [vmem:[%s3511 + $0x118] sm:$0xf]
        %v5972 = vld [vmem:[%s3511 + $0x11c] sm:$0xf]
        %v5973 = vld [vmem:[%s3511 + $0x120] sm:$0xf]
        %v5974 = vld [vmem:[%s3511 + $0x124] sm:$0xf]
        %v5975 = vld [vmem:[%s3511 + $0x128] sm:$0xf]
        %v5976 = vld [vmem:[%s3511 + $0x12c] sm:$0xf]
        %v5977 = vld [vmem:[%s3511 + $0x130] sm:$0xf]
        %v5978 = vld [vmem:[%s3511 + $0x134] sm:$0xf]
        %v5979 = vld [vmem:[%s3511 + $0x138] sm:$0xf]
        %v5980 = vld [vmem:[%s3511 + $0x13c] sm:$0xf]
        %v5984 = vunpack.c.l.b16 %v5898
        %v5985 = vunpack.c.h.b16 %v5898
        %v5986 = vunpack.c.l.b16 %v5899
        %v5987 = vunpack.c.h.b16 %v5899
        %v5988 = vunpack.c.l.b16 %v5900
        %v5989 = vpack.c.b16 %v5984, %v5984
        %v5990 = vpack.c.b16 %v5985, %v5985
        %v5991 = vpack.c.b16 %v5986, %v5986
        %v5992 = vpack.c.b16 %v5987, %v5987
        %v5993 = vpack.c.b16 %v5988, %v5988
        %v5995 = vshrl.u32 %v5989, 16
        %v5997 = vshll.u32 %v5989, 16
        %v5999 = vrot.slane %v5997, 1
        %v6000 = vor.u32 %v5995, %v5999
        %v6002 = vshrl.u32 %v5990, 16
        %v6004 = vshll.u32 %v5990, 16
        %v6006 = vrot.slane %v6004, 1
        %v6007 = vor.u32 %v6002, %v6006
        %v6009 = vshrl.u32 %v5991, 16
        %v6011 = vshll.u32 %v5991, 16
        %v6013 = vrot.slane %v6011, 1
        %v6014 = vor.u32 %v6009, %v6013
        %v6016 = vshrl.u32 %v5992, 16
        %v6018 = vshll.u32 %v5992, 16
        %v6020 = vrot.slane %v6018, 1
        %v6021 = vor.u32 %v6016, %v6020
        %v6023 = vshrl.u32 %v5993, 16
        %v6025 = vshll.u32 %v5993, 16
        %v6027 = vrot.slane %v6025, 1
        %v6028 = vor.u32 %v6023, %v6027
        %v6114 = vunpack.c.l.b16 %v5901
        %v6115 = vunpack.c.l.b16 %v5902
        %v6116 = vunpack.c.l.b16 %v5903
        %v6117 = vunpack.c.l.b16 %v5904
        %v6118 = vunpack.c.l.b16 %v5905
        %v6119 = vunpack.c.l.b16 %v5906
        %v6120 = vunpack.c.l.b16 %v5907
        %v6121 = vunpack.c.l.b16 %v5908
        %v6122 = vunpack.c.l.b16 %v5909
        %v6123 = vunpack.c.l.b16 %v5910
        %v6124 = vunpack.c.l.b16 %v5911
        %v6125 = vunpack.c.l.b16 %v5912
        %v6126 = vunpack.c.l.b16 %v5913
        %v6127 = vunpack.c.l.b16 %v5914
        %v6128 = vunpack.c.l.b16 %v5915
        %v6129 = vunpack.c.l.b16 %v5916
        %v6130 = vunpack.c.l.b16 %v5917
        %v6131 = vunpack.c.l.b16 %v5918
        %v6132 = vunpack.c.l.b16 %v5919
        %v6133 = vunpack.c.l.b16 %v5920
        %v6134 = vunpack.c.l.b16 %v5921
        %v6135 = vunpack.c.l.b16 %v5922
        %v6136 = vunpack.c.l.b16 %v5923
        %v6137 = vunpack.c.l.b16 %v5924
        %v6138 = vunpack.c.l.b16 %v5925
        %v6139 = vunpack.c.l.b16 %v5926
        %v6140 = vunpack.c.l.b16 %v5927
        %v6141 = vunpack.c.l.b16 %v5928
        %v6142 = vunpack.c.l.b16 %v5929
        %v6143 = vunpack.c.l.b16 %v5930
        %v6144 = vunpack.c.l.b16 %v5931
        %v6145 = vunpack.c.l.b16 %v5932
        %v6146 = vunpack.c.l.b16 %v5933
        %v6147 = vunpack.c.l.b16 %v5934
        %v6148 = vunpack.c.l.b16 %v5935
        %v6149 = vunpack.c.l.b16 %v5936
        %v6150 = vunpack.c.l.b16 %v5937
        %v6151 = vunpack.c.l.b16 %v5938
        %v6152 = vunpack.c.l.b16 %v5939
        %v6153 = vunpack.c.l.b16 %v5940
        %v6154 = vunpack.c.l.b16 %v5941
        %v6155 = vunpack.c.l.b16 %v5942
        %v6156 = vunpack.c.l.b16 %v5943
        %v6157 = vunpack.c.l.b16 %v5944
        %v6158 = vunpack.c.l.b16 %v5945
        %v6159 = vunpack.c.l.b16 %v5946
        %v6160 = vunpack.c.l.b16 %v5947
        %v6161 = vunpack.c.l.b16 %v5948
        %v6162 = vunpack.c.l.b16 %v5949
        %v6163 = vunpack.c.l.b16 %v5950
        %v6164 = vunpack.c.l.b16 %v5951
        %v6165 = vunpack.c.l.b16 %v5952
        %v6166 = vunpack.c.l.b16 %v5953
        %v6167 = vunpack.c.l.b16 %v5954
        %v6168 = vunpack.c.l.b16 %v5955
        %v6169 = vunpack.c.l.b16 %v5956
        %v6170 = vunpack.c.l.b16 %v5957
        %v6171 = vunpack.c.l.b16 %v5958
        %v6172 = vunpack.c.l.b16 %v5959
        %v6173 = vunpack.c.l.b16 %v5960
        %v6174 = vunpack.c.l.b16 %v5961
        %v6175 = vunpack.c.l.b16 %v5962
        %v6176 = vunpack.c.l.b16 %v5963
        %v6177 = vunpack.c.l.b16 %v5964
        %v6178 = vunpack.c.l.b16 %v5965
        %v6179 = vunpack.c.l.b16 %v5966
        %v6180 = vunpack.c.l.b16 %v5967
        %v6181 = vunpack.c.l.b16 %v5968
        %v6182 = vunpack.c.l.b16 %v5969
        %v6183 = vunpack.c.l.b16 %v5970
        %v6184 = vunpack.c.l.b16 %v5971
        %v6185 = vunpack.c.l.b16 %v5972
        %v6186 = vunpack.c.l.b16 %v5973
        %v6187 = vunpack.c.l.b16 %v5974
        %v6188 = vunpack.c.l.b16 %v5975
        %v6189 = vunpack.c.l.b16 %v5976
        %v6190 = vunpack.c.l.b16 %v5977
        %v6191 = vunpack.c.l.b16 %v5978
        %v6192 = vunpack.c.l.b16 %v5979
        %v6193 = vunpack.c.l.b16 %v5980
        %v6194 = vpack.c.b16 %v6115, %v6114
        %v6195 = vpack.c.b16 %v6117, %v6116
        %v6196 = vpack.c.b16 %v6119, %v6118
        %v6197 = vpack.c.b16 %v6121, %v6120
        %v6198 = vpack.c.b16 %v6123, %v6122
        %v6199 = vpack.c.b16 %v6125, %v6124
        %v6200 = vpack.c.b16 %v6127, %v6126
        %v6201 = vpack.c.b16 %v6129, %v6128
        %v6202 = vpack.c.b16 %v6131, %v6130
        %v6203 = vpack.c.b16 %v6133, %v6132
        %v6204 = vpack.c.b16 %v6135, %v6134
        %v6205 = vpack.c.b16 %v6137, %v6136
        %v6206 = vpack.c.b16 %v6139, %v6138
        %v6207 = vpack.c.b16 %v6141, %v6140
        %v6208 = vpack.c.b16 %v6143, %v6142
        %v6209 = vpack.c.b16 %v6145, %v6144
        %v6210 = vpack.c.b16 %v6147, %v6146
        %v6211 = vpack.c.b16 %v6149, %v6148
        %v6212 = vpack.c.b16 %v6151, %v6150
        %v6213 = vpack.c.b16 %v6153, %v6152
        %v6214 = vpack.c.b16 %v6155, %v6154
        %v6215 = vpack.c.b16 %v6157, %v6156
        %v6216 = vpack.c.b16 %v6159, %v6158
        %v6217 = vpack.c.b16 %v6161, %v6160
        %v6218 = vpack.c.b16 %v6163, %v6162
        %v6219 = vpack.c.b16 %v6165, %v6164
        %v6220 = vpack.c.b16 %v6167, %v6166
        %v6221 = vpack.c.b16 %v6169, %v6168
        %v6222 = vpack.c.b16 %v6171, %v6170
        %v6223 = vpack.c.b16 %v6173, %v6172
        %v6224 = vpack.c.b16 %v6175, %v6174
        %v6225 = vpack.c.b16 %v6177, %v6176
        %v6226 = vpack.c.b16 %v6179, %v6178
        %v6227 = vpack.c.b16 %v6181, %v6180
        %v6228 = vpack.c.b16 %v6183, %v6182
        %v6229 = vpack.c.b16 %v6185, %v6184
        %v6230 = vpack.c.b16 %v6187, %v6186
        %v6231 = vpack.c.b16 %v6189, %v6188
        %v6232 = vpack.c.b16 %v6191, %v6190
        %v6233 = vpack.c.b16 %v6193, %v6192
        %6274 = vmatprep.subr.bf16.mxu0 0
        %6275 = vmatpush1.bf16.msra.mxu0 %v6201
        %6276 = vmatprep.subr.bf16.mxu0 0
        %6277 = vmatpush1.bf16.msra.mxu0 %v6200
        %6278 = vmatprep.subr.bf16.mxu0 0
        %6279 = vmatpush1.bf16.msra.mxu0 %v6199
        %6280 = vmatprep.subr.bf16.mxu0 0
        %6281 = vmatpush1.bf16.msra.mxu0 %v6198
        %6282 = vmatprep.subr.bf16.mxu0 0
        %6283 = vmatpush1.bf16.msra.mxu0 %v6197
        %6284 = vmatprep.subr.bf16.mxu0 0
        %6285 = vmatpush1.bf16.msra.mxu0 %v6196
        %6286 = vmatprep.subr.bf16.mxu0 0
        %6287 = vmatpush1.bf16.msra.mxu0 %v6195
        %6288 = vmatprep.subr.bf16.mxu0 0
        %6289 = vmatpush1.bf16.msra.mxu0 %v6194
        %6290 = vmatprep.subr.bf16.mxu0 0
        %6291 = vmatpush2.bf16.msra.mxu0 %v6209
        %6292 = vmatprep.subr.bf16.mxu0 0
        %6293 = vmatpush2.bf16.msra.mxu0 %v6208
        %6294 = vmatprep.subr.bf16.mxu0 0
        %6295 = vmatpush2.bf16.msra.mxu0 %v6207
        %6296 = vmatprep.subr.bf16.mxu0 0
        %6297 = vmatpush2.bf16.msra.mxu0 %v6206
        %6298 = vmatprep.subr.bf16.mxu0 0
        %6299 = vmatpush2.bf16.msra.mxu0 %v6205
        %6300 = vmatprep.subr.bf16.mxu0 0
        %6301 = vmatpush2.bf16.msra.mxu0 %v6204
        %6302 = vmatprep.subr.bf16.mxu0 0
        %6303 = vmatpush2.bf16.msra.mxu0 %v6203
        %6304 = vmatprep.subr.bf16.mxu0 0
        %6305 = vmatpush2.bf16.msra.mxu0 %v6202
        %6306 = vmatprep.mubr.bf16.mxu0 %v6007
        %6307 = vmatmul.mubr.bf16.gmra.mxu0 %v6000
        %v6308 = vpop.f32.mrf.mxu0
        %v6309 = vadd.f32 0.0, %v6308
        %v6310 = vpop.f32.mrf.mxu0
        %v6311 = vpop.f32.mrf.mxu0
        %v6312 = vpop.f32.mrf.mxu0
        %6313 = vdwg.mxu0
        %6314 = vmatprep.subr.bf16.mxu0 0
        %6315 = vmatpush1.bf16.msra.mxu0 %v6217
        %6316 = vmatprep.subr.bf16.mxu0 0
        %6317 = vmatpush1.bf16.msra.mxu0 %v6216
        %6318 = vmatprep.subr.bf16.mxu0 0
        %6319 = vmatpush1.bf16.msra.mxu0 %v6215
        %6320 = vmatprep.subr.bf16.mxu0 0
        %6321 = vmatpush1.bf16.msra.mxu0 %v6214
        %6322 = vmatprep.subr.bf16.mxu0 0
        %6323 = vmatpush1.bf16.msra.mxu0 %v6213
        %6324 = vmatprep.subr.bf16.mxu0 0
        %6325 = vmatpush1.bf16.msra.mxu0 %v6212
        %6326 = vmatprep.subr.bf16.mxu0 0
        %6327 = vmatpush1.bf16.msra.mxu0 %v6211
        %6328 = vmatprep.subr.bf16.mxu0 0
        %6329 = vmatpush1.bf16.msra.mxu0 %v6210
        %6330 = vmatprep.subr.bf16.mxu0 0
        %6331 = vmatpush2.bf16.msra.mxu0 %v6225
        %6332 = vmatprep.subr.bf16.mxu0 0
        %6333 = vmatpush2.bf16.msra.mxu0 %v6224
        %6334 = vmatprep.subr.bf16.mxu0 0
        %6335 = vmatpush2.bf16.msra.mxu0 %v6223
        %6336 = vmatprep.subr.bf16.mxu0 0
        %6337 = vmatpush2.bf16.msra.mxu0 %v6222
        %6338 = vmatprep.subr.bf16.mxu0 0
        %6339 = vmatpush2.bf16.msra.mxu0 %v6221
        %6340 = vmatprep.subr.bf16.mxu0 0
        %6341 = vmatpush2.bf16.msra.mxu0 %v6220
        %6342 = vmatprep.subr.bf16.mxu0 0
        %6343 = vmatpush2.bf16.msra.mxu0 %v6219
        %6344 = vmatprep.subr.bf16.mxu0 0
        %6345 = vmatpush2.bf16.msra.mxu0 %v6218
        %6346 = vmatprep.mubr.bf16.mxu0 %v6021
        %6347 = vmatmul.mubr.bf16.gmra.mxu0 %v6014
        %v6348 = vpop.f32.mrf.mxu0
        %v6349 = vadd.f32 %v6309, %v6348
        %v6350 = vpop.f32.mrf.mxu0
        %v6351 = vpop.f32.mrf.mxu0
        %v6352 = vpop.f32.mrf.mxu0
        %6353 = vdwg.mxu0
        %6354 = vmatprep.subr.bf16.mxu0 0
        %6355 = vmatpush1.bf16.msra.mxu0 %v6233
        %6356 = vmatprep.subr.bf16.mxu0 0
        %6357 = vmatpush1.bf16.msra.mxu0 %v6232
        %6358 = vmatprep.subr.bf16.mxu0 0
        %6359 = vmatpush1.bf16.msra.mxu0 %v6231
        %6360 = vmatprep.subr.bf16.mxu0 0
        %6361 = vmatpush1.bf16.msra.mxu0 %v6230
        %6362 = vmatprep.subr.bf16.mxu0 0
        %6363 = vmatpush1.bf16.msra.mxu0 %v6229
        %6364 = vmatprep.subr.bf16.mxu0 0
        %6365 = vmatpush1.bf16.msra.mxu0 %v6228
        %6366 = vmatprep.subr.bf16.mxu0 0
        %6367 = vmatpush1.bf16.msra.mxu0 %v6227
        %6368 = vmatprep.subr.bf16.mxu0 0
        %6369 = vmatpush1.bf16.msra.mxu0 %v6226
        %6370 = vmatprep.subr.bf16.mxu0 0
        %6371 = vmatpush2.bf16.msra.mxu0 0
        %6372 = vmatprep.subr.bf16.mxu0 0
        %6373 = vmatpush2.bf16.msra.mxu0 0
        %6374 = vmatprep.subr.bf16.mxu0 0
        %6375 = vmatpush2.bf16.msra.mxu0 0
        %6376 = vmatprep.subr.bf16.mxu0 0
        %6377 = vmatpush2.bf16.msra.mxu0 0
        %6378 = vmatprep.subr.bf16.mxu0 0
        %6379 = vmatpush2.bf16.msra.mxu0 0
        %6380 = vmatprep.subr.bf16.mxu0 0
        %6381 = vmatpush2.bf16.msra.mxu0 0
        %6382 = vmatprep.subr.bf16.mxu0 0
        %6383 = vmatpush2.bf16.msra.mxu0 0
        %6384 = vmatprep.subr.bf16.mxu0 0
        %6385 = vmatpush2.bf16.msra.mxu0 0
        %6386 = vmatprep.mubr.bf16.mxu0 0
        %6387 = vmatmul.mubr.bf16.gmra.mxu0 %v6028
        %v6388 = vpop.f32.mrf.mxu0
        %v6389 = vadd.f32 %v6349, %v6388
        %v6390 = vpop.f32.mrf.mxu0
        %v6391 = vpop.f32.mrf.mxu0
        %v6392 = vpop.f32.mrf.mxu0
        %6393 = vdwg.mxu0
        %v6394 = vadd.f32 %v5897, %v6389
        %v6395 = vld [vmem:[%s1091 + $0xc] sm:$0x77]
        %v6396 = vld [vmem:[%s1091 + $0x14] sm:$0x77]
        %v6397 = vld [vmem:[%s1091 + $0x1c] sm:$0x7]
        %v6398 = vld [vmem:[%s4009] sm:$0xf]
        %v6399 = vld [vmem:[%s4009 + $0x4] sm:$0xf]
        %v6400 = vld [vmem:[%s4009 + $0x8] sm:$0xf]
        %v6401 = vld [vmem:[%s4009 + $0xc] sm:$0xf]
        %v6402 = vld [vmem:[%s4009 + $0x10] sm:$0xf]
        %v6403 = vld [vmem:[%s4009 + $0x14] sm:$0xf]
        %v6404 = vld [vmem:[%s4009 + $0x18] sm:$0xf]
        %v6405 = vld [vmem:[%s4009 + $0x1c] sm:$0xf]
        %v6406 = vld [vmem:[%s4009 + $0x20] sm:$0xf]
        %v6407 = vld [vmem:[%s4009 + $0x24] sm:$0xf]
        %v6408 = vld [vmem:[%s4009 + $0x28] sm:$0xf]
        %v6409 = vld [vmem:[%s4009 + $0x2c] sm:$0xf]
        %v6410 = vld [vmem:[%s4009 + $0x30] sm:$0xf]
        %v6411 = vld [vmem:[%s4009 + $0x34] sm:$0xf]
        %v6412 = vld [vmem:[%s4009 + $0x38] sm:$0xf]
        %v6413 = vld [vmem:[%s4009 + $0x3c] sm:$0xf]
        %v6414 = vld [vmem:[%s4009 + $0x40] sm:$0xf]
        %v6415 = vld [vmem:[%s4009 + $0x44] sm:$0xf]
        %v6416 = vld [vmem:[%s4009 + $0x48] sm:$0xf]
        %v6417 = vld [vmem:[%s4009 + $0x4c] sm:$0xf]
        %v6418 = vld [vmem:[%s4009 + $0x50] sm:$0xf]
        %v6419 = vld [vmem:[%s4009 + $0x54] sm:$0xf]
        %v6420 = vld [vmem:[%s4009 + $0x58] sm:$0xf]
        %v6421 = vld [vmem:[%s4009 + $0x5c] sm:$0xf]
        %v6422 = vld [vmem:[%s4009 + $0x60] sm:$0xf]
        %v6423 = vld [vmem:[%s4009 + $0x64] sm:$0xf]
        %v6424 = vld [vmem:[%s4009 + $0x68] sm:$0xf]
        %v6425 = vld [vmem:[%s4009 + $0x6c] sm:$0xf]
        %v6426 = vld [vmem:[%s4009 + $0x70] sm:$0xf]
        %v6427 = vld [vmem:[%s4009 + $0x74] sm:$0xf]
        %v6428 = vld [vmem:[%s4009 + $0x78] sm:$0xf]
        %v6429 = vld [vmem:[%s4009 + $0x7c] sm:$0xf]
        %v6430 = vld [vmem:[%s4009 + $0x80] sm:$0xf]
        %v6431 = vld [vmem:[%s4009 + $0x84] sm:$0xf]
        %v6432 = vld [vmem:[%s4009 + $0x88] sm:$0xf]
        %v6433 = vld [vmem:[%s4009 + $0x8c] sm:$0xf]
        %v6434 = vld [vmem:[%s4009 + $0x90] sm:$0xf]
        %v6435 = vld [vmem:[%s4009 + $0x94] sm:$0xf]
        %v6436 = vld [vmem:[%s4009 + $0x98] sm:$0xf]
        %v6437 = vld [vmem:[%s4009 + $0x9c] sm:$0xf]
        %v6438 = vld [vmem:[%s4009 + $0xa0] sm:$0xf]
        %v6439 = vld [vmem:[%s4009 + $0xa4] sm:$0xf]
        %v6440 = vld [vmem:[%s4009 + $0xa8] sm:$0xf]
        %v6441 = vld [vmem:[%s4009 + $0xac] sm:$0xf]
        %v6442 = vld [vmem:[%s4009 + $0xb0] sm:$0xf]
        %v6443 = vld [vmem:[%s4009 + $0xb4] sm:$0xf]
        %v6444 = vld [vmem:[%s4009 + $0xb8] sm:$0xf]
        %v6445 = vld [vmem:[%s4009 + $0xbc] sm:$0xf]
        %v6446 = vld [vmem:[%s4009 + $0xc0] sm:$0xf]
        %v6447 = vld [vmem:[%s4009 + $0xc4] sm:$0xf]
        %v6448 = vld [vmem:[%s4009 + $0xc8] sm:$0xf]
        %v6449 = vld [vmem:[%s4009 + $0xcc] sm:$0xf]
        %v6450 = vld [vmem:[%s4009 + $0xd0] sm:$0xf]
        %v6451 = vld [vmem:[%s4009 + $0xd4] sm:$0xf]
        %v6452 = vld [vmem:[%s4009 + $0xd8] sm:$0xf]
        %v6453 = vld [vmem:[%s4009 + $0xdc] sm:$0xf]
        %v6454 = vld [vmem:[%s4009 + $0xe0] sm:$0xf]
        %v6455 = vld [vmem:[%s4009 + $0xe4] sm:$0xf]
        %v6456 = vld [vmem:[%s4009 + $0xe8] sm:$0xf]
        %v6457 = vld [vmem:[%s4009 + $0xec] sm:$0xf]
        %v6458 = vld [vmem:[%s4009 + $0xf0] sm:$0xf]
        %v6459 = vld [vmem:[%s4009 + $0xf4] sm:$0xf]
        %v6460 = vld [vmem:[%s4009 + $0xf8] sm:$0xf]
        %v6461 = vld [vmem:[%s4009 + $0xfc] sm:$0xf]
        %v6462 = vld [vmem:[%s4009 + $0x100] sm:$0xf]
        %v6463 = vld [vmem:[%s4009 + $0x104] sm:$0xf]
        %v6464 = vld [vmem:[%s4009 + $0x108] sm:$0xf]
        %v6465 = vld [vmem:[%s4009 + $0x10c] sm:$0xf]
        %v6466 = vld [vmem:[%s4009 + $0x110] sm:$0xf]
        %v6467 = vld [vmem:[%s4009 + $0x114] sm:$0xf]
        %v6468 = vld [vmem:[%s4009 + $0x118] sm:$0xf]
        %v6469 = vld [vmem:[%s4009 + $0x11c] sm:$0xf]
        %v6470 = vld [vmem:[%s4009 + $0x120] sm:$0xf]
        %v6471 = vld [vmem:[%s4009 + $0x124] sm:$0xf]
        %v6472 = vld [vmem:[%s4009 + $0x128] sm:$0xf]
        %v6473 = vld [vmem:[%s4009 + $0x12c] sm:$0xf]
        %v6474 = vld [vmem:[%s4009 + $0x130] sm:$0xf]
        %v6475 = vld [vmem:[%s4009 + $0x134] sm:$0xf]
        %v6476 = vld [vmem:[%s4009 + $0x138] sm:$0xf]
        %v6477 = vld [vmem:[%s4009 + $0x13c] sm:$0xf]
        %v6481 = vunpack.c.l.b16 %v6395
        %v6482 = vunpack.c.h.b16 %v6395
        %v6483 = vunpack.c.l.b16 %v6396
        %v6484 = vunpack.c.h.b16 %v6396
        %v6485 = vunpack.c.l.b16 %v6397
        %v6486 = vpack.c.b16 %v6481, %v6481
        %v6487 = vpack.c.b16 %v6482, %v6482
        %v6488 = vpack.c.b16 %v6483, %v6483
        %v6489 = vpack.c.b16 %v6484, %v6484
        %v6490 = vpack.c.b16 %v6485, %v6485
        %v6492 = vshrl.u32 %v6486, 16
        %v6494 = vshll.u32 %v6486, 16
        %v6496 = vrot.slane %v6494, 1
        %v6497 = vor.u32 %v6492, %v6496
        %v6499 = vshrl.u32 %v6487, 16
        %v6501 = vshll.u32 %v6487, 16
        %v6503 = vrot.slane %v6501, 1
        %v6504 = vor.u32 %v6499, %v6503
        %v6506 = vshrl.u32 %v6488, 16
        %v6508 = vshll.u32 %v6488, 16
        %v6510 = vrot.slane %v6508, 1
        %v6511 = vor.u32 %v6506, %v6510
        %v6513 = vshrl.u32 %v6489, 16
        %v6515 = vshll.u32 %v6489, 16
        %v6517 = vrot.slane %v6515, 1
        %v6518 = vor.u32 %v6513, %v6517
        %v6520 = vshrl.u32 %v6490, 16
        %v6522 = vshll.u32 %v6490, 16
        %v6524 = vrot.slane %v6522, 1
        %v6525 = vor.u32 %v6520, %v6524
        %v6611 = vunpack.c.l.b16 %v6398
        %v6612 = vunpack.c.l.b16 %v6399
        %v6613 = vunpack.c.l.b16 %v6400
        %v6614 = vunpack.c.l.b16 %v6401
        %v6615 = vunpack.c.l.b16 %v6402
        %v6616 = vunpack.c.l.b16 %v6403
        %v6617 = vunpack.c.l.b16 %v6404
        %v6618 = vunpack.c.l.b16 %v6405
        %v6619 = vunpack.c.l.b16 %v6406
        %v6620 = vunpack.c.l.b16 %v6407
        %v6621 = vunpack.c.l.b16 %v6408
        %v6622 = vunpack.c.l.b16 %v6409
        %v6623 = vunpack.c.l.b16 %v6410
        %v6624 = vunpack.c.l.b16 %v6411
        %v6625 = vunpack.c.l.b16 %v6412
        %v6626 = vunpack.c.l.b16 %v6413
        %v6627 = vunpack.c.l.b16 %v6414
        %v6628 = vunpack.c.l.b16 %v6415
        %v6629 = vunpack.c.l.b16 %v6416
        %v6630 = vunpack.c.l.b16 %v6417
        %v6631 = vunpack.c.l.b16 %v6418
        %v6632 = vunpack.c.l.b16 %v6419
        %v6633 = vunpack.c.l.b16 %v6420
        %v6634 = vunpack.c.l.b16 %v6421
        %v6635 = vunpack.c.l.b16 %v6422
        %v6636 = vunpack.c.l.b16 %v6423
        %v6637 = vunpack.c.l.b16 %v6424
        %v6638 = vunpack.c.l.b16 %v6425
        %v6639 = vunpack.c.l.b16 %v6426
        %v6640 = vunpack.c.l.b16 %v6427
        %v6641 = vunpack.c.l.b16 %v6428
        %v6642 = vunpack.c.l.b16 %v6429
        %v6643 = vunpack.c.l.b16 %v6430
        %v6644 = vunpack.c.l.b16 %v6431
        %v6645 = vunpack.c.l.b16 %v6432
        %v6646 = vunpack.c.l.b16 %v6433
        %v6647 = vunpack.c.l.b16 %v6434
        %v6648 = vunpack.c.l.b16 %v6435
        %v6649 = vunpack.c.l.b16 %v6436
        %v6650 = vunpack.c.l.b16 %v6437
        %v6651 = vunpack.c.l.b16 %v6438
        %v6652 = vunpack.c.l.b16 %v6439
        %v6653 = vunpack.c.l.b16 %v6440
        %v6654 = vunpack.c.l.b16 %v6441
        %v6655 = vunpack.c.l.b16 %v6442
        %v6656 = vunpack.c.l.b16 %v6443
        %v6657 = vunpack.c.l.b16 %v6444
        %v6658 = vunpack.c.l.b16 %v6445
        %v6659 = vunpack.c.l.b16 %v6446
        %v6660 = vunpack.c.l.b16 %v6447
        %v6661 = vunpack.c.l.b16 %v6448
        %v6662 = vunpack.c.l.b16 %v6449
        %v6663 = vunpack.c.l.b16 %v6450
        %v6664 = vunpack.c.l.b16 %v6451
        %v6665 = vunpack.c.l.b16 %v6452
        %v6666 = vunpack.c.l.b16 %v6453
        %v6667 = vunpack.c.l.b16 %v6454
        %v6668 = vunpack.c.l.b16 %v6455
        %v6669 = vunpack.c.l.b16 %v6456
        %v6670 = vunpack.c.l.b16 %v6457
        %v6671 = vunpack.c.l.b16 %v6458
        %v6672 = vunpack.c.l.b16 %v6459
        %v6673 = vunpack.c.l.b16 %v6460
        %v6674 = vunpack.c.l.b16 %v6461
        %v6675 = vunpack.c.l.b16 %v6462
        %v6676 = vunpack.c.l.b16 %v6463
        %v6677 = vunpack.c.l.b16 %v6464
        %v6678 = vunpack.c.l.b16 %v6465
        %v6679 = vunpack.c.l.b16 %v6466
        %v6680 = vunpack.c.l.b16 %v6467
        %v6681 = vunpack.c.l.b16 %v6468
        %v6682 = vunpack.c.l.b16 %v6469
        %v6683 = vunpack.c.l.b16 %v6470
        %v6684 = vunpack.c.l.b16 %v6471
        %v6685 = vunpack.c.l.b16 %v6472
        %v6686 = vunpack.c.l.b16 %v6473
        %v6687 = vunpack.c.l.b16 %v6474
        %v6688 = vunpack.c.l.b16 %v6475
        %v6689 = vunpack.c.l.b16 %v6476
        %v6690 = vunpack.c.l.b16 %v6477
        %v6691 = vpack.c.b16 %v6612, %v6611
        %v6692 = vpack.c.b16 %v6614, %v6613
        %v6693 = vpack.c.b16 %v6616, %v6615
        %v6694 = vpack.c.b16 %v6618, %v6617
        %v6695 = vpack.c.b16 %v6620, %v6619
        %v6696 = vpack.c.b16 %v6622, %v6621
        %v6697 = vpack.c.b16 %v6624, %v6623
        %v6698 = vpack.c.b16 %v6626, %v6625
        %v6699 = vpack.c.b16 %v6628, %v6627
        %v6700 = vpack.c.b16 %v6630, %v6629
        %v6701 = vpack.c.b16 %v6632, %v6631
        %v6702 = vpack.c.b16 %v6634, %v6633
        %v6703 = vpack.c.b16 %v6636, %v6635
        %v6704 = vpack.c.b16 %v6638, %v6637
        %v6705 = vpack.c.b16 %v6640, %v6639
        %v6706 = vpack.c.b16 %v6642, %v6641
        %v6707 = vpack.c.b16 %v6644, %v6643
        %v6708 = vpack.c.b16 %v6646, %v6645
        %v6709 = vpack.c.b16 %v6648, %v6647
        %v6710 = vpack.c.b16 %v6650, %v6649
        %v6711 = vpack.c.b16 %v6652, %v6651
        %v6712 = vpack.c.b16 %v6654, %v6653
        %v6713 = vpack.c.b16 %v6656, %v6655
        %v6714 = vpack.c.b16 %v6658, %v6657
        %v6715 = vpack.c.b16 %v6660, %v6659
        %v6716 = vpack.c.b16 %v6662, %v6661
        %v6717 = vpack.c.b16 %v6664, %v6663
        %v6718 = vpack.c.b16 %v6666, %v6665
        %v6719 = vpack.c.b16 %v6668, %v6667
        %v6720 = vpack.c.b16 %v6670, %v6669
        %v6721 = vpack.c.b16 %v6672, %v6671
        %v6722 = vpack.c.b16 %v6674, %v6673
        %v6723 = vpack.c.b16 %v6676, %v6675
        %v6724 = vpack.c.b16 %v6678, %v6677
        %v6725 = vpack.c.b16 %v6680, %v6679
        %v6726 = vpack.c.b16 %v6682, %v6681
        %v6727 = vpack.c.b16 %v6684, %v6683
        %v6728 = vpack.c.b16 %v6686, %v6685
        %v6729 = vpack.c.b16 %v6688, %v6687
        %v6730 = vpack.c.b16 %v6690, %v6689
        %6771 = vmatprep.subr.bf16.mxu0 0
        %6772 = vmatpush1.bf16.msra.mxu0 %v6698
        %6773 = vmatprep.subr.bf16.mxu0 0
        %6774 = vmatpush1.bf16.msra.mxu0 %v6697
        %6775 = vmatprep.subr.bf16.mxu0 0
        %6776 = vmatpush1.bf16.msra.mxu0 %v6696
        %6777 = vmatprep.subr.bf16.mxu0 0
        %6778 = vmatpush1.bf16.msra.mxu0 %v6695
        %6779 = vmatprep.subr.bf16.mxu0 0
        %6780 = vmatpush1.bf16.msra.mxu0 %v6694
        %6781 = vmatprep.subr.bf16.mxu0 0
        %6782 = vmatpush1.bf16.msra.mxu0 %v6693
        %6783 = vmatprep.subr.bf16.mxu0 0
        %6784 = vmatpush1.bf16.msra.mxu0 %v6692
        %6785 = vmatprep.subr.bf16.mxu0 0
        %6786 = vmatpush1.bf16.msra.mxu0 %v6691
        %6787 = vmatprep.subr.bf16.mxu0 0
        %6788 = vmatpush2.bf16.msra.mxu0 %v6706
        %6789 = vmatprep.subr.bf16.mxu0 0
        %6790 = vmatpush2.bf16.msra.mxu0 %v6705
        %6791 = vmatprep.subr.bf16.mxu0 0
        %6792 = vmatpush2.bf16.msra.mxu0 %v6704
        %6793 = vmatprep.subr.bf16.mxu0 0
        %6794 = vmatpush2.bf16.msra.mxu0 %v6703
        %6795 = vmatprep.subr.bf16.mxu0 0
        %6796 = vmatpush2.bf16.msra.mxu0 %v6702
        %6797 = vmatprep.subr.bf16.mxu0 0
        %6798 = vmatpush2.bf16.msra.mxu0 %v6701
        %6799 = vmatprep.subr.bf16.mxu0 0
        %6800 = vmatpush2.bf16.msra.mxu0 %v6700
        %6801 = vmatprep.subr.bf16.mxu0 0
        %6802 = vmatpush2.bf16.msra.mxu0 %v6699
        %6803 = vmatprep.mubr.bf16.mxu0 %v6504
        %6804 = vmatmul.mubr.bf16.gmra.mxu0 %v6497
        %v6805 = vpop.f32.mrf.mxu0
        %v6806 = vadd.f32 0.0, %v6805
        %v6807 = vpop.f32.mrf.mxu0
        %v6808 = vpop.f32.mrf.mxu0
        %v6809 = vpop.f32.mrf.mxu0
        %6810 = vdwg.mxu0
        %6811 = vmatprep.subr.bf16.mxu0 0
        %6812 = vmatpush1.bf16.msra.mxu0 %v6714
        %6813 = vmatprep.subr.bf16.mxu0 0
        %6814 = vmatpush1.bf16.msra.mxu0 %v6713
        %6815 = vmatprep.subr.bf16.mxu0 0
        %6816 = vmatpush1.bf16.msra.mxu0 %v6712
        %6817 = vmatprep.subr.bf16.mxu0 0
        %6818 = vmatpush1.bf16.msra.mxu0 %v6711
        %6819 = vmatprep.subr.bf16.mxu0 0
        %6820 = vmatpush1.bf16.msra.mxu0 %v6710
        %6821 = vmatprep.subr.bf16.mxu0 0
        %6822 = vmatpush1.bf16.msra.mxu0 %v6709
        %6823 = vmatprep.subr.bf16.mxu0 0
        %6824 = vmatpush1.bf16.msra.mxu0 %v6708
        %6825 = vmatprep.subr.bf16.mxu0 0
        %6826 = vmatpush1.bf16.msra.mxu0 %v6707
        %6827 = vmatprep.subr.bf16.mxu0 0
        %6828 = vmatpush2.bf16.msra.mxu0 %v6722
        %6829 = vmatprep.subr.bf16.mxu0 0
        %6830 = vmatpush2.bf16.msra.mxu0 %v6721
        %6831 = vmatprep.subr.bf16.mxu0 0
        %6832 = vmatpush2.bf16.msra.mxu0 %v6720
        %6833 = vmatprep.subr.bf16.mxu0 0
        %6834 = vmatpush2.bf16.msra.mxu0 %v6719
        %6835 = vmatprep.subr.bf16.mxu0 0
        %6836 = vmatpush2.bf16.msra.mxu0 %v6718
        %6837 = vmatprep.subr.bf16.mxu0 0
        %6838 = vmatpush2.bf16.msra.mxu0 %v6717
        %6839 = vmatprep.subr.bf16.mxu0 0
        %6840 = vmatpush2.bf16.msra.mxu0 %v6716
        %6841 = vmatprep.subr.bf16.mxu0 0
        %6842 = vmatpush2.bf16.msra.mxu0 %v6715
        %6843 = vmatprep.mubr.bf16.mxu0 %v6518
        %6844 = vmatmul.mubr.bf16.gmra.mxu0 %v6511
        %v6845 = vpop.f32.mrf.mxu0
        %v6846 = vadd.f32 %v6806, %v6845
        %v6847 = vpop.f32.mrf.mxu0
        %v6848 = vpop.f32.mrf.mxu0
        %v6849 = vpop.f32.mrf.mxu0
        %6850 = vdwg.mxu0
        %6851 = vmatprep.subr.bf16.mxu0 0
        %6852 = vmatpush1.bf16.msra.mxu0 %v6730
        %6853 = vmatprep.subr.bf16.mxu0 0
        %6854 = vmatpush1.bf16.msra.mxu0 %v6729
        %6855 = vmatprep.subr.bf16.mxu0 0
        %6856 = vmatpush1.bf16.msra.mxu0 %v6728
        %6857 = vmatprep.subr.bf16.mxu0 0
        %6858 = vmatpush1.bf16.msra.mxu0 %v6727
        %6859 = vmatprep.subr.bf16.mxu0 0
        %6860 = vmatpush1.bf16.msra.mxu0 %v6726
        %6861 = vmatprep.subr.bf16.mxu0 0
        %6862 = vmatpush1.bf16.msra.mxu0 %v6725
        %6863 = vmatprep.subr.bf16.mxu0 0
        %6864 = vmatpush1.bf16.msra.mxu0 %v6724
        %6865 = vmatprep.subr.bf16.mxu0 0
        %6866 = vmatpush1.bf16.msra.mxu0 %v6723
        %6867 = vmatprep.subr.bf16.mxu0 0
        %6868 = vmatpush2.bf16.msra.mxu0 0
        %6869 = vmatprep.subr.bf16.mxu0 0
        %6870 = vmatpush2.bf16.msra.mxu0 0
        %6871 = vmatprep.subr.bf16.mxu0 0
        %6872 = vmatpush2.bf16.msra.mxu0 0
        %6873 = vmatprep.subr.bf16.mxu0 0
        %6874 = vmatpush2.bf16.msra.mxu0 0
        %6875 = vmatprep.subr.bf16.mxu0 0
        %6876 = vmatpush2.bf16.msra.mxu0 0
        %6877 = vmatprep.subr.bf16.mxu0 0
        %6878 = vmatpush2.bf16.msra.mxu0 0
        %6879 = vmatprep.subr.bf16.mxu0 0
        %6880 = vmatpush2.bf16.msra.mxu0 0
        %6881 = vmatprep.subr.bf16.mxu0 0
        %6882 = vmatpush2.bf16.msra.mxu0 0
        %6883 = vmatprep.mubr.bf16.mxu0 0
        %6884 = vmatmul.mubr.bf16.gmra.mxu0 %v6525
        %v6885 = vpop.f32.mrf.mxu0
        %v6886 = vadd.f32 %v6846, %v6885
        %v6887 = vpop.f32.mrf.mxu0
        %v6888 = vpop.f32.mrf.mxu0
        %v6889 = vpop.f32.mrf.mxu0
        %6890 = vdwg.mxu0
        %v6891 = vadd.f32 %v6394, %v6886
        %v6892 = vadd.f32 %v6891, %v4508
        %v6893 = vmax.f32 %v6892, 0.0
        %v6894 = vpack.c.bf16 %v6893, %v6893
        %6895 = vst [vmem:[#allocation3 + $0x4] sm:$0x3] %v6894
        %v6896 = vld [vmem:[#allocation2 + $0x18] sm:$0x33]
        %v6897 = vld [vmem:[#allocation2 + $0x20] sm:$0x33]
        %v6898 = vld [vmem:[#allocation2 + $0x28] sm:$0x3]
        %v6899 = vld [vmem:[%s3] sm:$0xf]
        %v6900 = vld [vmem:[%s3 + $0x4] sm:$0xf]
        %v6901 = vld [vmem:[%s3 + $0x8] sm:$0xf]
        %v6902 = vld [vmem:[%s3 + $0xc] sm:$0xf]
        %v6903 = vld [vmem:[%s3 + $0x10] sm:$0xf]
        %v6904 = vld [vmem:[%s3 + $0x14] sm:$0xf]
        %v6905 = vld [vmem:[%s3 + $0x18] sm:$0xf]
        %v6906 = vld [vmem:[%s3 + $0x1c] sm:$0xf]
        %v6907 = vld [vmem:[%s3 + $0x20] sm:$0xf]
        %v6908 = vld [vmem:[%s3 + $0x24] sm:$0xf]
        %v6909 = vld [vmem:[%s3 + $0x28] sm:$0xf]
        %v6910 = vld [vmem:[%s3 + $0x2c] sm:$0xf]
        %v6911 = vld [vmem:[%s3 + $0x30] sm:$0xf]
        %v6912 = vld [vmem:[%s3 + $0x34] sm:$0xf]
        %v6913 = vld [vmem:[%s3 + $0x38] sm:$0xf]
        %v6914 = vld [vmem:[%s3 + $0x3c] sm:$0xf]
        %v6915 = vld [vmem:[%s3 + $0x40] sm:$0xf]
        %v6916 = vld [vmem:[%s3 + $0x44] sm:$0xf]
        %v6917 = vld [vmem:[%s3 + $0x48] sm:$0xf]
        %v6918 = vld [vmem:[%s3 + $0x4c] sm:$0xf]
        %v6919 = vld [vmem:[%s3 + $0x50] sm:$0xf]
        %v6920 = vld [vmem:[%s3 + $0x54] sm:$0xf]
        %v6921 = vld [vmem:[%s3 + $0x58] sm:$0xf]
        %v6922 = vld [vmem:[%s3 + $0x5c] sm:$0xf]
        %v6923 = vld [vmem:[%s3 + $0x60] sm:$0xf]
        %v6924 = vld [vmem:[%s3 + $0x64] sm:$0xf]
        %v6925 = vld [vmem:[%s3 + $0x68] sm:$0xf]
        %v6926 = vld [vmem:[%s3 + $0x6c] sm:$0xf]
        %v6927 = vld [vmem:[%s3 + $0x70] sm:$0xf]
        %v6928 = vld [vmem:[%s3 + $0x74] sm:$0xf]
        %v6929 = vld [vmem:[%s3 + $0x78] sm:$0xf]
        %v6930 = vld [vmem:[%s3 + $0x7c] sm:$0xf]
        %v6931 = vld [vmem:[%s3 + $0x80] sm:$0xf]
        %v6932 = vld [vmem:[%s3 + $0x84] sm:$0xf]
        %v6933 = vld [vmem:[%s3 + $0x88] sm:$0xf]
        %v6934 = vld [vmem:[%s3 + $0x8c] sm:$0xf]
        %v6935 = vld [vmem:[%s3 + $0x90] sm:$0xf]
        %v6936 = vld [vmem:[%s3 + $0x94] sm:$0xf]
        %v6937 = vld [vmem:[%s3 + $0x98] sm:$0xf]
        %v6938 = vld [vmem:[%s3 + $0x9c] sm:$0xf]
        %v6939 = vld [vmem:[%s3 + $0xa0] sm:$0xf]
        %v6940 = vld [vmem:[%s3 + $0xa4] sm:$0xf]
        %v6941 = vld [vmem:[%s3 + $0xa8] sm:$0xf]
        %v6942 = vld [vmem:[%s3 + $0xac] sm:$0xf]
        %v6943 = vld [vmem:[%s3 + $0xb0] sm:$0xf]
        %v6944 = vld [vmem:[%s3 + $0xb4] sm:$0xf]
        %v6945 = vld [vmem:[%s3 + $0xb8] sm:$0xf]
        %v6946 = vld [vmem:[%s3 + $0xbc] sm:$0xf]
        %v6947 = vld [vmem:[%s3 + $0xc0] sm:$0xf]
        %v6948 = vld [vmem:[%s3 + $0xc4] sm:$0xf]
        %v6949 = vld [vmem:[%s3 + $0xc8] sm:$0xf]
        %v6950 = vld [vmem:[%s3 + $0xcc] sm:$0xf]
        %v6951 = vld [vmem:[%s3 + $0xd0] sm:$0xf]
        %v6952 = vld [vmem:[%s3 + $0xd4] sm:$0xf]
        %v6953 = vld [vmem:[%s3 + $0xd8] sm:$0xf]
        %v6954 = vld [vmem:[%s3 + $0xdc] sm:$0xf]
        %v6955 = vld [vmem:[%s3 + $0xe0] sm:$0xf]
        %v6956 = vld [vmem:[%s3 + $0xe4] sm:$0xf]
        %v6957 = vld [vmem:[%s3 + $0xe8] sm:$0xf]
        %v6958 = vld [vmem:[%s3 + $0xec] sm:$0xf]
        %v6959 = vld [vmem:[%s3 + $0xf0] sm:$0xf]
        %v6960 = vld [vmem:[%s3 + $0xf4] sm:$0xf]
        %v6961 = vld [vmem:[%s3 + $0xf8] sm:$0xf]
        %v6962 = vld [vmem:[%s3 + $0xfc] sm:$0xf]
        %v6963 = vld [vmem:[%s3 + $0x100] sm:$0xf]
        %v6964 = vld [vmem:[%s3 + $0x104] sm:$0xf]
        %v6965 = vld [vmem:[%s3 + $0x108] sm:$0xf]
        %v6966 = vld [vmem:[%s3 + $0x10c] sm:$0xf]
        %v6967 = vld [vmem:[%s3 + $0x110] sm:$0xf]
        %v6968 = vld [vmem:[%s3 + $0x114] sm:$0xf]
        %v6969 = vld [vmem:[%s3 + $0x118] sm:$0xf]
        %v6970 = vld [vmem:[%s3 + $0x11c] sm:$0xf]
        %v6971 = vld [vmem:[%s3 + $0x120] sm:$0xf]
        %v6972 = vld [vmem:[%s3 + $0x124] sm:$0xf]
        %v6973 = vld [vmem:[%s3 + $0x128] sm:$0xf]
        %v6974 = vld [vmem:[%s3 + $0x12c] sm:$0xf]
        %v6975 = vld [vmem:[%s3 + $0x130] sm:$0xf]
        %v6976 = vld [vmem:[%s3 + $0x134] sm:$0xf]
        %v6977 = vld [vmem:[%s3 + $0x138] sm:$0xf]
        %v6978 = vld [vmem:[%s3 + $0x13c] sm:$0xf]
        %v6979 = vld [vmem:[%s1091 + $0x18] sm:$0x33]
        %v6980 = vld [vmem:[%s1091 + $0x20] sm:$0x33]
        %v6981 = vld [vmem:[%s1091 + $0x28] sm:$0x3]
        %v6982 = vld [vmem:[%s2208] sm:$0xf]
        %v6983 = vld [vmem:[%s2208 + $0x4] sm:$0xf]
        %v6984 = vld [vmem:[%s2208 + $0x8] sm:$0xf]
        %v6985 = vld [vmem:[%s2208 + $0xc] sm:$0xf]
        %v6986 = vld [vmem:[%s2208 + $0x10] sm:$0xf]
        %v6987 = vld [vmem:[%s2208 + $0x14] sm:$0xf]
        %v6988 = vld [vmem:[%s2208 + $0x18] sm:$0xf]
        %v6989 = vld [vmem:[%s2208 + $0x1c] sm:$0xf]
        %v6990 = vld [vmem:[%s2208 + $0x20] sm:$0xf]
        %v6991 = vld [vmem:[%s2208 + $0x24] sm:$0xf]
        %v6992 = vld [vmem:[%s2208 + $0x28] sm:$0xf]
        %v6993 = vld [vmem:[%s2208 + $0x2c] sm:$0xf]
        %v6994 = vld [vmem:[%s2208 + $0x30] sm:$0xf]
        %v6995 = vld [vmem:[%s2208 + $0x34] sm:$0xf]
        %v6996 = vld [vmem:[%s2208 + $0x38] sm:$0xf]
        %v6997 = vld [vmem:[%s2208 + $0x3c] sm:$0xf]
        %v6998 = vld [vmem:[%s2208 + $0x40] sm:$0xf]
        %v6999 = vld [vmem:[%s2208 + $0x44] sm:$0xf]
        %v7000 = vld [vmem:[%s2208 + $0x48] sm:$0xf]
        %v7001 = vld [vmem:[%s2208 + $0x4c] sm:$0xf]
        %v7002 = vld [vmem:[%s2208 + $0x50] sm:$0xf]
        %v7003 = vld [vmem:[%s2208 + $0x54] sm:$0xf]
        %v7004 = vld [vmem:[%s2208 + $0x58] sm:$0xf]
        %v7005 = vld [vmem:[%s2208 + $0x5c] sm:$0xf]
        %v7006 = vld [vmem:[%s2208 + $0x60] sm:$0xf]
        %v7007 = vld [vmem:[%s2208 + $0x64] sm:$0xf]
        %v7008 = vld [vmem:[%s2208 + $0x68] sm:$0xf]
        %v7009 = vld [vmem:[%s2208 + $0x6c] sm:$0xf]
        %v7010 = vld [vmem:[%s2208 + $0x70] sm:$0xf]
        %v7011 = vld [vmem:[%s2208 + $0x74] sm:$0xf]
        %v7012 = vld [vmem:[%s2208 + $0x78] sm:$0xf]
        %v7013 = vld [vmem:[%s2208 + $0x7c] sm:$0xf]
        %v7014 = vld [vmem:[%s2208 + $0x80] sm:$0xf]
        %v7015 = vld [vmem:[%s2208 + $0x84] sm:$0xf]
        %v7016 = vld [vmem:[%s2208 + $0x88] sm:$0xf]
        %v7017 = vld [vmem:[%s2208 + $0x8c] sm:$0xf]
        %v7018 = vld [vmem:[%s2208 + $0x90] sm:$0xf]
        %v7019 = vld [vmem:[%s2208 + $0x94] sm:$0xf]
        %v7020 = vld [vmem:[%s2208 + $0x98] sm:$0xf]
        %v7021 = vld [vmem:[%s2208 + $0x9c] sm:$0xf]
        %v7022 = vld [vmem:[%s2208 + $0xa0] sm:$0xf]
        %v7023 = vld [vmem:[%s2208 + $0xa4] sm:$0xf]
        %v7024 = vld [vmem:[%s2208 + $0xa8] sm:$0xf]
        %v7025 = vld [vmem:[%s2208 + $0xac] sm:$0xf]
        %v7026 = vld [vmem:[%s2208 + $0xb0] sm:$0xf]
        %v7027 = vld [vmem:[%s2208 + $0xb4] sm:$0xf]
        %v7028 = vld [vmem:[%s2208 + $0xb8] sm:$0xf]
        %v7029 = vld [vmem:[%s2208 + $0xbc] sm:$0xf]
        %v7030 = vld [vmem:[%s2208 + $0xc0] sm:$0xf]
        %v7031 = vld [vmem:[%s2208 + $0xc4] sm:$0xf]
        %v7032 = vld [vmem:[%s2208 + $0xc8] sm:$0xf]
        %v7033 = vld [vmem:[%s2208 + $0xcc] sm:$0xf]
        %v7034 = vld [vmem:[%s2208 + $0xd0] sm:$0xf]
        %v7035 = vld [vmem:[%s2208 + $0xd4] sm:$0xf]
        %v7036 = vld [vmem:[%s2208 + $0xd8] sm:$0xf]
        %v7037 = vld [vmem:[%s2208 + $0xdc] sm:$0xf]
        %v7038 = vld [vmem:[%s2208 + $0xe0] sm:$0xf]
        %v7039 = vld [vmem:[%s2208 + $0xe4] sm:$0xf]
        %v7040 = vld [vmem:[%s2208 + $0xe8] sm:$0xf]
        %v7041 = vld [vmem:[%s2208 + $0xec] sm:$0xf]
        %v7042 = vld [vmem:[%s2208 + $0xf0] sm:$0xf]
        %v7043 = vld [vmem:[%s2208 + $0xf4] sm:$0xf]
        %v7044 = vld [vmem:[%s2208 + $0xf8] sm:$0xf]
        %v7045 = vld [vmem:[%s2208 + $0xfc] sm:$0xf]
        %v7046 = vld [vmem:[%s2208 + $0x100] sm:$0xf]
        %v7047 = vld [vmem:[%s2208 + $0x104] sm:$0xf]
        %v7048 = vld [vmem:[%s2208 + $0x108] sm:$0xf]
        %v7049 = vld [vmem:[%s2208 + $0x10c] sm:$0xf]
        %v7050 = vld [vmem:[%s2208 + $0x110] sm:$0xf]
        %v7051 = vld [vmem:[%s2208 + $0x114] sm:$0xf]
        %v7052 = vld [vmem:[%s2208 + $0x118] sm:$0xf]
        %v7053 = vld [vmem:[%s2208 + $0x11c] sm:$0xf]
        %v7054 = vld [vmem:[%s2208 + $0x120] sm:$0xf]
        %v7055 = vld [vmem:[%s2208 + $0x124] sm:$0xf]
        %v7056 = vld [vmem:[%s2208 + $0x128] sm:$0xf]
        %v7057 = vld [vmem:[%s2208 + $0x12c] sm:$0xf]
        %v7058 = vld [vmem:[%s2208 + $0x130] sm:$0xf]
        %v7059 = vld [vmem:[%s2208 + $0x134] sm:$0xf]
        %v7060 = vld [vmem:[%s2208 + $0x138] sm:$0xf]
        %v7061 = vld [vmem:[%s2208 + $0x13c] sm:$0xf]
        %v7065 = vunpack.c.l.b16 %v6979
        %v7066 = vunpack.c.h.b16 %v6979
        %v7067 = vunpack.c.l.b16 %v6980
        %v7068 = vunpack.c.h.b16 %v6980
        %v7069 = vunpack.c.l.b16 %v6981
        %v7070 = vpack.c.b16 %v7065, %v7065
        %v7071 = vpack.c.b16 %v7066, %v7066
        %v7072 = vpack.c.b16 %v7067, %v7067
        %v7073 = vpack.c.b16 %v7068, %v7068
        %v7074 = vpack.c.b16 %v7069, %v7069
        %v7160 = vunpack.c.l.b16 %v6982
        %v7161 = vunpack.c.l.b16 %v6983
        %v7162 = vunpack.c.l.b16 %v6984
        %v7163 = vunpack.c.l.b16 %v6985
        %v7164 = vunpack.c.l.b16 %v6986
        %v7165 = vunpack.c.l.b16 %v6987
        %v7166 = vunpack.c.l.b16 %v6988
        %v7167 = vunpack.c.l.b16 %v6989
        %v7168 = vunpack.c.l.b16 %v6990
        %v7169 = vunpack.c.l.b16 %v6991
        %v7170 = vunpack.c.l.b16 %v6992
        %v7171 = vunpack.c.l.b16 %v6993
        %v7172 = vunpack.c.l.b16 %v6994
        %v7173 = vunpack.c.l.b16 %v6995
        %v7174 = vunpack.c.l.b16 %v6996
        %v7175 = vunpack.c.l.b16 %v6997
        %v7176 = vunpack.c.l.b16 %v6998
        %v7177 = vunpack.c.l.b16 %v6999
        %v7178 = vunpack.c.l.b16 %v7000
        %v7179 = vunpack.c.l.b16 %v7001
        %v7180 = vunpack.c.l.b16 %v7002
        %v7181 = vunpack.c.l.b16 %v7003
        %v7182 = vunpack.c.l.b16 %v7004
        %v7183 = vunpack.c.l.b16 %v7005
        %v7184 = vunpack.c.l.b16 %v7006
        %v7185 = vunpack.c.l.b16 %v7007
        %v7186 = vunpack.c.l.b16 %v7008
        %v7187 = vunpack.c.l.b16 %v7009
        %v7188 = vunpack.c.l.b16 %v7010
        %v7189 = vunpack.c.l.b16 %v7011
        %v7190 = vunpack.c.l.b16 %v7012
        %v7191 = vunpack.c.l.b16 %v7013
        %v7192 = vunpack.c.l.b16 %v7014
        %v7193 = vunpack.c.l.b16 %v7015
        %v7194 = vunpack.c.l.b16 %v7016
        %v7195 = vunpack.c.l.b16 %v7017
        %v7196 = vunpack.c.l.b16 %v7018
        %v7197 = vunpack.c.l.b16 %v7019
        %v7198 = vunpack.c.l.b16 %v7020
        %v7199 = vunpack.c.l.b16 %v7021
        %v7200 = vunpack.c.l.b16 %v7022
        %v7201 = vunpack.c.l.b16 %v7023
        %v7202 = vunpack.c.l.b16 %v7024
        %v7203 = vunpack.c.l.b16 %v7025
        %v7204 = vunpack.c.l.b16 %v7026
        %v7205 = vunpack.c.l.b16 %v7027
        %v7206 = vunpack.c.l.b16 %v7028
        %v7207 = vunpack.c.l.b16 %v7029
        %v7208 = vunpack.c.l.b16 %v7030
        %v7209 = vunpack.c.l.b16 %v7031
        %v7210 = vunpack.c.l.b16 %v7032
        %v7211 = vunpack.c.l.b16 %v7033
        %v7212 = vunpack.c.l.b16 %v7034
        %v7213 = vunpack.c.l.b16 %v7035
        %v7214 = vunpack.c.l.b16 %v7036
        %v7215 = vunpack.c.l.b16 %v7037
        %v7216 = vunpack.c.l.b16 %v7038
        %v7217 = vunpack.c.l.b16 %v7039
        %v7218 = vunpack.c.l.b16 %v7040
        %v7219 = vunpack.c.l.b16 %v7041
        %v7220 = vunpack.c.l.b16 %v7042
        %v7221 = vunpack.c.l.b16 %v7043
        %v7222 = vunpack.c.l.b16 %v7044
        %v7223 = vunpack.c.l.b16 %v7045
        %v7224 = vunpack.c.l.b16 %v7046
        %v7225 = vunpack.c.l.b16 %v7047
        %v7226 = vunpack.c.l.b16 %v7048
        %v7227 = vunpack.c.l.b16 %v7049
        %v7228 = vunpack.c.l.b16 %v7050
        %v7229 = vunpack.c.l.b16 %v7051
        %v7230 = vunpack.c.l.b16 %v7052
        %v7231 = vunpack.c.l.b16 %v7053
        %v7232 = vunpack.c.l.b16 %v7054
        %v7233 = vunpack.c.l.b16 %v7055
        %v7234 = vunpack.c.l.b16 %v7056
        %v7235 = vunpack.c.l.b16 %v7057
        %v7236 = vunpack.c.l.b16 %v7058
        %v7237 = vunpack.c.l.b16 %v7059
        %v7238 = vunpack.c.l.b16 %v7060
        %v7239 = vunpack.c.l.b16 %v7061
        %v7240 = vpack.c.b16 %v7161, %v7160
        %v7241 = vpack.c.b16 %v7163, %v7162
        %v7242 = vpack.c.b16 %v7165, %v7164
        %v7243 = vpack.c.b16 %v7167, %v7166
        %v7244 = vpack.c.b16 %v7169, %v7168
        %v7245 = vpack.c.b16 %v7171, %v7170
        %v7246 = vpack.c.b16 %v7173, %v7172
        %v7247 = vpack.c.b16 %v7175, %v7174
        %v7248 = vpack.c.b16 %v7177, %v7176
        %v7249 = vpack.c.b16 %v7179, %v7178
        %v7250 = vpack.c.b16 %v7181, %v7180
        %v7251 = vpack.c.b16 %v7183, %v7182
        %v7252 = vpack.c.b16 %v7185, %v7184
        %v7253 = vpack.c.b16 %v7187, %v7186
        %v7254 = vpack.c.b16 %v7189, %v7188
        %v7255 = vpack.c.b16 %v7191, %v7190
        %v7256 = vpack.c.b16 %v7193, %v7192
        %v7257 = vpack.c.b16 %v7195, %v7194
        %v7258 = vpack.c.b16 %v7197, %v7196
        %v7259 = vpack.c.b16 %v7199, %v7198
        %v7260 = vpack.c.b16 %v7201, %v7200
        %v7261 = vpack.c.b16 %v7203, %v7202
        %v7262 = vpack.c.b16 %v7205, %v7204
        %v7263 = vpack.c.b16 %v7207, %v7206
        %v7264 = vpack.c.b16 %v7209, %v7208
        %v7265 = vpack.c.b16 %v7211, %v7210
        %v7266 = vpack.c.b16 %v7213, %v7212
        %v7267 = vpack.c.b16 %v7215, %v7214
        %v7268 = vpack.c.b16 %v7217, %v7216
        %v7269 = vpack.c.b16 %v7219, %v7218
        %v7270 = vpack.c.b16 %v7221, %v7220
        %v7271 = vpack.c.b16 %v7223, %v7222
        %v7272 = vpack.c.b16 %v7225, %v7224
        %v7273 = vpack.c.b16 %v7227, %v7226
        %v7274 = vpack.c.b16 %v7229, %v7228
        %v7275 = vpack.c.b16 %v7231, %v7230
        %v7276 = vpack.c.b16 %v7233, %v7232
        %v7277 = vpack.c.b16 %v7235, %v7234
        %v7278 = vpack.c.b16 %v7237, %v7236
        %v7279 = vpack.c.b16 %v7239, %v7238
        %7320 = vmatprep.subr.bf16.mxu0 0
        %7321 = vmatpush1.bf16.msra.mxu0 %v7247
        %7322 = vmatprep.subr.bf16.mxu0 0
        %7323 = vmatpush1.bf16.msra.mxu0 %v7246
        %7324 = vmatprep.subr.bf16.mxu0 0
        %7325 = vmatpush1.bf16.msra.mxu0 %v7245
        %7326 = vmatprep.subr.bf16.mxu0 0
        %7327 = vmatpush1.bf16.msra.mxu0 %v7244
        %7328 = vmatprep.subr.bf16.mxu0 0
        %7329 = vmatpush1.bf16.msra.mxu0 %v7243
        %7330 = vmatprep.subr.bf16.mxu0 0
        %7331 = vmatpush1.bf16.msra.mxu0 %v7242
        %7332 = vmatprep.subr.bf16.mxu0 0
        %7333 = vmatpush1.bf16.msra.mxu0 %v7241
        %7334 = vmatprep.subr.bf16.mxu0 0
        %7335 = vmatpush1.bf16.msra.mxu0 %v7240
        %7336 = vmatprep.subr.bf16.mxu0 0
        %7337 = vmatpush2.bf16.msra.mxu0 %v7255
        %7338 = vmatprep.subr.bf16.mxu0 0
        %7339 = vmatpush2.bf16.msra.mxu0 %v7254
        %7340 = vmatprep.subr.bf16.mxu0 0
        %7341 = vmatpush2.bf16.msra.mxu0 %v7253
        %7342 = vmatprep.subr.bf16.mxu0 0
        %7343 = vmatpush2.bf16.msra.mxu0 %v7252
        %7344 = vmatprep.subr.bf16.mxu0 0
        %7345 = vmatpush2.bf16.msra.mxu0 %v7251
        %7346 = vmatprep.subr.bf16.mxu0 0
        %7347 = vmatpush2.bf16.msra.mxu0 %v7250
        %7348 = vmatprep.subr.bf16.mxu0 0
        %7349 = vmatpush2.bf16.msra.mxu0 %v7249
        %7350 = vmatprep.subr.bf16.mxu0 0
        %7351 = vmatpush2.bf16.msra.mxu0 %v7248
        %7352 = vmatprep.mubr.bf16.mxu0 %v7071
        %7353 = vmatmul.mubr.bf16.gmra.mxu0 %v7070
        %v7354 = vpop.f32.mrf.mxu0
        %v7355 = vadd.f32 0.0, %v7354
        %v7356 = vpop.f32.mrf.mxu0
        %v7357 = vpop.f32.mrf.mxu0
        %v7358 = vpop.f32.mrf.mxu0
        %7359 = vdwg.mxu0
        %7360 = vmatprep.subr.bf16.mxu0 0
        %7361 = vmatpush1.bf16.msra.mxu0 %v7263
        %7362 = vmatprep.subr.bf16.mxu0 0
        %7363 = vmatpush1.bf16.msra.mxu0 %v7262
        %7364 = vmatprep.subr.bf16.mxu0 0
        %7365 = vmatpush1.bf16.msra.mxu0 %v7261
        %7366 = vmatprep.subr.bf16.mxu0 0
        %7367 = vmatpush1.bf16.msra.mxu0 %v7260
        %7368 = vmatprep.subr.bf16.mxu0 0
        %7369 = vmatpush1.bf16.msra.mxu0 %v7259
        %7370 = vmatprep.subr.bf16.mxu0 0
        %7371 = vmatpush1.bf16.msra.mxu0 %v7258
        %7372 = vmatprep.subr.bf16.mxu0 0
        %7373 = vmatpush1.bf16.msra.mxu0 %v7257
        %7374 = vmatprep.subr.bf16.mxu0 0
        %7375 = vmatpush1.bf16.msra.mxu0 %v7256
        %7376 = vmatprep.subr.bf16.mxu0 0
        %7377 = vmatpush2.bf16.msra.mxu0 %v7271
        %7378 = vmatprep.subr.bf16.mxu0 0
        %7379 = vmatpush2.bf16.msra.mxu0 %v7270
        %7380 = vmatprep.subr.bf16.mxu0 0
        %7381 = vmatpush2.bf16.msra.mxu0 %v7269
        %7382 = vmatprep.subr.bf16.mxu0 0
        %7383 = vmatpush2.bf16.msra.mxu0 %v7268
        %7384 = vmatprep.subr.bf16.mxu0 0
        %7385 = vmatpush2.bf16.msra.mxu0 %v7267
        %7386 = vmatprep.subr.bf16.mxu0 0
        %7387 = vmatpush2.bf16.msra.mxu0 %v7266
        %7388 = vmatprep.subr.bf16.mxu0 0
        %7389 = vmatpush2.bf16.msra.mxu0 %v7265
        %7390 = vmatprep.subr.bf16.mxu0 0
        %7391 = vmatpush2.bf16.msra.mxu0 %v7264
        %7392 = vmatprep.mubr.bf16.mxu0 %v7073
        %7393 = vmatmul.mubr.bf16.gmra.mxu0 %v7072
        %v7394 = vpop.f32.mrf.mxu0
        %v7395 = vadd.f32 %v7355, %v7394
        %v7396 = vpop.f32.mrf.mxu0
        %v7397 = vpop.f32.mrf.mxu0
        %v7398 = vpop.f32.mrf.mxu0
        %7399 = vdwg.mxu0
        %7400 = vmatprep.subr.bf16.mxu0 0
        %7401 = vmatpush1.bf16.msra.mxu0 %v7279
        %7402 = vmatprep.subr.bf16.mxu0 0
        %7403 = vmatpush1.bf16.msra.mxu0 %v7278
        %7404 = vmatprep.subr.bf16.mxu0 0
        %7405 = vmatpush1.bf16.msra.mxu0 %v7277
        %7406 = vmatprep.subr.bf16.mxu0 0
        %7407 = vmatpush1.bf16.msra.mxu0 %v7276
        %7408 = vmatprep.subr.bf16.mxu0 0
        %7409 = vmatpush1.bf16.msra.mxu0 %v7275
        %7410 = vmatprep.subr.bf16.mxu0 0
        %7411 = vmatpush1.bf16.msra.mxu0 %v7274
        %7412 = vmatprep.subr.bf16.mxu0 0
        %7413 = vmatpush1.bf16.msra.mxu0 %v7273
        %7414 = vmatprep.subr.bf16.mxu0 0
        %7415 = vmatpush1.bf16.msra.mxu0 %v7272
        %7416 = vmatprep.subr.bf16.mxu0 0
        %7417 = vmatpush2.bf16.msra.mxu0 0
        %7418 = vmatprep.subr.bf16.mxu0 0
        %7419 = vmatpush2.bf16.msra.mxu0 0
        %7420 = vmatprep.subr.bf16.mxu0 0
        %7421 = vmatpush2.bf16.msra.mxu0 0
        %7422 = vmatprep.subr.bf16.mxu0 0
        %7423 = vmatpush2.bf16.msra.mxu0 0
        %7424 = vmatprep.subr.bf16.mxu0 0
        %7425 = vmatpush2.bf16.msra.mxu0 0
        %7426 = vmatprep.subr.bf16.mxu0 0
        %7427 = vmatpush2.bf16.msra.mxu0 0
        %7428 = vmatprep.subr.bf16.mxu0 0
        %7429 = vmatpush2.bf16.msra.mxu0 0
        %7430 = vmatprep.subr.bf16.mxu0 0
        %7431 = vmatpush2.bf16.msra.mxu0 0
        %7432 = vmatprep.mubr.bf16.mxu0 0
        %7433 = vmatmul.mubr.bf16.gmra.mxu0 %v7074
        %v7434 = vpop.f32.mrf.mxu0
        %v7435 = vadd.f32 %v7395, %v7434
        %v7436 = vpop.f32.mrf.mxu0
        %v7437 = vpop.f32.mrf.mxu0
        %v7438 = vpop.f32.mrf.mxu0
        %7439 = vdwg.mxu0
        %v7443 = vunpack.c.l.b16 %v6896
        %v7444 = vunpack.c.h.b16 %v6896
        %v7445 = vunpack.c.l.b16 %v6897
        %v7446 = vunpack.c.h.b16 %v6897
        %v7447 = vunpack.c.l.b16 %v6898
        %v7448 = vpack.c.b16 %v7443, %v7443
        %v7449 = vpack.c.b16 %v7444, %v7444
        %v7450 = vpack.c.b16 %v7445, %v7445
        %v7451 = vpack.c.b16 %v7446, %v7446
        %v7452 = vpack.c.b16 %v7447, %v7447
        %v7538 = vunpack.c.l.b16 %v6899
        %v7539 = vunpack.c.l.b16 %v6900
        %v7540 = vunpack.c.l.b16 %v6901
        %v7541 = vunpack.c.l.b16 %v6902
        %v7542 = vunpack.c.l.b16 %v6903
        %v7543 = vunpack.c.l.b16 %v6904
        %v7544 = vunpack.c.l.b16 %v6905
        %v7545 = vunpack.c.l.b16 %v6906
        %v7546 = vunpack.c.l.b16 %v6907
        %v7547 = vunpack.c.l.b16 %v6908
        %v7548 = vunpack.c.l.b16 %v6909
        %v7549 = vunpack.c.l.b16 %v6910
        %v7550 = vunpack.c.l.b16 %v6911
        %v7551 = vunpack.c.l.b16 %v6912
        %v7552 = vunpack.c.l.b16 %v6913
        %v7553 = vunpack.c.l.b16 %v6914
        %v7554 = vunpack.c.l.b16 %v6915
        %v7555 = vunpack.c.l.b16 %v6916
        %v7556 = vunpack.c.l.b16 %v6917
        %v7557 = vunpack.c.l.b16 %v6918
        %v7558 = vunpack.c.l.b16 %v6919
        %v7559 = vunpack.c.l.b16 %v6920
        %v7560 = vunpack.c.l.b16 %v6921
        %v7561 = vunpack.c.l.b16 %v6922
        %v7562 = vunpack.c.l.b16 %v6923
        %v7563 = vunpack.c.l.b16 %v6924
        %v7564 = vunpack.c.l.b16 %v6925
        %v7565 = vunpack.c.l.b16 %v6926
        %v7566 = vunpack.c.l.b16 %v6927
        %v7567 = vunpack.c.l.b16 %v6928
        %v7568 = vunpack.c.l.b16 %v6929
        %v7569 = vunpack.c.l.b16 %v6930
        %v7570 = vunpack.c.l.b16 %v6931
        %v7571 = vunpack.c.l.b16 %v6932
        %v7572 = vunpack.c.l.b16 %v6933
        %v7573 = vunpack.c.l.b16 %v6934
        %v7574 = vunpack.c.l.b16 %v6935
        %v7575 = vunpack.c.l.b16 %v6936
        %v7576 = vunpack.c.l.b16 %v6937
        %v7577 = vunpack.c.l.b16 %v6938
        %v7578 = vunpack.c.l.b16 %v6939
        %v7579 = vunpack.c.l.b16 %v6940
        %v7580 = vunpack.c.l.b16 %v6941
        %v7581 = vunpack.c.l.b16 %v6942
        %v7582 = vunpack.c.l.b16 %v6943
        %v7583 = vunpack.c.l.b16 %v6944
        %v7584 = vunpack.c.l.b16 %v6945
        %v7585 = vunpack.c.l.b16 %v6946
        %v7586 = vunpack.c.l.b16 %v6947
        %v7587 = vunpack.c.l.b16 %v6948
        %v7588 = vunpack.c.l.b16 %v6949
        %v7589 = vunpack.c.l.b16 %v6950
        %v7590 = vunpack.c.l.b16 %v6951
        %v7591 = vunpack.c.l.b16 %v6952
        %v7592 = vunpack.c.l.b16 %v6953
        %v7593 = vunpack.c.l.b16 %v6954
        %v7594 = vunpack.c.l.b16 %v6955
        %v7595 = vunpack.c.l.b16 %v6956
        %v7596 = vunpack.c.l.b16 %v6957
        %v7597 = vunpack.c.l.b16 %v6958
        %v7598 = vunpack.c.l.b16 %v6959
        %v7599 = vunpack.c.l.b16 %v6960
        %v7600 = vunpack.c.l.b16 %v6961
        %v7601 = vunpack.c.l.b16 %v6962
        %v7602 = vunpack.c.l.b16 %v6963
        %v7603 = vunpack.c.l.b16 %v6964
        %v7604 = vunpack.c.l.b16 %v6965
        %v7605 = vunpack.c.l.b16 %v6966
        %v7606 = vunpack.c.l.b16 %v6967
        %v7607 = vunpack.c.l.b16 %v6968
        %v7608 = vunpack.c.l.b16 %v6969
        %v7609 = vunpack.c.l.b16 %v6970
        %v7610 = vunpack.c.l.b16 %v6971
        %v7611 = vunpack.c.l.b16 %v6972
        %v7612 = vunpack.c.l.b16 %v6973
        %v7613 = vunpack.c.l.b16 %v6974
        %v7614 = vunpack.c.l.b16 %v6975
        %v7615 = vunpack.c.l.b16 %v6976
        %v7616 = vunpack.c.l.b16 %v6977
        %v7617 = vunpack.c.l.b16 %v6978
        %v7618 = vpack.c.b16 %v7539, %v7538
        %v7619 = vpack.c.b16 %v7541, %v7540
        %v7620 = vpack.c.b16 %v7543, %v7542
        %v7621 = vpack.c.b16 %v7545, %v7544
        %v7622 = vpack.c.b16 %v7547, %v7546
        %v7623 = vpack.c.b16 %v7549, %v7548
        %v7624 = vpack.c.b16 %v7551, %v7550
        %v7625 = vpack.c.b16 %v7553, %v7552
        %v7626 = vpack.c.b16 %v7555, %v7554
        %v7627 = vpack.c.b16 %v7557, %v7556
        %v7628 = vpack.c.b16 %v7559, %v7558
        %v7629 = vpack.c.b16 %v7561, %v7560
        %v7630 = vpack.c.b16 %v7563, %v7562
        %v7631 = vpack.c.b16 %v7565, %v7564
        %v7632 = vpack.c.b16 %v7567, %v7566
        %v7633 = vpack.c.b16 %v7569, %v7568
        %v7634 = vpack.c.b16 %v7571, %v7570
        %v7635 = vpack.c.b16 %v7573, %v7572
        %v7636 = vpack.c.b16 %v7575, %v7574
        %v7637 = vpack.c.b16 %v7577, %v7576
        %v7638 = vpack.c.b16 %v7579, %v7578
        %v7639 = vpack.c.b16 %v7581, %v7580
        %v7640 = vpack.c.b16 %v7583, %v7582
        %v7641 = vpack.c.b16 %v7585, %v7584
        %v7642 = vpack.c.b16 %v7587, %v7586
        %v7643 = vpack.c.b16 %v7589, %v7588
        %v7644 = vpack.c.b16 %v7591, %v7590
        %v7645 = vpack.c.b16 %v7593, %v7592
        %v7646 = vpack.c.b16 %v7595, %v7594
        %v7647 = vpack.c.b16 %v7597, %v7596
        %v7648 = vpack.c.b16 %v7599, %v7598
        %v7649 = vpack.c.b16 %v7601, %v7600
        %v7650 = vpack.c.b16 %v7603, %v7602
        %v7651 = vpack.c.b16 %v7605, %v7604
        %v7652 = vpack.c.b16 %v7607, %v7606
        %v7653 = vpack.c.b16 %v7609, %v7608
        %v7654 = vpack.c.b16 %v7611, %v7610
        %v7655 = vpack.c.b16 %v7613, %v7612
        %v7656 = vpack.c.b16 %v7615, %v7614
        %v7657 = vpack.c.b16 %v7617, %v7616
        %7698 = vmatprep.subr.bf16.mxu0 0
        %7699 = vmatpush1.bf16.msra.mxu0 %v7625
        %7700 = vmatprep.subr.bf16.mxu0 0
        %7701 = vmatpush1.bf16.msra.mxu0 %v7624
        %7702 = vmatprep.subr.bf16.mxu0 0
        %7703 = vmatpush1.bf16.msra.mxu0 %v7623
        %7704 = vmatprep.subr.bf16.mxu0 0
        %7705 = vmatpush1.bf16.msra.mxu0 %v7622
        %7706 = vmatprep.subr.bf16.mxu0 0
        %7707 = vmatpush1.bf16.msra.mxu0 %v7621
        %7708 = vmatprep.subr.bf16.mxu0 0
        %7709 = vmatpush1.bf16.msra.mxu0 %v7620
        %7710 = vmatprep.subr.bf16.mxu0 0
        %7711 = vmatpush1.bf16.msra.mxu0 %v7619
        %7712 = vmatprep.subr.bf16.mxu0 0
        %7713 = vmatpush1.bf16.msra.mxu0 %v7618
        %7714 = vmatprep.subr.bf16.mxu0 0
        %7715 = vmatpush2.bf16.msra.mxu0 %v7633
        %7716 = vmatprep.subr.bf16.mxu0 0
        %7717 = vmatpush2.bf16.msra.mxu0 %v7632
        %7718 = vmatprep.subr.bf16.mxu0 0
        %7719 = vmatpush2.bf16.msra.mxu0 %v7631
        %7720 = vmatprep.subr.bf16.mxu0 0
        %7721 = vmatpush2.bf16.msra.mxu0 %v7630
        %7722 = vmatprep.subr.bf16.mxu0 0
        %7723 = vmatpush2.bf16.msra.mxu0 %v7629
        %7724 = vmatprep.subr.bf16.mxu0 0
        %7725 = vmatpush2.bf16.msra.mxu0 %v7628
        %7726 = vmatprep.subr.bf16.mxu0 0
        %7727 = vmatpush2.bf16.msra.mxu0 %v7627
        %7728 = vmatprep.subr.bf16.mxu0 0
        %7729 = vmatpush2.bf16.msra.mxu0 %v7626
        %7730 = vmatprep.mubr.bf16.mxu0 %v7449
        %7731 = vmatmul.mubr.bf16.gmra.mxu0 %v7448
        %v7732 = vpop.f32.mrf.mxu0
        %v7733 = vadd.f32 %v7435, %v7732
        %v7734 = vpop.f32.mrf.mxu0
        %v7735 = vpop.f32.mrf.mxu0
        %v7736 = vpop.f32.mrf.mxu0
        %7737 = vdwg.mxu0
        %7738 = vmatprep.subr.bf16.mxu0 0
        %7739 = vmatpush1.bf16.msra.mxu0 %v7641
        %7740 = vmatprep.subr.bf16.mxu0 0
        %7741 = vmatpush1.bf16.msra.mxu0 %v7640
        %7742 = vmatprep.subr.bf16.mxu0 0
        %7743 = vmatpush1.bf16.msra.mxu0 %v7639
        %7744 = vmatprep.subr.bf16.mxu0 0
        %7745 = vmatpush1.bf16.msra.mxu0 %v7638
        %7746 = vmatprep.subr.bf16.mxu0 0
        %7747 = vmatpush1.bf16.msra.mxu0 %v7637
        %7748 = vmatprep.subr.bf16.mxu0 0
        %7749 = vmatpush1.bf16.msra.mxu0 %v7636
        %7750 = vmatprep.subr.bf16.mxu0 0
        %7751 = vmatpush1.bf16.msra.mxu0 %v7635
        %7752 = vmatprep.subr.bf16.mxu0 0
        %7753 = vmatpush1.bf16.msra.mxu0 %v7634
        %7754 = vmatprep.subr.bf16.mxu0 0
        %7755 = vmatpush2.bf16.msra.mxu0 %v7649
        %7756 = vmatprep.subr.bf16.mxu0 0
        %7757 = vmatpush2.bf16.msra.mxu0 %v7648
        %7758 = vmatprep.subr.bf16.mxu0 0
        %7759 = vmatpush2.bf16.msra.mxu0 %v7647
        %7760 = vmatprep.subr.bf16.mxu0 0
        %7761 = vmatpush2.bf16.msra.mxu0 %v7646
        %7762 = vmatprep.subr.bf16.mxu0 0
        %7763 = vmatpush2.bf16.msra.mxu0 %v7645
        %7764 = vmatprep.subr.bf16.mxu0 0
        %7765 = vmatpush2.bf16.msra.mxu0 %v7644
        %7766 = vmatprep.subr.bf16.mxu0 0
        %7767 = vmatpush2.bf16.msra.mxu0 %v7643
        %7768 = vmatprep.subr.bf16.mxu0 0
        %7769 = vmatpush2.bf16.msra.mxu0 %v7642
        %7770 = vmatprep.mubr.bf16.mxu0 %v7451
        %7771 = vmatmul.mubr.bf16.gmra.mxu0 %v7450
        %v7772 = vpop.f32.mrf.mxu0
        %v7773 = vadd.f32 %v7733, %v7772
        %v7774 = vpop.f32.mrf.mxu0
        %v7775 = vpop.f32.mrf.mxu0
        %v7776 = vpop.f32.mrf.mxu0
        %7777 = vdwg.mxu0
        %7778 = vmatprep.subr.bf16.mxu0 0
        %7779 = vmatpush1.bf16.msra.mxu0 %v7657
        %7780 = vmatprep.subr.bf16.mxu0 0
        %7781 = vmatpush1.bf16.msra.mxu0 %v7656
        %7782 = vmatprep.subr.bf16.mxu0 0
        %7783 = vmatpush1.bf16.msra.mxu0 %v7655
        %7784 = vmatprep.subr.bf16.mxu0 0
        %7785 = vmatpush1.bf16.msra.mxu0 %v7654
        %7786 = vmatprep.subr.bf16.mxu0 0
        %7787 = vmatpush1.bf16.msra.mxu0 %v7653
        %7788 = vmatprep.subr.bf16.mxu0 0
        %7789 = vmatpush1.bf16.msra.mxu0 %v7652
        %7790 = vmatprep.subr.bf16.mxu0 0
        %7791 = vmatpush1.bf16.msra.mxu0 %v7651
        %7792 = vmatprep.subr.bf16.mxu0 0
        %7793 = vmatpush1.bf16.msra.mxu0 %v7650
        %7794 = vmatprep.subr.bf16.mxu0 0
        %7795 = vmatpush2.bf16.msra.mxu0 0
        %7796 = vmatprep.subr.bf16.mxu0 0
        %7797 = vmatpush2.bf16.msra.mxu0 0
        %7798 = vmatprep.subr.bf16.mxu0 0
        %7799 = vmatpush2.bf16.msra.mxu0 0
        %7800 = vmatprep.subr.bf16.mxu0 0
        %7801 = vmatpush2.bf16.msra.mxu0 0
        %7802 = vmatprep.subr.bf16.mxu0 0
        %7803 = vmatpush2.bf16.msra.mxu0 0
        %7804 = vmatprep.subr.bf16.mxu0 0
        %7805 = vmatpush2.bf16.msra.mxu0 0
        %7806 = vmatprep.subr.bf16.mxu0 0
        %7807 = vmatpush2.bf16.msra.mxu0 0
        %7808 = vmatprep.subr.bf16.mxu0 0
        %7809 = vmatpush2.bf16.msra.mxu0 0
        %7810 = vmatprep.mubr.bf16.mxu0 0
        %7811 = vmatmul.mubr.bf16.gmra.mxu0 %v7452
        %v7812 = vpop.f32.mrf.mxu0
        %v7813 = vadd.f32 %v7773, %v7812
        %v7814 = vpop.f32.mrf.mxu0
        %v7815 = vpop.f32.mrf.mxu0
        %v7816 = vpop.f32.mrf.mxu0
        %7817 = vdwg.mxu0
        %v7818 = vld [vmem:[%s1347 + $0x18] sm:$0x33]
        %v7819 = vld [vmem:[%s1347 + $0x20] sm:$0x33]
        %v7820 = vld [vmem:[%s1347 + $0x28] sm:$0x3]
        %v7821 = vld [vmem:[%s3048] sm:$0xf]
        %v7822 = vld [vmem:[%s3048 + $0x4] sm:$0xf]
        %v7823 = vld [vmem:[%s3048 + $0x8] sm:$0xf]
        %v7824 = vld [vmem:[%s3048 + $0xc] sm:$0xf]
        %v7825 = vld [vmem:[%s3048 + $0x10] sm:$0xf]
        %v7826 = vld [vmem:[%s3048 + $0x14] sm:$0xf]
        %v7827 = vld [vmem:[%s3048 + $0x18] sm:$0xf]
        %v7828 = vld [vmem:[%s3048 + $0x1c] sm:$0xf]
        %v7829 = vld [vmem:[%s3048 + $0x20] sm:$0xf]
        %v7830 = vld [vmem:[%s3048 + $0x24] sm:$0xf]
        %v7831 = vld [vmem:[%s3048 + $0x28] sm:$0xf]
        %v7832 = vld [vmem:[%s3048 + $0x2c] sm:$0xf]
        %v7833 = vld [vmem:[%s3048 + $0x30] sm:$0xf]
        %v7834 = vld [vmem:[%s3048 + $0x34] sm:$0xf]
        %v7835 = vld [vmem:[%s3048 + $0x38] sm:$0xf]
        %v7836 = vld [vmem:[%s3048 + $0x3c] sm:$0xf]
        %v7837 = vld [vmem:[%s3048 + $0x40] sm:$0xf]
        %v7838 = vld [vmem:[%s3048 + $0x44] sm:$0xf]
        %v7839 = vld [vmem:[%s3048 + $0x48] sm:$0xf]
        %v7840 = vld [vmem:[%s3048 + $0x4c] sm:$0xf]
        %v7841 = vld [vmem:[%s3048 + $0x50] sm:$0xf]
        %v7842 = vld [vmem:[%s3048 + $0x54] sm:$0xf]
        %v7843 = vld [vmem:[%s3048 + $0x58] sm:$0xf]
        %v7844 = vld [vmem:[%s3048 + $0x5c] sm:$0xf]
        %v7845 = vld [vmem:[%s3048 + $0x60] sm:$0xf]
        %v7846 = vld [vmem:[%s3048 + $0x64] sm:$0xf]
        %v7847 = vld [vmem:[%s3048 + $0x68] sm:$0xf]
        %v7848 = vld [vmem:[%s3048 + $0x6c] sm:$0xf]
        %v7849 = vld [vmem:[%s3048 + $0x70] sm:$0xf]
        %v7850 = vld [vmem:[%s3048 + $0x74] sm:$0xf]
        %v7851 = vld [vmem:[%s3048 + $0x78] sm:$0xf]
        %v7852 = vld [vmem:[%s3048 + $0x7c] sm:$0xf]
        %v7853 = vld [vmem:[%s3048 + $0x80] sm:$0xf]
        %v7854 = vld [vmem:[%s3048 + $0x84] sm:$0xf]
        %v7855 = vld [vmem:[%s3048 + $0x88] sm:$0xf]
        %v7856 = vld [vmem:[%s3048 + $0x8c] sm:$0xf]
        %v7857 = vld [vmem:[%s3048 + $0x90] sm:$0xf]
        %v7858 = vld [vmem:[%s3048 + $0x94] sm:$0xf]
        %v7859 = vld [vmem:[%s3048 + $0x98] sm:$0xf]
        %v7860 = vld [vmem:[%s3048 + $0x9c] sm:$0xf]
        %v7861 = vld [vmem:[%s3048 + $0xa0] sm:$0xf]
        %v7862 = vld [vmem:[%s3048 + $0xa4] sm:$0xf]
        %v7863 = vld [vmem:[%s3048 + $0xa8] sm:$0xf]
        %v7864 = vld [vmem:[%s3048 + $0xac] sm:$0xf]
        %v7865 = vld [vmem:[%s3048 + $0xb0] sm:$0xf]
        %v7866 = vld [vmem:[%s3048 + $0xb4] sm:$0xf]
        %v7867 = vld [vmem:[%s3048 + $0xb8] sm:$0xf]
        %v7868 = vld [vmem:[%s3048 + $0xbc] sm:$0xf]
        %v7869 = vld [vmem:[%s3048 + $0xc0] sm:$0xf]
        %v7870 = vld [vmem:[%s3048 + $0xc4] sm:$0xf]
        %v7871 = vld [vmem:[%s3048 + $0xc8] sm:$0xf]
        %v7872 = vld [vmem:[%s3048 + $0xcc] sm:$0xf]
        %v7873 = vld [vmem:[%s3048 + $0xd0] sm:$0xf]
        %v7874 = vld [vmem:[%s3048 + $0xd4] sm:$0xf]
        %v7875 = vld [vmem:[%s3048 + $0xd8] sm:$0xf]
        %v7876 = vld [vmem:[%s3048 + $0xdc] sm:$0xf]
        %v7877 = vld [vmem:[%s3048 + $0xe0] sm:$0xf]
        %v7878 = vld [vmem:[%s3048 + $0xe4] sm:$0xf]
        %v7879 = vld [vmem:[%s3048 + $0xe8] sm:$0xf]
        %v7880 = vld [vmem:[%s3048 + $0xec] sm:$0xf]
        %v7881 = vld [vmem:[%s3048 + $0xf0] sm:$0xf]
        %v7882 = vld [vmem:[%s3048 + $0xf4] sm:$0xf]
        %v7883 = vld [vmem:[%s3048 + $0xf8] sm:$0xf]
        %v7884 = vld [vmem:[%s3048 + $0xfc] sm:$0xf]
        %v7885 = vld [vmem:[%s3048 + $0x100] sm:$0xf]
        %v7886 = vld [vmem:[%s3048 + $0x104] sm:$0xf]
        %v7887 = vld [vmem:[%s3048 + $0x108] sm:$0xf]
        %v7888 = vld [vmem:[%s3048 + $0x10c] sm:$0xf]
        %v7889 = vld [vmem:[%s3048 + $0x110] sm:$0xf]
        %v7890 = vld [vmem:[%s3048 + $0x114] sm:$0xf]
        %v7891 = vld [vmem:[%s3048 + $0x118] sm:$0xf]
        %v7892 = vld [vmem:[%s3048 + $0x11c] sm:$0xf]
        %v7893 = vld [vmem:[%s3048 + $0x120] sm:$0xf]
        %v7894 = vld [vmem:[%s3048 + $0x124] sm:$0xf]
        %v7895 = vld [vmem:[%s3048 + $0x128] sm:$0xf]
        %v7896 = vld [vmem:[%s3048 + $0x12c] sm:$0xf]
        %v7897 = vld [vmem:[%s3048 + $0x130] sm:$0xf]
        %v7898 = vld [vmem:[%s3048 + $0x134] sm:$0xf]
        %v7899 = vld [vmem:[%s3048 + $0x138] sm:$0xf]
        %v7900 = vld [vmem:[%s3048 + $0x13c] sm:$0xf]
        %v7904 = vunpack.c.l.b16 %v7818
        %v7905 = vunpack.c.h.b16 %v7818
        %v7906 = vunpack.c.l.b16 %v7819
        %v7907 = vunpack.c.h.b16 %v7819
        %v7908 = vunpack.c.l.b16 %v7820
        %v7909 = vpack.c.b16 %v7904, %v7904
        %v7910 = vpack.c.b16 %v7905, %v7905
        %v7911 = vpack.c.b16 %v7906, %v7906
        %v7912 = vpack.c.b16 %v7907, %v7907
        %v7913 = vpack.c.b16 %v7908, %v7908
        %v7999 = vunpack.c.l.b16 %v7821
        %v8000 = vunpack.c.l.b16 %v7822
        %v8001 = vunpack.c.l.b16 %v7823
        %v8002 = vunpack.c.l.b16 %v7824
        %v8003 = vunpack.c.l.b16 %v7825
        %v8004 = vunpack.c.l.b16 %v7826
        %v8005 = vunpack.c.l.b16 %v7827
        %v8006 = vunpack.c.l.b16 %v7828
        %v8007 = vunpack.c.l.b16 %v7829
        %v8008 = vunpack.c.l.b16 %v7830
        %v8009 = vunpack.c.l.b16 %v7831
        %v8010 = vunpack.c.l.b16 %v7832
        %v8011 = vunpack.c.l.b16 %v7833
        %v8012 = vunpack.c.l.b16 %v7834
        %v8013 = vunpack.c.l.b16 %v7835
        %v8014 = vunpack.c.l.b16 %v7836
        %v8015 = vunpack.c.l.b16 %v7837
        %v8016 = vunpack.c.l.b16 %v7838
        %v8017 = vunpack.c.l.b16 %v7839
        %v8018 = vunpack.c.l.b16 %v7840
        %v8019 = vunpack.c.l.b16 %v7841
        %v8020 = vunpack.c.l.b16 %v7842
        %v8021 = vunpack.c.l.b16 %v7843
        %v8022 = vunpack.c.l.b16 %v7844
        %v8023 = vunpack.c.l.b16 %v7845
        %v8024 = vunpack.c.l.b16 %v7846
        %v8025 = vunpack.c.l.b16 %v7847
        %v8026 = vunpack.c.l.b16 %v7848
        %v8027 = vunpack.c.l.b16 %v7849
        %v8028 = vunpack.c.l.b16 %v7850
        %v8029 = vunpack.c.l.b16 %v7851
        %v8030 = vunpack.c.l.b16 %v7852
        %v8031 = vunpack.c.l.b16 %v7853
        %v8032 = vunpack.c.l.b16 %v7854
        %v8033 = vunpack.c.l.b16 %v7855
        %v8034 = vunpack.c.l.b16 %v7856
        %v8035 = vunpack.c.l.b16 %v7857
        %v8036 = vunpack.c.l.b16 %v7858
        %v8037 = vunpack.c.l.b16 %v7859
        %v8038 = vunpack.c.l.b16 %v7860
        %v8039 = vunpack.c.l.b16 %v7861
        %v8040 = vunpack.c.l.b16 %v7862
        %v8041 = vunpack.c.l.b16 %v7863
        %v8042 = vunpack.c.l.b16 %v7864
        %v8043 = vunpack.c.l.b16 %v7865
        %v8044 = vunpack.c.l.b16 %v7866
        %v8045 = vunpack.c.l.b16 %v7867
        %v8046 = vunpack.c.l.b16 %v7868
        %v8047 = vunpack.c.l.b16 %v7869
        %v8048 = vunpack.c.l.b16 %v7870
        %v8049 = vunpack.c.l.b16 %v7871
        %v8050 = vunpack.c.l.b16 %v7872
        %v8051 = vunpack.c.l.b16 %v7873
        %v8052 = vunpack.c.l.b16 %v7874
        %v8053 = vunpack.c.l.b16 %v7875
        %v8054 = vunpack.c.l.b16 %v7876
        %v8055 = vunpack.c.l.b16 %v7877
        %v8056 = vunpack.c.l.b16 %v7878
        %v8057 = vunpack.c.l.b16 %v7879
        %v8058 = vunpack.c.l.b16 %v7880
        %v8059 = vunpack.c.l.b16 %v7881
        %v8060 = vunpack.c.l.b16 %v7882
        %v8061 = vunpack.c.l.b16 %v7883
        %v8062 = vunpack.c.l.b16 %v7884
        %v8063 = vunpack.c.l.b16 %v7885
        %v8064 = vunpack.c.l.b16 %v7886
        %v8065 = vunpack.c.l.b16 %v7887
        %v8066 = vunpack.c.l.b16 %v7888
        %v8067 = vunpack.c.l.b16 %v7889
        %v8068 = vunpack.c.l.b16 %v7890
        %v8069 = vunpack.c.l.b16 %v7891
        %v8070 = vunpack.c.l.b16 %v7892
        %v8071 = vunpack.c.l.b16 %v7893
        %v8072 = vunpack.c.l.b16 %v7894
        %v8073 = vunpack.c.l.b16 %v7895
        %v8074 = vunpack.c.l.b16 %v7896
        %v8075 = vunpack.c.l.b16 %v7897
        %v8076 = vunpack.c.l.b16 %v7898
        %v8077 = vunpack.c.l.b16 %v7899
        %v8078 = vunpack.c.l.b16 %v7900
        %v8079 = vpack.c.b16 %v8000, %v7999
        %v8080 = vpack.c.b16 %v8002, %v8001
        %v8081 = vpack.c.b16 %v8004, %v8003
        %v8082 = vpack.c.b16 %v8006, %v8005
        %v8083 = vpack.c.b16 %v8008, %v8007
        %v8084 = vpack.c.b16 %v8010, %v8009
        %v8085 = vpack.c.b16 %v8012, %v8011
        %v8086 = vpack.c.b16 %v8014, %v8013
        %v8087 = vpack.c.b16 %v8016, %v8015
        %v8088 = vpack.c.b16 %v8018, %v8017
        %v8089 = vpack.c.b16 %v8020, %v8019
        %v8090 = vpack.c.b16 %v8022, %v8021
        %v8091 = vpack.c.b16 %v8024, %v8023
        %v8092 = vpack.c.b16 %v8026, %v8025
        %v8093 = vpack.c.b16 %v8028, %v8027
        %v8094 = vpack.c.b16 %v8030, %v8029
        %v8095 = vpack.c.b16 %v8032, %v8031
        %v8096 = vpack.c.b16 %v8034, %v8033
        %v8097 = vpack.c.b16 %v8036, %v8035
        %v8098 = vpack.c.b16 %v8038, %v8037
        %v8099 = vpack.c.b16 %v8040, %v8039
        %v8100 = vpack.c.b16 %v8042, %v8041
        %v8101 = vpack.c.b16 %v8044, %v8043
        %v8102 = vpack.c.b16 %v8046, %v8045
        %v8103 = vpack.c.b16 %v8048, %v8047
        %v8104 = vpack.c.b16 %v8050, %v8049
        %v8105 = vpack.c.b16 %v8052, %v8051
        %v8106 = vpack.c.b16 %v8054, %v8053
        %v8107 = vpack.c.b16 %v8056, %v8055
        %v8108 = vpack.c.b16 %v8058, %v8057
        %v8109 = vpack.c.b16 %v8060, %v8059
        %v8110 = vpack.c.b16 %v8062, %v8061
        %v8111 = vpack.c.b16 %v8064, %v8063
        %v8112 = vpack.c.b16 %v8066, %v8065
        %v8113 = vpack.c.b16 %v8068, %v8067
        %v8114 = vpack.c.b16 %v8070, %v8069
        %v8115 = vpack.c.b16 %v8072, %v8071
        %v8116 = vpack.c.b16 %v8074, %v8073
        %v8117 = vpack.c.b16 %v8076, %v8075
        %v8118 = vpack.c.b16 %v8078, %v8077
        %8159 = vmatprep.subr.bf16.mxu0 0
        %8160 = vmatpush1.bf16.msra.mxu0 %v8086
        %8161 = vmatprep.subr.bf16.mxu0 0
        %8162 = vmatpush1.bf16.msra.mxu0 %v8085
        %8163 = vmatprep.subr.bf16.mxu0 0
        %8164 = vmatpush1.bf16.msra.mxu0 %v8084
        %8165 = vmatprep.subr.bf16.mxu0 0
        %8166 = vmatpush1.bf16.msra.mxu0 %v8083
        %8167 = vmatprep.subr.bf16.mxu0 0
        %8168 = vmatpush1.bf16.msra.mxu0 %v8082
        %8169 = vmatprep.subr.bf16.mxu0 0
        %8170 = vmatpush1.bf16.msra.mxu0 %v8081
        %8171 = vmatprep.subr.bf16.mxu0 0
        %8172 = vmatpush1.bf16.msra.mxu0 %v8080
        %8173 = vmatprep.subr.bf16.mxu0 0
        %8174 = vmatpush1.bf16.msra.mxu0 %v8079
        %8175 = vmatprep.subr.bf16.mxu0 0
        %8176 = vmatpush2.bf16.msra.mxu0 %v8094
        %8177 = vmatprep.subr.bf16.mxu0 0
        %8178 = vmatpush2.bf16.msra.mxu0 %v8093
        %8179 = vmatprep.subr.bf16.mxu0 0
        %8180 = vmatpush2.bf16.msra.mxu0 %v8092
        %8181 = vmatprep.subr.bf16.mxu0 0
        %8182 = vmatpush2.bf16.msra.mxu0 %v8091
        %8183 = vmatprep.subr.bf16.mxu0 0
        %8184 = vmatpush2.bf16.msra.mxu0 %v8090
        %8185 = vmatprep.subr.bf16.mxu0 0
        %8186 = vmatpush2.bf16.msra.mxu0 %v8089
        %8187 = vmatprep.subr.bf16.mxu0 0
        %8188 = vmatpush2.bf16.msra.mxu0 %v8088
        %8189 = vmatprep.subr.bf16.mxu0 0
        %8190 = vmatpush2.bf16.msra.mxu0 %v8087
        %8191 = vmatprep.mubr.bf16.mxu0 %v7910
        %8192 = vmatmul.mubr.bf16.gmra.mxu0 %v7909
        %v8193 = vpop.f32.mrf.mxu0
        %v8194 = vadd.f32 0.0, %v8193
        %v8195 = vpop.f32.mrf.mxu0
        %v8196 = vpop.f32.mrf.mxu0
        %v8197 = vpop.f32.mrf.mxu0
        %8198 = vdwg.mxu0
        %8199 = vmatprep.subr.bf16.mxu0 0
        %8200 = vmatpush1.bf16.msra.mxu0 %v8102
        %8201 = vmatprep.subr.bf16.mxu0 0
        %8202 = vmatpush1.bf16.msra.mxu0 %v8101
        %8203 = vmatprep.subr.bf16.mxu0 0
        %8204 = vmatpush1.bf16.msra.mxu0 %v8100
        %8205 = vmatprep.subr.bf16.mxu0 0
        %8206 = vmatpush1.bf16.msra.mxu0 %v8099
        %8207 = vmatprep.subr.bf16.mxu0 0
        %8208 = vmatpush1.bf16.msra.mxu0 %v8098
        %8209 = vmatprep.subr.bf16.mxu0 0
        %8210 = vmatpush1.bf16.msra.mxu0 %v8097
        %8211 = vmatprep.subr.bf16.mxu0 0
        %8212 = vmatpush1.bf16.msra.mxu0 %v8096
        %8213 = vmatprep.subr.bf16.mxu0 0
        %8214 = vmatpush1.bf16.msra.mxu0 %v8095
        %8215 = vmatprep.subr.bf16.mxu0 0
        %8216 = vmatpush2.bf16.msra.mxu0 %v8110
        %8217 = vmatprep.subr.bf16.mxu0 0
        %8218 = vmatpush2.bf16.msra.mxu0 %v8109
        %8219 = vmatprep.subr.bf16.mxu0 0
        %8220 = vmatpush2.bf16.msra.mxu0 %v8108
        %8221 = vmatprep.subr.bf16.mxu0 0
        %8222 = vmatpush2.bf16.msra.mxu0 %v8107
        %8223 = vmatprep.subr.bf16.mxu0 0
        %8224 = vmatpush2.bf16.msra.mxu0 %v8106
        %8225 = vmatprep.subr.bf16.mxu0 0
        %8226 = vmatpush2.bf16.msra.mxu0 %v8105
        %8227 = vmatprep.subr.bf16.mxu0 0
        %8228 = vmatpush2.bf16.msra.mxu0 %v8104
        %8229 = vmatprep.subr.bf16.mxu0 0
        %8230 = vmatpush2.bf16.msra.mxu0 %v8103
        %8231 = vmatprep.mubr.bf16.mxu0 %v7912
        %8232 = vmatmul.mubr.bf16.gmra.mxu0 %v7911
        %v8233 = vpop.f32.mrf.mxu0
        %v8234 = vadd.f32 %v8194, %v8233
        %v8235 = vpop.f32.mrf.mxu0
        %v8236 = vpop.f32.mrf.mxu0
        %v8237 = vpop.f32.mrf.mxu0
        %8238 = vdwg.mxu0
        %8239 = vmatprep.subr.bf16.mxu0 0
        %8240 = vmatpush1.bf16.msra.mxu0 %v8118
        %8241 = vmatprep.subr.bf16.mxu0 0
        %8242 = vmatpush1.bf16.msra.mxu0 %v8117
        %8243 = vmatprep.subr.bf16.mxu0 0
        %8244 = vmatpush1.bf16.msra.mxu0 %v8116
        %8245 = vmatprep.subr.bf16.mxu0 0
        %8246 = vmatpush1.bf16.msra.mxu0 %v8115
        %8247 = vmatprep.subr.bf16.mxu0 0
        %8248 = vmatpush1.bf16.msra.mxu0 %v8114
        %8249 = vmatprep.subr.bf16.mxu0 0
        %8250 = vmatpush1.bf16.msra.mxu0 %v8113
        %8251 = vmatprep.subr.bf16.mxu0 0
        %8252 = vmatpush1.bf16.msra.mxu0 %v8112
        %8253 = vmatprep.subr.bf16.mxu0 0
        %8254 = vmatpush1.bf16.msra.mxu0 %v8111
        %8255 = vmatprep.subr.bf16.mxu0 0
        %8256 = vmatpush2.bf16.msra.mxu0 0
        %8257 = vmatprep.subr.bf16.mxu0 0
        %8258 = vmatpush2.bf16.msra.mxu0 0
        %8259 = vmatprep.subr.bf16.mxu0 0
        %8260 = vmatpush2.bf16.msra.mxu0 0
        %8261 = vmatprep.subr.bf16.mxu0 0
        %8262 = vmatpush2.bf16.msra.mxu0 0
        %8263 = vmatprep.subr.bf16.mxu0 0
        %8264 = vmatpush2.bf16.msra.mxu0 0
        %8265 = vmatprep.subr.bf16.mxu0 0
        %8266 = vmatpush2.bf16.msra.mxu0 0
        %8267 = vmatprep.subr.bf16.mxu0 0
        %8268 = vmatpush2.bf16.msra.mxu0 0
        %8269 = vmatprep.subr.bf16.mxu0 0
        %8270 = vmatpush2.bf16.msra.mxu0 0
        %8271 = vmatprep.mubr.bf16.mxu0 0
        %8272 = vmatmul.mubr.bf16.gmra.mxu0 %v7913
        %v8273 = vpop.f32.mrf.mxu0
        %v8274 = vadd.f32 %v8234, %v8273
        %v8275 = vpop.f32.mrf.mxu0
        %v8276 = vpop.f32.mrf.mxu0
        %v8277 = vpop.f32.mrf.mxu0
        %8278 = vdwg.mxu0
        %v8279 = vadd.f32 %v7813, %v8274
        %v8280 = vld [vmem:[#allocation2 + $0x18] sm:$0x77]
        %v8281 = vld [vmem:[#allocation2 + $0x20] sm:$0x77]
        %v8282 = vld [vmem:[#allocation2 + $0x28] sm:$0x7]
        %v8283 = vld [vmem:[%s3511] sm:$0xf]
        %v8284 = vld [vmem:[%s3511 + $0x4] sm:$0xf]
        %v8285 = vld [vmem:[%s3511 + $0x8] sm:$0xf]
        %v8286 = vld [vmem:[%s3511 + $0xc] sm:$0xf]
        %v8287 = vld [vmem:[%s3511 + $0x10] sm:$0xf]
        %v8288 = vld [vmem:[%s3511 + $0x14] sm:$0xf]
        %v8289 = vld [vmem:[%s3511 + $0x18] sm:$0xf]
        %v8290 = vld [vmem:[%s3511 + $0x1c] sm:$0xf]
        %v8291 = vld [vmem:[%s3511 + $0x20] sm:$0xf]
        %v8292 = vld [vmem:[%s3511 + $0x24] sm:$0xf]
        %v8293 = vld [vmem:[%s3511 + $0x28] sm:$0xf]
        %v8294 = vld [vmem:[%s3511 + $0x2c] sm:$0xf]
        %v8295 = vld [vmem:[%s3511 + $0x30] sm:$0xf]
        %v8296 = vld [vmem:[%s3511 + $0x34] sm:$0xf]
        %v8297 = vld [vmem:[%s3511 + $0x38] sm:$0xf]
        %v8298 = vld [vmem:[%s3511 + $0x3c] sm:$0xf]
        %v8299 = vld [vmem:[%s3511 + $0x40] sm:$0xf]
        %v8300 = vld [vmem:[%s3511 + $0x44] sm:$0xf]
        %v8301 = vld [vmem:[%s3511 + $0x48] sm:$0xf]
        %v8302 = vld [vmem:[%s3511 + $0x4c] sm:$0xf]
        %v8303 = vld [vmem:[%s3511 + $0x50] sm:$0xf]
        %v8304 = vld [vmem:[%s3511 + $0x54] sm:$0xf]
        %v8305 = vld [vmem:[%s3511 + $0x58] sm:$0xf]
        %v8306 = vld [vmem:[%s3511 + $0x5c] sm:$0xf]
        %v8307 = vld [vmem:[%s3511 + $0x60] sm:$0xf]
        %v8308 = vld [vmem:[%s3511 + $0x64] sm:$0xf]
        %v8309 = vld [vmem:[%s3511 + $0x68] sm:$0xf]
        %v8310 = vld [vmem:[%s3511 + $0x6c] sm:$0xf]
        %v8311 = vld [vmem:[%s3511 + $0x70] sm:$0xf]
        %v8312 = vld [vmem:[%s3511 + $0x74] sm:$0xf]
        %v8313 = vld [vmem:[%s3511 + $0x78] sm:$0xf]
        %v8314 = vld [vmem:[%s3511 + $0x7c] sm:$0xf]
        %v8315 = vld [vmem:[%s3511 + $0x80] sm:$0xf]
        %v8316 = vld [vmem:[%s3511 + $0x84] sm:$0xf]
        %v8317 = vld [vmem:[%s3511 + $0x88] sm:$0xf]
        %v8318 = vld [vmem:[%s3511 + $0x8c] sm:$0xf]
        %v8319 = vld [vmem:[%s3511 + $0x90] sm:$0xf]
        %v8320 = vld [vmem:[%s3511 + $0x94] sm:$0xf]
        %v8321 = vld [vmem:[%s3511 + $0x98] sm:$0xf]
        %v8322 = vld [vmem:[%s3511 + $0x9c] sm:$0xf]
        %v8323 = vld [vmem:[%s3511 + $0xa0] sm:$0xf]
        %v8324 = vld [vmem:[%s3511 + $0xa4] sm:$0xf]
        %v8325 = vld [vmem:[%s3511 + $0xa8] sm:$0xf]
        %v8326 = vld [vmem:[%s3511 + $0xac] sm:$0xf]
        %v8327 = vld [vmem:[%s3511 + $0xb0] sm:$0xf]
        %v8328 = vld [vmem:[%s3511 + $0xb4] sm:$0xf]
        %v8329 = vld [vmem:[%s3511 + $0xb8] sm:$0xf]
        %v8330 = vld [vmem:[%s3511 + $0xbc] sm:$0xf]
        %v8331 = vld [vmem:[%s3511 + $0xc0] sm:$0xf]
        %v8332 = vld [vmem:[%s3511 + $0xc4] sm:$0xf]
        %v8333 = vld [vmem:[%s3511 + $0xc8] sm:$0xf]
        %v8334 = vld [vmem:[%s3511 + $0xcc] sm:$0xf]
        %v8335 = vld [vmem:[%s3511 + $0xd0] sm:$0xf]
        %v8336 = vld [vmem:[%s3511 + $0xd4] sm:$0xf]
        %v8337 = vld [vmem:[%s3511 + $0xd8] sm:$0xf]
        %v8338 = vld [vmem:[%s3511 + $0xdc] sm:$0xf]
        %v8339 = vld [vmem:[%s3511 + $0xe0] sm:$0xf]
        %v8340 = vld [vmem:[%s3511 + $0xe4] sm:$0xf]
        %v8341 = vld [vmem:[%s3511 + $0xe8] sm:$0xf]
        %v8342 = vld [vmem:[%s3511 + $0xec] sm:$0xf]
        %v8343 = vld [vmem:[%s3511 + $0xf0] sm:$0xf]
        %v8344 = vld [vmem:[%s3511 + $0xf4] sm:$0xf]
        %v8345 = vld [vmem:[%s3511 + $0xf8] sm:$0xf]
        %v8346 = vld [vmem:[%s3511 + $0xfc] sm:$0xf]
        %v8347 = vld [vmem:[%s3511 + $0x100] sm:$0xf]
        %v8348 = vld [vmem:[%s3511 + $0x104] sm:$0xf]
        %v8349 = vld [vmem:[%s3511 + $0x108] sm:$0xf]
        %v8350 = vld [vmem:[%s3511 + $0x10c] sm:$0xf]
        %v8351 = vld [vmem:[%s3511 + $0x110] sm:$0xf]
        %v8352 = vld [vmem:[%s3511 + $0x114] sm:$0xf]
        %v8353 = vld [vmem:[%s3511 + $0x118] sm:$0xf]
        %v8354 = vld [vmem:[%s3511 + $0x11c] sm:$0xf]
        %v8355 = vld [vmem:[%s3511 + $0x120] sm:$0xf]
        %v8356 = vld [vmem:[%s3511 + $0x124] sm:$0xf]
        %v8357 = vld [vmem:[%s3511 + $0x128] sm:$0xf]
        %v8358 = vld [vmem:[%s3511 + $0x12c] sm:$0xf]
        %v8359 = vld [vmem:[%s3511 + $0x130] sm:$0xf]
        %v8360 = vld [vmem:[%s3511 + $0x134] sm:$0xf]
        %v8361 = vld [vmem:[%s3511 + $0x138] sm:$0xf]
        %v8362 = vld [vmem:[%s3511 + $0x13c] sm:$0xf]
        %v8366 = vunpack.c.l.b16 %v8280
        %v8367 = vunpack.c.h.b16 %v8280
        %v8368 = vunpack.c.l.b16 %v8281
        %v8369 = vunpack.c.h.b16 %v8281
        %v8370 = vunpack.c.l.b16 %v8282
        %v8371 = vpack.c.b16 %v8366, %v8366
        %v8372 = vpack.c.b16 %v8367, %v8367
        %v8373 = vpack.c.b16 %v8368, %v8368
        %v8374 = vpack.c.b16 %v8369, %v8369
        %v8375 = vpack.c.b16 %v8370, %v8370
        %v8377 = vshrl.u32 %v8371, 16
        %v8379 = vshll.u32 %v8371, 16
        %v8381 = vrot.slane %v8379, 1
        %v8382 = vor.u32 %v8377, %v8381
        %v8384 = vshrl.u32 %v8372, 16
        %v8386 = vshll.u32 %v8372, 16
        %v8388 = vrot.slane %v8386, 1
        %v8389 = vor.u32 %v8384, %v8388
        %v8391 = vshrl.u32 %v8373, 16
        %v8393 = vshll.u32 %v8373, 16
        %v8395 = vrot.slane %v8393, 1
        %v8396 = vor.u32 %v8391, %v8395
        %v8398 = vshrl.u32 %v8374, 16
        %v8400 = vshll.u32 %v8374, 16
        %v8402 = vrot.slane %v8400, 1
        %v8403 = vor.u32 %v8398, %v8402
        %v8405 = vshrl.u32 %v8375, 16
        %v8407 = vshll.u32 %v8375, 16
        %v8409 = vrot.slane %v8407, 1
        %v8410 = vor.u32 %v8405, %v8409
        %v8496 = vunpack.c.l.b16 %v8283
        %v8497 = vunpack.c.l.b16 %v8284
        %v8498 = vunpack.c.l.b16 %v8285
        %v8499 = vunpack.c.l.b16 %v8286
        %v8500 = vunpack.c.l.b16 %v8287
        %v8501 = vunpack.c.l.b16 %v8288
        %v8502 = vunpack.c.l.b16 %v8289
        %v8503 = vunpack.c.l.b16 %v8290
        %v8504 = vunpack.c.l.b16 %v8291
        %v8505 = vunpack.c.l.b16 %v8292
        %v8506 = vunpack.c.l.b16 %v8293
        %v8507 = vunpack.c.l.b16 %v8294
        %v8508 = vunpack.c.l.b16 %v8295
        %v8509 = vunpack.c.l.b16 %v8296
        %v8510 = vunpack.c.l.b16 %v8297
        %v8511 = vunpack.c.l.b16 %v8298
        %v8512 = vunpack.c.l.b16 %v8299
        %v8513 = vunpack.c.l.b16 %v8300
        %v8514 = vunpack.c.l.b16 %v8301
        %v8515 = vunpack.c.l.b16 %v8302
        %v8516 = vunpack.c.l.b16 %v8303
        %v8517 = vunpack.c.l.b16 %v8304
        %v8518 = vunpack.c.l.b16 %v8305
        %v8519 = vunpack.c.l.b16 %v8306
        %v8520 = vunpack.c.l.b16 %v8307
        %v8521 = vunpack.c.l.b16 %v8308
        %v8522 = vunpack.c.l.b16 %v8309
        %v8523 = vunpack.c.l.b16 %v8310
        %v8524 = vunpack.c.l.b16 %v8311
        %v8525 = vunpack.c.l.b16 %v8312
        %v8526 = vunpack.c.l.b16 %v8313
        %v8527 = vunpack.c.l.b16 %v8314
        %v8528 = vunpack.c.l.b16 %v8315
        %v8529 = vunpack.c.l.b16 %v8316
        %v8530 = vunpack.c.l.b16 %v8317
        %v8531 = vunpack.c.l.b16 %v8318
        %v8532 = vunpack.c.l.b16 %v8319
        %v8533 = vunpack.c.l.b16 %v8320
        %v8534 = vunpack.c.l.b16 %v8321
        %v8535 = vunpack.c.l.b16 %v8322
        %v8536 = vunpack.c.l.b16 %v8323
        %v8537 = vunpack.c.l.b16 %v8324
        %v8538 = vunpack.c.l.b16 %v8325
        %v8539 = vunpack.c.l.b16 %v8326
        %v8540 = vunpack.c.l.b16 %v8327
        %v8541 = vunpack.c.l.b16 %v8328
        %v8542 = vunpack.c.l.b16 %v8329
        %v8543 = vunpack.c.l.b16 %v8330
        %v8544 = vunpack.c.l.b16 %v8331
        %v8545 = vunpack.c.l.b16 %v8332
        %v8546 = vunpack.c.l.b16 %v8333
        %v8547 = vunpack.c.l.b16 %v8334
        %v8548 = vunpack.c.l.b16 %v8335
        %v8549 = vunpack.c.l.b16 %v8336
        %v8550 = vunpack.c.l.b16 %v8337
        %v8551 = vunpack.c.l.b16 %v8338
        %v8552 = vunpack.c.l.b16 %v8339
        %v8553 = vunpack.c.l.b16 %v8340
        %v8554 = vunpack.c.l.b16 %v8341
        %v8555 = vunpack.c.l.b16 %v8342
        %v8556 = vunpack.c.l.b16 %v8343
        %v8557 = vunpack.c.l.b16 %v8344
        %v8558 = vunpack.c.l.b16 %v8345
        %v8559 = vunpack.c.l.b16 %v8346
        %v8560 = vunpack.c.l.b16 %v8347
        %v8561 = vunpack.c.l.b16 %v8348
        %v8562 = vunpack.c.l.b16 %v8349
        %v8563 = vunpack.c.l.b16 %v8350
        %v8564 = vunpack.c.l.b16 %v8351
        %v8565 = vunpack.c.l.b16 %v8352
        %v8566 = vunpack.c.l.b16 %v8353
        %v8567 = vunpack.c.l.b16 %v8354
        %v8568 = vunpack.c.l.b16 %v8355
        %v8569 = vunpack.c.l.b16 %v8356
        %v8570 = vunpack.c.l.b16 %v8357
        %v8571 = vunpack.c.l.b16 %v8358
        %v8572 = vunpack.c.l.b16 %v8359
        %v8573 = vunpack.c.l.b16 %v8360
        %v8574 = vunpack.c.l.b16 %v8361
        %v8575 = vunpack.c.l.b16 %v8362
        %v8576 = vpack.c.b16 %v8497, %v8496
        %v8577 = vpack.c.b16 %v8499, %v8498
        %v8578 = vpack.c.b16 %v8501, %v8500
        %v8579 = vpack.c.b16 %v8503, %v8502
        %v8580 = vpack.c.b16 %v8505, %v8504
        %v8581 = vpack.c.b16 %v8507, %v8506
        %v8582 = vpack.c.b16 %v8509, %v8508
        %v8583 = vpack.c.b16 %v8511, %v8510
        %v8584 = vpack.c.b16 %v8513, %v8512
        %v8585 = vpack.c.b16 %v8515, %v8514
        %v8586 = vpack.c.b16 %v8517, %v8516
        %v8587 = vpack.c.b16 %v8519, %v8518
        %v8588 = vpack.c.b16 %v8521, %v8520
        %v8589 = vpack.c.b16 %v8523, %v8522
        %v8590 = vpack.c.b16 %v8525, %v8524
        %v8591 = vpack.c.b16 %v8527, %v8526
        %v8592 = vpack.c.b16 %v8529, %v8528
        %v8593 = vpack.c.b16 %v8531, %v8530
        %v8594 = vpack.c.b16 %v8533, %v8532
        %v8595 = vpack.c.b16 %v8535, %v8534
        %v8596 = vpack.c.b16 %v8537, %v8536
        %v8597 = vpack.c.b16 %v8539, %v8538
        %v8598 = vpack.c.b16 %v8541, %v8540
        %v8599 = vpack.c.b16 %v8543, %v8542
        %v8600 = vpack.c.b16 %v8545, %v8544
        %v8601 = vpack.c.b16 %v8547, %v8546
        %v8602 = vpack.c.b16 %v8549, %v8548
        %v8603 = vpack.c.b16 %v8551, %v8550
        %v8604 = vpack.c.b16 %v8553, %v8552
        %v8605 = vpack.c.b16 %v8555, %v8554
        %v8606 = vpack.c.b16 %v8557, %v8556
        %v8607 = vpack.c.b16 %v8559, %v8558
        %v8608 = vpack.c.b16 %v8561, %v8560
        %v8609 = vpack.c.b16 %v8563, %v8562
        %v8610 = vpack.c.b16 %v8565, %v8564
        %v8611 = vpack.c.b16 %v8567, %v8566
        %v8612 = vpack.c.b16 %v8569, %v8568
        %v8613 = vpack.c.b16 %v8571, %v8570
        %v8614 = vpack.c.b16 %v8573, %v8572
        %v8615 = vpack.c.b16 %v8575, %v8574
        %8656 = vmatprep.subr.bf16.mxu0 0
        %8657 = vmatpush1.bf16.msra.mxu0 %v8583
        %8658 = vmatprep.subr.bf16.mxu0 0
        %8659 = vmatpush1.bf16.msra.mxu0 %v8582
        %8660 = vmatprep.subr.bf16.mxu0 0
        %8661 = vmatpush1.bf16.msra.mxu0 %v8581
        %8662 = vmatprep.subr.bf16.mxu0 0
        %8663 = vmatpush1.bf16.msra.mxu0 %v8580
        %8664 = vmatprep.subr.bf16.mxu0 0
        %8665 = vmatpush1.bf16.msra.mxu0 %v8579
        %8666 = vmatprep.subr.bf16.mxu0 0
        %8667 = vmatpush1.bf16.msra.mxu0 %v8578
        %8668 = vmatprep.subr.bf16.mxu0 0
        %8669 = vmatpush1.bf16.msra.mxu0 %v8577
        %8670 = vmatprep.subr.bf16.mxu0 0
        %8671 = vmatpush1.bf16.msra.mxu0 %v8576
        %8672 = vmatprep.subr.bf16.mxu0 0
        %8673 = vmatpush2.bf16.msra.mxu0 %v8591
        %8674 = vmatprep.subr.bf16.mxu0 0
        %8675 = vmatpush2.bf16.msra.mxu0 %v8590
        %8676 = vmatprep.subr.bf16.mxu0 0
        %8677 = vmatpush2.bf16.msra.mxu0 %v8589
        %8678 = vmatprep.subr.bf16.mxu0 0
        %8679 = vmatpush2.bf16.msra.mxu0 %v8588
        %8680 = vmatprep.subr.bf16.mxu0 0
        %8681 = vmatpush2.bf16.msra.mxu0 %v8587
        %8682 = vmatprep.subr.bf16.mxu0 0
        %8683 = vmatpush2.bf16.msra.mxu0 %v8586
        %8684 = vmatprep.subr.bf16.mxu0 0
        %8685 = vmatpush2.bf16.msra.mxu0 %v8585
        %8686 = vmatprep.subr.bf16.mxu0 0
        %8687 = vmatpush2.bf16.msra.mxu0 %v8584
        %8688 = vmatprep.mubr.bf16.mxu0 %v8389
        %8689 = vmatmul.mubr.bf16.gmra.mxu0 %v8382
        %v8690 = vpop.f32.mrf.mxu0
        %v8691 = vadd.f32 0.0, %v8690
        %v8692 = vpop.f32.mrf.mxu0
        %v8693 = vpop.f32.mrf.mxu0
        %v8694 = vpop.f32.mrf.mxu0
        %8695 = vdwg.mxu0
        %8696 = vmatprep.subr.bf16.mxu0 0
        %8697 = vmatpush1.bf16.msra.mxu0 %v8599
        %8698 = vmatprep.subr.bf16.mxu0 0
        %8699 = vmatpush1.bf16.msra.mxu0 %v8598
        %8700 = vmatprep.subr.bf16.mxu0 0
        %8701 = vmatpush1.bf16.msra.mxu0 %v8597
        %8702 = vmatprep.subr.bf16.mxu0 0
        %8703 = vmatpush1.bf16.msra.mxu0 %v8596
        %8704 = vmatprep.subr.bf16.mxu0 0
        %8705 = vmatpush1.bf16.msra.mxu0 %v8595
        %8706 = vmatprep.subr.bf16.mxu0 0
        %8707 = vmatpush1.bf16.msra.mxu0 %v8594
        %8708 = vmatprep.subr.bf16.mxu0 0
        %8709 = vmatpush1.bf16.msra.mxu0 %v8593
        %8710 = vmatprep.subr.bf16.mxu0 0
        %8711 = vmatpush1.bf16.msra.mxu0 %v8592
        %8712 = vmatprep.subr.bf16.mxu0 0
        %8713 = vmatpush2.bf16.msra.mxu0 %v8607
        %8714 = vmatprep.subr.bf16.mxu0 0
        %8715 = vmatpush2.bf16.msra.mxu0 %v8606
        %8716 = vmatprep.subr.bf16.mxu0 0
        %8717 = vmatpush2.bf16.msra.mxu0 %v8605
        %8718 = vmatprep.subr.bf16.mxu0 0
        %8719 = vmatpush2.bf16.msra.mxu0 %v8604
        %8720 = vmatprep.subr.bf16.mxu0 0
        %8721 = vmatpush2.bf16.msra.mxu0 %v8603
        %8722 = vmatprep.subr.bf16.mxu0 0
        %8723 = vmatpush2.bf16.msra.mxu0 %v8602
        %8724 = vmatprep.subr.bf16.mxu0 0
        %8725 = vmatpush2.bf16.msra.mxu0 %v8601
        %8726 = vmatprep.subr.bf16.mxu0 0
        %8727 = vmatpush2.bf16.msra.mxu0 %v8600
        %8728 = vmatprep.mubr.bf16.mxu0 %v8403
        %8729 = vmatmul.mubr.bf16.gmra.mxu0 %v8396
        %v8730 = vpop.f32.mrf.mxu0
        %v8731 = vadd.f32 %v8691, %v8730
        %v8732 = vpop.f32.mrf.mxu0
        %v8733 = vpop.f32.mrf.mxu0
        %v8734 = vpop.f32.mrf.mxu0
        %8735 = vdwg.mxu0
        %8736 = vmatprep.subr.bf16.mxu0 0
        %8737 = vmatpush1.bf16.msra.mxu0 %v8615
        %8738 = vmatprep.subr.bf16.mxu0 0
        %8739 = vmatpush1.bf16.msra.mxu0 %v8614
        %8740 = vmatprep.subr.bf16.mxu0 0
        %8741 = vmatpush1.bf16.msra.mxu0 %v8613
        %8742 = vmatprep.subr.bf16.mxu0 0
        %8743 = vmatpush1.bf16.msra.mxu0 %v8612
        %8744 = vmatprep.subr.bf16.mxu0 0
        %8745 = vmatpush1.bf16.msra.mxu0 %v8611
        %8746 = vmatprep.subr.bf16.mxu0 0
        %8747 = vmatpush1.bf16.msra.mxu0 %v8610
        %8748 = vmatprep.subr.bf16.mxu0 0
        %8749 = vmatpush1.bf16.msra.mxu0 %v8609
        %8750 = vmatprep.subr.bf16.mxu0 0
        %8751 = vmatpush1.bf16.msra.mxu0 %v8608
        %8752 = vmatprep.subr.bf16.mxu0 0
        %8753 = vmatpush2.bf16.msra.mxu0 0
        %8754 = vmatprep.subr.bf16.mxu0 0
        %8755 = vmatpush2.bf16.msra.mxu0 0
        %8756 = vmatprep.subr.bf16.mxu0 0
        %8757 = vmatpush2.bf16.msra.mxu0 0
        %8758 = vmatprep.subr.bf16.mxu0 0
        %8759 = vmatpush2.bf16.msra.mxu0 0
        %8760 = vmatprep.subr.bf16.mxu0 0
        %8761 = vmatpush2.bf16.msra.mxu0 0
        %8762 = vmatprep.subr.bf16.mxu0 0
        %8763 = vmatpush2.bf16.msra.mxu0 0
        %8764 = vmatprep.subr.bf16.mxu0 0
        %8765 = vmatpush2.bf16.msra.mxu0 0
        %8766 = vmatprep.subr.bf16.mxu0 0
        %8767 = vmatpush2.bf16.msra.mxu0 0
        %8768 = vmatprep.mubr.bf16.mxu0 0
        %8769 = vmatmul.mubr.bf16.gmra.mxu0 %v8410
        %v8770 = vpop.f32.mrf.mxu0
        %v8771 = vadd.f32 %v8731, %v8770
        %v8772 = vpop.f32.mrf.mxu0
        %v8773 = vpop.f32.mrf.mxu0
        %v8774 = vpop.f32.mrf.mxu0
        %8775 = vdwg.mxu0
        %v8776 = vadd.f32 %v8279, %v8771
        %v8777 = vld [vmem:[%s1091 + $0x18] sm:$0x77]
        %v8778 = vld [vmem:[%s1091 + $0x20] sm:$0x77]
        %v8779 = vld [vmem:[%s1091 + $0x28] sm:$0x7]
        %v8780 = vld [vmem:[%s4009] sm:$0xf]
        %v8781 = vld [vmem:[%s4009 + $0x4] sm:$0xf]
        %v8782 = vld [vmem:[%s4009 + $0x8] sm:$0xf]
        %v8783 = vld [vmem:[%s4009 + $0xc] sm:$0xf]
        %v8784 = vld [vmem:[%s4009 + $0x10] sm:$0xf]
        %v8785 = vld [vmem:[%s4009 + $0x14] sm:$0xf]
        %v8786 = vld [vmem:[%s4009 + $0x18] sm:$0xf]
        %v8787 = vld [vmem:[%s4009 + $0x1c] sm:$0xf]
        %v8788 = vld [vmem:[%s4009 + $0x20] sm:$0xf]
        %v8789 = vld [vmem:[%s4009 + $0x24] sm:$0xf]
        %v8790 = vld [vmem:[%s4009 + $0x28] sm:$0xf]
        %v8791 = vld [vmem:[%s4009 + $0x2c] sm:$0xf]
        %v8792 = vld [vmem:[%s4009 + $0x30] sm:$0xf]
        %v8793 = vld [vmem:[%s4009 + $0x34] sm:$0xf]
        %v8794 = vld [vmem:[%s4009 + $0x38] sm:$0xf]
        %v8795 = vld [vmem:[%s4009 + $0x3c] sm:$0xf]
        %v8796 = vld [vmem:[%s4009 + $0x40] sm:$0xf]
        %v8797 = vld [vmem:[%s4009 + $0x44] sm:$0xf]
        %v8798 = vld [vmem:[%s4009 + $0x48] sm:$0xf]
        %v8799 = vld [vmem:[%s4009 + $0x4c] sm:$0xf]
        %v8800 = vld [vmem:[%s4009 + $0x50] sm:$0xf]
        %v8801 = vld [vmem:[%s4009 + $0x54] sm:$0xf]
        %v8802 = vld [vmem:[%s4009 + $0x58] sm:$0xf]
        %v8803 = vld [vmem:[%s4009 + $0x5c] sm:$0xf]
        %v8804 = vld [vmem:[%s4009 + $0x60] sm:$0xf]
        %v8805 = vld [vmem:[%s4009 + $0x64] sm:$0xf]
        %v8806 = vld [vmem:[%s4009 + $0x68] sm:$0xf]
        %v8807 = vld [vmem:[%s4009 + $0x6c] sm:$0xf]
        %v8808 = vld [vmem:[%s4009 + $0x70] sm:$0xf]
        %v8809 = vld [vmem:[%s4009 + $0x74] sm:$0xf]
        %v8810 = vld [vmem:[%s4009 + $0x78] sm:$0xf]
        %v8811 = vld [vmem:[%s4009 + $0x7c] sm:$0xf]
        %v8812 = vld [vmem:[%s4009 + $0x80] sm:$0xf]
        %v8813 = vld [vmem:[%s4009 + $0x84] sm:$0xf]
        %v8814 = vld [vmem:[%s4009 + $0x88] sm:$0xf]
        %v8815 = vld [vmem:[%s4009 + $0x8c] sm:$0xf]
        %v8816 = vld [vmem:[%s4009 + $0x90] sm:$0xf]
        %v8817 = vld [vmem:[%s4009 + $0x94] sm:$0xf]
        %v8818 = vld [vmem:[%s4009 + $0x98] sm:$0xf]
        %v8819 = vld [vmem:[%s4009 + $0x9c] sm:$0xf]
        %v8820 = vld [vmem:[%s4009 + $0xa0] sm:$0xf]
        %v8821 = vld [vmem:[%s4009 + $0xa4] sm:$0xf]
        %v8822 = vld [vmem:[%s4009 + $0xa8] sm:$0xf]
        %v8823 = vld [vmem:[%s4009 + $0xac] sm:$0xf]
        %v8824 = vld [vmem:[%s4009 + $0xb0] sm:$0xf]
        %v8825 = vld [vmem:[%s4009 + $0xb4] sm:$0xf]
        %v8826 = vld [vmem:[%s4009 + $0xb8] sm:$0xf]
        %v8827 = vld [vmem:[%s4009 + $0xbc] sm:$0xf]
        %v8828 = vld [vmem:[%s4009 + $0xc0] sm:$0xf]
        %v8829 = vld [vmem:[%s4009 + $0xc4] sm:$0xf]
        %v8830 = vld [vmem:[%s4009 + $0xc8] sm:$0xf]
        %v8831 = vld [vmem:[%s4009 + $0xcc] sm:$0xf]
        %v8832 = vld [vmem:[%s4009 + $0xd0] sm:$0xf]
        %v8833 = vld [vmem:[%s4009 + $0xd4] sm:$0xf]
        %v8834 = vld [vmem:[%s4009 + $0xd8] sm:$0xf]
        %v8835 = vld [vmem:[%s4009 + $0xdc] sm:$0xf]
        %v8836 = vld [vmem:[%s4009 + $0xe0] sm:$0xf]
        %v8837 = vld [vmem:[%s4009 + $0xe4] sm:$0xf]
        %v8838 = vld [vmem:[%s4009 + $0xe8] sm:$0xf]
        %v8839 = vld [vmem:[%s4009 + $0xec] sm:$0xf]
        %v8840 = vld [vmem:[%s4009 + $0xf0] sm:$0xf]
        %v8841 = vld [vmem:[%s4009 + $0xf4] sm:$0xf]
        %v8842 = vld [vmem:[%s4009 + $0xf8] sm:$0xf]
        %v8843 = vld [vmem:[%s4009 + $0xfc] sm:$0xf]
        %v8844 = vld [vmem:[%s4009 + $0x100] sm:$0xf]
        %v8845 = vld [vmem:[%s4009 + $0x104] sm:$0xf]
        %v8846 = vld [vmem:[%s4009 + $0x108] sm:$0xf]
        %v8847 = vld [vmem:[%s4009 + $0x10c] sm:$0xf]
        %v8848 = vld [vmem:[%s4009 + $0x110] sm:$0xf]
        %v8849 = vld [vmem:[%s4009 + $0x114] sm:$0xf]
        %v8850 = vld [vmem:[%s4009 + $0x118] sm:$0xf]
        %v8851 = vld [vmem:[%s4009 + $0x11c] sm:$0xf]
        %v8852 = vld [vmem:[%s4009 + $0x120] sm:$0xf]
        %v8853 = vld [vmem:[%s4009 + $0x124] sm:$0xf]
        %v8854 = vld [vmem:[%s4009 + $0x128] sm:$0xf]
        %v8855 = vld [vmem:[%s4009 + $0x12c] sm:$0xf]
        %v8856 = vld [vmem:[%s4009 + $0x130] sm:$0xf]
        %v8857 = vld [vmem:[%s4009 + $0x134] sm:$0xf]
        %v8858 = vld [vmem:[%s4009 + $0x138] sm:$0xf]
        %v8859 = vld [vmem:[%s4009 + $0x13c] sm:$0xf]
        %v8863 = vunpack.c.l.b16 %v8777
        %v8864 = vunpack.c.h.b16 %v8777
        %v8865 = vunpack.c.l.b16 %v8778
        %v8866 = vunpack.c.h.b16 %v8778
        %v8867 = vunpack.c.l.b16 %v8779
        %v8868 = vpack.c.b16 %v8863, %v8863
        %v8869 = vpack.c.b16 %v8864, %v8864
        %v8870 = vpack.c.b16 %v8865, %v8865
        %v8871 = vpack.c.b16 %v8866, %v8866
        %v8872 = vpack.c.b16 %v8867, %v8867
        %v8874 = vshrl.u32 %v8868, 16
        %v8876 = vshll.u32 %v8868, 16
        %v8878 = vrot.slane %v8876, 1
        %v8879 = vor.u32 %v8874, %v8878
        %v8881 = vshrl.u32 %v8869, 16
        %v8883 = vshll.u32 %v8869, 16
        %v8885 = vrot.slane %v8883, 1
        %v8886 = vor.u32 %v8881, %v8885
        %v8888 = vshrl.u32 %v8870, 16
        %v8890 = vshll.u32 %v8870, 16
        %v8892 = vrot.slane %v8890, 1
        %v8893 = vor.u32 %v8888, %v8892
        %v8895 = vshrl.u32 %v8871, 16
        %v8897 = vshll.u32 %v8871, 16
        %v8899 = vrot.slane %v8897, 1
        %v8900 = vor.u32 %v8895, %v8899
        %v8902 = vshrl.u32 %v8872, 16
        %v8904 = vshll.u32 %v8872, 16
        %v8906 = vrot.slane %v8904, 1
        %v8907 = vor.u32 %v8902, %v8906
        %v8993 = vunpack.c.l.b16 %v8780
        %v8994 = vunpack.c.l.b16 %v8781
        %v8995 = vunpack.c.l.b16 %v8782
        %v8996 = vunpack.c.l.b16 %v8783
        %v8997 = vunpack.c.l.b16 %v8784
        %v8998 = vunpack.c.l.b16 %v8785
        %v8999 = vunpack.c.l.b16 %v8786
        %v9000 = vunpack.c.l.b16 %v8787
        %v9001 = vunpack.c.l.b16 %v8788
        %v9002 = vunpack.c.l.b16 %v8789
        %v9003 = vunpack.c.l.b16 %v8790
        %v9004 = vunpack.c.l.b16 %v8791
        %v9005 = vunpack.c.l.b16 %v8792
        %v9006 = vunpack.c.l.b16 %v8793
        %v9007 = vunpack.c.l.b16 %v8794
        %v9008 = vunpack.c.l.b16 %v8795
        %v9009 = vunpack.c.l.b16 %v8796
        %v9010 = vunpack.c.l.b16 %v8797
        %v9011 = vunpack.c.l.b16 %v8798
        %v9012 = vunpack.c.l.b16 %v8799
        %v9013 = vunpack.c.l.b16 %v8800
        %v9014 = vunpack.c.l.b16 %v8801
        %v9015 = vunpack.c.l.b16 %v8802
        %v9016 = vunpack.c.l.b16 %v8803
        %v9017 = vunpack.c.l.b16 %v8804
        %v9018 = vunpack.c.l.b16 %v8805
        %v9019 = vunpack.c.l.b16 %v8806
        %v9020 = vunpack.c.l.b16 %v8807
        %v9021 = vunpack.c.l.b16 %v8808
        %v9022 = vunpack.c.l.b16 %v8809
        %v9023 = vunpack.c.l.b16 %v8810
        %v9024 = vunpack.c.l.b16 %v8811
        %v9025 = vunpack.c.l.b16 %v8812
        %v9026 = vunpack.c.l.b16 %v8813
        %v9027 = vunpack.c.l.b16 %v8814
        %v9028 = vunpack.c.l.b16 %v8815
        %v9029 = vunpack.c.l.b16 %v8816
        %v9030 = vunpack.c.l.b16 %v8817
        %v9031 = vunpack.c.l.b16 %v8818
        %v9032 = vunpack.c.l.b16 %v8819
        %v9033 = vunpack.c.l.b16 %v8820
        %v9034 = vunpack.c.l.b16 %v8821
        %v9035 = vunpack.c.l.b16 %v8822
        %v9036 = vunpack.c.l.b16 %v8823
        %v9037 = vunpack.c.l.b16 %v8824
        %v9038 = vunpack.c.l.b16 %v8825
        %v9039 = vunpack.c.l.b16 %v8826
        %v9040 = vunpack.c.l.b16 %v8827
        %v9041 = vunpack.c.l.b16 %v8828
        %v9042 = vunpack.c.l.b16 %v8829
        %v9043 = vunpack.c.l.b16 %v8830
        %v9044 = vunpack.c.l.b16 %v8831
        %v9045 = vunpack.c.l.b16 %v8832
        %v9046 = vunpack.c.l.b16 %v8833
        %v9047 = vunpack.c.l.b16 %v8834
        %v9048 = vunpack.c.l.b16 %v8835
        %v9049 = vunpack.c.l.b16 %v8836
        %v9050 = vunpack.c.l.b16 %v8837
        %v9051 = vunpack.c.l.b16 %v8838
        %v9052 = vunpack.c.l.b16 %v8839
        %v9053 = vunpack.c.l.b16 %v8840
        %v9054 = vunpack.c.l.b16 %v8841
        %v9055 = vunpack.c.l.b16 %v8842
        %v9056 = vunpack.c.l.b16 %v8843
        %v9057 = vunpack.c.l.b16 %v8844
        %v9058 = vunpack.c.l.b16 %v8845
        %v9059 = vunpack.c.l.b16 %v8846
        %v9060 = vunpack.c.l.b16 %v8847
        %v9061 = vunpack.c.l.b16 %v8848
        %v9062 = vunpack.c.l.b16 %v8849
        %v9063 = vunpack.c.l.b16 %v8850
        %v9064 = vunpack.c.l.b16 %v8851
        %v9065 = vunpack.c.l.b16 %v8852
        %v9066 = vunpack.c.l.b16 %v8853
        %v9067 = vunpack.c.l.b16 %v8854
        %v9068 = vunpack.c.l.b16 %v8855
        %v9069 = vunpack.c.l.b16 %v8856
        %v9070 = vunpack.c.l.b16 %v8857
        %v9071 = vunpack.c.l.b16 %v8858
        %v9072 = vunpack.c.l.b16 %v8859
        %v9073 = vpack.c.b16 %v8994, %v8993
        %v9074 = vpack.c.b16 %v8996, %v8995
        %v9075 = vpack.c.b16 %v8998, %v8997
        %v9076 = vpack.c.b16 %v9000, %v8999
        %v9077 = vpack.c.b16 %v9002, %v9001
        %v9078 = vpack.c.b16 %v9004, %v9003
        %v9079 = vpack.c.b16 %v9006, %v9005
        %v9080 = vpack.c.b16 %v9008, %v9007
        %v9081 = vpack.c.b16 %v9010, %v9009
        %v9082 = vpack.c.b16 %v9012, %v9011
        %v9083 = vpack.c.b16 %v9014, %v9013
        %v9084 = vpack.c.b16 %v9016, %v9015
        %v9085 = vpack.c.b16 %v9018, %v9017
        %v9086 = vpack.c.b16 %v9020, %v9019
        %v9087 = vpack.c.b16 %v9022, %v9021
        %v9088 = vpack.c.b16 %v9024, %v9023
        %v9089 = vpack.c.b16 %v9026, %v9025
        %v9090 = vpack.c.b16 %v9028, %v9027
        %v9091 = vpack.c.b16 %v9030, %v9029
        %v9092 = vpack.c.b16 %v9032, %v9031
        %v9093 = vpack.c.b16 %v9034, %v9033
        %v9094 = vpack.c.b16 %v9036, %v9035
        %v9095 = vpack.c.b16 %v9038, %v9037
        %v9096 = vpack.c.b16 %v9040, %v9039
        %v9097 = vpack.c.b16 %v9042, %v9041
        %v9098 = vpack.c.b16 %v9044, %v9043
        %v9099 = vpack.c.b16 %v9046, %v9045
        %v9100 = vpack.c.b16 %v9048, %v9047
        %v9101 = vpack.c.b16 %v9050, %v9049
        %v9102 = vpack.c.b16 %v9052, %v9051
        %v9103 = vpack.c.b16 %v9054, %v9053
        %v9104 = vpack.c.b16 %v9056, %v9055
        %v9105 = vpack.c.b16 %v9058, %v9057
        %v9106 = vpack.c.b16 %v9060, %v9059
        %v9107 = vpack.c.b16 %v9062, %v9061
        %v9108 = vpack.c.b16 %v9064, %v9063
        %v9109 = vpack.c.b16 %v9066, %v9065
        %v9110 = vpack.c.b16 %v9068, %v9067
        %v9111 = vpack.c.b16 %v9070, %v9069
        %v9112 = vpack.c.b16 %v9072, %v9071
        %9153 = vmatprep.subr.bf16.mxu0 0
        %9154 = vmatpush1.bf16.msra.mxu0 %v9080
        %9155 = vmatprep.subr.bf16.mxu0 0
        %9156 = vmatpush1.bf16.msra.mxu0 %v9079
        %9157 = vmatprep.subr.bf16.mxu0 0
        %9158 = vmatpush1.bf16.msra.mxu0 %v9078
        %9159 = vmatprep.subr.bf16.mxu0 0
        %9160 = vmatpush1.bf16.msra.mxu0 %v9077
        %9161 = vmatprep.subr.bf16.mxu0 0
        %9162 = vmatpush1.bf16.msra.mxu0 %v9076
        %9163 = vmatprep.subr.bf16.mxu0 0
        %9164 = vmatpush1.bf16.msra.mxu0 %v9075
        %9165 = vmatprep.subr.bf16.mxu0 0
        %9166 = vmatpush1.bf16.msra.mxu0 %v9074
        %9167 = vmatprep.subr.bf16.mxu0 0
        %9168 = vmatpush1.bf16.msra.mxu0 %v9073
        %9169 = vmatprep.subr.bf16.mxu0 0
        %9170 = vmatpush2.bf16.msra.mxu0 %v9088
        %9171 = vmatprep.subr.bf16.mxu0 0
        %9172 = vmatpush2.bf16.msra.mxu0 %v9087
        %9173 = vmatprep.subr.bf16.mxu0 0
        %9174 = vmatpush2.bf16.msra.mxu0 %v9086
        %9175 = vmatprep.subr.bf16.mxu0 0
        %9176 = vmatpush2.bf16.msra.mxu0 %v9085
        %9177 = vmatprep.subr.bf16.mxu0 0
        %9178 = vmatpush2.bf16.msra.mxu0 %v9084
        %9179 = vmatprep.subr.bf16.mxu0 0
        %9180 = vmatpush2.bf16.msra.mxu0 %v9083
        %9181 = vmatprep.subr.bf16.mxu0 0
        %9182 = vmatpush2.bf16.msra.mxu0 %v9082
        %9183 = vmatprep.subr.bf16.mxu0 0
        %9184 = vmatpush2.bf16.msra.mxu0 %v9081
        %9185 = vmatprep.mubr.bf16.mxu0 %v8886
        %9186 = vmatmul.mubr.bf16.gmra.mxu0 %v8879
        %v9187 = vpop.f32.mrf.mxu0
        %v9188 = vadd.f32 0.0, %v9187
        %v9189 = vpop.f32.mrf.mxu0
        %v9190 = vpop.f32.mrf.mxu0
        %v9191 = vpop.f32.mrf.mxu0
        %9192 = vdwg.mxu0
        %9193 = vmatprep.subr.bf16.mxu0 0
        %9194 = vmatpush1.bf16.msra.mxu0 %v9096
        %9195 = vmatprep.subr.bf16.mxu0 0
        %9196 = vmatpush1.bf16.msra.mxu0 %v9095
        %9197 = vmatprep.subr.bf16.mxu0 0
        %9198 = vmatpush1.bf16.msra.mxu0 %v9094
        %9199 = vmatprep.subr.bf16.mxu0 0
        %9200 = vmatpush1.bf16.msra.mxu0 %v9093
        %9201 = vmatprep.subr.bf16.mxu0 0
        %9202 = vmatpush1.bf16.msra.mxu0 %v9092
        %9203 = vmatprep.subr.bf16.mxu0 0
        %9204 = vmatpush1.bf16.msra.mxu0 %v9091
        %9205 = vmatprep.subr.bf16.mxu0 0
        %9206 = vmatpush1.bf16.msra.mxu0 %v9090
        %9207 = vmatprep.subr.bf16.mxu0 0
        %9208 = vmatpush1.bf16.msra.mxu0 %v9089
        %9209 = vmatprep.subr.bf16.mxu0 0
        %9210 = vmatpush2.bf16.msra.mxu0 %v9104
        %9211 = vmatprep.subr.bf16.mxu0 0
        %9212 = vmatpush2.bf16.msra.mxu0 %v9103
        %9213 = vmatprep.subr.bf16.mxu0 0
        %9214 = vmatpush2.bf16.msra.mxu0 %v9102
        %9215 = vmatprep.subr.bf16.mxu0 0
        %9216 = vmatpush2.bf16.msra.mxu0 %v9101
        %9217 = vmatprep.subr.bf16.mxu0 0
        %9218 = vmatpush2.bf16.msra.mxu0 %v9100
        %9219 = vmatprep.subr.bf16.mxu0 0
        %9220 = vmatpush2.bf16.msra.mxu0 %v9099
        %9221 = vmatprep.subr.bf16.mxu0 0
        %9222 = vmatpush2.bf16.msra.mxu0 %v9098
        %9223 = vmatprep.subr.bf16.mxu0 0
        %9224 = vmatpush2.bf16.msra.mxu0 %v9097
        %9225 = vmatprep.mubr.bf16.mxu0 %v8900
        %9226 = vmatmul.mubr.bf16.gmra.mxu0 %v8893
        %v9227 = vpop.f32.mrf.mxu0
        %v9228 = vadd.f32 %v9188, %v9227
        %v9229 = vpop.f32.mrf.mxu0
        %v9230 = vpop.f32.mrf.mxu0
        %v9231 = vpop.f32.mrf.mxu0
        %9232 = vdwg.mxu0
        %9233 = vmatprep.subr.bf16.mxu0 0
        %9234 = vmatpush1.bf16.msra.mxu0 %v9112
        %9235 = vmatprep.subr.bf16.mxu0 0
        %9236 = vmatpush1.bf16.msra.mxu0 %v9111
        %9237 = vmatprep.subr.bf16.mxu0 0
        %9238 = vmatpush1.bf16.msra.mxu0 %v9110
        %9239 = vmatprep.subr.bf16.mxu0 0
        %9240 = vmatpush1.bf16.msra.mxu0 %v9109
        %9241 = vmatprep.subr.bf16.mxu0 0
        %9242 = vmatpush1.bf16.msra.mxu0 %v9108
        %9243 = vmatprep.subr.bf16.mxu0 0
        %9244 = vmatpush1.bf16.msra.mxu0 %v9107
        %9245 = vmatprep.subr.bf16.mxu0 0
        %9246 = vmatpush1.bf16.msra.mxu0 %v9106
        %9247 = vmatprep.subr.bf16.mxu0 0
        %9248 = vmatpush1.bf16.msra.mxu0 %v9105
        %9249 = vmatprep.subr.bf16.mxu0 0
        %9250 = vmatpush2.bf16.msra.mxu0 0
        %9251 = vmatprep.subr.bf16.mxu0 0
        %9252 = vmatpush2.bf16.msra.mxu0 0
        %9253 = vmatprep.subr.bf16.mxu0 0
        %9254 = vmatpush2.bf16.msra.mxu0 0
        %9255 = vmatprep.subr.bf16.mxu0 0
        %9256 = vmatpush2.bf16.msra.mxu0 0
        %9257 = vmatprep.subr.bf16.mxu0 0
        %9258 = vmatpush2.bf16.msra.mxu0 0
        %9259 = vmatprep.subr.bf16.mxu0 0
        %9260 = vmatpush2.bf16.msra.mxu0 0
        %9261 = vmatprep.subr.bf16.mxu0 0
        %9262 = vmatpush2.bf16.msra.mxu0 0
        %9263 = vmatprep.subr.bf16.mxu0 0
        %9264 = vmatpush2.bf16.msra.mxu0 0
        %9265 = vmatprep.mubr.bf16.mxu0 0
        %9266 = vmatmul.mubr.bf16.gmra.mxu0 %v8907
        %v9267 = vpop.f32.mrf.mxu0
        %v9268 = vadd.f32 %v9228, %v9267
        %v9269 = vpop.f32.mrf.mxu0
        %v9270 = vpop.f32.mrf.mxu0
        %v9271 = vpop.f32.mrf.mxu0
        %9272 = vdwg.mxu0
        %v9273 = vadd.f32 %v8776, %v9268
        %v9274 = vadd.f32 %v9273, %v4508
        %v9275 = vmax.f32 %v9274, 0.0
        %v9276 = vpack.c.bf16 %v9275, %v9275
        %9277 = vst [vmem:[#allocation3 + $0x8] sm:$0x3] %v9276
        %v9278 = vld [vmem:[#allocation2 + $0x24] sm:$0x33]
        %v9279 = vld [vmem:[#allocation2 + $0x2c] sm:$0x33]
        %v9280 = vld [vmem:[#allocation2 + $0x34] sm:$0x3]
        %v9281 = vld [vmem:[%s3] sm:$0xf]
        %v9282 = vld [vmem:[%s3 + $0x4] sm:$0xf]
        %v9283 = vld [vmem:[%s3 + $0x8] sm:$0xf]
        %v9284 = vld [vmem:[%s3 + $0xc] sm:$0xf]
        %v9285 = vld [vmem:[%s3 + $0x10] sm:$0xf]
        %v9286 = vld [vmem:[%s3 + $0x14] sm:$0xf]
        %v9287 = vld [vmem:[%s3 + $0x18] sm:$0xf]
        %v9288 = vld [vmem:[%s3 + $0x1c] sm:$0xf]
        %v9289 = vld [vmem:[%s3 + $0x20] sm:$0xf]
        %v9290 = vld [vmem:[%s3 + $0x24] sm:$0xf]
        %v9291 = vld [vmem:[%s3 + $0x28] sm:$0xf]
        %v9292 = vld [vmem:[%s3 + $0x2c] sm:$0xf]
        %v9293 = vld [vmem:[%s3 + $0x30] sm:$0xf]
        %v9294 = vld [vmem:[%s3 + $0x34] sm:$0xf]
        %v9295 = vld [vmem:[%s3 + $0x38] sm:$0xf]
        %v9296 = vld [vmem:[%s3 + $0x3c] sm:$0xf]
        %v9297 = vld [vmem:[%s3 + $0x40] sm:$0xf]
        %v9298 = vld [vmem:[%s3 + $0x44] sm:$0xf]
        %v9299 = vld [vmem:[%s3 + $0x48] sm:$0xf]
        %v9300 = vld [vmem:[%s3 + $0x4c] sm:$0xf]
        %v9301 = vld [vmem:[%s3 + $0x50] sm:$0xf]
        %v9302 = vld [vmem:[%s3 + $0x54] sm:$0xf]
        %v9303 = vld [vmem:[%s3 + $0x58] sm:$0xf]
        %v9304 = vld [vmem:[%s3 + $0x5c] sm:$0xf]
        %v9305 = vld [vmem:[%s3 + $0x60] sm:$0xf]
        %v9306 = vld [vmem:[%s3 + $0x64] sm:$0xf]
        %v9307 = vld [vmem:[%s3 + $0x68] sm:$0xf]
        %v9308 = vld [vmem:[%s3 + $0x6c] sm:$0xf]
        %v9309 = vld [vmem:[%s3 + $0x70] sm:$0xf]
        %v9310 = vld [vmem:[%s3 + $0x74] sm:$0xf]
        %v9311 = vld [vmem:[%s3 + $0x78] sm:$0xf]
        %v9312 = vld [vmem:[%s3 + $0x7c] sm:$0xf]
        %v9313 = vld [vmem:[%s3 + $0x80] sm:$0xf]
        %v9314 = vld [vmem:[%s3 + $0x84] sm:$0xf]
        %v9315 = vld [vmem:[%s3 + $0x88] sm:$0xf]
        %v9316 = vld [vmem:[%s3 + $0x8c] sm:$0xf]
        %v9317 = vld [vmem:[%s3 + $0x90] sm:$0xf]
        %v9318 = vld [vmem:[%s3 + $0x94] sm:$0xf]
        %v9319 = vld [vmem:[%s3 + $0x98] sm:$0xf]
        %v9320 = vld [vmem:[%s3 + $0x9c] sm:$0xf]
        %v9321 = vld [vmem:[%s3 + $0xa0] sm:$0xf]
        %v9322 = vld [vmem:[%s3 + $0xa4] sm:$0xf]
        %v9323 = vld [vmem:[%s3 + $0xa8] sm:$0xf]
        %v9324 = vld [vmem:[%s3 + $0xac] sm:$0xf]
        %v9325 = vld [vmem:[%s3 + $0xb0] sm:$0xf]
        %v9326 = vld [vmem:[%s3 + $0xb4] sm:$0xf]
        %v9327 = vld [vmem:[%s3 + $0xb8] sm:$0xf]
        %v9328 = vld [vmem:[%s3 + $0xbc] sm:$0xf]
        %v9329 = vld [vmem:[%s3 + $0xc0] sm:$0xf]
        %v9330 = vld [vmem:[%s3 + $0xc4] sm:$0xf]
        %v9331 = vld [vmem:[%s3 + $0xc8] sm:$0xf]
        %v9332 = vld [vmem:[%s3 + $0xcc] sm:$0xf]
        %v9333 = vld [vmem:[%s3 + $0xd0] sm:$0xf]
        %v9334 = vld [vmem:[%s3 + $0xd4] sm:$0xf]
        %v9335 = vld [vmem:[%s3 + $0xd8] sm:$0xf]
        %v9336 = vld [vmem:[%s3 + $0xdc] sm:$0xf]
        %v9337 = vld [vmem:[%s3 + $0xe0] sm:$0xf]
        %v9338 = vld [vmem:[%s3 + $0xe4] sm:$0xf]
        %v9339 = vld [vmem:[%s3 + $0xe8] sm:$0xf]
        %v9340 = vld [vmem:[%s3 + $0xec] sm:$0xf]
        %v9341 = vld [vmem:[%s3 + $0xf0] sm:$0xf]
        %v9342 = vld [vmem:[%s3 + $0xf4] sm:$0xf]
        %v9343 = vld [vmem:[%s3 + $0xf8] sm:$0xf]
        %v9344 = vld [vmem:[%s3 + $0xfc] sm:$0xf]
        %v9345 = vld [vmem:[%s3 + $0x100] sm:$0xf]
        %v9346 = vld [vmem:[%s3 + $0x104] sm:$0xf]
        %v9347 = vld [vmem:[%s3 + $0x108] sm:$0xf]
        %v9348 = vld [vmem:[%s3 + $0x10c] sm:$0xf]
        %v9349 = vld [vmem:[%s3 + $0x110] sm:$0xf]
        %v9350 = vld [vmem:[%s3 + $0x114] sm:$0xf]
        %v9351 = vld [vmem:[%s3 + $0x118] sm:$0xf]
        %v9352 = vld [vmem:[%s3 + $0x11c] sm:$0xf]
        %v9353 = vld [vmem:[%s3 + $0x120] sm:$0xf]
        %v9354 = vld [vmem:[%s3 + $0x124] sm:$0xf]
        %v9355 = vld [vmem:[%s3 + $0x128] sm:$0xf]
        %v9356 = vld [vmem:[%s3 + $0x12c] sm:$0xf]
        %v9357 = vld [vmem:[%s3 + $0x130] sm:$0xf]
        %v9358 = vld [vmem:[%s3 + $0x134] sm:$0xf]
        %v9359 = vld [vmem:[%s3 + $0x138] sm:$0xf]
        %v9360 = vld [vmem:[%s3 + $0x13c] sm:$0xf]
        %v9361 = vld [vmem:[%s1091 + $0x24] sm:$0x33]
        %v9362 = vld [vmem:[%s1091 + $0x2c] sm:$0x33]
        %v9363 = vld [vmem:[%s1091 + $0x34] sm:$0x3]
        %v9364 = vld [vmem:[%s2208] sm:$0xf]
        %v9365 = vld [vmem:[%s2208 + $0x4] sm:$0xf]
        %v9366 = vld [vmem:[%s2208 + $0x8] sm:$0xf]
        %v9367 = vld [vmem:[%s2208 + $0xc] sm:$0xf]
        %v9368 = vld [vmem:[%s2208 + $0x10] sm:$0xf]
        %v9369 = vld [vmem:[%s2208 + $0x14] sm:$0xf]
        %v9370 = vld [vmem:[%s2208 + $0x18] sm:$0xf]
        %v9371 = vld [vmem:[%s2208 + $0x1c] sm:$0xf]
        %v9372 = vld [vmem:[%s2208 + $0x20] sm:$0xf]
        %v9373 = vld [vmem:[%s2208 + $0x24] sm:$0xf]
        %v9374 = vld [vmem:[%s2208 + $0x28] sm:$0xf]
        %v9375 = vld [vmem:[%s2208 + $0x2c] sm:$0xf]
        %v9376 = vld [vmem:[%s2208 + $0x30] sm:$0xf]
        %v9377 = vld [vmem:[%s2208 + $0x34] sm:$0xf]
        %v9378 = vld [vmem:[%s2208 + $0x38] sm:$0xf]
        %v9379 = vld [vmem:[%s2208 + $0x3c] sm:$0xf]
        %v9380 = vld [vmem:[%s2208 + $0x40] sm:$0xf]
        %v9381 = vld [vmem:[%s2208 + $0x44] sm:$0xf]
        %v9382 = vld [vmem:[%s2208 + $0x48] sm:$0xf]
        %v9383 = vld [vmem:[%s2208 + $0x4c] sm:$0xf]
        %v9384 = vld [vmem:[%s2208 + $0x50] sm:$0xf]
        %v9385 = vld [vmem:[%s2208 + $0x54] sm:$0xf]
        %v9386 = vld [vmem:[%s2208 + $0x58] sm:$0xf]
        %v9387 = vld [vmem:[%s2208 + $0x5c] sm:$0xf]
        %v9388 = vld [vmem:[%s2208 + $0x60] sm:$0xf]
        %v9389 = vld [vmem:[%s2208 + $0x64] sm:$0xf]
        %v9390 = vld [vmem:[%s2208 + $0x68] sm:$0xf]
        %v9391 = vld [vmem:[%s2208 + $0x6c] sm:$0xf]
        %v9392 = vld [vmem:[%s2208 + $0x70] sm:$0xf]
        %v9393 = vld [vmem:[%s2208 + $0x74] sm:$0xf]
        %v9394 = vld [vmem:[%s2208 + $0x78] sm:$0xf]
        %v9395 = vld [vmem:[%s2208 + $0x7c] sm:$0xf]
        %v9396 = vld [vmem:[%s2208 + $0x80] sm:$0xf]
        %v9397 = vld [vmem:[%s2208 + $0x84] sm:$0xf]
        %v9398 = vld [vmem:[%s2208 + $0x88] sm:$0xf]
        %v9399 = vld [vmem:[%s2208 + $0x8c] sm:$0xf]
        %v9400 = vld [vmem:[%s2208 + $0x90] sm:$0xf]
        %v9401 = vld [vmem:[%s2208 + $0x94] sm:$0xf]
        %v9402 = vld [vmem:[%s2208 + $0x98] sm:$0xf]
        %v9403 = vld [vmem:[%s2208 + $0x9c] sm:$0xf]
        %v9404 = vld [vmem:[%s2208 + $0xa0] sm:$0xf]
        %v9405 = vld [vmem:[%s2208 + $0xa4] sm:$0xf]
        %v9406 = vld [vmem:[%s2208 + $0xa8] sm:$0xf]
        %v9407 = vld [vmem:[%s2208 + $0xac] sm:$0xf]
        %v9408 = vld [vmem:[%s2208 + $0xb0] sm:$0xf]
        %v9409 = vld [vmem:[%s2208 + $0xb4] sm:$0xf]
        %v9410 = vld [vmem:[%s2208 + $0xb8] sm:$0xf]
        %v9411 = vld [vmem:[%s2208 + $0xbc] sm:$0xf]
        %v9412 = vld [vmem:[%s2208 + $0xc0] sm:$0xf]
        %v9413 = vld [vmem:[%s2208 + $0xc4] sm:$0xf]
        %v9414 = vld [vmem:[%s2208 + $0xc8] sm:$0xf]
        %v9415 = vld [vmem:[%s2208 + $0xcc] sm:$0xf]
        %v9416 = vld [vmem:[%s2208 + $0xd0] sm:$0xf]
        %v9417 = vld [vmem:[%s2208 + $0xd4] sm:$0xf]
        %v9418 = vld [vmem:[%s2208 + $0xd8] sm:$0xf]
        %v9419 = vld [vmem:[%s2208 + $0xdc] sm:$0xf]
        %v9420 = vld [vmem:[%s2208 + $0xe0] sm:$0xf]
        %v9421 = vld [vmem:[%s2208 + $0xe4] sm:$0xf]
        %v9422 = vld [vmem:[%s2208 + $0xe8] sm:$0xf]
        %v9423 = vld [vmem:[%s2208 + $0xec] sm:$0xf]
        %v9424 = vld [vmem:[%s2208 + $0xf0] sm:$0xf]
        %v9425 = vld [vmem:[%s2208 + $0xf4] sm:$0xf]
        %v9426 = vld [vmem:[%s2208 + $0xf8] sm:$0xf]
        %v9427 = vld [vmem:[%s2208 + $0xfc] sm:$0xf]
        %v9428 = vld [vmem:[%s2208 + $0x100] sm:$0xf]
        %v9429 = vld [vmem:[%s2208 + $0x104] sm:$0xf]
        %v9430 = vld [vmem:[%s2208 + $0x108] sm:$0xf]
        %v9431 = vld [vmem:[%s2208 + $0x10c] sm:$0xf]
        %v9432 = vld [vmem:[%s2208 + $0x110] sm:$0xf]
        %v9433 = vld [vmem:[%s2208 + $0x114] sm:$0xf]
        %v9434 = vld [vmem:[%s2208 + $0x118] sm:$0xf]
        %v9435 = vld [vmem:[%s2208 + $0x11c] sm:$0xf]
        %v9436 = vld [vmem:[%s2208 + $0x120] sm:$0xf]
        %v9437 = vld [vmem:[%s2208 + $0x124] sm:$0xf]
        %v9438 = vld [vmem:[%s2208 + $0x128] sm:$0xf]
        %v9439 = vld [vmem:[%s2208 + $0x12c] sm:$0xf]
        %v9440 = vld [vmem:[%s2208 + $0x130] sm:$0xf]
        %v9441 = vld [vmem:[%s2208 + $0x134] sm:$0xf]
        %v9442 = vld [vmem:[%s2208 + $0x138] sm:$0xf]
        %v9443 = vld [vmem:[%s2208 + $0x13c] sm:$0xf]
        %v9447 = vunpack.c.l.b16 %v9361
        %v9448 = vunpack.c.h.b16 %v9361
        %v9449 = vunpack.c.l.b16 %v9362
        %v9450 = vunpack.c.h.b16 %v9362
        %v9451 = vunpack.c.l.b16 %v9363
        %v9452 = vpack.c.b16 %v9447, %v9447
        %v9453 = vpack.c.b16 %v9448, %v9448
        %v9454 = vpack.c.b16 %v9449, %v9449
        %v9455 = vpack.c.b16 %v9450, %v9450
        %v9456 = vpack.c.b16 %v9451, %v9451
        %v9542 = vunpack.c.l.b16 %v9364
        %v9543 = vunpack.c.l.b16 %v9365
        %v9544 = vunpack.c.l.b16 %v9366
        %v9545 = vunpack.c.l.b16 %v9367
        %v9546 = vunpack.c.l.b16 %v9368
        %v9547 = vunpack.c.l.b16 %v9369
        %v9548 = vunpack.c.l.b16 %v9370
        %v9549 = vunpack.c.l.b16 %v9371
        %v9550 = vunpack.c.l.b16 %v9372
        %v9551 = vunpack.c.l.b16 %v9373
        %v9552 = vunpack.c.l.b16 %v9374
        %v9553 = vunpack.c.l.b16 %v9375
        %v9554 = vunpack.c.l.b16 %v9376
        %v9555 = vunpack.c.l.b16 %v9377
        %v9556 = vunpack.c.l.b16 %v9378
        %v9557 = vunpack.c.l.b16 %v9379
        %v9558 = vunpack.c.l.b16 %v9380
        %v9559 = vunpack.c.l.b16 %v9381
        %v9560 = vunpack.c.l.b16 %v9382
        %v9561 = vunpack.c.l.b16 %v9383
        %v9562 = vunpack.c.l.b16 %v9384
        %v9563 = vunpack.c.l.b16 %v9385
        %v9564 = vunpack.c.l.b16 %v9386
        %v9565 = vunpack.c.l.b16 %v9387
        %v9566 = vunpack.c.l.b16 %v9388
        %v9567 = vunpack.c.l.b16 %v9389
        %v9568 = vunpack.c.l.b16 %v9390
        %v9569 = vunpack.c.l.b16 %v9391
        %v9570 = vunpack.c.l.b16 %v9392
        %v9571 = vunpack.c.l.b16 %v9393
        %v9572 = vunpack.c.l.b16 %v9394
        %v9573 = vunpack.c.l.b16 %v9395
        %v9574 = vunpack.c.l.b16 %v9396
        %v9575 = vunpack.c.l.b16 %v9397
        %v9576 = vunpack.c.l.b16 %v9398
        %v9577 = vunpack.c.l.b16 %v9399
        %v9578 = vunpack.c.l.b16 %v9400
        %v9579 = vunpack.c.l.b16 %v9401
        %v9580 = vunpack.c.l.b16 %v9402
        %v9581 = vunpack.c.l.b16 %v9403
        %v9582 = vunpack.c.l.b16 %v9404
        %v9583 = vunpack.c.l.b16 %v9405
        %v9584 = vunpack.c.l.b16 %v9406
        %v9585 = vunpack.c.l.b16 %v9407
        %v9586 = vunpack.c.l.b16 %v9408
        %v9587 = vunpack.c.l.b16 %v9409
        %v9588 = vunpack.c.l.b16 %v9410
        %v9589 = vunpack.c.l.b16 %v9411
        %v9590 = vunpack.c.l.b16 %v9412
        %v9591 = vunpack.c.l.b16 %v9413
        %v9592 = vunpack.c.l.b16 %v9414
        %v9593 = vunpack.c.l.b16 %v9415
        %v9594 = vunpack.c.l.b16 %v9416
        %v9595 = vunpack.c.l.b16 %v9417
        %v9596 = vunpack.c.l.b16 %v9418
        %v9597 = vunpack.c.l.b16 %v9419
        %v9598 = vunpack.c.l.b16 %v9420
        %v9599 = vunpack.c.l.b16 %v9421
        %v9600 = vunpack.c.l.b16 %v9422
        %v9601 = vunpack.c.l.b16 %v9423
        %v9602 = vunpack.c.l.b16 %v9424
        %v9603 = vunpack.c.l.b16 %v9425
        %v9604 = vunpack.c.l.b16 %v9426
        %v9605 = vunpack.c.l.b16 %v9427
        %v9606 = vunpack.c.l.b16 %v9428
        %v9607 = vunpack.c.l.b16 %v9429
        %v9608 = vunpack.c.l.b16 %v9430
        %v9609 = vunpack.c.l.b16 %v9431
        %v9610 = vunpack.c.l.b16 %v9432
        %v9611 = vunpack.c.l.b16 %v9433
        %v9612 = vunpack.c.l.b16 %v9434
        %v9613 = vunpack.c.l.b16 %v9435
        %v9614 = vunpack.c.l.b16 %v9436
        %v9615 = vunpack.c.l.b16 %v9437
        %v9616 = vunpack.c.l.b16 %v9438
        %v9617 = vunpack.c.l.b16 %v9439
        %v9618 = vunpack.c.l.b16 %v9440
        %v9619 = vunpack.c.l.b16 %v9441
        %v9620 = vunpack.c.l.b16 %v9442
        %v9621 = vunpack.c.l.b16 %v9443
        %v9622 = vpack.c.b16 %v9543, %v9542
        %v9623 = vpack.c.b16 %v9545, %v9544
        %v9624 = vpack.c.b16 %v9547, %v9546
        %v9625 = vpack.c.b16 %v9549, %v9548
        %v9626 = vpack.c.b16 %v9551, %v9550
        %v9627 = vpack.c.b16 %v9553, %v9552
        %v9628 = vpack.c.b16 %v9555, %v9554
        %v9629 = vpack.c.b16 %v9557, %v9556
        %v9630 = vpack.c.b16 %v9559, %v9558
        %v9631 = vpack.c.b16 %v9561, %v9560
        %v9632 = vpack.c.b16 %v9563, %v9562
        %v9633 = vpack.c.b16 %v9565, %v9564
        %v9634 = vpack.c.b16 %v9567, %v9566
        %v9635 = vpack.c.b16 %v9569, %v9568
        %v9636 = vpack.c.b16 %v9571, %v9570
        %v9637 = vpack.c.b16 %v9573, %v9572
        %v9638 = vpack.c.b16 %v9575, %v9574
        %v9639 = vpack.c.b16 %v9577, %v9576
        %v9640 = vpack.c.b16 %v9579, %v9578
        %v9641 = vpack.c.b16 %v9581, %v9580
        %v9642 = vpack.c.b16 %v9583, %v9582
        %v9643 = vpack.c.b16 %v9585, %v9584
        %v9644 = vpack.c.b16 %v9587, %v9586
        %v9645 = vpack.c.b16 %v9589, %v9588
        %v9646 = vpack.c.b16 %v9591, %v9590
        %v9647 = vpack.c.b16 %v9593, %v9592
        %v9648 = vpack.c.b16 %v9595, %v9594
        %v9649 = vpack.c.b16 %v9597, %v9596
        %v9650 = vpack.c.b16 %v9599, %v9598
        %v9651 = vpack.c.b16 %v9601, %v9600
        %v9652 = vpack.c.b16 %v9603, %v9602
        %v9653 = vpack.c.b16 %v9605, %v9604
        %v9654 = vpack.c.b16 %v9607, %v9606
        %v9655 = vpack.c.b16 %v9609, %v9608
        %v9656 = vpack.c.b16 %v9611, %v9610
        %v9657 = vpack.c.b16 %v9613, %v9612
        %v9658 = vpack.c.b16 %v9615, %v9614
        %v9659 = vpack.c.b16 %v9617, %v9616
        %v9660 = vpack.c.b16 %v9619, %v9618
        %v9661 = vpack.c.b16 %v9621, %v9620
        %9702 = vmatprep.subr.bf16.mxu0 0
        %9703 = vmatpush1.bf16.msra.mxu0 %v9629
        %9704 = vmatprep.subr.bf16.mxu0 0
        %9705 = vmatpush1.bf16.msra.mxu0 %v9628
        %9706 = vmatprep.subr.bf16.mxu0 0
        %9707 = vmatpush1.bf16.msra.mxu0 %v9627
        %9708 = vmatprep.subr.bf16.mxu0 0
        %9709 = vmatpush1.bf16.msra.mxu0 %v9626
        %9710 = vmatprep.subr.bf16.mxu0 0
        %9711 = vmatpush1.bf16.msra.mxu0 %v9625
        %9712 = vmatprep.subr.bf16.mxu0 0
        %9713 = vmatpush1.bf16.msra.mxu0 %v9624
        %9714 = vmatprep.subr.bf16.mxu0 0
        %9715 = vmatpush1.bf16.msra.mxu0 %v9623
        %9716 = vmatprep.subr.bf16.mxu0 0
        %9717 = vmatpush1.bf16.msra.mxu0 %v9622
        %9718 = vmatprep.subr.bf16.mxu0 0
        %9719 = vmatpush2.bf16.msra.mxu0 %v9637
        %9720 = vmatprep.subr.bf16.mxu0 0
        %9721 = vmatpush2.bf16.msra.mxu0 %v9636
        %9722 = vmatprep.subr.bf16.mxu0 0
        %9723 = vmatpush2.bf16.msra.mxu0 %v9635
        %9724 = vmatprep.subr.bf16.mxu0 0
        %9725 = vmatpush2.bf16.msra.mxu0 %v9634
        %9726 = vmatprep.subr.bf16.mxu0 0
        %9727 = vmatpush2.bf16.msra.mxu0 %v9633
        %9728 = vmatprep.subr.bf16.mxu0 0
        %9729 = vmatpush2.bf16.msra.mxu0 %v9632
        %9730 = vmatprep.subr.bf16.mxu0 0
        %9731 = vmatpush2.bf16.msra.mxu0 %v9631
        %9732 = vmatprep.subr.bf16.mxu0 0
        %9733 = vmatpush2.bf16.msra.mxu0 %v9630
        %9734 = vmatprep.mubr.bf16.mxu0 %v9453
        %9735 = vmatmul.mubr.bf16.gmra.mxu0 %v9452
        %v9736 = vpop.f32.mrf.mxu0
        %v9737 = vadd.f32 0.0, %v9736
        %v9738 = vpop.f32.mrf.mxu0
        %v9739 = vpop.f32.mrf.mxu0
        %v9740 = vpop.f32.mrf.mxu0
        %9741 = vdwg.mxu0
        %9742 = vmatprep.subr.bf16.mxu0 0
        %9743 = vmatpush1.bf16.msra.mxu0 %v9645
        %9744 = vmatprep.subr.bf16.mxu0 0
        %9745 = vmatpush1.bf16.msra.mxu0 %v9644
        %9746 = vmatprep.subr.bf16.mxu0 0
        %9747 = vmatpush1.bf16.msra.mxu0 %v9643
        %9748 = vmatprep.subr.bf16.mxu0 0
        %9749 = vmatpush1.bf16.msra.mxu0 %v9642
        %9750 = vmatprep.subr.bf16.mxu0 0
        %9751 = vmatpush1.bf16.msra.mxu0 %v9641
        %9752 = vmatprep.subr.bf16.mxu0 0
        %9753 = vmatpush1.bf16.msra.mxu0 %v9640
        %9754 = vmatprep.subr.bf16.mxu0 0
        %9755 = vmatpush1.bf16.msra.mxu0 %v9639
        %9756 = vmatprep.subr.bf16.mxu0 0
        %9757 = vmatpush1.bf16.msra.mxu0 %v9638
        %9758 = vmatprep.subr.bf16.mxu0 0
        %9759 = vmatpush2.bf16.msra.mxu0 %v9653
        %9760 = vmatprep.subr.bf16.mxu0 0
        %9761 = vmatpush2.bf16.msra.mxu0 %v9652
        %9762 = vmatprep.subr.bf16.mxu0 0
        %9763 = vmatpush2.bf16.msra.mxu0 %v9651
        %9764 = vmatprep.subr.bf16.mxu0 0
        %9765 = vmatpush2.bf16.msra.mxu0 %v9650
        %9766 = vmatprep.subr.bf16.mxu0 0
        %9767 = vmatpush2.bf16.msra.mxu0 %v9649
        %9768 = vmatprep.subr.bf16.mxu0 0
        %9769 = vmatpush2.bf16.msra.mxu0 %v9648
        %9770 = vmatprep.subr.bf16.mxu0 0
        %9771 = vmatpush2.bf16.msra.mxu0 %v9647
        %9772 = vmatprep.subr.bf16.mxu0 0
        %9773 = vmatpush2.bf16.msra.mxu0 %v9646
        %9774 = vmatprep.mubr.bf16.mxu0 %v9455
        %9775 = vmatmul.mubr.bf16.gmra.mxu0 %v9454
        %v9776 = vpop.f32.mrf.mxu0
        %v9777 = vadd.f32 %v9737, %v9776
        %v9778 = vpop.f32.mrf.mxu0
        %v9779 = vpop.f32.mrf.mxu0
        %v9780 = vpop.f32.mrf.mxu0
        %9781 = vdwg.mxu0
        %9782 = vmatprep.subr.bf16.mxu0 0
        %9783 = vmatpush1.bf16.msra.mxu0 %v9661
        %9784 = vmatprep.subr.bf16.mxu0 0
        %9785 = vmatpush1.bf16.msra.mxu0 %v9660
        %9786 = vmatprep.subr.bf16.mxu0 0
        %9787 = vmatpush1.bf16.msra.mxu0 %v9659
        %9788 = vmatprep.subr.bf16.mxu0 0
        %9789 = vmatpush1.bf16.msra.mxu0 %v9658
        %9790 = vmatprep.subr.bf16.mxu0 0
        %9791 = vmatpush1.bf16.msra.mxu0 %v9657
        %9792 = vmatprep.subr.bf16.mxu0 0
        %9793 = vmatpush1.bf16.msra.mxu0 %v9656
        %9794 = vmatprep.subr.bf16.mxu0 0
        %9795 = vmatpush1.bf16.msra.mxu0 %v9655
        %9796 = vmatprep.subr.bf16.mxu0 0
        %9797 = vmatpush1.bf16.msra.mxu0 %v9654
        %9798 = vmatprep.subr.bf16.mxu0 0
        %9799 = vmatpush2.bf16.msra.mxu0 0
        %9800 = vmatprep.subr.bf16.mxu0 0
        %9801 = vmatpush2.bf16.msra.mxu0 0
        %9802 = vmatprep.subr.bf16.mxu0 0
        %9803 = vmatpush2.bf16.msra.mxu0 0
        %9804 = vmatprep.subr.bf16.mxu0 0
        %9805 = vmatpush2.bf16.msra.mxu0 0
        %9806 = vmatprep.subr.bf16.mxu0 0
        %9807 = vmatpush2.bf16.msra.mxu0 0
        %9808 = vmatprep.subr.bf16.mxu0 0
        %9809 = vmatpush2.bf16.msra.mxu0 0
        %9810 = vmatprep.subr.bf16.mxu0 0
        %9811 = vmatpush2.bf16.msra.mxu0 0
        %9812 = vmatprep.subr.bf16.mxu0 0
        %9813 = vmatpush2.bf16.msra.mxu0 0
        %9814 = vmatprep.mubr.bf16.mxu0 0
        %9815 = vmatmul.mubr.bf16.gmra.mxu0 %v9456
        %v9816 = vpop.f32.mrf.mxu0
        %v9817 = vadd.f32 %v9777, %v9816
        %v9818 = vpop.f32.mrf.mxu0
        %v9819 = vpop.f32.mrf.mxu0
        %v9820 = vpop.f32.mrf.mxu0
        %9821 = vdwg.mxu0
        %v9825 = vunpack.c.l.b16 %v9278
        %v9826 = vunpack.c.h.b16 %v9278
        %v9827 = vunpack.c.l.b16 %v9279
        %v9828 = vunpack.c.h.b16 %v9279
        %v9829 = vunpack.c.l.b16 %v9280
        %v9830 = vpack.c.b16 %v9825, %v9825
        %v9831 = vpack.c.b16 %v9826, %v9826
        %v9832 = vpack.c.b16 %v9827, %v9827
        %v9833 = vpack.c.b16 %v9828, %v9828
        %v9834 = vpack.c.b16 %v9829, %v9829
        %v9920 = vunpack.c.l.b16 %v9281
        %v9921 = vunpack.c.l.b16 %v9282
        %v9922 = vunpack.c.l.b16 %v9283
        %v9923 = vunpack.c.l.b16 %v9284
        %v9924 = vunpack.c.l.b16 %v9285
        %v9925 = vunpack.c.l.b16 %v9286
        %v9926 = vunpack.c.l.b16 %v9287
        %v9927 = vunpack.c.l.b16 %v9288
        %v9928 = vunpack.c.l.b16 %v9289
        %v9929 = vunpack.c.l.b16 %v9290
        %v9930 = vunpack.c.l.b16 %v9291
        %v9931 = vunpack.c.l.b16 %v9292
        %v9932 = vunpack.c.l.b16 %v9293
        %v9933 = vunpack.c.l.b16 %v9294
        %v9934 = vunpack.c.l.b16 %v9295
        %v9935 = vunpack.c.l.b16 %v9296
        %v9936 = vunpack.c.l.b16 %v9297
        %v9937 = vunpack.c.l.b16 %v9298
        %v9938 = vunpack.c.l.b16 %v9299
        %v9939 = vunpack.c.l.b16 %v9300
        %v9940 = vunpack.c.l.b16 %v9301
        %v9941 = vunpack.c.l.b16 %v9302
        %v9942 = vunpack.c.l.b16 %v9303
        %v9943 = vunpack.c.l.b16 %v9304
        %v9944 = vunpack.c.l.b16 %v9305
        %v9945 = vunpack.c.l.b16 %v9306
        %v9946 = vunpack.c.l.b16 %v9307
        %v9947 = vunpack.c.l.b16 %v9308
        %v9948 = vunpack.c.l.b16 %v9309
        %v9949 = vunpack.c.l.b16 %v9310
        %v9950 = vunpack.c.l.b16 %v9311
        %v9951 = vunpack.c.l.b16 %v9312
        %v9952 = vunpack.c.l.b16 %v9313
        %v9953 = vunpack.c.l.b16 %v9314
        %v9954 = vunpack.c.l.b16 %v9315
        %v9955 = vunpack.c.l.b16 %v9316
        %v9956 = vunpack.c.l.b16 %v9317
        %v9957 = vunpack.c.l.b16 %v9318
        %v9958 = vunpack.c.l.b16 %v9319
        %v9959 = vunpack.c.l.b16 %v9320
        %v9960 = vunpack.c.l.b16 %v9321
        %v9961 = vunpack.c.l.b16 %v9322
        %v9962 = vunpack.c.l.b16 %v9323
        %v9963 = vunpack.c.l.b16 %v9324
        %v9964 = vunpack.c.l.b16 %v9325
        %v9965 = vunpack.c.l.b16 %v9326
        %v9966 = vunpack.c.l.b16 %v9327
        %v9967 = vunpack.c.l.b16 %v9328
        %v9968 = vunpack.c.l.b16 %v9329
        %v9969 = vunpack.c.l.b16 %v9330
        %v9970 = vunpack.c.l.b16 %v9331
        %v9971 = vunpack.c.l.b16 %v9332
        %v9972 = vunpack.c.l.b16 %v9333
        %v9973 = vunpack.c.l.b16 %v9334
        %v9974 = vunpack.c.l.b16 %v9335
        %v9975 = vunpack.c.l.b16 %v9336
        %v9976 = vunpack.c.l.b16 %v9337
        %v9977 = vunpack.c.l.b16 %v9338
        %v9978 = vunpack.c.l.b16 %v9339
        %v9979 = vunpack.c.l.b16 %v9340
        %v9980 = vunpack.c.l.b16 %v9341
        %v9981 = vunpack.c.l.b16 %v9342
        %v9982 = vunpack.c.l.b16 %v9343
        %v9983 = vunpack.c.l.b16 %v9344
        %v9984 = vunpack.c.l.b16 %v9345
        %v9985 = vunpack.c.l.b16 %v9346
        %v9986 = vunpack.c.l.b16 %v9347
        %v9987 = vunpack.c.l.b16 %v9348
        %v9988 = vunpack.c.l.b16 %v9349
        %v9989 = vunpack.c.l.b16 %v9350
        %v9990 = vunpack.c.l.b16 %v9351
        %v9991 = vunpack.c.l.b16 %v9352
        %v9992 = vunpack.c.l.b16 %v9353
        %v9993 = vunpack.c.l.b16 %v9354
        %v9994 = vunpack.c.l.b16 %v9355
        %v9995 = vunpack.c.l.b16 %v9356
        %v9996 = vunpack.c.l.b16 %v9357
        %v9997 = vunpack.c.l.b16 %v9358
        %v9998 = vunpack.c.l.b16 %v9359
        %v9999 = vunpack.c.l.b16 %v9360
        %v10000 = vpack.c.b16 %v9921, %v9920
        %v10001 = vpack.c.b16 %v9923, %v9922
        %v10002 = vpack.c.b16 %v9925, %v9924
        %v10003 = vpack.c.b16 %v9927, %v9926
        %v10004 = vpack.c.b16 %v9929, %v9928
        %v10005 = vpack.c.b16 %v9931, %v9930
        %v10006 = vpack.c.b16 %v9933, %v9932
        %v10007 = vpack.c.b16 %v9935, %v9934
        %v10008 = vpack.c.b16 %v9937, %v9936
        %v10009 = vpack.c.b16 %v9939, %v9938
        %v10010 = vpack.c.b16 %v9941, %v9940
        %v10011 = vpack.c.b16 %v9943, %v9942
        %v10012 = vpack.c.b16 %v9945, %v9944
        %v10013 = vpack.c.b16 %v9947, %v9946
        %v10014 = vpack.c.b16 %v9949, %v9948
        %v10015 = vpack.c.b16 %v9951, %v9950
        %v10016 = vpack.c.b16 %v9953, %v9952
        %v10017 = vpack.c.b16 %v9955, %v9954
        %v10018 = vpack.c.b16 %v9957, %v9956
        %v10019 = vpack.c.b16 %v9959, %v9958
        %v10020 = vpack.c.b16 %v9961, %v9960
        %v10021 = vpack.c.b16 %v9963, %v9962
        %v10022 = vpack.c.b16 %v9965, %v9964
        %v10023 = vpack.c.b16 %v9967, %v9966
        %v10024 = vpack.c.b16 %v9969, %v9968
        %v10025 = vpack.c.b16 %v9971, %v9970
        %v10026 = vpack.c.b16 %v9973, %v9972
        %v10027 = vpack.c.b16 %v9975, %v9974
        %v10028 = vpack.c.b16 %v9977, %v9976
        %v10029 = vpack.c.b16 %v9979, %v9978
        %v10030 = vpack.c.b16 %v9981, %v9980
        %v10031 = vpack.c.b16 %v9983, %v9982
        %v10032 = vpack.c.b16 %v9985, %v9984
        %v10033 = vpack.c.b16 %v9987, %v9986
        %v10034 = vpack.c.b16 %v9989, %v9988
        %v10035 = vpack.c.b16 %v9991, %v9990
        %v10036 = vpack.c.b16 %v9993, %v9992
        %v10037 = vpack.c.b16 %v9995, %v9994
        %v10038 = vpack.c.b16 %v9997, %v9996
        %v10039 = vpack.c.b16 %v9999, %v9998
        %10080 = vmatprep.subr.bf16.mxu0 0
        %10081 = vmatpush1.bf16.msra.mxu0 %v10007
        %10082 = vmatprep.subr.bf16.mxu0 0
        %10083 = vmatpush1.bf16.msra.mxu0 %v10006
        %10084 = vmatprep.subr.bf16.mxu0 0
        %10085 = vmatpush1.bf16.msra.mxu0 %v10005
        %10086 = vmatprep.subr.bf16.mxu0 0
        %10087 = vmatpush1.bf16.msra.mxu0 %v10004
        %10088 = vmatprep.subr.bf16.mxu0 0
        %10089 = vmatpush1.bf16.msra.mxu0 %v10003
        %10090 = vmatprep.subr.bf16.mxu0 0
        %10091 = vmatpush1.bf16.msra.mxu0 %v10002
        %10092 = vmatprep.subr.bf16.mxu0 0
        %10093 = vmatpush1.bf16.msra.mxu0 %v10001
        %10094 = vmatprep.subr.bf16.mxu0 0
        %10095 = vmatpush1.bf16.msra.mxu0 %v10000
        %10096 = vmatprep.subr.bf16.mxu0 0
        %10097 = vmatpush2.bf16.msra.mxu0 %v10015
        %10098 = vmatprep.subr.bf16.mxu0 0
        %10099 = vmatpush2.bf16.msra.mxu0 %v10014
        %10100 = vmatprep.subr.bf16.mxu0 0
        %10101 = vmatpush2.bf16.msra.mxu0 %v10013
        %10102 = vmatprep.subr.bf16.mxu0 0
        %10103 = vmatpush2.bf16.msra.mxu0 %v10012
        %10104 = vmatprep.subr.bf16.mxu0 0
        %10105 = vmatpush2.bf16.msra.mxu0 %v10011
        %10106 = vmatprep.subr.bf16.mxu0 0
        %10107 = vmatpush2.bf16.msra.mxu0 %v10010
        %10108 = vmatprep.subr.bf16.mxu0 0
        %10109 = vmatpush2.bf16.msra.mxu0 %v10009
        %10110 = vmatprep.subr.bf16.mxu0 0
        %10111 = vmatpush2.bf16.msra.mxu0 %v10008
        %10112 = vmatprep.mubr.bf16.mxu0 %v9831
        %10113 = vmatmul.mubr.bf16.gmra.mxu0 %v9830
        %v10114 = vpop.f32.mrf.mxu0
        %v10115 = vadd.f32 %v9817, %v10114
        %v10116 = vpop.f32.mrf.mxu0
        %v10117 = vpop.f32.mrf.mxu0
        %v10118 = vpop.f32.mrf.mxu0
        %10119 = vdwg.mxu0
        %10120 = vmatprep.subr.bf16.mxu0 0
        %10121 = vmatpush1.bf16.msra.mxu0 %v10023
        %10122 = vmatprep.subr.bf16.mxu0 0
        %10123 = vmatpush1.bf16.msra.mxu0 %v10022
        %10124 = vmatprep.subr.bf16.mxu0 0
        %10125 = vmatpush1.bf16.msra.mxu0 %v10021
        %10126 = vmatprep.subr.bf16.mxu0 0
        %10127 = vmatpush1.bf16.msra.mxu0 %v10020
        %10128 = vmatprep.subr.bf16.mxu0 0
        %10129 = vmatpush1.bf16.msra.mxu0 %v10019
        %10130 = vmatprep.subr.bf16.mxu0 0
        %10131 = vmatpush1.bf16.msra.mxu0 %v10018
        %10132 = vmatprep.subr.bf16.mxu0 0
        %10133 = vmatpush1.bf16.msra.mxu0 %v10017
        %10134 = vmatprep.subr.bf16.mxu0 0
        %10135 = vmatpush1.bf16.msra.mxu0 %v10016
        %10136 = vmatprep.subr.bf16.mxu0 0
        %10137 = vmatpush2.bf16.msra.mxu0 %v10031
        %10138 = vmatprep.subr.bf16.mxu0 0
        %10139 = vmatpush2.bf16.msra.mxu0 %v10030
        %10140 = vmatprep.subr.bf16.mxu0 0
        %10141 = vmatpush2.bf16.msra.mxu0 %v10029
        %10142 = vmatprep.subr.bf16.mxu0 0
        %10143 = vmatpush2.bf16.msra.mxu0 %v10028
        %10144 = vmatprep.subr.bf16.mxu0 0
        %10145 = vmatpush2.bf16.msra.mxu0 %v10027
        %10146 = vmatprep.subr.bf16.mxu0 0
        %10147 = vmatpush2.bf16.msra.mxu0 %v10026
        %10148 = vmatprep.subr.bf16.mxu0 0
        %10149 = vmatpush2.bf16.msra.mxu0 %v10025
        %10150 = vmatprep.subr.bf16.mxu0 0
        %10151 = vmatpush2.bf16.msra.mxu0 %v10024
        %10152 = vmatprep.mubr.bf16.mxu0 %v9833
        %10153 = vmatmul.mubr.bf16.gmra.mxu0 %v9832
        %v10154 = vpop.f32.mrf.mxu0
        %v10155 = vadd.f32 %v10115, %v10154
        %v10156 = vpop.f32.mrf.mxu0
        %v10157 = vpop.f32.mrf.mxu0
        %v10158 = vpop.f32.mrf.mxu0
        %10159 = vdwg.mxu0
        %10160 = vmatprep.subr.bf16.mxu0 0
        %10161 = vmatpush1.bf16.msra.mxu0 %v10039
        %10162 = vmatprep.subr.bf16.mxu0 0
        %10163 = vmatpush1.bf16.msra.mxu0 %v10038
        %10164 = vmatprep.subr.bf16.mxu0 0
        %10165 = vmatpush1.bf16.msra.mxu0 %v10037
        %10166 = vmatprep.subr.bf16.mxu0 0
        %10167 = vmatpush1.bf16.msra.mxu0 %v10036
        %10168 = vmatprep.subr.bf16.mxu0 0
        %10169 = vmatpush1.bf16.msra.mxu0 %v10035
        %10170 = vmatprep.subr.bf16.mxu0 0
        %10171 = vmatpush1.bf16.msra.mxu0 %v10034
        %10172 = vmatprep.subr.bf16.mxu0 0
        %10173 = vmatpush1.bf16.msra.mxu0 %v10033
        %10174 = vmatprep.subr.bf16.mxu0 0
        %10175 = vmatpush1.bf16.msra.mxu0 %v10032
        %10176 = vmatprep.subr.bf16.mxu0 0
        %10177 = vmatpush2.bf16.msra.mxu0 0
        %10178 = vmatprep.subr.bf16.mxu0 0
        %10179 = vmatpush2.bf16.msra.mxu0 0
        %10180 = vmatprep.subr.bf16.mxu0 0
        %10181 = vmatpush2.bf16.msra.mxu0 0
        %10182 = vmatprep.subr.bf16.mxu0 0
        %10183 = vmatpush2.bf16.msra.mxu0 0
        %10184 = vmatprep.subr.bf16.mxu0 0
        %10185 = vmatpush2.bf16.msra.mxu0 0
        %10186 = vmatprep.subr.bf16.mxu0 0
        %10187 = vmatpush2.bf16.msra.mxu0 0
        %10188 = vmatprep.subr.bf16.mxu0 0
        %10189 = vmatpush2.bf16.msra.mxu0 0
        %10190 = vmatprep.subr.bf16.mxu0 0
        %10191 = vmatpush2.bf16.msra.mxu0 0
        %10192 = vmatprep.mubr.bf16.mxu0 0
        %10193 = vmatmul.mubr.bf16.gmra.mxu0 %v9834
        %v10194 = vpop.f32.mrf.mxu0
        %v10195 = vadd.f32 %v10155, %v10194
        %v10196 = vpop.f32.mrf.mxu0
        %v10197 = vpop.f32.mrf.mxu0
        %v10198 = vpop.f32.mrf.mxu0
        %10199 = vdwg.mxu0
        %v10200 = vld [vmem:[%s1347 + $0x24] sm:$0x33]
        %v10201 = vld [vmem:[%s1347 + $0x2c] sm:$0x33]
        %v10202 = vld [vmem:[%s1347 + $0x34] sm:$0x3]
        %v10203 = vld [vmem:[%s3048] sm:$0xf]
        %v10204 = vld [vmem:[%s3048 + $0x4] sm:$0xf]
        %v10205 = vld [vmem:[%s3048 + $0x8] sm:$0xf]
        %v10206 = vld [vmem:[%s3048 + $0xc] sm:$0xf]
        %v10207 = vld [vmem:[%s3048 + $0x10] sm:$0xf]
        %v10208 = vld [vmem:[%s3048 + $0x14] sm:$0xf]
        %v10209 = vld [vmem:[%s3048 + $0x18] sm:$0xf]
        %v10210 = vld [vmem:[%s3048 + $0x1c] sm:$0xf]
        %v10211 = vld [vmem:[%s3048 + $0x20] sm:$0xf]
        %v10212 = vld [vmem:[%s3048 + $0x24] sm:$0xf]
        %v10213 = vld [vmem:[%s3048 + $0x28] sm:$0xf]
        %v10214 = vld [vmem:[%s3048 + $0x2c] sm:$0xf]
        %v10215 = vld [vmem:[%s3048 + $0x30] sm:$0xf]
        %v10216 = vld [vmem:[%s3048 + $0x34] sm:$0xf]
        %v10217 = vld [vmem:[%s3048 + $0x38] sm:$0xf]
        %v10218 = vld [vmem:[%s3048 + $0x3c] sm:$0xf]
        %v10219 = vld [vmem:[%s3048 + $0x40] sm:$0xf]
        %v10220 = vld [vmem:[%s3048 + $0x44] sm:$0xf]
        %v10221 = vld [vmem:[%s3048 + $0x48] sm:$0xf]
        %v10222 = vld [vmem:[%s3048 + $0x4c] sm:$0xf]
        %v10223 = vld [vmem:[%s3048 + $0x50] sm:$0xf]
        %v10224 = vld [vmem:[%s3048 + $0x54] sm:$0xf]
        %v10225 = vld [vmem:[%s3048 + $0x58] sm:$0xf]
        %v10226 = vld [vmem:[%s3048 + $0x5c] sm:$0xf]
        %v10227 = vld [vmem:[%s3048 + $0x60] sm:$0xf]
        %v10228 = vld [vmem:[%s3048 + $0x64] sm:$0xf]
        %v10229 = vld [vmem:[%s3048 + $0x68] sm:$0xf]
        %v10230 = vld [vmem:[%s3048 + $0x6c] sm:$0xf]
        %v10231 = vld [vmem:[%s3048 + $0x70] sm:$0xf]
        %v10232 = vld [vmem:[%s3048 + $0x74] sm:$0xf]
        %v10233 = vld [vmem:[%s3048 + $0x78] sm:$0xf]
        %v10234 = vld [vmem:[%s3048 + $0x7c] sm:$0xf]
        %v10235 = vld [vmem:[%s3048 + $0x80] sm:$0xf]
        %v10236 = vld [vmem:[%s3048 + $0x84] sm:$0xf]
        %v10237 = vld [vmem:[%s3048 + $0x88] sm:$0xf]
        %v10238 = vld [vmem:[%s3048 + $0x8c] sm:$0xf]
        %v10239 = vld [vmem:[%s3048 + $0x90] sm:$0xf]
        %v10240 = vld [vmem:[%s3048 + $0x94] sm:$0xf]
        %v10241 = vld [vmem:[%s3048 + $0x98] sm:$0xf]
        %v10242 = vld [vmem:[%s3048 + $0x9c] sm:$0xf]
        %v10243 = vld [vmem:[%s3048 + $0xa0] sm:$0xf]
        %v10244 = vld [vmem:[%s3048 + $0xa4] sm:$0xf]
        %v10245 = vld [vmem:[%s3048 + $0xa8] sm:$0xf]
        %v10246 = vld [vmem:[%s3048 + $0xac] sm:$0xf]
        %v10247 = vld [vmem:[%s3048 + $0xb0] sm:$0xf]
        %v10248 = vld [vmem:[%s3048 + $0xb4] sm:$0xf]
        %v10249 = vld [vmem:[%s3048 + $0xb8] sm:$0xf]
        %v10250 = vld [vmem:[%s3048 + $0xbc] sm:$0xf]
        %v10251 = vld [vmem:[%s3048 + $0xc0] sm:$0xf]
        %v10252 = vld [vmem:[%s3048 + $0xc4] sm:$0xf]
        %v10253 = vld [vmem:[%s3048 + $0xc8] sm:$0xf]
        %v10254 = vld [vmem:[%s3048 + $0xcc] sm:$0xf]
        %v10255 = vld [vmem:[%s3048 + $0xd0] sm:$0xf]
        %v10256 = vld [vmem:[%s3048 + $0xd4] sm:$0xf]
        %v10257 = vld [vmem:[%s3048 + $0xd8] sm:$0xf]
        %v10258 = vld [vmem:[%s3048 + $0xdc] sm:$0xf]
        %v10259 = vld [vmem:[%s3048 + $0xe0] sm:$0xf]
        %v10260 = vld [vmem:[%s3048 + $0xe4] sm:$0xf]
        %v10261 = vld [vmem:[%s3048 + $0xe8] sm:$0xf]
        %v10262 = vld [vmem:[%s3048 + $0xec] sm:$0xf]
        %v10263 = vld [vmem:[%s3048 + $0xf0] sm:$0xf]
        %v10264 = vld [vmem:[%s3048 + $0xf4] sm:$0xf]
        %v10265 = vld [vmem:[%s3048 + $0xf8] sm:$0xf]
        %v10266 = vld [vmem:[%s3048 + $0xfc] sm:$0xf]
        %v10267 = vld [vmem:[%s3048 + $0x100] sm:$0xf]
        %v10268 = vld [vmem:[%s3048 + $0x104] sm:$0xf]
        %v10269 = vld [vmem:[%s3048 + $0x108] sm:$0xf]
        %v10270 = vld [vmem:[%s3048 + $0x10c] sm:$0xf]
        %v10271 = vld [vmem:[%s3048 + $0x110] sm:$0xf]
        %v10272 = vld [vmem:[%s3048 + $0x114] sm:$0xf]
        %v10273 = vld [vmem:[%s3048 + $0x118] sm:$0xf]
        %v10274 = vld [vmem:[%s3048 + $0x11c] sm:$0xf]
        %v10275 = vld [vmem:[%s3048 + $0x120] sm:$0xf]
        %v10276 = vld [vmem:[%s3048 + $0x124] sm:$0xf]
        %v10277 = vld [vmem:[%s3048 + $0x128] sm:$0xf]
        %v10278 = vld [vmem:[%s3048 + $0x12c] sm:$0xf]
        %v10279 = vld [vmem:[%s3048 + $0x130] sm:$0xf]
        %v10280 = vld [vmem:[%s3048 + $0x134] sm:$0xf]
        %v10281 = vld [vmem:[%s3048 + $0x138] sm:$0xf]
        %v10282 = vld [vmem:[%s3048 + $0x13c] sm:$0xf]
        %v10286 = vunpack.c.l.b16 %v10200
        %v10287 = vunpack.c.h.b16 %v10200
        %v10288 = vunpack.c.l.b16 %v10201
        %v10289 = vunpack.c.h.b16 %v10201
        %v10290 = vunpack.c.l.b16 %v10202
        %v10291 = vpack.c.b16 %v10286, %v10286
        %v10292 = vpack.c.b16 %v10287, %v10287
        %v10293 = vpack.c.b16 %v10288, %v10288
        %v10294 = vpack.c.b16 %v10289, %v10289
        %v10295 = vpack.c.b16 %v10290, %v10290
        %v10381 = vunpack.c.l.b16 %v10203
        %v10382 = vunpack.c.l.b16 %v10204
        %v10383 = vunpack.c.l.b16 %v10205
        %v10384 = vunpack.c.l.b16 %v10206
        %v10385 = vunpack.c.l.b16 %v10207
        %v10386 = vunpack.c.l.b16 %v10208
        %v10387 = vunpack.c.l.b16 %v10209
        %v10388 = vunpack.c.l.b16 %v10210
        %v10389 = vunpack.c.l.b16 %v10211
        %v10390 = vunpack.c.l.b16 %v10212
        %v10391 = vunpack.c.l.b16 %v10213
        %v10392 = vunpack.c.l.b16 %v10214
        %v10393 = vunpack.c.l.b16 %v10215
        %v10394 = vunpack.c.l.b16 %v10216
        %v10395 = vunpack.c.l.b16 %v10217
        %v10396 = vunpack.c.l.b16 %v10218
        %v10397 = vunpack.c.l.b16 %v10219
        %v10398 = vunpack.c.l.b16 %v10220
        %v10399 = vunpack.c.l.b16 %v10221
        %v10400 = vunpack.c.l.b16 %v10222
        %v10401 = vunpack.c.l.b16 %v10223
        %v10402 = vunpack.c.l.b16 %v10224
        %v10403 = vunpack.c.l.b16 %v10225
        %v10404 = vunpack.c.l.b16 %v10226
        %v10405 = vunpack.c.l.b16 %v10227
        %v10406 = vunpack.c.l.b16 %v10228
        %v10407 = vunpack.c.l.b16 %v10229
        %v10408 = vunpack.c.l.b16 %v10230
        %v10409 = vunpack.c.l.b16 %v10231
        %v10410 = vunpack.c.l.b16 %v10232
        %v10411 = vunpack.c.l.b16 %v10233
        %v10412 = vunpack.c.l.b16 %v10234
        %v10413 = vunpack.c.l.b16 %v10235
        %v10414 = vunpack.c.l.b16 %v10236
        %v10415 = vunpack.c.l.b16 %v10237
        %v10416 = vunpack.c.l.b16 %v10238
        %v10417 = vunpack.c.l.b16 %v10239
        %v10418 = vunpack.c.l.b16 %v10240
        %v10419 = vunpack.c.l.b16 %v10241
        %v10420 = vunpack.c.l.b16 %v10242
        %v10421 = vunpack.c.l.b16 %v10243
        %v10422 = vunpack.c.l.b16 %v10244
        %v10423 = vunpack.c.l.b16 %v10245
        %v10424 = vunpack.c.l.b16 %v10246
        %v10425 = vunpack.c.l.b16 %v10247
        %v10426 = vunpack.c.l.b16 %v10248
        %v10427 = vunpack.c.l.b16 %v10249
        %v10428 = vunpack.c.l.b16 %v10250
        %v10429 = vunpack.c.l.b16 %v10251
        %v10430 = vunpack.c.l.b16 %v10252
        %v10431 = vunpack.c.l.b16 %v10253
        %v10432 = vunpack.c.l.b16 %v10254
        %v10433 = vunpack.c.l.b16 %v10255
        %v10434 = vunpack.c.l.b16 %v10256
        %v10435 = vunpack.c.l.b16 %v10257
        %v10436 = vunpack.c.l.b16 %v10258
        %v10437 = vunpack.c.l.b16 %v10259
        %v10438 = vunpack.c.l.b16 %v10260
        %v10439 = vunpack.c.l.b16 %v10261
        %v10440 = vunpack.c.l.b16 %v10262
        %v10441 = vunpack.c.l.b16 %v10263
        %v10442 = vunpack.c.l.b16 %v10264
        %v10443 = vunpack.c.l.b16 %v10265
        %v10444 = vunpack.c.l.b16 %v10266
        %v10445 = vunpack.c.l.b16 %v10267
        %v10446 = vunpack.c.l.b16 %v10268
        %v10447 = vunpack.c.l.b16 %v10269
        %v10448 = vunpack.c.l.b16 %v10270
        %v10449 = vunpack.c.l.b16 %v10271
        %v10450 = vunpack.c.l.b16 %v10272
        %v10451 = vunpack.c.l.b16 %v10273
        %v10452 = vunpack.c.l.b16 %v10274
        %v10453 = vunpack.c.l.b16 %v10275
        %v10454 = vunpack.c.l.b16 %v10276
        %v10455 = vunpack.c.l.b16 %v10277
        %v10456 = vunpack.c.l.b16 %v10278
        %v10457 = vunpack.c.l.b16 %v10279
        %v10458 = vunpack.c.l.b16 %v10280
        %v10459 = vunpack.c.l.b16 %v10281
        %v10460 = vunpack.c.l.b16 %v10282
        %v10461 = vpack.c.b16 %v10382, %v10381
        %v10462 = vpack.c.b16 %v10384, %v10383
        %v10463 = vpack.c.b16 %v10386, %v10385
        %v10464 = vpack.c.b16 %v10388, %v10387
        %v10465 = vpack.c.b16 %v10390, %v10389
        %v10466 = vpack.c.b16 %v10392, %v10391
        %v10467 = vpack.c.b16 %v10394, %v10393
        %v10468 = vpack.c.b16 %v10396, %v10395
        %v10469 = vpack.c.b16 %v10398, %v10397
        %v10470 = vpack.c.b16 %v10400, %v10399
        %v10471 = vpack.c.b16 %v10402, %v10401
        %v10472 = vpack.c.b16 %v10404, %v10403
        %v10473 = vpack.c.b16 %v10406, %v10405
        %v10474 = vpack.c.b16 %v10408, %v10407
        %v10475 = vpack.c.b16 %v10410, %v10409
        %v10476 = vpack.c.b16 %v10412, %v10411
        %v10477 = vpack.c.b16 %v10414, %v10413
        %v10478 = vpack.c.b16 %v10416, %v10415
        %v10479 = vpack.c.b16 %v10418, %v10417
        %v10480 = vpack.c.b16 %v10420, %v10419
        %v10481 = vpack.c.b16 %v10422, %v10421
        %v10482 = vpack.c.b16 %v10424, %v10423
        %v10483 = vpack.c.b16 %v10426, %v10425
        %v10484 = vpack.c.b16 %v10428, %v10427
        %v10485 = vpack.c.b16 %v10430, %v10429
        %v10486 = vpack.c.b16 %v10432, %v10431
        %v10487 = vpack.c.b16 %v10434, %v10433
        %v10488 = vpack.c.b16 %v10436, %v10435
        %v10489 = vpack.c.b16 %v10438, %v10437
        %v10490 = vpack.c.b16 %v10440, %v10439
        %v10491 = vpack.c.b16 %v10442, %v10441
        %v10492 = vpack.c.b16 %v10444, %v10443
        %v10493 = vpack.c.b16 %v10446, %v10445
        %v10494 = vpack.c.b16 %v10448, %v10447
        %v10495 = vpack.c.b16 %v10450, %v10449
        %v10496 = vpack.c.b16 %v10452, %v10451
        %v10497 = vpack.c.b16 %v10454, %v10453
        %v10498 = vpack.c.b16 %v10456, %v10455
        %v10499 = vpack.c.b16 %v10458, %v10457
        %v10500 = vpack.c.b16 %v10460, %v10459
        %10541 = vmatprep.subr.bf16.mxu0 0
        %10542 = vmatpush1.bf16.msra.mxu0 %v10468
        %10543 = vmatprep.subr.bf16.mxu0 0
        %10544 = vmatpush1.bf16.msra.mxu0 %v10467
        %10545 = vmatprep.subr.bf16.mxu0 0
        %10546 = vmatpush1.bf16.msra.mxu0 %v10466
        %10547 = vmatprep.subr.bf16.mxu0 0
        %10548 = vmatpush1.bf16.msra.mxu0 %v10465
        %10549 = vmatprep.subr.bf16.mxu0 0
        %10550 = vmatpush1.bf16.msra.mxu0 %v10464
        %10551 = vmatprep.subr.bf16.mxu0 0
        %10552 = vmatpush1.bf16.msra.mxu0 %v10463
        %10553 = vmatprep.subr.bf16.mxu0 0
        %10554 = vmatpush1.bf16.msra.mxu0 %v10462
        %10555 = vmatprep.subr.bf16.mxu0 0
        %10556 = vmatpush1.bf16.msra.mxu0 %v10461
        %10557 = vmatprep.subr.bf16.mxu0 0
        %10558 = vmatpush2.bf16.msra.mxu0 %v10476
        %10559 = vmatprep.subr.bf16.mxu0 0
        %10560 = vmatpush2.bf16.msra.mxu0 %v10475
        %10561 = vmatprep.subr.bf16.mxu0 0
        %10562 = vmatpush2.bf16.msra.mxu0 %v10474
        %10563 = vmatprep.subr.bf16.mxu0 0
        %10564 = vmatpush2.bf16.msra.mxu0 %v10473
        %10565 = vmatprep.subr.bf16.mxu0 0
        %10566 = vmatpush2.bf16.msra.mxu0 %v10472
        %10567 = vmatprep.subr.bf16.mxu0 0
        %10568 = vmatpush2.bf16.msra.mxu0 %v10471
        %10569 = vmatprep.subr.bf16.mxu0 0
        %10570 = vmatpush2.bf16.msra.mxu0 %v10470
        %10571 = vmatprep.subr.bf16.mxu0 0
        %10572 = vmatpush2.bf16.msra.mxu0 %v10469
        %10573 = vmatprep.mubr.bf16.mxu0 %v10292
        %10574 = vmatmul.mubr.bf16.gmra.mxu0 %v10291
        %v10575 = vpop.f32.mrf.mxu0
        %v10576 = vadd.f32 0.0, %v10575
        %v10577 = vpop.f32.mrf.mxu0
        %v10578 = vpop.f32.mrf.mxu0
        %v10579 = vpop.f32.mrf.mxu0
        %10580 = vdwg.mxu0
        %10581 = vmatprep.subr.bf16.mxu0 0
        %10582 = vmatpush1.bf16.msra.mxu0 %v10484
        %10583 = vmatprep.subr.bf16.mxu0 0
        %10584 = vmatpush1.bf16.msra.mxu0 %v10483
        %10585 = vmatprep.subr.bf16.mxu0 0
        %10586 = vmatpush1.bf16.msra.mxu0 %v10482
        %10587 = vmatprep.subr.bf16.mxu0 0
        %10588 = vmatpush1.bf16.msra.mxu0 %v10481
        %10589 = vmatprep.subr.bf16.mxu0 0
        %10590 = vmatpush1.bf16.msra.mxu0 %v10480
        %10591 = vmatprep.subr.bf16.mxu0 0
        %10592 = vmatpush1.bf16.msra.mxu0 %v10479
        %10593 = vmatprep.subr.bf16.mxu0 0
        %10594 = vmatpush1.bf16.msra.mxu0 %v10478
        %10595 = vmatprep.subr.bf16.mxu0 0
        %10596 = vmatpush1.bf16.msra.mxu0 %v10477
        %10597 = vmatprep.subr.bf16.mxu0 0
        %10598 = vmatpush2.bf16.msra.mxu0 %v10492
        %10599 = vmatprep.subr.bf16.mxu0 0
        %10600 = vmatpush2.bf16.msra.mxu0 %v10491
        %10601 = vmatprep.subr.bf16.mxu0 0
        %10602 = vmatpush2.bf16.msra.mxu0 %v10490
        %10603 = vmatprep.subr.bf16.mxu0 0
        %10604 = vmatpush2.bf16.msra.mxu0 %v10489
        %10605 = vmatprep.subr.bf16.mxu0 0
        %10606 = vmatpush2.bf16.msra.mxu0 %v10488
        %10607 = vmatprep.subr.bf16.mxu0 0
        %10608 = vmatpush2.bf16.msra.mxu0 %v10487
        %10609 = vmatprep.subr.bf16.mxu0 0
        %10610 = vmatpush2.bf16.msra.mxu0 %v10486
        %10611 = vmatprep.subr.bf16.mxu0 0
        %10612 = vmatpush2.bf16.msra.mxu0 %v10485
        %10613 = vmatprep.mubr.bf16.mxu0 %v10294
        %10614 = vmatmul.mubr.bf16.gmra.mxu0 %v10293
        %v10615 = vpop.f32.mrf.mxu0
        %v10616 = vadd.f32 %v10576, %v10615
        %v10617 = vpop.f32.mrf.mxu0
        %v10618 = vpop.f32.mrf.mxu0
        %v10619 = vpop.f32.mrf.mxu0
        %10620 = vdwg.mxu0
        %10621 = vmatprep.subr.bf16.mxu0 0
        %10622 = vmatpush1.bf16.msra.mxu0 %v10500
        %10623 = vmatprep.subr.bf16.mxu0 0
        %10624 = vmatpush1.bf16.msra.mxu0 %v10499
        %10625 = vmatprep.subr.bf16.mxu0 0
        %10626 = vmatpush1.bf16.msra.mxu0 %v10498
        %10627 = vmatprep.subr.bf16.mxu0 0
        %10628 = vmatpush1.bf16.msra.mxu0 %v10497
        %10629 = vmatprep.subr.bf16.mxu0 0
        %10630 = vmatpush1.bf16.msra.mxu0 %v10496
        %10631 = vmatprep.subr.bf16.mxu0 0
        %10632 = vmatpush1.bf16.msra.mxu0 %v10495
        %10633 = vmatprep.subr.bf16.mxu0 0
        %10634 = vmatpush1.bf16.msra.mxu0 %v10494
        %10635 = vmatprep.subr.bf16.mxu0 0
        %10636 = vmatpush1.bf16.msra.mxu0 %v10493
        %10637 = vmatprep.subr.bf16.mxu0 0
        %10638 = vmatpush2.bf16.msra.mxu0 0
        %10639 = vmatprep.subr.bf16.mxu0 0
        %10640 = vmatpush2.bf16.msra.mxu0 0
        %10641 = vmatprep.subr.bf16.mxu0 0
        %10642 = vmatpush2.bf16.msra.mxu0 0
        %10643 = vmatprep.subr.bf16.mxu0 0
        %10644 = vmatpush2.bf16.msra.mxu0 0
        %10645 = vmatprep.subr.bf16.mxu0 0
        %10646 = vmatpush2.bf16.msra.mxu0 0
        %10647 = vmatprep.subr.bf16.mxu0 0
        %10648 = vmatpush2.bf16.msra.mxu0 0
        %10649 = vmatprep.subr.bf16.mxu0 0
        %10650 = vmatpush2.bf16.msra.mxu0 0
        %10651 = vmatprep.subr.bf16.mxu0 0
        %10652 = vmatpush2.bf16.msra.mxu0 0
        %10653 = vmatprep.mubr.bf16.mxu0 0
        %10654 = vmatmul.mubr.bf16.gmra.mxu0 %v10295
        %v10655 = vpop.f32.mrf.mxu0
        %v10656 = vadd.f32 %v10616, %v10655
        %v10657 = vpop.f32.mrf.mxu0
        %v10658 = vpop.f32.mrf.mxu0
        %v10659 = vpop.f32.mrf.mxu0
        %10660 = vdwg.mxu0
        %v10661 = vadd.f32 %v10195, %v10656
        %v10662 = vld [vmem:[#allocation2 + $0x24] sm:$0x77]
        %v10663 = vld [vmem:[#allocation2 + $0x2c] sm:$0x77]
        %v10664 = vld [vmem:[#allocation2 + $0x34] sm:$0x7]
        %v10665 = vld [vmem:[%s3511] sm:$0xf]
        %v10666 = vld [vmem:[%s3511 + $0x4] sm:$0xf]
        %v10667 = vld [vmem:[%s3511 + $0x8] sm:$0xf]
        %v10668 = vld [vmem:[%s3511 + $0xc] sm:$0xf]
        %v10669 = vld [vmem:[%s3511 + $0x10] sm:$0xf]
        %v10670 = vld [vmem:[%s3511 + $0x14] sm:$0xf]
        %v10671 = vld [vmem:[%s3511 + $0x18] sm:$0xf]
        %v10672 = vld [vmem:[%s3511 + $0x1c] sm:$0xf]
        %v10673 = vld [vmem:[%s3511 + $0x20] sm:$0xf]
        %v10674 = vld [vmem:[%s3511 + $0x24] sm:$0xf]
        %v10675 = vld [vmem:[%s3511 + $0x28] sm:$0xf]
        %v10676 = vld [vmem:[%s3511 + $0x2c] sm:$0xf]
        %v10677 = vld [vmem:[%s3511 + $0x30] sm:$0xf]
        %v10678 = vld [vmem:[%s3511 + $0x34] sm:$0xf]
        %v10679 = vld [vmem:[%s3511 + $0x38] sm:$0xf]
        %v10680 = vld [vmem:[%s3511 + $0x3c] sm:$0xf]
        %v10681 = vld [vmem:[%s3511 + $0x40] sm:$0xf]
        %v10682 = vld [vmem:[%s3511 + $0x44] sm:$0xf]
        %v10683 = vld [vmem:[%s3511 + $0x48] sm:$0xf]
        %v10684 = vld [vmem:[%s3511 + $0x4c] sm:$0xf]
        %v10685 = vld [vmem:[%s3511 + $0x50] sm:$0xf]
        %v10686 = vld [vmem:[%s3511 + $0x54] sm:$0xf]
        %v10687 = vld [vmem:[%s3511 + $0x58] sm:$0xf]
        %v10688 = vld [vmem:[%s3511 + $0x5c] sm:$0xf]
        %v10689 = vld [vmem:[%s3511 + $0x60] sm:$0xf]
        %v10690 = vld [vmem:[%s3511 + $0x64] sm:$0xf]
        %v10691 = vld [vmem:[%s3511 + $0x68] sm:$0xf]
        %v10692 = vld [vmem:[%s3511 + $0x6c] sm:$0xf]
        %v10693 = vld [vmem:[%s3511 + $0x70] sm:$0xf]
        %v10694 = vld [vmem:[%s3511 + $0x74] sm:$0xf]
        %v10695 = vld [vmem:[%s3511 + $0x78] sm:$0xf]
        %v10696 = vld [vmem:[%s3511 + $0x7c] sm:$0xf]
        %v10697 = vld [vmem:[%s3511 + $0x80] sm:$0xf]
        %v10698 = vld [vmem:[%s3511 + $0x84] sm:$0xf]
        %v10699 = vld [vmem:[%s3511 + $0x88] sm:$0xf]
        %v10700 = vld [vmem:[%s3511 + $0x8c] sm:$0xf]
        %v10701 = vld [vmem:[%s3511 + $0x90] sm:$0xf]
        %v10702 = vld [vmem:[%s3511 + $0x94] sm:$0xf]
        %v10703 = vld [vmem:[%s3511 + $0x98] sm:$0xf]
        %v10704 = vld [vmem:[%s3511 + $0x9c] sm:$0xf]
        %v10705 = vld [vmem:[%s3511 + $0xa0] sm:$0xf]
        %v10706 = vld [vmem:[%s3511 + $0xa4] sm:$0xf]
        %v10707 = vld [vmem:[%s3511 + $0xa8] sm:$0xf]
        %v10708 = vld [vmem:[%s3511 + $0xac] sm:$0xf]
        %v10709 = vld [vmem:[%s3511 + $0xb0] sm:$0xf]
        %v10710 = vld [vmem:[%s3511 + $0xb4] sm:$0xf]
        %v10711 = vld [vmem:[%s3511 + $0xb8] sm:$0xf]
        %v10712 = vld [vmem:[%s3511 + $0xbc] sm:$0xf]
        %v10713 = vld [vmem:[%s3511 + $0xc0] sm:$0xf]
        %v10714 = vld [vmem:[%s3511 + $0xc4] sm:$0xf]
        %v10715 = vld [vmem:[%s3511 + $0xc8] sm:$0xf]
        %v10716 = vld [vmem:[%s3511 + $0xcc] sm:$0xf]
        %v10717 = vld [vmem:[%s3511 + $0xd0] sm:$0xf]
        %v10718 = vld [vmem:[%s3511 + $0xd4] sm:$0xf]
        %v10719 = vld [vmem:[%s3511 + $0xd8] sm:$0xf]
        %v10720 = vld [vmem:[%s3511 + $0xdc] sm:$0xf]
        %v10721 = vld [vmem:[%s3511 + $0xe0] sm:$0xf]
        %v10722 = vld [vmem:[%s3511 + $0xe4] sm:$0xf]
        %v10723 = vld [vmem:[%s3511 + $0xe8] sm:$0xf]
        %v10724 = vld [vmem:[%s3511 + $0xec] sm:$0xf]
        %v10725 = vld [vmem:[%s3511 + $0xf0] sm:$0xf]
        %v10726 = vld [vmem:[%s3511 + $0xf4] sm:$0xf]
        %v10727 = vld [vmem:[%s3511 + $0xf8] sm:$0xf]
        %v10728 = vld [vmem:[%s3511 + $0xfc] sm:$0xf]
        %v10729 = vld [vmem:[%s3511 + $0x100] sm:$0xf]
        %v10730 = vld [vmem:[%s3511 + $0x104] sm:$0xf]
        %v10731 = vld [vmem:[%s3511 + $0x108] sm:$0xf]
        %v10732 = vld [vmem:[%s3511 + $0x10c] sm:$0xf]
        %v10733 = vld [vmem:[%s3511 + $0x110] sm:$0xf]
        %v10734 = vld [vmem:[%s3511 + $0x114] sm:$0xf]
        %v10735 = vld [vmem:[%s3511 + $0x118] sm:$0xf]
        %v10736 = vld [vmem:[%s3511 + $0x11c] sm:$0xf]
        %v10737 = vld [vmem:[%s3511 + $0x120] sm:$0xf]
        %v10738 = vld [vmem:[%s3511 + $0x124] sm:$0xf]
        %v10739 = vld [vmem:[%s3511 + $0x128] sm:$0xf]
        %v10740 = vld [vmem:[%s3511 + $0x12c] sm:$0xf]
        %v10741 = vld [vmem:[%s3511 + $0x130] sm:$0xf]
        %v10742 = vld [vmem:[%s3511 + $0x134] sm:$0xf]
        %v10743 = vld [vmem:[%s3511 + $0x138] sm:$0xf]
        %v10744 = vld [vmem:[%s3511 + $0x13c] sm:$0xf]
        %v10748 = vunpack.c.l.b16 %v10662
        %v10749 = vunpack.c.h.b16 %v10662
        %v10750 = vunpack.c.l.b16 %v10663
        %v10751 = vunpack.c.h.b16 %v10663
        %v10752 = vunpack.c.l.b16 %v10664
        %v10753 = vpack.c.b16 %v10748, %v10748
        %v10754 = vpack.c.b16 %v10749, %v10749
        %v10755 = vpack.c.b16 %v10750, %v10750
        %v10756 = vpack.c.b16 %v10751, %v10751
        %v10757 = vpack.c.b16 %v10752, %v10752
        %v10759 = vshrl.u32 %v10753, 16
        %v10761 = vshll.u32 %v10753, 16
        %v10763 = vrot.slane %v10761, 1
        %v10764 = vor.u32 %v10759, %v10763
        %v10766 = vshrl.u32 %v10754, 16
        %v10768 = vshll.u32 %v10754, 16
        %v10770 = vrot.slane %v10768, 1
        %v10771 = vor.u32 %v10766, %v10770
        %v10773 = vshrl.u32 %v10755, 16
        %v10775 = vshll.u32 %v10755, 16
        %v10777 = vrot.slane %v10775, 1
        %v10778 = vor.u32 %v10773, %v10777
        %v10780 = vshrl.u32 %v10756, 16
        %v10782 = vshll.u32 %v10756, 16
        %v10784 = vrot.slane %v10782, 1
        %v10785 = vor.u32 %v10780, %v10784
        %v10787 = vshrl.u32 %v10757, 16
        %v10789 = vshll.u32 %v10757, 16
        %v10791 = vrot.slane %v10789, 1
        %v10792 = vor.u32 %v10787, %v10791
        %v10878 = vunpack.c.l.b16 %v10665
        %v10879 = vunpack.c.l.b16 %v10666
        %v10880 = vunpack.c.l.b16 %v10667
        %v10881 = vunpack.c.l.b16 %v10668
        %v10882 = vunpack.c.l.b16 %v10669
        %v10883 = vunpack.c.l.b16 %v10670
        %v10884 = vunpack.c.l.b16 %v10671
        %v10885 = vunpack.c.l.b16 %v10672
        %v10886 = vunpack.c.l.b16 %v10673
        %v10887 = vunpack.c.l.b16 %v10674
        %v10888 = vunpack.c.l.b16 %v10675
        %v10889 = vunpack.c.l.b16 %v10676
        %v10890 = vunpack.c.l.b16 %v10677
        %v10891 = vunpack.c.l.b16 %v10678
        %v10892 = vunpack.c.l.b16 %v10679
        %v10893 = vunpack.c.l.b16 %v10680
        %v10894 = vunpack.c.l.b16 %v10681
        %v10895 = vunpack.c.l.b16 %v10682
        %v10896 = vunpack.c.l.b16 %v10683
        %v10897 = vunpack.c.l.b16 %v10684
        %v10898 = vunpack.c.l.b16 %v10685
        %v10899 = vunpack.c.l.b16 %v10686
        %v10900 = vunpack.c.l.b16 %v10687
        %v10901 = vunpack.c.l.b16 %v10688
        %v10902 = vunpack.c.l.b16 %v10689
        %v10903 = vunpack.c.l.b16 %v10690
        %v10904 = vunpack.c.l.b16 %v10691
        %v10905 = vunpack.c.l.b16 %v10692
        %v10906 = vunpack.c.l.b16 %v10693
        %v10907 = vunpack.c.l.b16 %v10694
        %v10908 = vunpack.c.l.b16 %v10695
        %v10909 = vunpack.c.l.b16 %v10696
        %v10910 = vunpack.c.l.b16 %v10697
        %v10911 = vunpack.c.l.b16 %v10698
        %v10912 = vunpack.c.l.b16 %v10699
        %v10913 = vunpack.c.l.b16 %v10700
        %v10914 = vunpack.c.l.b16 %v10701
        %v10915 = vunpack.c.l.b16 %v10702
        %v10916 = vunpack.c.l.b16 %v10703
        %v10917 = vunpack.c.l.b16 %v10704
        %v10918 = vunpack.c.l.b16 %v10705
        %v10919 = vunpack.c.l.b16 %v10706
        %v10920 = vunpack.c.l.b16 %v10707
        %v10921 = vunpack.c.l.b16 %v10708
        %v10922 = vunpack.c.l.b16 %v10709
        %v10923 = vunpack.c.l.b16 %v10710
        %v10924 = vunpack.c.l.b16 %v10711
        %v10925 = vunpack.c.l.b16 %v10712
        %v10926 = vunpack.c.l.b16 %v10713
        %v10927 = vunpack.c.l.b16 %v10714
        %v10928 = vunpack.c.l.b16 %v10715
        %v10929 = vunpack.c.l.b16 %v10716
        %v10930 = vunpack.c.l.b16 %v10717
        %v10931 = vunpack.c.l.b16 %v10718
        %v10932 = vunpack.c.l.b16 %v10719
        %v10933 = vunpack.c.l.b16 %v10720
        %v10934 = vunpack.c.l.b16 %v10721
        %v10935 = vunpack.c.l.b16 %v10722
        %v10936 = vunpack.c.l.b16 %v10723
        %v10937 = vunpack.c.l.b16 %v10724
        %v10938 = vunpack.c.l.b16 %v10725
        %v10939 = vunpack.c.l.b16 %v10726
        %v10940 = vunpack.c.l.b16 %v10727
        %v10941 = vunpack.c.l.b16 %v10728
        %v10942 = vunpack.c.l.b16 %v10729
        %v10943 = vunpack.c.l.b16 %v10730
        %v10944 = vunpack.c.l.b16 %v10731
        %v10945 = vunpack.c.l.b16 %v10732
        %v10946 = vunpack.c.l.b16 %v10733
        %v10947 = vunpack.c.l.b16 %v10734
        %v10948 = vunpack.c.l.b16 %v10735
        %v10949 = vunpack.c.l.b16 %v10736
        %v10950 = vunpack.c.l.b16 %v10737
        %v10951 = vunpack.c.l.b16 %v10738
        %v10952 = vunpack.c.l.b16 %v10739
        %v10953 = vunpack.c.l.b16 %v10740
        %v10954 = vunpack.c.l.b16 %v10741
        %v10955 = vunpack.c.l.b16 %v10742
        %v10956 = vunpack.c.l.b16 %v10743
        %v10957 = vunpack.c.l.b16 %v10744
        %v10958 = vpack.c.b16 %v10879, %v10878
        %v10959 = vpack.c.b16 %v10881, %v10880
        %v10960 = vpack.c.b16 %v10883, %v10882
        %v10961 = vpack.c.b16 %v10885, %v10884
        %v10962 = vpack.c.b16 %v10887, %v10886
        %v10963 = vpack.c.b16 %v10889, %v10888
        %v10964 = vpack.c.b16 %v10891, %v10890
        %v10965 = vpack.c.b16 %v10893, %v10892
        %v10966 = vpack.c.b16 %v10895, %v10894
        %v10967 = vpack.c.b16 %v10897, %v10896
        %v10968 = vpack.c.b16 %v10899, %v10898
        %v10969 = vpack.c.b16 %v10901, %v10900
        %v10970 = vpack.c.b16 %v10903, %v10902
        %v10971 = vpack.c.b16 %v10905, %v10904
        %v10972 = vpack.c.b16 %v10907, %v10906
        %v10973 = vpack.c.b16 %v10909, %v10908
        %v10974 = vpack.c.b16 %v10911, %v10910
        %v10975 = vpack.c.b16 %v10913, %v10912
        %v10976 = vpack.c.b16 %v10915, %v10914
        %v10977 = vpack.c.b16 %v10917, %v10916
        %v10978 = vpack.c.b16 %v10919, %v10918
        %v10979 = vpack.c.b16 %v10921, %v10920
        %v10980 = vpack.c.b16 %v10923, %v10922
        %v10981 = vpack.c.b16 %v10925, %v10924
        %v10982 = vpack.c.b16 %v10927, %v10926
        %v10983 = vpack.c.b16 %v10929, %v10928
        %v10984 = vpack.c.b16 %v10931, %v10930
        %v10985 = vpack.c.b16 %v10933, %v10932
        %v10986 = vpack.c.b16 %v10935, %v10934
        %v10987 = vpack.c.b16 %v10937, %v10936
        %v10988 = vpack.c.b16 %v10939, %v10938
        %v10989 = vpack.c.b16 %v10941, %v10940
        %v10990 = vpack.c.b16 %v10943, %v10942
        %v10991 = vpack.c.b16 %v10945, %v10944
        %v10992 = vpack.c.b16 %v10947, %v10946
        %v10993 = vpack.c.b16 %v10949, %v10948
        %v10994 = vpack.c.b16 %v10951, %v10950
        %v10995 = vpack.c.b16 %v10953, %v10952
        %v10996 = vpack.c.b16 %v10955, %v10954
        %v10997 = vpack.c.b16 %v10957, %v10956
        %11038 = vmatprep.subr.bf16.mxu0 0
        %11039 = vmatpush1.bf16.msra.mxu0 %v10965
        %11040 = vmatprep.subr.bf16.mxu0 0
        %11041 = vmatpush1.bf16.msra.mxu0 %v10964
        %11042 = vmatprep.subr.bf16.mxu0 0
        %11043 = vmatpush1.bf16.msra.mxu0 %v10963
        %11044 = vmatprep.subr.bf16.mxu0 0
        %11045 = vmatpush1.bf16.msra.mxu0 %v10962
        %11046 = vmatprep.subr.bf16.mxu0 0
        %11047 = vmatpush1.bf16.msra.mxu0 %v10961
        %11048 = vmatprep.subr.bf16.mxu0 0
        %11049 = vmatpush1.bf16.msra.mxu0 %v10960
        %11050 = vmatprep.subr.bf16.mxu0 0
        %11051 = vmatpush1.bf16.msra.mxu0 %v10959
        %11052 = vmatprep.subr.bf16.mxu0 0
        %11053 = vmatpush1.bf16.msra.mxu0 %v10958
        %11054 = vmatprep.subr.bf16.mxu0 0
        %11055 = vmatpush2.bf16.msra.mxu0 %v10973
        %11056 = vmatprep.subr.bf16.mxu0 0
        %11057 = vmatpush2.bf16.msra.mxu0 %v10972
        %11058 = vmatprep.subr.bf16.mxu0 0
        %11059 = vmatpush2.bf16.msra.mxu0 %v10971
        %11060 = vmatprep.subr.bf16.mxu0 0
        %11061 = vmatpush2.bf16.msra.mxu0 %v10970
        %11062 = vmatprep.subr.bf16.mxu0 0
        %11063 = vmatpush2.bf16.msra.mxu0 %v10969
        %11064 = vmatprep.subr.bf16.mxu0 0
        %11065 = vmatpush2.bf16.msra.mxu0 %v10968
        %11066 = vmatprep.subr.bf16.mxu0 0
        %11067 = vmatpush2.bf16.msra.mxu0 %v10967
        %11068 = vmatprep.subr.bf16.mxu0 0
        %11069 = vmatpush2.bf16.msra.mxu0 %v10966
        %11070 = vmatprep.mubr.bf16.mxu0 %v10771
        %11071 = vmatmul.mubr.bf16.gmra.mxu0 %v10764
        %v11072 = vpop.f32.mrf.mxu0
        %v11073 = vadd.f32 0.0, %v11072
        %v11074 = vpop.f32.mrf.mxu0
        %v11075 = vpop.f32.mrf.mxu0
        %v11076 = vpop.f32.mrf.mxu0
        %11077 = vdwg.mxu0
        %11078 = vmatprep.subr.bf16.mxu0 0
        %11079 = vmatpush1.bf16.msra.mxu0 %v10981
        %11080 = vmatprep.subr.bf16.mxu0 0
        %11081 = vmatpush1.bf16.msra.mxu0 %v10980
        %11082 = vmatprep.subr.bf16.mxu0 0
        %11083 = vmatpush1.bf16.msra.mxu0 %v10979
        %11084 = vmatprep.subr.bf16.mxu0 0
        %11085 = vmatpush1.bf16.msra.mxu0 %v10978
        %11086 = vmatprep.subr.bf16.mxu0 0
        %11087 = vmatpush1.bf16.msra.mxu0 %v10977
        %11088 = vmatprep.subr.bf16.mxu0 0
        %11089 = vmatpush1.bf16.msra.mxu0 %v10976
        %11090 = vmatprep.subr.bf16.mxu0 0
        %11091 = vmatpush1.bf16.msra.mxu0 %v10975
        %11092 = vmatprep.subr.bf16.mxu0 0
        %11093 = vmatpush1.bf16.msra.mxu0 %v10974
        %11094 = vmatprep.subr.bf16.mxu0 0
        %11095 = vmatpush2.bf16.msra.mxu0 %v10989
        %11096 = vmatprep.subr.bf16.mxu0 0
        %11097 = vmatpush2.bf16.msra.mxu0 %v10988
        %11098 = vmatprep.subr.bf16.mxu0 0
        %11099 = vmatpush2.bf16.msra.mxu0 %v10987
        %11100 = vmatprep.subr.bf16.mxu0 0
        %11101 = vmatpush2.bf16.msra.mxu0 %v10986
        %11102 = vmatprep.subr.bf16.mxu0 0
        %11103 = vmatpush2.bf16.msra.mxu0 %v10985
        %11104 = vmatprep.subr.bf16.mxu0 0
        %11105 = vmatpush2.bf16.msra.mxu0 %v10984
        %11106 = vmatprep.subr.bf16.mxu0 0
        %11107 = vmatpush2.bf16.msra.mxu0 %v10983
        %11108 = vmatprep.subr.bf16.mxu0 0
        %11109 = vmatpush2.bf16.msra.mxu0 %v10982
        %11110 = vmatprep.mubr.bf16.mxu0 %v10785
        %11111 = vmatmul.mubr.bf16.gmra.mxu0 %v10778
        %v11112 = vpop.f32.mrf.mxu0
        %v11113 = vadd.f32 %v11073, %v11112
        %v11114 = vpop.f32.mrf.mxu0
        %v11115 = vpop.f32.mrf.mxu0
        %v11116 = vpop.f32.mrf.mxu0
        %11117 = vdwg.mxu0
        %11118 = vmatprep.subr.bf16.mxu0 0
        %11119 = vmatpush1.bf16.msra.mxu0 %v10997
        %11120 = vmatprep.subr.bf16.mxu0 0
        %11121 = vmatpush1.bf16.msra.mxu0 %v10996
        %11122 = vmatprep.subr.bf16.mxu0 0
        %11123 = vmatpush1.bf16.msra.mxu0 %v10995
        %11124 = vmatprep.subr.bf16.mxu0 0
        %11125 = vmatpush1.bf16.msra.mxu0 %v10994
        %11126 = vmatprep.subr.bf16.mxu0 0
        %11127 = vmatpush1.bf16.msra.mxu0 %v10993
        %11128 = vmatprep.subr.bf16.mxu0 0
        %11129 = vmatpush1.bf16.msra.mxu0 %v10992
        %11130 = vmatprep.subr.bf16.mxu0 0
        %11131 = vmatpush1.bf16.msra.mxu0 %v10991
        %11132 = vmatprep.subr.bf16.mxu0 0
        %11133 = vmatpush1.bf16.msra.mxu0 %v10990
        %11134 = vmatprep.subr.bf16.mxu0 0
        %11135 = vmatpush2.bf16.msra.mxu0 0
        %11136 = vmatprep.subr.bf16.mxu0 0
        %11137 = vmatpush2.bf16.msra.mxu0 0
        %11138 = vmatprep.subr.bf16.mxu0 0
        %11139 = vmatpush2.bf16.msra.mxu0 0
        %11140 = vmatprep.subr.bf16.mxu0 0
        %11141 = vmatpush2.bf16.msra.mxu0 0
        %11142 = vmatprep.subr.bf16.mxu0 0
        %11143 = vmatpush2.bf16.msra.mxu0 0
        %11144 = vmatprep.subr.bf16.mxu0 0
        %11145 = vmatpush2.bf16.msra.mxu0 0
        %11146 = vmatprep.subr.bf16.mxu0 0
        %11147 = vmatpush2.bf16.msra.mxu0 0
        %11148 = vmatprep.subr.bf16.mxu0 0
        %11149 = vmatpush2.bf16.msra.mxu0 0
        %11150 = vmatprep.mubr.bf16.mxu0 0
        %11151 = vmatmul.mubr.bf16.gmra.mxu0 %v10792
        %v11152 = vpop.f32.mrf.mxu0
        %v11153 = vadd.f32 %v11113, %v11152
        %v11154 = vpop.f32.mrf.mxu0
        %v11155 = vpop.f32.mrf.mxu0
        %v11156 = vpop.f32.mrf.mxu0
        %11157 = vdwg.mxu0
        %v11158 = vadd.f32 %v10661, %v11153
        %v11159 = vld [vmem:[%s1091 + $0x24] sm:$0x77]
        %v11160 = vld [vmem:[%s1091 + $0x2c] sm:$0x77]
        %v11161 = vld [vmem:[%s1091 + $0x34] sm:$0x7]
        %v11162 = vld [vmem:[%s4009] sm:$0xf]
        %v11163 = vld [vmem:[%s4009 + $0x4] sm:$0xf]
        %v11164 = vld [vmem:[%s4009 + $0x8] sm:$0xf]
        %v11165 = vld [vmem:[%s4009 + $0xc] sm:$0xf]
        %v11166 = vld [vmem:[%s4009 + $0x10] sm:$0xf]
        %v11167 = vld [vmem:[%s4009 + $0x14] sm:$0xf]
        %v11168 = vld [vmem:[%s4009 + $0x18] sm:$0xf]
        %v11169 = vld [vmem:[%s4009 + $0x1c] sm:$0xf]
        %v11170 = vld [vmem:[%s4009 + $0x20] sm:$0xf]
        %v11171 = vld [vmem:[%s4009 + $0x24] sm:$0xf]
        %v11172 = vld [vmem:[%s4009 + $0x28] sm:$0xf]
        %v11173 = vld [vmem:[%s4009 + $0x2c] sm:$0xf]
        %v11174 = vld [vmem:[%s4009 + $0x30] sm:$0xf]
        %v11175 = vld [vmem:[%s4009 + $0x34] sm:$0xf]
        %v11176 = vld [vmem:[%s4009 + $0x38] sm:$0xf]
        %v11177 = vld [vmem:[%s4009 + $0x3c] sm:$0xf]
        %v11178 = vld [vmem:[%s4009 + $0x40] sm:$0xf]
        %v11179 = vld [vmem:[%s4009 + $0x44] sm:$0xf]
        %v11180 = vld [vmem:[%s4009 + $0x48] sm:$0xf]
        %v11181 = vld [vmem:[%s4009 + $0x4c] sm:$0xf]
        %v11182 = vld [vmem:[%s4009 + $0x50] sm:$0xf]
        %v11183 = vld [vmem:[%s4009 + $0x54] sm:$0xf]
        %v11184 = vld [vmem:[%s4009 + $0x58] sm:$0xf]
        %v11185 = vld [vmem:[%s4009 + $0x5c] sm:$0xf]
        %v11186 = vld [vmem:[%s4009 + $0x60] sm:$0xf]
        %v11187 = vld [vmem:[%s4009 + $0x64] sm:$0xf]
        %v11188 = vld [vmem:[%s4009 + $0x68] sm:$0xf]
        %v11189 = vld [vmem:[%s4009 + $0x6c] sm:$0xf]
        %v11190 = vld [vmem:[%s4009 + $0x70] sm:$0xf]
        %v11191 = vld [vmem:[%s4009 + $0x74] sm:$0xf]
        %v11192 = vld [vmem:[%s4009 + $0x78] sm:$0xf]
        %v11193 = vld [vmem:[%s4009 + $0x7c] sm:$0xf]
        %v11194 = vld [vmem:[%s4009 + $0x80] sm:$0xf]
        %v11195 = vld [vmem:[%s4009 + $0x84] sm:$0xf]
        %v11196 = vld [vmem:[%s4009 + $0x88] sm:$0xf]
        %v11197 = vld [vmem:[%s4009 + $0x8c] sm:$0xf]
        %v11198 = vld [vmem:[%s4009 + $0x90] sm:$0xf]
        %v11199 = vld [vmem:[%s4009 + $0x94] sm:$0xf]
        %v11200 = vld [vmem:[%s4009 + $0x98] sm:$0xf]
        %v11201 = vld [vmem:[%s4009 + $0x9c] sm:$0xf]
        %v11202 = vld [vmem:[%s4009 + $0xa0] sm:$0xf]
        %v11203 = vld [vmem:[%s4009 + $0xa4] sm:$0xf]
        %v11204 = vld [vmem:[%s4009 + $0xa8] sm:$0xf]
        %v11205 = vld [vmem:[%s4009 + $0xac] sm:$0xf]
        %v11206 = vld [vmem:[%s4009 + $0xb0] sm:$0xf]
        %v11207 = vld [vmem:[%s4009 + $0xb4] sm:$0xf]
        %v11208 = vld [vmem:[%s4009 + $0xb8] sm:$0xf]
        %v11209 = vld [vmem:[%s4009 + $0xbc] sm:$0xf]
        %v11210 = vld [vmem:[%s4009 + $0xc0] sm:$0xf]
        %v11211 = vld [vmem:[%s4009 + $0xc4] sm:$0xf]
        %v11212 = vld [vmem:[%s4009 + $0xc8] sm:$0xf]
        %v11213 = vld [vmem:[%s4009 + $0xcc] sm:$0xf]
        %v11214 = vld [vmem:[%s4009 + $0xd0] sm:$0xf]
        %v11215 = vld [vmem:[%s4009 + $0xd4] sm:$0xf]
        %v11216 = vld [vmem:[%s4009 + $0xd8] sm:$0xf]
        %v11217 = vld [vmem:[%s4009 + $0xdc] sm:$0xf]
        %v11218 = vld [vmem:[%s4009 + $0xe0] sm:$0xf]
        %v11219 = vld [vmem:[%s4009 + $0xe4] sm:$0xf]
        %v11220 = vld [vmem:[%s4009 + $0xe8] sm:$0xf]
        %v11221 = vld [vmem:[%s4009 + $0xec] sm:$0xf]
        %v11222 = vld [vmem:[%s4009 + $0xf0] sm:$0xf]
        %v11223 = vld [vmem:[%s4009 + $0xf4] sm:$0xf]
        %v11224 = vld [vmem:[%s4009 + $0xf8] sm:$0xf]
        %v11225 = vld [vmem:[%s4009 + $0xfc] sm:$0xf]
        %v11226 = vld [vmem:[%s4009 + $0x100] sm:$0xf]
        %v11227 = vld [vmem:[%s4009 + $0x104] sm:$0xf]
        %v11228 = vld [vmem:[%s4009 + $0x108] sm:$0xf]
        %v11229 = vld [vmem:[%s4009 + $0x10c] sm:$0xf]
        %v11230 = vld [vmem:[%s4009 + $0x110] sm:$0xf]
        %v11231 = vld [vmem:[%s4009 + $0x114] sm:$0xf]
        %v11232 = vld [vmem:[%s4009 + $0x118] sm:$0xf]
        %v11233 = vld [vmem:[%s4009 + $0x11c] sm:$0xf]
        %v11234 = vld [vmem:[%s4009 + $0x120] sm:$0xf]
        %v11235 = vld [vmem:[%s4009 + $0x124] sm:$0xf]
        %v11236 = vld [vmem:[%s4009 + $0x128] sm:$0xf]
        %v11237 = vld [vmem:[%s4009 + $0x12c] sm:$0xf]
        %v11238 = vld [vmem:[%s4009 + $0x130] sm:$0xf]
        %v11239 = vld [vmem:[%s4009 + $0x134] sm:$0xf]
        %v11240 = vld [vmem:[%s4009 + $0x138] sm:$0xf]
        %v11241 = vld [vmem:[%s4009 + $0x13c] sm:$0xf]
        %v11245 = vunpack.c.l.b16 %v11159
        %v11246 = vunpack.c.h.b16 %v11159
        %v11247 = vunpack.c.l.b16 %v11160
        %v11248 = vunpack.c.h.b16 %v11160
        %v11249 = vunpack.c.l.b16 %v11161
        %v11250 = vpack.c.b16 %v11245, %v11245
        %v11251 = vpack.c.b16 %v11246, %v11246
        %v11252 = vpack.c.b16 %v11247, %v11247
        %v11253 = vpack.c.b16 %v11248, %v11248
        %v11254 = vpack.c.b16 %v11249, %v11249
        %v11256 = vshrl.u32 %v11250, 16
        %v11258 = vshll.u32 %v11250, 16
        %v11260 = vrot.slane %v11258, 1
        %v11261 = vor.u32 %v11256, %v11260
        %v11263 = vshrl.u32 %v11251, 16
        %v11265 = vshll.u32 %v11251, 16
        %v11267 = vrot.slane %v11265, 1
        %v11268 = vor.u32 %v11263, %v11267
        %v11270 = vshrl.u32 %v11252, 16
        %v11272 = vshll.u32 %v11252, 16
        %v11274 = vrot.slane %v11272, 1
        %v11275 = vor.u32 %v11270, %v11274
        %v11277 = vshrl.u32 %v11253, 16
        %v11279 = vshll.u32 %v11253, 16
        %v11281 = vrot.slane %v11279, 1
        %v11282 = vor.u32 %v11277, %v11281
        %v11284 = vshrl.u32 %v11254, 16
        %v11286 = vshll.u32 %v11254, 16
        %v11288 = vrot.slane %v11286, 1
        %v11289 = vor.u32 %v11284, %v11288
        %v11375 = vunpack.c.l.b16 %v11162
        %v11376 = vunpack.c.l.b16 %v11163
        %v11377 = vunpack.c.l.b16 %v11164
        %v11378 = vunpack.c.l.b16 %v11165
        %v11379 = vunpack.c.l.b16 %v11166
        %v11380 = vunpack.c.l.b16 %v11167
        %v11381 = vunpack.c.l.b16 %v11168
        %v11382 = vunpack.c.l.b16 %v11169
        %v11383 = vunpack.c.l.b16 %v11170
        %v11384 = vunpack.c.l.b16 %v11171
        %v11385 = vunpack.c.l.b16 %v11172
        %v11386 = vunpack.c.l.b16 %v11173
        %v11387 = vunpack.c.l.b16 %v11174
        %v11388 = vunpack.c.l.b16 %v11175
        %v11389 = vunpack.c.l.b16 %v11176
        %v11390 = vunpack.c.l.b16 %v11177
        %v11391 = vunpack.c.l.b16 %v11178
        %v11392 = vunpack.c.l.b16 %v11179
        %v11393 = vunpack.c.l.b16 %v11180
        %v11394 = vunpack.c.l.b16 %v11181
        %v11395 = vunpack.c.l.b16 %v11182
        %v11396 = vunpack.c.l.b16 %v11183
        %v11397 = vunpack.c.l.b16 %v11184
        %v11398 = vunpack.c.l.b16 %v11185
        %v11399 = vunpack.c.l.b16 %v11186
        %v11400 = vunpack.c.l.b16 %v11187
        %v11401 = vunpack.c.l.b16 %v11188
        %v11402 = vunpack.c.l.b16 %v11189
        %v11403 = vunpack.c.l.b16 %v11190
        %v11404 = vunpack.c.l.b16 %v11191
        %v11405 = vunpack.c.l.b16 %v11192
        %v11406 = vunpack.c.l.b16 %v11193
        %v11407 = vunpack.c.l.b16 %v11194
        %v11408 = vunpack.c.l.b16 %v11195
        %v11409 = vunpack.c.l.b16 %v11196
        %v11410 = vunpack.c.l.b16 %v11197
        %v11411 = vunpack.c.l.b16 %v11198
        %v11412 = vunpack.c.l.b16 %v11199
        %v11413 = vunpack.c.l.b16 %v11200
        %v11414 = vunpack.c.l.b16 %v11201
        %v11415 = vunpack.c.l.b16 %v11202
        %v11416 = vunpack.c.l.b16 %v11203
        %v11417 = vunpack.c.l.b16 %v11204
        %v11418 = vunpack.c.l.b16 %v11205
        %v11419 = vunpack.c.l.b16 %v11206
        %v11420 = vunpack.c.l.b16 %v11207
        %v11421 = vunpack.c.l.b16 %v11208
        %v11422 = vunpack.c.l.b16 %v11209
        %v11423 = vunpack.c.l.b16 %v11210
        %v11424 = vunpack.c.l.b16 %v11211
        %v11425 = vunpack.c.l.b16 %v11212
        %v11426 = vunpack.c.l.b16 %v11213
        %v11427 = vunpack.c.l.b16 %v11214
        %v11428 = vunpack.c.l.b16 %v11215
        %v11429 = vunpack.c.l.b16 %v11216
        %v11430 = vunpack.c.l.b16 %v11217
        %v11431 = vunpack.c.l.b16 %v11218
        %v11432 = vunpack.c.l.b16 %v11219
        %v11433 = vunpack.c.l.b16 %v11220
        %v11434 = vunpack.c.l.b16 %v11221
        %v11435 = vunpack.c.l.b16 %v11222
        %v11436 = vunpack.c.l.b16 %v11223
        %v11437 = vunpack.c.l.b16 %v11224
        %v11438 = vunpack.c.l.b16 %v11225
        %v11439 = vunpack.c.l.b16 %v11226
        %v11440 = vunpack.c.l.b16 %v11227
        %v11441 = vunpack.c.l.b16 %v11228
        %v11442 = vunpack.c.l.b16 %v11229
        %v11443 = vunpack.c.l.b16 %v11230
        %v11444 = vunpack.c.l.b16 %v11231
        %v11445 = vunpack.c.l.b16 %v11232
        %v11446 = vunpack.c.l.b16 %v11233
        %v11447 = vunpack.c.l.b16 %v11234
        %v11448 = vunpack.c.l.b16 %v11235
        %v11449 = vunpack.c.l.b16 %v11236
        %v11450 = vunpack.c.l.b16 %v11237
        %v11451 = vunpack.c.l.b16 %v11238
        %v11452 = vunpack.c.l.b16 %v11239
        %v11453 = vunpack.c.l.b16 %v11240
        %v11454 = vunpack.c.l.b16 %v11241
        %v11455 = vpack.c.b16 %v11376, %v11375
        %v11456 = vpack.c.b16 %v11378, %v11377
        %v11457 = vpack.c.b16 %v11380, %v11379
        %v11458 = vpack.c.b16 %v11382, %v11381
        %v11459 = vpack.c.b16 %v11384, %v11383
        %v11460 = vpack.c.b16 %v11386, %v11385
        %v11461 = vpack.c.b16 %v11388, %v11387
        %v11462 = vpack.c.b16 %v11390, %v11389
        %v11463 = vpack.c.b16 %v11392, %v11391
        %v11464 = vpack.c.b16 %v11394, %v11393
        %v11465 = vpack.c.b16 %v11396, %v11395
        %v11466 = vpack.c.b16 %v11398, %v11397
        %v11467 = vpack.c.b16 %v11400, %v11399
        %v11468 = vpack.c.b16 %v11402, %v11401
        %v11469 = vpack.c.b16 %v11404, %v11403
        %v11470 = vpack.c.b16 %v11406, %v11405
        %v11471 = vpack.c.b16 %v11408, %v11407
        %v11472 = vpack.c.b16 %v11410, %v11409
        %v11473 = vpack.c.b16 %v11412, %v11411
        %v11474 = vpack.c.b16 %v11414, %v11413
        %v11475 = vpack.c.b16 %v11416, %v11415
        %v11476 = vpack.c.b16 %v11418, %v11417
        %v11477 = vpack.c.b16 %v11420, %v11419
        %v11478 = vpack.c.b16 %v11422, %v11421
        %v11479 = vpack.c.b16 %v11424, %v11423
        %v11480 = vpack.c.b16 %v11426, %v11425
        %v11481 = vpack.c.b16 %v11428, %v11427
        %v11482 = vpack.c.b16 %v11430, %v11429
        %v11483 = vpack.c.b16 %v11432, %v11431
        %v11484 = vpack.c.b16 %v11434, %v11433
        %v11485 = vpack.c.b16 %v11436, %v11435
        %v11486 = vpack.c.b16 %v11438, %v11437
        %v11487 = vpack.c.b16 %v11440, %v11439
        %v11488 = vpack.c.b16 %v11442, %v11441
        %v11489 = vpack.c.b16 %v11444, %v11443
        %v11490 = vpack.c.b16 %v11446, %v11445
        %v11491 = vpack.c.b16 %v11448, %v11447
        %v11492 = vpack.c.b16 %v11450, %v11449
        %v11493 = vpack.c.b16 %v11452, %v11451
        %v11494 = vpack.c.b16 %v11454, %v11453
        %11535 = vmatprep.subr.bf16.mxu0 0
        %11536 = vmatpush1.bf16.msra.mxu0 %v11462
        %11537 = vmatprep.subr.bf16.mxu0 0
        %11538 = vmatpush1.bf16.msra.mxu0 %v11461
        %11539 = vmatprep.subr.bf16.mxu0 0
        %11540 = vmatpush1.bf16.msra.mxu0 %v11460
        %11541 = vmatprep.subr.bf16.mxu0 0
        %11542 = vmatpush1.bf16.msra.mxu0 %v11459
        %11543 = vmatprep.subr.bf16.mxu0 0
        %11544 = vmatpush1.bf16.msra.mxu0 %v11458
        %11545 = vmatprep.subr.bf16.mxu0 0
        %11546 = vmatpush1.bf16.msra.mxu0 %v11457
        %11547 = vmatprep.subr.bf16.mxu0 0
        %11548 = vmatpush1.bf16.msra.mxu0 %v11456
        %11549 = vmatprep.subr.bf16.mxu0 0
        %11550 = vmatpush1.bf16.msra.mxu0 %v11455
        %11551 = vmatprep.subr.bf16.mxu0 0
        %11552 = vmatpush2.bf16.msra.mxu0 %v11470
        %11553 = vmatprep.subr.bf16.mxu0 0
        %11554 = vmatpush2.bf16.msra.mxu0 %v11469
        %11555 = vmatprep.subr.bf16.mxu0 0
        %11556 = vmatpush2.bf16.msra.mxu0 %v11468
        %11557 = vmatprep.subr.bf16.mxu0 0
        %11558 = vmatpush2.bf16.msra.mxu0 %v11467
        %11559 = vmatprep.subr.bf16.mxu0 0
        %11560 = vmatpush2.bf16.msra.mxu0 %v11466
        %11561 = vmatprep.subr.bf16.mxu0 0
        %11562 = vmatpush2.bf16.msra.mxu0 %v11465
        %11563 = vmatprep.subr.bf16.mxu0 0
        %11564 = vmatpush2.bf16.msra.mxu0 %v11464
        %11565 = vmatprep.subr.bf16.mxu0 0
        %11566 = vmatpush2.bf16.msra.mxu0 %v11463
        %11567 = vmatprep.mubr.bf16.mxu0 %v11268
        %11568 = vmatmul.mubr.bf16.gmra.mxu0 %v11261
        %v11569 = vpop.f32.mrf.mxu0
        %v11570 = vadd.f32 0.0, %v11569
        %v11571 = vpop.f32.mrf.mxu0
        %v11572 = vpop.f32.mrf.mxu0
        %v11573 = vpop.f32.mrf.mxu0
        %11574 = vdwg.mxu0
        %11575 = vmatprep.subr.bf16.mxu0 0
        %11576 = vmatpush1.bf16.msra.mxu0 %v11478
        %11577 = vmatprep.subr.bf16.mxu0 0
        %11578 = vmatpush1.bf16.msra.mxu0 %v11477
        %11579 = vmatprep.subr.bf16.mxu0 0
        %11580 = vmatpush1.bf16.msra.mxu0 %v11476
        %11581 = vmatprep.subr.bf16.mxu0 0
        %11582 = vmatpush1.bf16.msra.mxu0 %v11475
        %11583 = vmatprep.subr.bf16.mxu0 0
        %11584 = vmatpush1.bf16.msra.mxu0 %v11474
        %11585 = vmatprep.subr.bf16.mxu0 0
        %11586 = vmatpush1.bf16.msra.mxu0 %v11473
        %11587 = vmatprep.subr.bf16.mxu0 0
        %11588 = vmatpush1.bf16.msra.mxu0 %v11472
        %11589 = vmatprep.subr.bf16.mxu0 0
        %11590 = vmatpush1.bf16.msra.mxu0 %v11471
        %11591 = vmatprep.subr.bf16.mxu0 0
        %11592 = vmatpush2.bf16.msra.mxu0 %v11486
        %11593 = vmatprep.subr.bf16.mxu0 0
        %11594 = vmatpush2.bf16.msra.mxu0 %v11485
        %11595 = vmatprep.subr.bf16.mxu0 0
        %11596 = vmatpush2.bf16.msra.mxu0 %v11484
        %11597 = vmatprep.subr.bf16.mxu0 0
        %11598 = vmatpush2.bf16.msra.mxu0 %v11483
        %11599 = vmatprep.subr.bf16.mxu0 0
        %11600 = vmatpush2.bf16.msra.mxu0 %v11482
        %11601 = vmatprep.subr.bf16.mxu0 0
        %11602 = vmatpush2.bf16.msra.mxu0 %v11481
        %11603 = vmatprep.subr.bf16.mxu0 0
        %11604 = vmatpush2.bf16.msra.mxu0 %v11480
        %11605 = vmatprep.subr.bf16.mxu0 0
        %11606 = vmatpush2.bf16.msra.mxu0 %v11479
        %11607 = vmatprep.mubr.bf16.mxu0 %v11282
        %11608 = vmatmul.mubr.bf16.gmra.mxu0 %v11275
        %v11609 = vpop.f32.mrf.mxu0
        %v11610 = vadd.f32 %v11570, %v11609
        %v11611 = vpop.f32.mrf.mxu0
        %v11612 = vpop.f32.mrf.mxu0
        %v11613 = vpop.f32.mrf.mxu0
        %11614 = vdwg.mxu0
        %11615 = vmatprep.subr.bf16.mxu0 0
        %11616 = vmatpush1.bf16.msra.mxu0 %v11494
        %11617 = vmatprep.subr.bf16.mxu0 0
        %11618 = vmatpush1.bf16.msra.mxu0 %v11493
        %11619 = vmatprep.subr.bf16.mxu0 0
        %11620 = vmatpush1.bf16.msra.mxu0 %v11492
        %11621 = vmatprep.subr.bf16.mxu0 0
        %11622 = vmatpush1.bf16.msra.mxu0 %v11491
        %11623 = vmatprep.subr.bf16.mxu0 0
        %11624 = vmatpush1.bf16.msra.mxu0 %v11490
        %11625 = vmatprep.subr.bf16.mxu0 0
        %11626 = vmatpush1.bf16.msra.mxu0 %v11489
        %11627 = vmatprep.subr.bf16.mxu0 0
        %11628 = vmatpush1.bf16.msra.mxu0 %v11488
        %11629 = vmatprep.subr.bf16.mxu0 0
        %11630 = vmatpush1.bf16.msra.mxu0 %v11487
        %11631 = vmatprep.subr.bf16.mxu0 0
        %11632 = vmatpush2.bf16.msra.mxu0 0
        %11633 = vmatprep.subr.bf16.mxu0 0
        %11634 = vmatpush2.bf16.msra.mxu0 0
        %11635 = vmatprep.subr.bf16.mxu0 0
        %11636 = vmatpush2.bf16.msra.mxu0 0
        %11637 = vmatprep.subr.bf16.mxu0 0
        %11638 = vmatpush2.bf16.msra.mxu0 0
        %11639 = vmatprep.subr.bf16.mxu0 0
        %11640 = vmatpush2.bf16.msra.mxu0 0
        %11641 = vmatprep.subr.bf16.mxu0 0
        %11642 = vmatpush2.bf16.msra.mxu0 0
        %11643 = vmatprep.subr.bf16.mxu0 0
        %11644 = vmatpush2.bf16.msra.mxu0 0
        %11645 = vmatprep.subr.bf16.mxu0 0
        %11646 = vmatpush2.bf16.msra.mxu0 0
        %11647 = vmatprep.mubr.bf16.mxu0 0
        %11648 = vmatmul.mubr.bf16.gmra.mxu0 %v11289
        %v11649 = vpop.f32.mrf.mxu0
        %v11650 = vadd.f32 %v11610, %v11649
        %v11651 = vpop.f32.mrf.mxu0
        %v11652 = vpop.f32.mrf.mxu0
        %v11653 = vpop.f32.mrf.mxu0
        %11654 = vdwg.mxu0
        %v11655 = vadd.f32 %v11158, %v11650
        %v11656 = vadd.f32 %v11655, %v4508
        %v11657 = vmax.f32 %v11656, 0.0
        %v11658 = vpack.c.bf16 %v11657, %v11657
        %11659 = vst [vmem:[#allocation3 + $0xc] sm:$0x3] %v11658
        %v11660 = vld [vmem:[#allocation3] sm:$0x33]
        %v11661 = vld [vmem:[#allocation3 + $0x8] sm:$0x33]
        %v11662 = vld [vmem:[%s5] sm:$0xf]
        %v11663 = vld [vmem:[%s5 + $0x4] sm:$0xf]
        %v11664 = vld [vmem:[%s5 + $0x8] sm:$0xf]
        %v11665 = vld [vmem:[%s5 + $0xc] sm:$0xf]
        %v11666 = vld [vmem:[%s5 + $0x10] sm:$0xf]
        %v11667 = vld [vmem:[%s5 + $0x14] sm:$0xf]
        %v11668 = vld [vmem:[%s5 + $0x18] sm:$0xf]
        %v11669 = vld [vmem:[%s5 + $0x1c] sm:$0xf]
        %v11670 = vld [vmem:[%s5 + $0x20] sm:$0xf]
        %v11671 = vld [vmem:[%s5 + $0x24] sm:$0xf]
        %v11672 = vld [vmem:[%s5 + $0x28] sm:$0xf]
        %v11673 = vld [vmem:[%s5 + $0x2c] sm:$0xf]
        %v11674 = vld [vmem:[%s5 + $0x30] sm:$0xf]
        %v11675 = vld [vmem:[%s5 + $0x34] sm:$0xf]
        %v11676 = vld [vmem:[%s5 + $0x38] sm:$0xf]
        %v11677 = vld [vmem:[%s5 + $0x3c] sm:$0xf]
        %v11678 = vld [vmem:[%s5 + $0x40] sm:$0xf]
        %v11679 = vld [vmem:[%s5 + $0x44] sm:$0xf]
        %v11680 = vld [vmem:[%s5 + $0x48] sm:$0xf]
        %v11681 = vld [vmem:[%s5 + $0x4c] sm:$0xf]
        %v11682 = vld [vmem:[%s5 + $0x50] sm:$0xf]
        %v11683 = vld [vmem:[%s5 + $0x54] sm:$0xf]
        %v11684 = vld [vmem:[%s5 + $0x58] sm:$0xf]
        %v11685 = vld [vmem:[%s5 + $0x5c] sm:$0xf]
        %v11686 = vld [vmem:[%s5 + $0x60] sm:$0xf]
        %v11687 = vld [vmem:[%s5 + $0x64] sm:$0xf]
        %v11688 = vld [vmem:[%s5 + $0x68] sm:$0xf]
        %v11689 = vld [vmem:[%s5 + $0x6c] sm:$0xf]
        %v11690 = vld [vmem:[%s5 + $0x70] sm:$0xf]
        %v11691 = vld [vmem:[%s5 + $0x74] sm:$0xf]
        %v11692 = vld [vmem:[%s5 + $0x78] sm:$0xf]
        %v11693 = vld [vmem:[%s5 + $0x7c] sm:$0xf]
        %v11694 = vld [vmem:[%s5 + $0x80] sm:$0xf]
        %v11695 = vld [vmem:[%s5 + $0x84] sm:$0xf]
        %v11696 = vld [vmem:[%s5 + $0x88] sm:$0xf]
        %v11697 = vld [vmem:[%s5 + $0x8c] sm:$0xf]
        %v11698 = vld [vmem:[%s5 + $0x90] sm:$0xf]
        %v11699 = vld [vmem:[%s5 + $0x94] sm:$0xf]
        %v11700 = vld [vmem:[%s5 + $0x98] sm:$0xf]
        %v11701 = vld [vmem:[%s5 + $0x9c] sm:$0xf]
        %v11702 = vld [vmem:[%s5 + $0xa0] sm:$0xf]
        %v11703 = vld [vmem:[%s5 + $0xa4] sm:$0xf]
        %v11704 = vld [vmem:[%s5 + $0xa8] sm:$0xf]
        %v11705 = vld [vmem:[%s5 + $0xac] sm:$0xf]
        %v11706 = vld [vmem:[%s5 + $0xb0] sm:$0xf]
        %v11707 = vld [vmem:[%s5 + $0xb4] sm:$0xf]
        %v11708 = vld [vmem:[%s5 + $0xb8] sm:$0xf]
        %v11709 = vld [vmem:[%s5 + $0xbc] sm:$0xf]
        %v11710 = vld [vmem:[%s5 + $0xc0] sm:$0xf]
        %v11711 = vld [vmem:[%s5 + $0xc4] sm:$0xf]
        %v11712 = vld [vmem:[%s5 + $0xc8] sm:$0xf]
        %v11713 = vld [vmem:[%s5 + $0xcc] sm:$0xf]
        %v11714 = vld [vmem:[%s5 + $0xd0] sm:$0xf]
        %v11715 = vld [vmem:[%s5 + $0xd4] sm:$0xf]
        %v11716 = vld [vmem:[%s5 + $0xd8] sm:$0xf]
        %v11717 = vld [vmem:[%s5 + $0xdc] sm:$0xf]
        %v11718 = vld [vmem:[%s5 + $0xe0] sm:$0xf]
        %v11719 = vld [vmem:[%s5 + $0xe4] sm:$0xf]
        %v11720 = vld [vmem:[%s5 + $0xe8] sm:$0xf]
        %v11721 = vld [vmem:[%s5 + $0xec] sm:$0xf]
        %v11722 = vld [vmem:[%s5 + $0xf0] sm:$0xf]
        %v11723 = vld [vmem:[%s5 + $0xf4] sm:$0xf]
        %v11724 = vld [vmem:[%s5 + $0xf8] sm:$0xf]
        %v11725 = vld [vmem:[%s5 + $0xfc] sm:$0xf]
        %v11726 = vld [vmem:[%s6] sm:$0x1]
        %v11728 = vlaneseq
        %v11729 = vshrl.u32 %v11728, 7
        %v11730 = vsub.s32 0, %v11729
        %v11731 = vrot.slane %v11726, %v11730
        %v11735 = vunpack.c.l.b16 %v11660
        %v11736 = vunpack.c.h.b16 %v11660
        %v11737 = vunpack.c.l.b16 %v11661
        %v11738 = vunpack.c.h.b16 %v11661
        %v11739 = vpack.c.b16 %v11735, %v11735
        %v11740 = vpack.c.b16 %v11736, %v11736
        %v11741 = vpack.c.b16 %v11737, %v11737
        %v11742 = vpack.c.b16 %v11738, %v11738
        %v11811 = vunpack.c.l.b16 %v11662
        %v11812 = vunpack.c.l.b16 %v11663
        %v11813 = vunpack.c.l.b16 %v11664
        %v11814 = vunpack.c.l.b16 %v11665
        %v11815 = vunpack.c.l.b16 %v11666
        %v11816 = vunpack.c.l.b16 %v11667
        %v11817 = vunpack.c.l.b16 %v11668
        %v11818 = vunpack.c.l.b16 %v11669
        %v11819 = vunpack.c.l.b16 %v11670
        %v11820 = vunpack.c.l.b16 %v11671
        %v11821 = vunpack.c.l.b16 %v11672
        %v11822 = vunpack.c.l.b16 %v11673
        %v11823 = vunpack.c.l.b16 %v11674
        %v11824 = vunpack.c.l.b16 %v11675
        %v11825 = vunpack.c.l.b16 %v11676
        %v11826 = vunpack.c.l.b16 %v11677
        %v11827 = vunpack.c.l.b16 %v11678
        %v11828 = vunpack.c.l.b16 %v11679
        %v11829 = vunpack.c.l.b16 %v11680
        %v11830 = vunpack.c.l.b16 %v11681
        %v11831 = vunpack.c.l.b16 %v11682
        %v11832 = vunpack.c.l.b16 %v11683
        %v11833 = vunpack.c.l.b16 %v11684
        %v11834 = vunpack.c.l.b16 %v11685
        %v11835 = vunpack.c.l.b16 %v11686
        %v11836 = vunpack.c.l.b16 %v11687
        %v11837 = vunpack.c.l.b16 %v11688
        %v11838 = vunpack.c.l.b16 %v11689
        %v11839 = vunpack.c.l.b16 %v11690
        %v11840 = vunpack.c.l.b16 %v11691
        %v11841 = vunpack.c.l.b16 %v11692
        %v11842 = vunpack.c.l.b16 %v11693
        %v11843 = vunpack.c.l.b16 %v11694
        %v11844 = vunpack.c.l.b16 %v11695
        %v11845 = vunpack.c.l.b16 %v11696
        %v11846 = vunpack.c.l.b16 %v11697
        %v11847 = vunpack.c.l.b16 %v11698
        %v11848 = vunpack.c.l.b16 %v11699
        %v11849 = vunpack.c.l.b16 %v11700
        %v11850 = vunpack.c.l.b16 %v11701
        %v11851 = vunpack.c.l.b16 %v11702
        %v11852 = vunpack.c.l.b16 %v11703
        %v11853 = vunpack.c.l.b16 %v11704
        %v11854 = vunpack.c.l.b16 %v11705
        %v11855 = vunpack.c.l.b16 %v11706
        %v11856 = vunpack.c.l.b16 %v11707
        %v11857 = vunpack.c.l.b16 %v11708
        %v11858 = vunpack.c.l.b16 %v11709
        %v11859 = vunpack.c.l.b16 %v11710
        %v11860 = vunpack.c.l.b16 %v11711
        %v11861 = vunpack.c.l.b16 %v11712
        %v11862 = vunpack.c.l.b16 %v11713
        %v11863 = vunpack.c.l.b16 %v11714
        %v11864 = vunpack.c.l.b16 %v11715
        %v11865 = vunpack.c.l.b16 %v11716
        %v11866 = vunpack.c.l.b16 %v11717
        %v11867 = vunpack.c.l.b16 %v11718
        %v11868 = vunpack.c.l.b16 %v11719
        %v11869 = vunpack.c.l.b16 %v11720
        %v11870 = vunpack.c.l.b16 %v11721
        %v11871 = vunpack.c.l.b16 %v11722
        %v11872 = vunpack.c.l.b16 %v11723
        %v11873 = vunpack.c.l.b16 %v11724
        %v11874 = vunpack.c.l.b16 %v11725
        %v11875 = vpack.c.b16 %v11812, %v11811
        %v11876 = vpack.c.b16 %v11814, %v11813
        %v11877 = vpack.c.b16 %v11816, %v11815
        %v11878 = vpack.c.b16 %v11818, %v11817
        %v11879 = vpack.c.b16 %v11820, %v11819
        %v11880 = vpack.c.b16 %v11822, %v11821
        %v11881 = vpack.c.b16 %v11824, %v11823
        %v11882 = vpack.c.b16 %v11826, %v11825
        %v11883 = vpack.c.b16 %v11828, %v11827
        %v11884 = vpack.c.b16 %v11830, %v11829
        %v11885 = vpack.c.b16 %v11832, %v11831
        %v11886 = vpack.c.b16 %v11834, %v11833
        %v11887 = vpack.c.b16 %v11836, %v11835
        %v11888 = vpack.c.b16 %v11838, %v11837
        %v11889 = vpack.c.b16 %v11840, %v11839
        %v11890 = vpack.c.b16 %v11842, %v11841
        %v11891 = vpack.c.b16 %v11844, %v11843
        %v11892 = vpack.c.b16 %v11846, %v11845
        %v11893 = vpack.c.b16 %v11848, %v11847
        %v11894 = vpack.c.b16 %v11850, %v11849
        %v11895 = vpack.c.b16 %v11852, %v11851
        %v11896 = vpack.c.b16 %v11854, %v11853
        %v11897 = vpack.c.b16 %v11856, %v11855
        %v11898 = vpack.c.b16 %v11858, %v11857
        %v11899 = vpack.c.b16 %v11860, %v11859
        %v11900 = vpack.c.b16 %v11862, %v11861
        %v11901 = vpack.c.b16 %v11864, %v11863
        %v11902 = vpack.c.b16 %v11866, %v11865
        %v11903 = vpack.c.b16 %v11868, %v11867
        %v11904 = vpack.c.b16 %v11870, %v11869
        %v11905 = vpack.c.b16 %v11872, %v11871
        %v11906 = vpack.c.b16 %v11874, %v11873
        %11939 = vmatprep.subr.bf16.mxu0 0
        %11940 = vmatpush1.bf16.msra.mxu0 %v11882
        %11941 = vmatprep.subr.bf16.mxu0 0
        %11942 = vmatpush1.bf16.msra.mxu0 %v11881
        %11943 = vmatprep.subr.bf16.mxu0 0
        %11944 = vmatpush1.bf16.msra.mxu0 %v11880
        %11945 = vmatprep.subr.bf16.mxu0 0
        %11946 = vmatpush1.bf16.msra.mxu0 %v11879
        %11947 = vmatprep.subr.bf16.mxu0 0
        %11948 = vmatpush1.bf16.msra.mxu0 %v11878
        %11949 = vmatprep.subr.bf16.mxu0 0
        %11950 = vmatpush1.bf16.msra.mxu0 %v11877
        %11951 = vmatprep.subr.bf16.mxu0 0
        %11952 = vmatpush1.bf16.msra.mxu0 %v11876
        %11953 = vmatprep.subr.bf16.mxu0 0
        %11954 = vmatpush1.bf16.msra.mxu0 %v11875
        %11955 = vmatprep.subr.bf16.mxu0 0
        %11956 = vmatpush2.bf16.msra.mxu0 %v11890
        %11957 = vmatprep.subr.bf16.mxu0 0
        %11958 = vmatpush2.bf16.msra.mxu0 %v11889
        %11959 = vmatprep.subr.bf16.mxu0 0
        %11960 = vmatpush2.bf16.msra.mxu0 %v11888
        %11961 = vmatprep.subr.bf16.mxu0 0
        %11962 = vmatpush2.bf16.msra.mxu0 %v11887
        %11963 = vmatprep.subr.bf16.mxu0 0
        %11964 = vmatpush2.bf16.msra.mxu0 %v11886
        %11965 = vmatprep.subr.bf16.mxu0 0
        %11966 = vmatpush2.bf16.msra.mxu0 %v11885
        %11967 = vmatprep.subr.bf16.mxu0 0
        %11968 = vmatpush2.bf16.msra.mxu0 %v11884
        %11969 = vmatprep.subr.bf16.mxu0 0
        %11970 = vmatpush2.bf16.msra.mxu0 %v11883
        %11971 = vmatprep.mubr.bf16.mxu0 %v11740
        %11972 = vmatmul.mubr.bf16.gmra.mxu0 %v11739
        %v11973 = vpop.f32.mrf.mxu0
        %v11974 = vadd.f32 %v11731, %v11973
        %v11975 = vpop.f32.mrf.mxu0
        %v11976 = vpop.f32.mrf.mxu0
        %v11977 = vpop.f32.mrf.mxu0
        %11978 = vdwg.mxu0
        %11979 = vmatprep.subr.bf16.mxu0 0
        %11980 = vmatpush1.bf16.msra.mxu0 %v11898
        %11981 = vmatprep.subr.bf16.mxu0 0
        %11982 = vmatpush1.bf16.msra.mxu0 %v11897
        %11983 = vmatprep.subr.bf16.mxu0 0
        %11984 = vmatpush1.bf16.msra.mxu0 %v11896
        %11985 = vmatprep.subr.bf16.mxu0 0
        %11986 = vmatpush1.bf16.msra.mxu0 %v11895
        %11987 = vmatprep.subr.bf16.mxu0 0
        %11988 = vmatpush1.bf16.msra.mxu0 %v11894
        %11989 = vmatprep.subr.bf16.mxu0 0
        %11990 = vmatpush1.bf16.msra.mxu0 %v11893
        %11991 = vmatprep.subr.bf16.mxu0 0
        %11992 = vmatpush1.bf16.msra.mxu0 %v11892
        %11993 = vmatprep.subr.bf16.mxu0 0
        %11994 = vmatpush1.bf16.msra.mxu0 %v11891
        %11995 = vmatprep.subr.bf16.mxu0 0
        %11996 = vmatpush2.bf16.msra.mxu0 %v11906
        %11997 = vmatprep.subr.bf16.mxu0 0
        %11998 = vmatpush2.bf16.msra.mxu0 %v11905
        %11999 = vmatprep.subr.bf16.mxu0 0
        %12000 = vmatpush2.bf16.msra.mxu0 %v11904
        %12001 = vmatprep.subr.bf16.mxu0 0
        %12002 = vmatpush2.bf16.msra.mxu0 %v11903
        %12003 = vmatprep.subr.bf16.mxu0 0
        %12004 = vmatpush2.bf16.msra.mxu0 %v11902
        %12005 = vmatprep.subr.bf16.mxu0 0
        %12006 = vmatpush2.bf16.msra.mxu0 %v11901
        %12007 = vmatprep.subr.bf16.mxu0 0
        %12008 = vmatpush2.bf16.msra.mxu0 %v11900
        %12009 = vmatprep.subr.bf16.mxu0 0
        %12010 = vmatpush2.bf16.msra.mxu0 %v11899
        %12011 = vmatprep.mubr.bf16.mxu0 %v11742
        %12012 = vmatmul.mubr.bf16.gmra.mxu0 %v11741
        %v12013 = vpop.f32.mrf.mxu0
        %v12014 = vadd.f32 %v11974, %v12013
        %v12015 = vpop.f32.mrf.mxu0
        %v12016 = vpop.f32.mrf.mxu0
        %v12017 = vpop.f32.mrf.mxu0
        %12018 = vdwg.mxu0
        %v12019 = vpack.c.bf16 %v12014, %v12014
        %vm12020 = vcmask 254976
        %12021 = vst.msk [vmem:[%s295] sm:$0x3] %vm12020, %v12019
        %s12022 = sand.u32 %s197, 1
        %s12023 = scalar_lea.sflag [#allocation5], %s12022
        %s12024 = sand.u32 %s197, 1
        %s12025 = smul.addr %s12024, 2
        %s12026 = scalar_lea.vmem [#allocation4], %s12025
        // Predicated region
        $region49: #{rel_conv2d_subsampling6.1} parent=47 // pred_check
          %p12027 = pneg %p207
        $region50: #{rel_conv2d_subsampling6.1} parent=47 // pred_check_branch
          %12029 = sbr.rel (%p12027) target = $region52
        $region51: #{rel_conv2d_subsampling6.1} parent=47 // pred_region
          %s12031 = ssub.s32 32, 32
          %12032 = vsyncadd %s12023, %s12031
          %s12033 = sadd.s32 %s26, %s25
          %s12034 = smul.addr %s12033, 32
          %s12035 = scalar_lea.hbm %s7, %s12034
          %s12037 = sshll.u32 %s12026, 4
          %s12038 = int_to_ptr.vmem [resolvable:$true] %s12037
          %12040 = dma.vmem_to_hbm [thread:$0]  %s12038, 32, %s12035, %s12023
        $region52: #{rel_conv2d_subsampling6.1} parent=47 // pred_fallthru
          _
      $region48: #{rel_conv2d_subsampling6.1} parent=5 // pred_fallthru
        _
      %p12041 = scmp.le.s32.totalorder 2, %s16
      // Predicated region
      $region53: #{rel_conv2d_subsampling6.1} parent=5 // pred_check
        %p12042 = pneg %p12041
      $region54: #{rel_conv2d_subsampling6.1} parent=5 // pred_check_branch
        %12044 = sbr.rel (%p12042) target = $region56
      $region55: #{rel_conv2d_subsampling6.1} parent=5 // pred_region
        %s12045 = ssub.s32 %s16, 2
        // Predicated region
        $region57: #{rel_conv2d_subsampling6.1} parent=55 // pred_check
          %p12046 = pneg %p213
        $region58: #{rel_conv2d_subsampling6.1} parent=55 // pred_check_branch
          %12048 = sbr.rel (%p12046) target = $region60
        $region59: #{rel_conv2d_subsampling6.1} parent=55 // pred_region
          %s12049 = sand.u32 %s198, 1
          %s12050 = scalar_lea.sflag [#allocation5], %s12049
          %s12051 = sand.u32 %s198, 1
          %s12052 = smul.addr %s12051, 2
          %s12053 = scalar_lea.vmem [#allocation4], %s12052
          %12054 = dma.done %s12050, 32
        $region60: #{rel_conv2d_subsampling6.1} parent=55 // pred_fallthru
          _
      $region56: #{rel_conv2d_subsampling6.1} parent=5 // pred_fallthru
        _
    $region6: #{rel_conv2d_subsampling6.1} parent=1 // loop_footer
      %s20 = sadd.s32 1, %s16
    $region7: #{rel_conv2d_subsampling6.1} parent=1 // loop_footer_branch
      %15 = sbr.rel target = $region3
    $region8: #{rel_conv2d_subsampling6.1} parent=1 // loop_exit
      _
    %12055 = vsyncpa [#allocation5], 1
    %s12056 = scalar_lea.sflag [#allocation5], 1
    %12057 = vsyncpa %s12056, 1

</llo_original>
